<compile_context>
chip_gen: v7x
topology: tpu7x:2x2x1
jax: 0.10.0
libtpu: 0.0.40
codegen_flags: <defaults>
</compile_context>

<pallas_src>
import jax
import jax.numpy as jnp
from jax import lax
from jax.experimental import pallas as pl
from jax.experimental.pallas import tpu as pltpu


# ----------------------------------------------------------------------------
# Model dimensions (synthetic stand-ins; shapes follow the module __init__)
# ----------------------------------------------------------------------------
IMG_C, IMG_H, IMG_W = 3, 16, 16
CONV_OUT = 8
CONV_K = IMG_C * 9            # 27
CONV_K_PAD = 32               # 27 real rows + 1 ones-row (bias fold) + zero pad
XF_DIM = 32                   # small stand-in for the HMR 2048-d backbone feature
XF_PAD = 128
IMU_IN = 72                   # 6 IMUs * (3 acc + 9 ori)
IMU_IN_PAD = 128
IMU_HID = 64
IMU_HID_PAD = 128
FULL_POSE_DIM = 87            # FC(87, 1024) input dim
FULL_POSE_PAD = 128
LEAF_DIM = 15                 # 5 leaf joints * 3
LEAF_PAD = 128
POSE_FEAT_DIM = 1024
NPOSE, NSHAPE, NCAM = 144, 10, 3
NTHETA = NPOSE + NSHAPE + NCAM       # 157
NTHETA_PAD = 256
REG_HID = 1024
N_ITER = 3
B_PAD_MIN = 8                        # pad batch rows to a full f32 sublane
OUT_W = NTHETA_PAD + XF_PAD + LEAF_PAD   # 512 lane-dense packed output

# int8 weight-slab row offsets (all multiples of 32 for int8 sublane packing)
Q_FCP = 0
Q_W1XF = Q_FCP + FULL_POSE_PAD          # 128
Q_W1PF = Q_W1XF + XF_PAD                # 256
Q_W1T = Q_W1PF + POSE_FEAT_DIM          # 1280
Q_W2 = Q_W1T + NTHETA_PAD               # 1536
Q_WDEC = Q_W2 + REG_HID                 # 2560
Q_ROWS = Q_WDEC + NTHETA_PAD            # 2816

# small-weight slab (f32, width 128) row offsets (multiples of 8)
SW_CONV = 0
SW_HMR = 16
SW_IMU1 = 32
SW_IMUP = SW_IMU1 + IMU_IN_PAD          # 160
SW_IMUL = SW_IMUP + IMU_HID_PAD         # 288
SW_ROWS = SW_IMUL + IMU_HID_PAD         # 416

# bias / scale / init slab rows (f32, width 1024)
BR_HMR, BR_IMU1, BR_IMUP, BR_IMUL = 0, 1, 2, 3
BR_FCP, BR_B1, BR_B2, BR_BDEC = 4, 5, 6, 7
BR_SFCP, BR_SW1, BR_SW2, BR_SDEC = 8, 9, 10, 11
BR_INIT = 12
BIAS_ROWS = 16


# ----------------------------------------------------------------------------
# Fused Pallas kernel: whole forward pass, weights VMEM-resident.
# ----------------------------------------------------------------------------
def _fused_kernel(patches_ref, pool_ref, imu_ref, bias_ref, sw_ref, wq_ref, out_ref):
    f32, bf16 = jnp.float32, jnp.bfloat16
    bsz = out_ref.shape[0]

    def bdot(x, w):
        # bf16 operands on the MXU, explicit f32 accumulation.
        return jnp.dot(x.astype(bf16), w.astype(bf16), preferred_element_type=f32)

    def dot_bt(x, w_t):
        # x @ w_t.T without materialising a transpose (contract last dims of both).
        return lax.dot_general(x.astype(bf16), w_t.astype(bf16),
                               (((1,), (1,)), ((), ())),
                               preferred_element_type=f32)

    def deq(r0, r1):
        # int8 weight rows -> bf16 (via f32: universally supported converts).
        # Per-output-channel scale is applied to the (B, N) matmul output instead.
        return wq_ref[r0:r1, :].astype(f32).astype(bf16)

    def brow(r, width):
        return bias_ref[r:r + 1, 0:width]          # (1, width) static slice

    # --- hmr_model.feature_extractor: transposed conv-as-matmul (bias folded into
    #     the ones-row of the patches) + ReLU + avg-pool (A@B^T) + fc + ReLU.
    conv_wt = sw_ref[SW_CONV:SW_CONV + CONV_OUT, 0:CONV_K_PAD].astype(bf16)   # (8, 32)
    feat_t = jnp.maximum(
        jnp.dot(conv_wt, patches_ref[...], preferred_element_type=f32), 0.0)  # (8, B*H*W)
    pooled = dot_bt(pool_ref[...], feat_t)                                     # (bsz, 8)
    hmr_w = sw_ref[SW_HMR:SW_HMR + CONV_OUT, :]                                # (8, 128)
    xf = jnp.maximum(bdot(pooled, hmr_w) + brow(BR_HMR, XF_PAD), 0.0)          # (bsz, 128)

    # --- imu_model
    imu1_w = sw_ref[SW_IMU1:SW_IMU1 + IMU_IN_PAD, :]
    h = jnp.maximum(bdot(imu_ref[...], imu1_w) + brow(BR_IMU1, IMU_HID_PAD), 0.0)
    imup_w = sw_ref[SW_IMUP:SW_IMUP + IMU_HID_PAD, :]
    fjp = bdot(h, imup_w) + brow(BR_IMUP, FULL_POSE_PAD)                       # (bsz, 128)
    imul_w = sw_ref[SW_IMUL:SW_IMUL + IMU_HID_PAD, :]
    leaf = bdot(h, imul_w) + brow(BR_IMUL, LEAF_PAD)                           # (bsz, 128)

    # --- fc_full_pose (dropout = identity at eval)
    pose_feat = jnp.maximum(
        bdot(fjp, deq(Q_FCP, Q_FCP + FULL_POSE_PAD)) * brow(BR_SFCP, REG_HID)
        + brow(BR_FCP, REG_HID), 0.0)                                          # (bsz, 1024)

    # --- regressor: loop-invariant K-slices of fc1 hoisted out of the loop
    scale_w1 = brow(BR_SW1, REG_HID)
    base = (bdot(xf, deq(Q_W1XF, Q_W1XF + XF_PAD))
            + bdot(pose_feat, deq(Q_W1PF, Q_W1PF + POSE_FEAT_DIM))) * scale_w1 \
        + brow(BR_B1, REG_HID)                                                 # (bsz, 1024)

    # Hoisted out of the unrolled loop: dequantized loop-reused weights, scales,
    # and pre-broadcast biases (JAX does not CSE broadcast_in_dim).
    w1t_w = deq(Q_W1T, Q_W1T + NTHETA_PAD)                                     # (256, 1024)
    w2_w = deq(Q_W2, Q_W2 + REG_HID)                                           # (1024, 1024)
    wdec_t = deq(Q_WDEC, Q_WDEC + NTHETA_PAD)                                  # (256, 1024)
    scale_w2 = brow(BR_SW2, REG_HID)
    scale_dec = brow(BR_SDEC, NTHETA_PAD)
    b2_full = jnp.broadcast_to(brow(BR_B2, REG_HID), (bsz, REG_HID))
    bdec_full = jnp.broadcast_to(brow(BR_BDEC, NTHETA_PAD), (bsz, NTHETA_PAD))
    theta0 = jnp.broadcast_to(brow(BR_INIT, NTHETA_PAD), (bsz, NTHETA_PAD))

    def body(_, theta):
        xc = base + bdot(theta, w1t_w) * scale_w1          # fc1 (only the theta K-slice)
        xc = bdot(xc, w2_w) * scale_w2 + b2_full           # fc2
        return theta + dot_bt(xc, wdec_t) * scale_dec + bdec_full   # fused dec heads + residual

    theta = lax.fori_loop(0, N_ITER, body, theta0, unroll=True)

    # --- single lane-dense packed output: [theta(256) | xf(128) | leaf(128)]
    out_ref[...] = jnp.concatenate([theta, xf, leaf], axis=1)


def _full_block(shape):
    nd = len(shape)
    return pl.BlockSpec(shape, lambda *args, _nd=nd: (0,) * _nd)


@jax.jit
def _run_fused(patches_t, pool, imu, bias, sw, wq):
    b_pad = imu.shape[0]
    args = (patches_t, pool, imu, bias, sw, wq)
    return pl.pallas_call(
        _fused_kernel,
        out_shape=jax.ShapeDtypeStruct((b_pad, OUT_W), jnp.float32),
        grid=(1,),
        in_specs=[_full_block(a.shape) for a in args],
        out_specs=_full_block((b_pad, OUT_W)),
        compiler_params=pltpu.CompilerParams(
            dimension_semantics=("arbitrary",),
            vmem_limit_bytes=48 * 1024 * 1024,
        ),
    )(*args)


# ----------------------------------------------------------------------------
# Glue helpers (plain JAX, run once per forward)
# ----------------------------------------------------------------------------
def im2col_3x3_t(x_nchw):
    """NCHW -> transposed (CONV_K_PAD, B*H*W) patches for a 3x3 conv, pad=1, stride=1.
    Row CONV_K (=27) is all ones so the conv bias can be folded into the weight."""
    B, C, H, W = x_nchw.shape
    xp = jnp.pad(x_nchw, ((0, 0), (0, 0), (1, 1), (1, 1)))
    cols = []
    for dy in range(3):
        for dx in range(3):
            cols.append(xp[:, :, dy:dy + H, dx:dx + W])
    patches = jnp.stack(cols, axis=2)                  # (B, C, 9, H, W)
    patches = patches.transpose(1, 2, 0, 3, 4)         # (C, 9, B, H, W)
    patches = patches.reshape(C * 9, B * H * W)        # (27, B*H*W)
    ones = jnp.ones((1, patches.shape[1]), patches.dtype)
    zeros = jnp.zeros((CONV_K_PAD - C * 9 - 1, patches.shape[1]), patches.dtype)
    return jnp.concatenate([patches, ones, zeros], axis=0)   # (32, B*H*W)


def make_pool_matrix(B, b_pad, HW):
    cols = jnp.arange(B * HW) // HW
    sel = (cols[None, :] == jnp.arange(b_pad)[:, None]).astype(jnp.float32)
    return sel / float(HW)                             # (b_pad, B*HW), rows >= B are zero


# ----------------------------------------------------------------------------
# Parameters: deterministic synthetic init, packed kernel-ready
# (int8 + per-channel scales for big matrices, f32 slabs for the small pieces).
# ----------------------------------------------------------------------------
def _linear(key, fan_in, fan_out, scale=0.05):
    kw, kb = jax.random.split(key)
    w = scale * jax.random.normal(kw, (fan_in, fan_out), jnp.float32)
    b = scale * jax.random.normal(kb, (fan_out,), jnp.float32)
    return w, b


def _pad_to(a, shape):
    return jnp.pad(a, [(0, s - d) for s, d in zip(shape, a.shape)])


def _quant_cols(w):
    """Symmetric int8 quantization with a per-output-column f32 scale."""
    amax = jnp.max(jnp.abs(w), axis=0)
    scale = jnp.where(amax > 0, amax / 127.0, 1.0)
    q = jnp.clip(jnp.round(w / scale), -127, 127).astype(jnp.int8)
    return q, scale.astype(jnp.float32)


def make_params(seed=0):
    keys = jax.random.split(jax.random.PRNGKey(seed), 12)

    # hmr feature extractor (tiny conv backbone stand-in)
    kc = jax.random.split(keys[0])
    conv_w = 0.05 * jax.random.normal(kc[0], (CONV_OUT, IMG_C, 3, 3), jnp.float32)
    conv_b = 0.05 * jax.random.normal(kc[1], (CONV_OUT,), jnp.float32)
    conv_wt = conv_w.reshape(CONV_OUT, CONV_K)                         # (8, 27)
    conv_wt = jnp.concatenate([conv_wt, conv_b[:, None]], axis=1)      # bias folded -> (8, 28)
    conv_wt = _pad_to(conv_wt, (16, 128))
    hmr_w, hmr_b = _linear(keys[1], CONV_OUT, XF_DIM)
    # imu model
    imu1_w, imu1_b = _linear(keys[2], IMU_IN, IMU_HID)
    imup_w, imup_b = _linear(keys[3], IMU_HID, FULL_POSE_DIM)
    imul_w, imul_b = _linear(keys[4], IMU_HID, LEAF_DIM)
    # fc_full_pose = FC(87, 1024, dropout_r=0.2)
    fcp_w, fcp_b = _linear(keys[5], FULL_POSE_DIM, POSE_FEAT_DIM)
    # regressor
    reg_in = XF_DIM + POSE_FEAT_DIM + NTHETA
    w1, b1 = _linear(keys[6], reg_in, REG_HID)
    w2, b2 = _linear(keys[7], REG_HID, REG_HID)
    wp, bp = _linear(keys[8], REG_HID, NPOSE, 0.01)
    ws, bs = _linear(keys[9], REG_HID, NSHAPE, 0.01)
    wc, bc = _linear(keys[10], REG_HID, NCAM, 0.01)

    # ---- small-weight slab (f32, 416 x 128)
    sw = jnp.zeros((SW_ROWS, 128), jnp.float32)
    sw = sw.at[SW_CONV:SW_CONV + 16, :].set(conv_wt)
    sw = sw.at[SW_HMR:SW_HMR + CONV_OUT, :].set(_pad_to(hmr_w, (CONV_OUT, XF_PAD)))
    sw = sw.at[SW_IMU1:SW_IMU1 + IMU_IN_PAD, :].set(_pad_to(imu1_w, (IMU_IN_PAD, IMU_HID_PAD)))
    sw = sw.at[SW_IMUP:SW_IMUP + IMU_HID_PAD, :].set(_pad_to(imup_w, (IMU_HID_PAD, FULL_POSE_PAD)))
    sw = sw.at[SW_IMUL:SW_IMUL + IMU_HID_PAD, :].set(_pad_to(imul_w, (IMU_HID_PAD, LEAF_PAD)))

    # ---- int8 weight slab (2816 x 1024) with per-output-channel scales
    q_fcp, s_fcp = _quant_cols(_pad_to(fcp_w, (FULL_POSE_PAD, POSE_FEAT_DIM)))
    # fc1 (1213, 1024) split along K into [xf | pose_feat | theta] with zero-padded rows;
    # one shared per-column scale keeps the split exact.
    w1_full = jnp.zeros((XF_PAD + POSE_FEAT_DIM + NTHETA_PAD, REG_HID), jnp.float32)
    w1_full = w1_full.at[0:XF_DIM].set(w1[:XF_DIM])
    w1_full = w1_full.at[XF_PAD:XF_PAD + POSE_FEAT_DIM].set(w1[XF_DIM:XF_DIM + POSE_FEAT_DIM])
    w1_full = w1_full.at[XF_PAD + POSE_FEAT_DIM:XF_PAD + POSE_FEAT_DIM + NTHETA].set(
        w1[XF_DIM + POSE_FEAT_DIM:])
    q_w1, s_w1 = _quant_cols(w1_full)
    q_w2, s_w2 = _quant_cols(w2)
    # decpose / decshape / deccam fused into one head, stored transposed (used as A@B^T)
    wdec = _pad_to(jnp.concatenate([wp, ws, wc], axis=1), (REG_HID, NTHETA_PAD))
    q_wdec, s_dec = _quant_cols(wdec)                  # per theta-column scale (256,)
    q_wdec_t = q_wdec.T                                # (256, 1024)

    wq = jnp.zeros((Q_ROWS, REG_HID), jnp.int8)
    wq = wq.at[Q_FCP:Q_FCP + FULL_POSE_PAD].set(q_fcp)
    wq = wq.at[Q_W1XF:Q_W1XF + q_w1.shape[0]].set(q_w1)
    wq = wq.at[Q_W2:Q_W2 + REG_HID].set(q_w2)
    wq = wq.at[Q_WDEC:Q_WDEC + NTHETA_PAD].set(q_wdec_t)

    # ---- bias / scale / init slab (f32, 16 x 1024)
    bias = jnp.zeros((BIAS_ROWS, REG_HID), jnp.float32)

    def set_row(b, r, v):
        return b.at[r, :v.shape[0]].set(v)

    bias = set_row(bias, BR_HMR, hmr_b)
    bias = set_row(bias, BR_IMU1, imu1_b)
    bias = set_row(bias, BR_IMUP, imup_b)
    bias = set_row(bias, BR_IMUL, imul_b)
    bias = set_row(bias, BR_FCP, fcp_b)
    bias = set_row(bias, BR_B1, b1)
    bias = set_row(bias, BR_B2, b2)
    bias = set_row(bias, BR_BDEC, jnp.concatenate([bp, bs, bc]))
    bias = set_row(bias, BR_SFCP, s_fcp)
    bias = set_row(bias, BR_SW1, s_w1)
    bias = set_row(bias, BR_SW2, s_w2)
    bias = set_row(bias, BR_SDEC, s_dec)
    # BR_INIT row stays zero (stand-in for SPIN mean-theta init); pad lanes MUST stay zero.

    return {"bias": bias, "sw": sw, "wq": wq}


# ----------------------------------------------------------------------------
# Forward pass (mirrors Net_Connect.forward)
# ----------------------------------------------------------------------------
def net_connect_forward(params, inp, imu_root=None):
    # TODO(synk): the original Regressor can override root orientation via `imu_root`
    # and runs the SMPL layer for vertices/keypoints; SMPL mesh recovery has no clean
    # Pallas equivalent here and is omitted.
    img = inp["img"].astype(jnp.float32)        # (B, 3, H, W) NCHW
    imu = inp["imu_data"].astype(jnp.float32)   # (B, 72)
    B = img.shape[0]
    b_pad = max(B_PAD_MIN, ((B + 7) // 8) * 8)

    patches_t = im2col_3x3_t(img).astype(jnp.bfloat16)                      # (32, B*H*W)
    pool = make_pool_matrix(B, b_pad, IMG_H * IMG_W).astype(jnp.bfloat16)   # (b_pad, B*H*W)
    imu_pad = jnp.zeros((b_pad, IMU_IN_PAD), jnp.float32).at[:B, :IMU_IN].set(imu)

    out = _run_fused(patches_t, pool, imu_pad,
                     params["bias"], params["sw"], params["wq"])            # (b_pad, 512)

    theta = out[:B, :NTHETA_PAD]
    xf = out[:B, NTHETA_PAD:NTHETA_PAD + XF_DIM]
    leaf = out[:B, NTHETA_PAD + XF_PAD:NTHETA_PAD + XF_PAD + LEAF_DIM]
    return {
        "pred_pose": theta[:, :NPOSE],
        "pred_shape": theta[:, NPOSE:NPOSE + NSHAPE],
        "pred_cam": theta[:, NPOSE + NSHAPE:NTHETA],
        "xf_img": xf,
        "leaf_keypoints": leaf.reshape(B, 5, 3),
    }


# ----------------------------------------------------------------------------
if __name__ == "__main__":
    params = make_params(seed=0)

    key = jax.random.PRNGKey(0)
    k_img, k_imu = jax.random.split(key)
    inp = {
        "img": jax.random.normal(k_img, (2, IMG_C, IMG_H, IMG_W), jnp.float32),
        "imu_data": jax.random.normal(k_imu, (2, IMU_IN), jnp.float32),
    }

    fwd = jax.jit(net_connect_forward)
    out = jax.block_until_ready(fwd(params, inp))

    assert out["pred_pose"].shape == (2, NPOSE)
    assert out["pred_shape"].shape == (2, NSHAPE)
    assert out["pred_cam"].shape == (2, NCAM)
    assert out["xf_img"].shape == (2, XF_DIM)
    assert out["leaf_keypoints"].shape == (2, 5, 3)
    for v in out.values():
        assert bool(jnp.all(jnp.isfinite(v)))
    print("KERNEL_OK")
</pallas_src>

<mosaic_0001>
module attributes {stable_mosaic.version = 11 : i64} {
  func.func @_fused_kernel(%arg0: i32, %arg1: memref<32x512xbf16, #tpu.memory_space<vmem>>, %arg2: memref<8x512xbf16, #tpu.memory_space<vmem>>, %arg3: memref<8x128xf32, #tpu.memory_space<vmem>>, %arg4: memref<16x1024xf32, #tpu.memory_space<vmem>>, %arg5: memref<416x128xf32, #tpu.memory_space<vmem>>, %arg6: memref<2816x1024xi8, #tpu.memory_space<vmem>>, %arg7: memref<8x512xf32, #tpu.memory_space<vmem>>) attributes {dimension_semantics = [#tpu.dimension_semantics<arbitrary>], iteration_bounds = array<i64: 1>, scalar_prefetch = 0 : i64, scratch_operands = 0 : i64, tpu.core_type = #tpu.core_type<tc>, window_params = [{pipeline_mode = #tpu.pipeline_mode<synchronous>, transform_indices = @transform_0, window_bounds = array<i64: 32, 512>}, {pipeline_mode = #tpu.pipeline_mode<synchronous>, transform_indices = @transform_1, window_bounds = array<i64: 8, 512>}, {pipeline_mode = #tpu.pipeline_mode<synchronous>, transform_indices = @transform_2, window_bounds = array<i64: 8, 128>}, {pipeline_mode = #tpu.pipeline_mode<synchronous>, transform_indices = @transform_3, window_bounds = array<i64: 16, 1024>}, {pipeline_mode = #tpu.pipeline_mode<synchronous>, transform_indices = @transform_4, window_bounds = array<i64: 416, 128>}, {pipeline_mode = #tpu.pipeline_mode<synchronous>, transform_indices = @transform_5, window_bounds = array<i64: 2816, 1024>}, {pipeline_mode = #tpu.pipeline_mode<synchronous>, transform_indices = @transform_6, window_bounds = array<i64: 8, 512>}]} {
    %c0 = arith.constant 0 : index
    %c0_0 = arith.constant 0 : index
    %0 = vector.load %arg5[%c0, %c0_0] : memref<416x128xf32, #tpu.memory_space<vmem>>, vector<8x32xf32>
    %1 = arith.truncf %0 : vector<8x32xf32> to vector<8x32xbf16>
    %c0_1 = arith.constant 0 : index
    %c0_2 = arith.constant 0 : index
    %2 = vector.load %arg1[%c0_1, %c0_2] : memref<32x512xbf16, #tpu.memory_space<vmem>>, vector<32x512xbf16>
    %cst = arith.constant dense<0.000000e+00> : vector<8x512xf32>
    %3 = tpu.matmul %1, %2, %cst {dimension_numbers = #tpu.dot_dimension_numbers<[1], [0], [0], [1], [0, 0, 1, 1], [], []>} : vector<8x32xbf16>, vector<32x512xbf16>, vector<8x512xf32> -> vector<8x512xf32>
    %cst_3 = arith.constant 0.000000e+00 : f32
    %4 = vector.broadcast %cst_3 : f32 to vector<8x512xf32>
    %5 = arith.maximumf %3, %4 : vector<8x512xf32>
    %c0_4 = arith.constant 0 : index
    %c0_5 = arith.constant 0 : index
    %6 = vector.load %arg2[%c0_4, %c0_5] : memref<8x512xbf16, #tpu.memory_space<vmem>>, vector<8x512xbf16>
    %7 = arith.truncf %5 : vector<8x512xf32> to vector<8x512xbf16>
    %cst_6 = arith.constant dense<0.000000e+00> : vector<8x8xf32>
    %8 = tpu.matmul %6, %7, %cst_6 {dimension_numbers = #tpu.dot_dimension_numbers<[1], [1], [0], [0], [0, 0, 1, 0], [], []>} : vector<8x512xbf16>, vector<8x512xbf16>, vector<8x8xf32> -> vector<8x8xf32>
    %c16 = arith.constant 16 : index
    %c0_7 = arith.constant 0 : index
    %9 = vector.load %arg5[%c16, %c0_7] : memref<416x128xf32, #tpu.memory_space<vmem>>, vector<8x128xf32>
    %10 = arith.truncf %8 : vector<8x8xf32> to vector<8x8xbf16>
    %11 = arith.truncf %9 : vector<8x128xf32> to vector<8x128xbf16>
    %cst_8 = arith.constant dense<0.000000e+00> : vector<8x128xf32>
    %12 = tpu.matmul %10, %11, %cst_8 {dimension_numbers = #tpu.dot_dimension_numbers<[1], [0], [0], [1], [0, 0, 1, 1], [], []>} : vector<8x8xbf16>, vector<8x128xbf16>, vector<8x128xf32> -> vector<8x128xf32>
    %c0_9 = arith.constant 0 : index
    %c0_10 = arith.constant 0 : index
    %13 = vector.load %arg4[%c0_9, %c0_10] : memref<16x1024xf32, #tpu.memory_space<vmem>>, vector<1x128xf32>
    %14 = vector.broadcast %13 : vector<1x128xf32> to vector<8x128xf32>
    %15 = arith.addf %12, %14 : vector<8x128xf32>
    %cst_11 = arith.constant 0.000000e+00 : f32
    %16 = vector.broadcast %cst_11 : f32 to vector<8x128xf32>
    %17 = arith.maximumf %15, %16 : vector<8x128xf32>
    %c32 = arith.constant 32 : index
    %c0_12 = arith.constant 0 : index
    %18 = vector.load %arg5[%c32, %c0_12] : memref<416x128xf32, #tpu.memory_space<vmem>>, vector<128x128xf32>
    %c0_13 = arith.constant 0 : index
    %c0_14 = arith.constant 0 : index
    %19 = vector.load %arg3[%c0_13, %c0_14] : memref<8x128xf32, #tpu.memory_space<vmem>>, vector<8x128xf32>
    %20 = arith.truncf %19 : vector<8x128xf32> to vector<8x128xbf16>
    %21 = arith.truncf %18 : vector<128x128xf32> to vector<128x128xbf16>
    %cst_15 = arith.constant dense<0.000000e+00> : vector<8x128xf32>
    %22 = tpu.matmul %20, %21, %cst_15 {dimension_numbers = #tpu.dot_dimension_numbers<[1], [0], [0], [1], [0, 0, 1, 1], [], []>} : vector<8x128xbf16>, vector<128x128xbf16>, vector<8x128xf32> -> vector<8x128xf32>
    %c1 = arith.constant 1 : index
    %c0_16 = arith.constant 0 : index
    %23 = vector.load %arg4[%c1, %c0_16] : memref<16x1024xf32, #tpu.memory_space<vmem>>, vector<1x128xf32>
    %24 = vector.broadcast %23 : vector<1x128xf32> to vector<8x128xf32>
    %25 = arith.addf %22, %24 : vector<8x128xf32>
    %cst_17 = arith.constant 0.000000e+00 : f32
    %26 = vector.broadcast %cst_17 : f32 to vector<8x128xf32>
    %27 = arith.maximumf %25, %26 : vector<8x128xf32>
    %c160 = arith.constant 160 : index
    %c0_18 = arith.constant 0 : index
    %28 = vector.load %arg5[%c160, %c0_18] : memref<416x128xf32, #tpu.memory_space<vmem>>, vector<128x128xf32>
    %29 = arith.truncf %27 : vector<8x128xf32> to vector<8x128xbf16>
    %30 = arith.truncf %28 : vector<128x128xf32> to vector<128x128xbf16>
    %cst_19 = arith.constant dense<0.000000e+00> : vector<8x128xf32>
    %31 = tpu.matmul %29, %30, %cst_19 {dimension_numbers = #tpu.dot_dimension_numbers<[1], [0], [0], [1], [0, 0, 1, 1], [], []>} : vector<8x128xbf16>, vector<128x128xbf16>, vector<8x128xf32> -> vector<8x128xf32>
    %c2 = arith.constant 2 : index
    %c0_20 = arith.constant 0 : index
    %32 = vector.load %arg4[%c2, %c0_20] : memref<16x1024xf32, #tpu.memory_space<vmem>>, vector<1x128xf32>
    %33 = vector.broadcast %32 : vector<1x128xf32> to vector<8x128xf32>
    %34 = arith.addf %31, %33 : vector<8x128xf32>
    %c288 = arith.constant 288 : index
    %c0_21 = arith.constant 0 : index
    %35 = vector.load %arg5[%c288, %c0_21] : memref<416x128xf32, #tpu.memory_space<vmem>>, vector<128x128xf32>
    %36 = arith.truncf %27 : vector<8x128xf32> to vector<8x128xbf16>
    %37 = arith.truncf %35 : vector<128x128xf32> to vector<128x128xbf16>
    %cst_22 = arith.constant dense<0.000000e+00> : vector<8x128xf32>
    %38 = tpu.matmul %36, %37, %cst_22 {dimension_numbers = #tpu.dot_dimension_numbers<[1], [0], [0], [1], [0, 0, 1, 1], [], []>} : vector<8x128xbf16>, vector<128x128xbf16>, vector<8x128xf32> -> vector<8x128xf32>
    %c3 = arith.constant 3 : index
    %c0_23 = arith.constant 0 : index
    %39 = vector.load %arg4[%c3, %c0_23] : memref<16x1024xf32, #tpu.memory_space<vmem>>, vector<1x128xf32>
    %40 = vector.broadcast %39 : vector<1x128xf32> to vector<8x128xf32>
    %41 = arith.addf %38, %40 : vector<8x128xf32>
    %c0_24 = arith.constant 0 : index
    %c0_25 = arith.constant 0 : index
    %42 = vector.load %arg6[%c0_24, %c0_25] : memref<2816x1024xi8, #tpu.memory_space<vmem>>, vector<128x1024xi8>
    %43 = arith.sitofp %42 : vector<128x1024xi8> to vector<128x1024xf32>
    %44 = arith.truncf %43 : vector<128x1024xf32> to vector<128x1024xbf16>
    %45 = arith.truncf %34 : vector<8x128xf32> to vector<8x128xbf16>
    %cst_26 = arith.constant dense<0.000000e+00> : vector<8x1024xf32>
    %46 = tpu.matmul %45, %44, %cst_26 {dimension_numbers = #tpu.dot_dimension_numbers<[1], [0], [0], [1], [0, 0, 1, 1], [], []>} : vector<8x128xbf16>, vector<128x1024xbf16>, vector<8x1024xf32> -> vector<8x1024xf32>
    %c8 = arith.constant 8 : index
    %c0_27 = arith.constant 0 : index
    %47 = vector.load %arg4[%c8, %c0_27] : memref<16x1024xf32, #tpu.memory_space<vmem>>, vector<1x1024xf32>
    %48 = vector.broadcast %47 : vector<1x1024xf32> to vector<8x1024xf32>
    %49 = arith.mulf %46, %48 : vector<8x1024xf32>
    %c4 = arith.constant 4 : index
    %c0_28 = arith.constant 0 : index
    %50 = vector.load %arg4[%c4, %c0_28] : memref<16x1024xf32, #tpu.memory_space<vmem>>, vector<1x1024xf32>
    %51 = vector.broadcast %50 : vector<1x1024xf32> to vector<8x1024xf32>
    %52 = arith.addf %49, %51 : vector<8x1024xf32>
    %cst_29 = arith.constant 0.000000e+00 : f32
    %53 = vector.broadcast %cst_29 : f32 to vector<8x1024xf32>
    %54 = arith.maximumf %52, %53 : vector<8x1024xf32>
    %c9 = arith.constant 9 : index
    %c0_30 = arith.constant 0 : index
    %55 = vector.load %arg4[%c9, %c0_30] : memref<16x1024xf32, #tpu.memory_space<vmem>>, vector<1x1024xf32>
    %c128 = arith.constant 128 : index
    %c0_31 = arith.constant 0 : index
    %56 = vector.load %arg6[%c128, %c0_31] : memref<2816x1024xi8, #tpu.memory_space<vmem>>, vector<128x1024xi8>
    %57 = arith.sitofp %56 : vector<128x1024xi8> to vector<128x1024xf32>
    %58 = arith.truncf %57 : vector<128x1024xf32> to vector<128x1024xbf16>
    %59 = arith.truncf %17 : vector<8x128xf32> to vector<8x128xbf16>
    %cst_32 = arith.constant dense<0.000000e+00> : vector<8x1024xf32>
    %60 = tpu.matmul %59, %58, %cst_32 {dimension_numbers = #tpu.dot_dimension_numbers<[1], [0], [0], [1], [0, 0, 1, 1], [], []>} : vector<8x128xbf16>, vector<128x1024xbf16>, vector<8x1024xf32> -> vector<8x1024xf32>
    %c256 = arith.constant 256 : index
    %c0_33 = arith.constant 0 : index
    %61 = vector.load %arg6[%c256, %c0_33] : memref<2816x1024xi8, #tpu.memory_space<vmem>>, vector<1024x1024xi8>
    %62 = arith.sitofp %61 : vector<1024x1024xi8> to vector<1024x1024xf32>
    %63 = arith.truncf %62 : vector<1024x1024xf32> to vector<1024x1024xbf16>
    %64 = arith.truncf %54 : vector<8x1024xf32> to vector<8x1024xbf16>
    %cst_34 = arith.constant dense<0.000000e+00> : vector<8x1024xf32>
    %65 = tpu.matmul %64, %63, %cst_34 {dimension_numbers = #tpu.dot_dimension_numbers<[1], [0], [0], [1], [0, 0, 1, 1], [], []>} : vector<8x1024xbf16>, vector<1024x1024xbf16>, vector<8x1024xf32> -> vector<8x1024xf32>
    %66 = arith.addf %60, %65 : vector<8x1024xf32>
    %67 = vector.broadcast %55 : vector<1x1024xf32> to vector<8x1024xf32>
    %68 = arith.mulf %66, %67 : vector<8x1024xf32>
    %c5 = arith.constant 5 : index
    %c0_35 = arith.constant 0 : index
    %69 = vector.load %arg4[%c5, %c0_35] : memref<16x1024xf32, #tpu.memory_space<vmem>>, vector<1x1024xf32>
    %70 = vector.broadcast %69 : vector<1x1024xf32> to vector<8x1024xf32>
    %71 = arith.addf %68, %70 : vector<8x1024xf32>
    %c1280 = arith.constant 1280 : index
    %c0_36 = arith.constant 0 : index
    %72 = vector.load %arg6[%c1280, %c0_36] : memref<2816x1024xi8, #tpu.memory_space<vmem>>, vector<256x1024xi8>
    %73 = arith.sitofp %72 : vector<256x1024xi8> to vector<256x1024xf32>
    %74 = arith.truncf %73 : vector<256x1024xf32> to vector<256x1024xbf16>
    %c1536 = arith.constant 1536 : index
    %c0_37 = arith.constant 0 : index
    %75 = vector.load %arg6[%c1536, %c0_37] : memref<2816x1024xi8, #tpu.memory_space<vmem>>, vector<1024x1024xi8>
    %76 = arith.sitofp %75 : vector<1024x1024xi8> to vector<1024x1024xf32>
    %77 = arith.truncf %76 : vector<1024x1024xf32> to vector<1024x1024xbf16>
    %c2560 = arith.constant 2560 : index
    %c0_38 = arith.constant 0 : index
    %78 = vector.load %arg6[%c2560, %c0_38] : memref<2816x1024xi8, #tpu.memory_space<vmem>>, vector<256x1024xi8>
    %79 = arith.sitofp %78 : vector<256x1024xi8> to vector<256x1024xf32>
    %80 = arith.truncf %79 : vector<256x1024xf32> to vector<256x1024xbf16>
    %c10 = arith.constant 10 : index
    %c0_39 = arith.constant 0 : index
    %81 = vector.load %arg4[%c10, %c0_39] : memref<16x1024xf32, #tpu.memory_space<vmem>>, vector<1x1024xf32>
    %c11 = arith.constant 11 : index
    %c0_40 = arith.constant 0 : index
    %82 = vector.load %arg4[%c11, %c0_40] : memref<16x1024xf32, #tpu.memory_space<vmem>>, vector<1x256xf32>
    %c6 = arith.constant 6 : index
    %c0_41 = arith.constant 0 : index
    %83 = vector.load %arg4[%c6, %c0_41] : memref<16x1024xf32, #tpu.memory_space<vmem>>, vector<1x1024xf32>
    %84 = vector.shape_cast %83 : vector<1x1024xf32> to vector<1x1024xf32>
    %85 = vector.broadcast %84 : vector<1x1024xf32> to vector<8x1024xf32>
    %c7 = arith.constant 7 : index
    %c0_42 = arith.constant 0 : index
    %86 = vector.load %arg4[%c7, %c0_42] : memref<16x1024xf32, #tpu.memory_space<vmem>>, vector<1x256xf32>
    %87 = vector.shape_cast %86 : vector<1x256xf32> to vector<1x256xf32>
    %88 = vector.broadcast %87 : vector<1x256xf32> to vector<8x256xf32>
    %c12 = arith.constant 12 : index
    %c0_43 = arith.constant 0 : index
    %89 = vector.load %arg4[%c12, %c0_43] : memref<16x1024xf32, #tpu.memory_space<vmem>>, vector<1x256xf32>
    %90 = vector.shape_cast %89 : vector<1x256xf32> to vector<1x256xf32>
    %91 = vector.broadcast %90 : vector<1x256xf32> to vector<8x256xf32>
    %c0_i32 = arith.constant 0 : i32
    %92 = arith.truncf %91 : vector<8x256xf32> to vector<8x256xbf16>
    %cst_44 = arith.constant dense<0.000000e+00> : vector<8x1024xf32>
    %93 = tpu.matmul %92, %74, %cst_44 {dimension_numbers = #tpu.dot_dimension_numbers<[1], [0], [0], [1], [0, 0, 1, 1], [], []>} : vector<8x256xbf16>, vector<256x1024xbf16>, vector<8x1024xf32> -> vector<8x1024xf32>
    %94 = vector.broadcast %55 : vector<1x1024xf32> to vector<8x1024xf32>
    %95 = arith.mulf %93, %94 : vector<8x1024xf32>
    %96 = arith.addf %71, %95 : vector<8x1024xf32>
    %97 = arith.truncf %96 : vector<8x1024xf32> to vector<8x1024xbf16>
    %cst_45 = arith.constant dense<0.000000e+00> : vector<8x1024xf32>
    %98 = tpu.matmul %97, %77, %cst_45 {dimension_numbers = #tpu.dot_dimension_numbers<[1], [0], [0], [1], [0, 0, 1, 1], [], []>} : vector<8x1024xbf16>, vector<1024x1024xbf16>, vector<8x1024xf32> -> vector<8x1024xf32>
    %99 = vector.broadcast %81 : vector<1x1024xf32> to vector<8x1024xf32>
    %100 = arith.mulf %98, %99 : vector<8x1024xf32>
    %101 = arith.addf %100, %85 : vector<8x1024xf32>
    %102 = arith.truncf %101 : vector<8x1024xf32> to vector<8x1024xbf16>
    %cst_46 = arith.constant dense<0.000000e+00> : vector<8x256xf32>
    %103 = tpu.matmul %102, %80, %cst_46 {dimension_numbers = #tpu.dot_dimension_numbers<[1], [1], [0], [0], [0, 0, 1, 0], [], []>} : vector<8x1024xbf16>, vector<256x1024xbf16>, vector<8x256xf32> -> vector<8x256xf32>
    %104 = vector.broadcast %82 : vector<1x256xf32> to vector<8x256xf32>
    %105 = arith.mulf %103, %104 : vector<8x256xf32>
    %106 = arith.addf %91, %105 : vector<8x256xf32>
    %107 = arith.addf %106, %88 : vector<8x256xf32>
    %c1_i32 = arith.constant 1 : i32
    %108 = arith.truncf %107 : vector<8x256xf32> to vector<8x256xbf16>
    %cst_47 = arith.constant dense<0.000000e+00> : vector<8x1024xf32>
    %109 = tpu.matmul %108, %74, %cst_47 {dimension_numbers = #tpu.dot_dimension_numbers<[1], [0], [0], [1], [0, 0, 1, 1], [], []>} : vector<8x256xbf16>, vector<256x1024xbf16>, vector<8x1024xf32> -> vector<8x1024xf32>
    %110 = vector.broadcast %55 : vector<1x1024xf32> to vector<8x1024xf32>
    %111 = arith.mulf %109, %110 : vector<8x1024xf32>
    %112 = arith.addf %71, %111 : vector<8x1024xf32>
    %113 = arith.truncf %112 : vector<8x1024xf32> to vector<8x1024xbf16>
    %cst_48 = arith.constant dense<0.000000e+00> : vector<8x1024xf32>
    %114 = tpu.matmul %113, %77, %cst_48 {dimension_numbers = #tpu.dot_dimension_numbers<[1], [0], [0], [1], [0, 0, 1, 1], [], []>} : vector<8x1024xbf16>, vector<1024x1024xbf16>, vector<8x1024xf32> -> vector<8x1024xf32>
    %115 = vector.broadcast %81 : vector<1x1024xf32> to vector<8x1024xf32>
    %116 = arith.mulf %114, %115 : vector<8x1024xf32>
    %117 = arith.addf %116, %85 : vector<8x1024xf32>
    %118 = arith.truncf %117 : vector<8x1024xf32> to vector<8x1024xbf16>
    %cst_49 = arith.constant dense<0.000000e+00> : vector<8x256xf32>
    %119 = tpu.matmul %118, %80, %cst_49 {dimension_numbers = #tpu.dot_dimension_numbers<[1], [1], [0], [0], [0, 0, 1, 0], [], []>} : vector<8x1024xbf16>, vector<256x1024xbf16>, vector<8x256xf32> -> vector<8x256xf32>
    %120 = vector.broadcast %82 : vector<1x256xf32> to vector<8x256xf32>
    %121 = arith.mulf %119, %120 : vector<8x256xf32>
    %122 = arith.addf %107, %121 : vector<8x256xf32>
    %123 = arith.addf %122, %88 : vector<8x256xf32>
    %c2_i32 = arith.constant 2 : i32
    %124 = arith.truncf %123 : vector<8x256xf32> to vector<8x256xbf16>
    %cst_50 = arith.constant dense<0.000000e+00> : vector<8x1024xf32>
    %125 = tpu.matmul %124, %74, %cst_50 {dimension_numbers = #tpu.dot_dimension_numbers<[1], [0], [0], [1], [0, 0, 1, 1], [], []>} : vector<8x256xbf16>, vector<256x1024xbf16>, vector<8x1024xf32> -> vector<8x1024xf32>
    %126 = vector.broadcast %55 : vector<1x1024xf32> to vector<8x1024xf32>
    %127 = arith.mulf %125, %126 : vector<8x1024xf32>
    %128 = arith.addf %71, %127 : vector<8x1024xf32>
    %129 = arith.truncf %128 : vector<8x1024xf32> to vector<8x1024xbf16>
    %cst_51 = arith.constant dense<0.000000e+00> : vector<8x1024xf32>
    %130 = tpu.matmul %129, %77, %cst_51 {dimension_numbers = #tpu.dot_dimension_numbers<[1], [0], [0], [1], [0, 0, 1, 1], [], []>} : vector<8x1024xbf16>, vector<1024x1024xbf16>, vector<8x1024xf32> -> vector<8x1024xf32>
    %131 = vector.broadcast %81 : vector<1x1024xf32> to vector<8x1024xf32>
    %132 = arith.mulf %130, %131 : vector<8x1024xf32>
    %133 = arith.addf %132, %85 : vector<8x1024xf32>
    %134 = arith.truncf %133 : vector<8x1024xf32> to vector<8x1024xbf16>
    %cst_52 = arith.constant dense<0.000000e+00> : vector<8x256xf32>
    %135 = tpu.matmul %134, %80, %cst_52 {dimension_numbers = #tpu.dot_dimension_numbers<[1], [1], [0], [0], [0, 0, 1, 0], [], []>} : vector<8x1024xbf16>, vector<256x1024xbf16>, vector<8x256xf32> -> vector<8x256xf32>
    %136 = vector.broadcast %82 : vector<1x256xf32> to vector<8x256xf32>
    %137 = arith.mulf %135, %136 : vector<8x256xf32>
    %138 = arith.addf %123, %137 : vector<8x256xf32>
    %139 = arith.addf %138, %88 : vector<8x256xf32>
    %140 = tpu.concatenate %139, %17, %41 in 1 : vector<8x256xf32>, vector<8x128xf32>, vector<8x128xf32> -> vector<8x512xf32>
    %c0_53 = arith.constant 0 : index
    %c0_54 = arith.constant 0 : index
    %141 = vector.load %arg7[%c0_53, %c0_54] : memref<8x512xf32, #tpu.memory_space<vmem>>, vector<8x512xf32>
    tpu.vector_store %arg7[%c0_53, %c0_54], %140 {strides = array<i32>} : memref<8x512xf32, #tpu.memory_space<vmem>>, vector<8x512xf32>,
    return
  }
  func.func @transform_0(%arg0: i32) -> (i32, i32) {
    %c0_i32 = arith.constant 0 : i32
    %c0_i32_0 = arith.constant 0 : i32
    %c0_i32_1 = arith.constant 0 : i32
    return %c0_i32, %c0_i32_0 : i32, i32
  }
  func.func @transform_1(%arg0: i32) -> (i32, i32) {
    %c0_i32 = arith.constant 0 : i32
    %c0_i32_0 = arith.constant 0 : i32
    %c0_i32_1 = arith.constant 0 : i32
    return %c0_i32, %c0_i32_0 : i32, i32
  }
  func.func @transform_2(%arg0: i32) -> (i32, i32) {
    %c0_i32 = arith.constant 0 : i32
    %c0_i32_0 = arith.constant 0 : i32
    %c0_i32_1 = arith.constant 0 : i32
    return %c0_i32, %c0_i32_0 : i32, i32
  }
  func.func @transform_3(%arg0: i32) -> (i32, i32) {
    %c0_i32 = arith.constant 0 : i32
    %c0_i32_0 = arith.constant 0 : i32
    %c0_i32_1 = arith.constant 0 : i32
    return %c0_i32, %c0_i32_0 : i32, i32
  }
  func.func @transform_4(%arg0: i32) -> (i32, i32) {
    %c0_i32 = arith.constant 0 : i32
    %c0_i32_0 = arith.constant 0 : i32
    %c0_i32_1 = arith.constant 0 : i32
    return %c0_i32, %c0_i32_0 : i32, i32
  }
  func.func @transform_5(%arg0: i32) -> (i32, i32) {
    %c0_i32 = arith.constant 0 : i32
    %c0_i32_0 = arith.constant 0 : i32
    %c0_i32_1 = arith.constant 0 : i32
    return %c0_i32, %c0_i32_0 : i32, i32
  }
  func.func @transform_6(%arg0: i32) -> (i32, i32) {
    %c0_i32 = arith.constant 0 : i32
    %c0_i32_0 = arith.constant 0 : i32
    %c0_i32_1 = arith.constant 0 : i32
    return %c0_i32, %c0_i32_0 : i32, i32
  }
}

</mosaic_0001>

<llo_original>
// kernel: _run_fused.1
$region0: #{_run_fused.1}
  #allocation0 [shape = 'u32[]', space=smem, size = 0x4, offset = 0x4, fixed_abs, tag = 'smem constant byte address 0x4 - core index']
  #allocation1 [shape = 'u32[144,128]{1,0:T(1,128)}', space=vmem, size = 0x12000, scoped, tag = 'internal scratch']
  %s0 = inlined_call_operand.hbm [shape: bf16[32,512], index: 0, kind: input, shape index: {}]
  %s1 = inlined_call_operand.hbm [shape: bf16[8,512], index: 1, kind: input, shape index: {}]
  %s2 = inlined_call_operand.hbm [shape: f32[8,128], index: 2, kind: input, shape index: {}]
  %s3 = inlined_call_operand.hbm [shape: f32[16,1024], index: 3, kind: input, shape index: {}]
  %s4 = inlined_call_operand.hbm [shape: f32[416,128], index: 4, kind: input, shape index: {}]
  %s5 = inlined_call_operand.hbm [shape: s8[2816,1024], index: 5, kind: input, shape index: {}]
  %s6 = inlined_call_operand.hbm [shape: f32[8,512], index: 6, kind: output, shape index: {}]
  %s7 = sld [smem:[#allocation0]]
  $region58: #{_run_fused.1} parent=0
    _
  %s9 = ssub.s32 1, %s7
  %s10 = scalar_select 0, %s9, %s7
  $region1: #{_run_fused.1} parent=0
    #allocation2 [shape = 'u8[32768]{0}', space=vmem, size = 0x8000, scoped, tag = 'input window, operand 0, single buffered']
    #allocation3 [shape = 's32[1]{0}', space=sflag, size = 0x4, scoped, tag = 'scoped memory for _run_fused.1']
    #allocation4 [shape = 's32[1]{0}', space=sflag, size = 0x4, scoped, tag = 'scoped memory for _run_fused.1']
    #allocation5 [shape = 'u8[8192]{0}', space=vmem, size = 0x2000, scoped, tag = 'input window, operand 1, single buffered']
    #allocation6 [shape = 's32[1]{0}', space=sflag, size = 0x4, scoped, tag = 'scoped memory for _run_fused.1']
    #allocation7 [shape = 'u8[4096]{0}', space=vmem, size = 0x1000, scoped, tag = 'input window, operand 2, single buffered']
    #allocation8 [shape = 'u8[65536]{0}', space=vmem, size = 0x10000, scoped, tag = 'input window, operand 3, single buffered']
    #allocation9 [shape = 's32[1]{0}', space=sflag, size = 0x4, scoped, tag = 'scoped memory for _run_fused.1']
    #allocation10 [shape = 'u8[212992]{0}', space=vmem, size = 0x34000, scoped, tag = 'input window, operand 4, single buffered']
    #allocation11 [shape = 'u8[2883584]{0}', space=vmem, size = 0x2c0000, scoped, tag = 'input window, operand 5, single buffered']
    #allocation12 [shape = 's32[1]{0}', space=sflag, size = 0x4, scoped, tag = 'scoped memory for _run_fused.1']
    #allocation13 [shape = 'u8[16384]{0}', space=vmem, size = 0x4000, scoped, tag = 'output window, operand 0, single buffered']
    %11 = vsyncpa [#allocation3], 0
    %12 = vsyncpa [#allocation6], 0
    %13 = vsyncpa [#allocation9], 0
    %14 = vsyncpa [#allocation12], 0
    %15 = vsyncpa [#allocation4], 0
    // Predicated region
    $region2: #{_run_fused.1} parent=1 // pred_check
      _
    $region3: #{_run_fused.1} parent=1 // pred_check_branch
      %17 = sbr.rel (0) target = $region5
    $region4: #{_run_fused.1} parent=1 // pred_region
      %s19 = ssub.s32 1024, 1024
      %20 = vsyncadd [#allocation3], %s19
      %s21 = sshll.u32 [#allocation2], 4
      %s22 = int_to_ptr.vmem [resolvable:$true] %s21
      %27 = dma.hbm_to_vmem [thread:$0]  %s0, 1024, %s22, [#allocation3], 256, 256, 16
    $region5: #{_run_fused.1} parent=1 // pred_fallthru
      _
    // Predicated region
    $region6: #{_run_fused.1} parent=1 // pred_check
      _
    $region7: #{_run_fused.1} parent=1 // pred_check_branch
      %29 = sbr.rel (0) target = $region9
    $region8: #{_run_fused.1} parent=1 // pred_region
      %s31 = ssub.s32 256, 256
      %32 = vsyncadd [#allocation6], %s31
      %s34 = sshll.u32 [#allocation5], 4
      %s35 = int_to_ptr.vmem [resolvable:$true] %s34
      %37 = dma.hbm_to_vmem [thread:$0]  %s1, 256, %s35, [#allocation6]
    $region9: #{_run_fused.1} parent=1 // pred_fallthru
      _
    // Predicated region
    $region10: #{_run_fused.1} parent=1 // pred_check
      _
    $region11: #{_run_fused.1} parent=1 // pred_check_branch
      %39 = sbr.rel (0) target = $region13
    $region12: #{_run_fused.1} parent=1 // pred_region
      %s41 = ssub.s32 128, 128
      %42 = vsyncadd [#allocation6], %s41
      %s44 = sshll.u32 [#allocation7], 4
      %s45 = int_to_ptr.vmem [resolvable:$true] %s44
      %47 = dma.hbm_to_vmem [thread:$0]  %s2, 128, %s45, [#allocation6]
    $region13: #{_run_fused.1} parent=1 // pred_fallthru
      _
    // Predicated region
    $region14: #{_run_fused.1} parent=1 // pred_check
      _
    $region15: #{_run_fused.1} parent=1 // pred_check_branch
      %49 = sbr.rel (0) target = $region17
    $region16: #{_run_fused.1} parent=1 // pred_region
      %s51 = ssub.s32 2048, 2048
      %52 = vsyncadd [#allocation9], %s51
      %s53 = sshll.u32 [#allocation8], 4
      %s54 = int_to_ptr.vmem [resolvable:$true] %s53
      %59 = dma.hbm_to_vmem [thread:$0]  %s3, 2048, %s54, [#allocation9], 1024, 1024, 64
    $region17: #{_run_fused.1} parent=1 // pred_fallthru
      _
    // Predicated region
    $region18: #{_run_fused.1} parent=1 // pred_check
      _
    $region19: #{_run_fused.1} parent=1 // pred_check_branch
      %61 = sbr.rel (0) target = $region21
    $region20: #{_run_fused.1} parent=1 // pred_region
      %s63 = ssub.s32 6656, 6656
      %64 = vsyncadd [#allocation9], %s63
      %s65 = sshll.u32 [#allocation10], 4
      %s66 = int_to_ptr.vmem [resolvable:$true] %s65
      %71 = dma.hbm_to_vmem [thread:$0]  %s4, 6656, %s66, [#allocation9], 128, 128, 8
    $region21: #{_run_fused.1} parent=1 // pred_fallthru
      _
    // Predicated region
    $region22: #{_run_fused.1} parent=1 // pred_check
      _
    $region23: #{_run_fused.1} parent=1 // pred_check_branch
      %73 = sbr.rel (0) target = $region25
    $region24: #{_run_fused.1} parent=1 // pred_region
      %s75 = ssub.s32 90112, 90112
      %76 = vsyncadd [#allocation12], %s75
      %s77 = sshll.u32 [#allocation11], 4
      %s78 = int_to_ptr.vmem [resolvable:$true] %s77
      %83 = dma.hbm_to_vmem [thread:$0]  %s5, 90112, %s78, [#allocation12], 1024, 1024, 64
    $region25: #{_run_fused.1} parent=1 // pred_fallthru
      _
    // Predicated region
    $region26: #{_run_fused.1} parent=1 // pred_check
      _
    $region27: #{_run_fused.1} parent=1 // pred_check_branch
      %85 = sbr.rel (0) target = $region29
    $region28: #{_run_fused.1} parent=1 // pred_region
      %86 = dma.done [#allocation3], 1024
    $region29: #{_run_fused.1} parent=1 // pred_fallthru
      _
    // Predicated region
    $region30: #{_run_fused.1} parent=1 // pred_check
      _
    $region31: #{_run_fused.1} parent=1 // pred_check_branch
      %88 = sbr.rel (0) target = $region33
    $region32: #{_run_fused.1} parent=1 // pred_region
      %89 = dma.done [#allocation6], 256
    $region33: #{_run_fused.1} parent=1 // pred_fallthru
      _
    // Predicated region
    $region34: #{_run_fused.1} parent=1 // pred_check
      _
    $region35: #{_run_fused.1} parent=1 // pred_check_branch
      %91 = sbr.rel (0) target = $region37
    $region36: #{_run_fused.1} parent=1 // pred_region
      %92 = dma.done [#allocation6], 128
    $region37: #{_run_fused.1} parent=1 // pred_fallthru
      _
    // Predicated region
    $region38: #{_run_fused.1} parent=1 // pred_check
      _
    $region39: #{_run_fused.1} parent=1 // pred_check_branch
      %94 = sbr.rel (0) target = $region41
    $region40: #{_run_fused.1} parent=1 // pred_region
      %95 = dma.done [#allocation9], 2048
    $region41: #{_run_fused.1} parent=1 // pred_fallthru
      _
    // Predicated region
    $region42: #{_run_fused.1} parent=1 // pred_check
      _
    $region43: #{_run_fused.1} parent=1 // pred_check_branch
      %97 = sbr.rel (0) target = $region45
    $region44: #{_run_fused.1} parent=1 // pred_region
      %98 = dma.done [#allocation9], 6656
    $region45: #{_run_fused.1} parent=1 // pred_fallthru
      _
    // Predicated region
    $region46: #{_run_fused.1} parent=1 // pred_check
      _
    $region47: #{_run_fused.1} parent=1 // pred_check_branch
      %100 = sbr.rel (0) target = $region49
    $region48: #{_run_fused.1} parent=1 // pred_region
      %101 = dma.done [#allocation12], 90112
    $region49: #{_run_fused.1} parent=1 // pred_fallthru
      _
    %v103 = vld [vmem:[#allocation10] sm:$0xff]
    %v104 = vpack.c.bf16 %v103, %v103
    %v105 = vld [vmem:[#allocation2] sm:$0xff]
    %v106 = vld [vmem:[#allocation2 + $0x8] sm:$0xff]
    %v107 = vld [vmem:[#allocation2 + $0x10] sm:$0xff]
    %v108 = vld [vmem:[#allocation2 + $0x18] sm:$0xff]
    %v109 = vld [vmem:[#allocation2 + $0x20] sm:$0xff]
    %v110 = vld [vmem:[#allocation2 + $0x28] sm:$0xff]
    %v111 = vld [vmem:[#allocation2 + $0x30] sm:$0xff]
    %v112 = vld [vmem:[#allocation2 + $0x38] sm:$0xff]
    %v121 = vunpack.c.l.b16 %v105
    %v122 = vunpack.c.h.b16 %v105
    %v123 = vunpack.c.l.b16 %v106
    %v124 = vunpack.c.h.b16 %v106
    %v125 = vunpack.c.l.b16 %v107
    %v126 = vunpack.c.h.b16 %v107
    %v127 = vunpack.c.l.b16 %v108
    %v128 = vunpack.c.h.b16 %v108
    %v129 = vunpack.c.l.b16 %v109
    %v130 = vunpack.c.h.b16 %v109
    %v131 = vunpack.c.l.b16 %v110
    %v132 = vunpack.c.h.b16 %v110
    %v133 = vunpack.c.l.b16 %v111
    %v134 = vunpack.c.h.b16 %v111
    %v135 = vunpack.c.l.b16 %v112
    %v136 = vunpack.c.h.b16 %v112
    %v137 = vpack.c.b16 %v125, %v121
    %v138 = vpack.c.b16 %v126, %v122
    %v139 = vpack.c.b16 %v127, %v123
    %v140 = vpack.c.b16 %v128, %v124
    %v141 = vpack.c.b16 %v133, %v129
    %v142 = vpack.c.b16 %v134, %v130
    %v143 = vpack.c.b16 %v135, %v131
    %v144 = vpack.c.b16 %v136, %v132
    %vm153 = vcmask 261120
    %v155 = vsel %vm153, %v104, 0
    %157 = vmatprep.subr.bf16.mxu0 %v138
    %158 = vmatpush1.bf16.msra.mxu0 %v137
    %159 = vmatprep.subr.bf16.mxu0 %v142
    %160 = vmatpush1.bf16.msra.mxu0 %v141
    %161 = vmatprep.subr.bf16.mxu0 0
    %162 = vmatpush1.bf16.msra.mxu0 0
    %163 = vmatprep.subr.bf16.mxu0 0
    %164 = vmatpush1.bf16.msra.mxu0 0
    %165 = vmatprep.subr.bf16.mxu0 0
    %166 = vmatpush1.bf16.msra.mxu0 0
    %167 = vmatprep.subr.bf16.mxu0 0
    %168 = vmatpush1.bf16.msra.mxu0 0
    %169 = vmatprep.subr.bf16.mxu0 0
    %170 = vmatpush1.bf16.msra.mxu0 0
    %171 = vmatprep.subr.bf16.mxu0 0
    %172 = vmatpush1.bf16.msra.mxu0 0
    %173 = vmatprep.subr.bf16.mxu0 0
    %174 = vmatpush1.bf16.msra.mxu0 0
    %175 = vmatprep.subr.bf16.mxu0 0
    %176 = vmatpush1.bf16.msra.mxu0 0
    %177 = vmatprep.subr.bf16.mxu0 0
    %178 = vmatpush1.bf16.msra.mxu0 0
    %179 = vmatprep.subr.bf16.mxu0 0
    %180 = vmatpush1.bf16.msra.mxu0 0
    %181 = vmatprep.subr.bf16.mxu0 0
    %182 = vmatpush1.bf16.msra.mxu0 0
    %183 = vmatprep.subr.bf16.mxu0 0
    %184 = vmatpush1.bf16.msra.mxu0 0
    %185 = vmatprep.subr.bf16.mxu0 0
    %186 = vmatpush1.bf16.msra.mxu0 0
    %187 = vmatprep.subr.bf16.mxu0 0
    %188 = vmatpush1.bf16.msra.mxu0 0
    %189 = vmatprep.mubr.bf16.mxu0 0
    %190 = vmatmul.mubr.bf16.gmra.mrb[0].mxu0 %v155
    %v191 = vpop.f32.mrb[0].mxu0
    %v192 = vadd.f32 0.0, %v191
    %v193 = vpop.f32.mrb[0].mxu0
    %v194 = vadd.f32 0.0, %v193
    %v195 = vpop.f32.mrb[0].mxu0
    %v196 = vpop.f32.mrb[0].mxu0
    %197 = vdwg.mxu0
    %198 = vmatprep.subr.bf16.mxu0 %v140
    %199 = vmatpush1.bf16.msra.mxu0 %v139
    %200 = vmatprep.subr.bf16.mxu0 %v144
    %201 = vmatpush1.bf16.msra.mxu0 %v143
    %202 = vmatprep.subr.bf16.mxu0 0
    %203 = vmatpush1.bf16.msra.mxu0 0
    %204 = vmatprep.subr.bf16.mxu0 0
    %205 = vmatpush1.bf16.msra.mxu0 0
    %206 = vmatprep.subr.bf16.mxu0 0
    %207 = vmatpush1.bf16.msra.mxu0 0
    %208 = vmatprep.subr.bf16.mxu0 0
    %209 = vmatpush1.bf16.msra.mxu0 0
    %210 = vmatprep.subr.bf16.mxu0 0
    %211 = vmatpush1.bf16.msra.mxu0 0
    %212 = vmatprep.subr.bf16.mxu0 0
    %213 = vmatpush1.bf16.msra.mxu0 0
    %214 = vmatprep.subr.bf16.mxu0 0
    %215 = vmatpush1.bf16.msra.mxu0 0
    %216 = vmatprep.subr.bf16.mxu0 0
    %217 = vmatpush1.bf16.msra.mxu0 0
    %218 = vmatprep.subr.bf16.mxu0 0
    %219 = vmatpush1.bf16.msra.mxu0 0
    %220 = vmatprep.subr.bf16.mxu0 0
    %221 = vmatpush1.bf16.msra.mxu0 0
    %222 = vmatprep.subr.bf16.mxu0 0
    %223 = vmatpush1.bf16.msra.mxu0 0
    %224 = vmatprep.subr.bf16.mxu0 0
    %225 = vmatpush1.bf16.msra.mxu0 0
    %226 = vmatprep.subr.bf16.mxu0 0
    %227 = vmatpush1.bf16.msra.mxu0 0
    %228 = vmatprep.subr.bf16.mxu0 0
    %229 = vmatpush1.bf16.msra.mxu0 0
    %230 = vmatprep.mubr.bf16.mxu0 0
    %231 = vmatmul.mubr.bf16.gmra.mrb[0].mxu0 %v155
    %v232 = vpop.f32.mrb[0].mxu0
    %v233 = vadd.f32 0.0, %v232
    %v234 = vpop.f32.mrb[0].mxu0
    %v235 = vadd.f32 0.0, %v234
    %v236 = vpop.f32.mrb[0].mxu0
    %v237 = vpop.f32.mrb[0].mxu0
    %238 = vdwg.mxu0
    %v239 = vmax.f32 %v192, 0.0
    %v240 = vmax.f32 %v194, 0.0
    %v241 = vmax.f32 %v233, 0.0
    %v242 = vmax.f32 %v235, 0.0
    %v243 = vld [vmem:[#allocation5] sm:$0xff]
    %v244 = vld [vmem:[#allocation5 + $0x8] sm:$0xff]
    %v245 = vpack.c.bf16 %v239, %v239
    %v246 = vpack.c.bf16 %v240, %v240
    %v247 = vpack.c.bf16 %v241, %v241
    %v248 = vpack.c.bf16 %v242, %v242
    %v251 = vunpack.c.l.b16 %v243
    %v252 = vunpack.c.h.b16 %v243
    %v253 = vunpack.c.l.b16 %v244
    %v254 = vunpack.c.h.b16 %v244
    %v255 = vpack.c.b16 %v251, %v251
    %v256 = vpack.c.b16 %v252, %v252
    %v257 = vpack.c.b16 %v253, %v253
    %v258 = vpack.c.b16 %v254, %v254
    %263 = vmatprep.subr.bf16.mxu0 %v246
    %264 = vmatpush1.bf16.xpose.msra.mxu0 %v245
    %265 = vmatprep.subr.bf16.mxu0 0
    %266 = vmatpush1.bf16.xpose.msra.mxu0 0
    %267 = vmatprep.subr.bf16.mxu0 0
    %268 = vmatpush1.bf16.xpose.msra.mxu0 0
    %269 = vmatprep.subr.bf16.mxu0 0
    %270 = vmatpush1.bf16.xpose.msra.mxu0 0
    %271 = vmatprep.subr.bf16.mxu0 0
    %272 = vmatpush1.bf16.xpose.msra.mxu0 0
    %273 = vmatprep.subr.bf16.mxu0 0
    %274 = vmatpush1.bf16.xpose.msra.mxu0 0
    %275 = vmatprep.subr.bf16.mxu0 0
    %276 = vmatpush1.bf16.xpose.msra.mxu0 0
    %277 = vmatprep.subr.bf16.mxu0 0
    %278 = vmatpush1.bf16.xpose.msra.mxu0 0
    %279 = vmatprep.subr.bf16.mxu0 0
    %280 = vmatpush1.bf16.xpose.msra.mxu0 0
    %281 = vmatprep.subr.bf16.mxu0 0
    %282 = vmatpush1.bf16.xpose.msra.mxu0 0
    %283 = vmatprep.subr.bf16.mxu0 0
    %284 = vmatpush1.bf16.xpose.msra.mxu0 0
    %285 = vmatprep.subr.bf16.mxu0 0
    %286 = vmatpush1.bf16.xpose.msra.mxu0 0
    %287 = vmatprep.subr.bf16.mxu0 0
    %288 = vmatpush1.bf16.xpose.msra.mxu0 0
    %289 = vmatprep.subr.bf16.mxu0 0
    %290 = vmatpush1.bf16.xpose.msra.mxu0 0
    %291 = vmatprep.subr.bf16.mxu0 0
    %292 = vmatpush1.bf16.xpose.msra.mxu0 0
    %293 = vmatprep.subr.bf16.mxu0 0
    %294 = vmatpush1.bf16.xpose.msra.mxu0 0
    %295 = vmatprep.mubr.bf16.mxu0 %v256
    %296 = vmatmul.mubr.bf16.gmra.mrb[0].mxu0 %v255
    %v297 = vpop.f32.mrb[0].mxu0
    %v298 = vadd.f32 0.0, %v297
    %v299 = vpop.f32.mrb[0].mxu0
    %v300 = vpop.f32.mrb[0].mxu0
    %v301 = vpop.f32.mrb[0].mxu0
    %302 = vdwg.mxu0
    %303 = vmatprep.subr.bf16.mxu0 %v248
    %304 = vmatpush1.bf16.xpose.msra.mxu0 %v247
    %305 = vmatprep.subr.bf16.mxu0 0
    %306 = vmatpush1.bf16.xpose.msra.mxu0 0
    %307 = vmatprep.subr.bf16.mxu0 0
    %308 = vmatpush1.bf16.xpose.msra.mxu0 0
    %309 = vmatprep.subr.bf16.mxu0 0
    %310 = vmatpush1.bf16.xpose.msra.mxu0 0
    %311 = vmatprep.subr.bf16.mxu0 0
    %312 = vmatpush1.bf16.xpose.msra.mxu0 0
    %313 = vmatprep.subr.bf16.mxu0 0
    %314 = vmatpush1.bf16.xpose.msra.mxu0 0
    %315 = vmatprep.subr.bf16.mxu0 0
    %316 = vmatpush1.bf16.xpose.msra.mxu0 0
    %317 = vmatprep.subr.bf16.mxu0 0
    %318 = vmatpush1.bf16.xpose.msra.mxu0 0
    %319 = vmatprep.subr.bf16.mxu0 0
    %320 = vmatpush1.bf16.xpose.msra.mxu0 0
    %321 = vmatprep.subr.bf16.mxu0 0
    %322 = vmatpush1.bf16.xpose.msra.mxu0 0
    %323 = vmatprep.subr.bf16.mxu0 0
    %324 = vmatpush1.bf16.xpose.msra.mxu0 0
    %325 = vmatprep.subr.bf16.mxu0 0
    %326 = vmatpush1.bf16.xpose.msra.mxu0 0
    %327 = vmatprep.subr.bf16.mxu0 0
    %328 = vmatpush1.bf16.xpose.msra.mxu0 0
    %329 = vmatprep.subr.bf16.mxu0 0
    %330 = vmatpush1.bf16.xpose.msra.mxu0 0
    %331 = vmatprep.subr.bf16.mxu0 0
    %332 = vmatpush1.bf16.xpose.msra.mxu0 0
    %333 = vmatprep.subr.bf16.mxu0 0
    %334 = vmatpush1.bf16.xpose.msra.mxu0 0
    %335 = vmatprep.mubr.bf16.mxu0 %v258
    %336 = vmatmul.mubr.bf16.gmra.mrb[0].mxu0 %v257
    %v337 = vpop.f32.mrb[0].mxu0
    %v338 = vadd.f32 %v298, %v337
    %v339 = vpop.f32.mrb[0].mxu0
    %v340 = vpop.f32.mrb[0].mxu0
    %v341 = vpop.f32.mrb[0].mxu0
    %342 = vdwg.mxu0
    %v343 = vld [vmem:[#allocation10 + $0x10] sm:$0xff]
    %v344 = vpack.c.bf16 %v338, %v338
    %v345 = vpack.c.bf16 %v343, %v343
    %v346 = vld [vmem:[#allocation8] ss:$0 sm:$0xff]
    %vm347 = vcmask 64512
    %v349 = vsel %vm347, %v344, 0
    %vm351 = vcmask 1043456
    %v353 = vsel %vm351, %v345, 0
    %355 = vmatprep.subr.bf16.mxu0 0
    %356 = vmatpush1.bf16.msra.mxu0 %v353
    %357 = vmatprep.subr.bf16.mxu0 0
    %358 = vmatpush1.bf16.msra.mxu0 0
    %359 = vmatprep.subr.bf16.mxu0 0
    %360 = vmatpush1.bf16.msra.mxu0 0
    %361 = vmatprep.subr.bf16.mxu0 0
    %362 = vmatpush1.bf16.msra.mxu0 0
    %363 = vmatprep.subr.bf16.mxu0 0
    %364 = vmatpush1.bf16.msra.mxu0 0
    %365 = vmatprep.subr.bf16.mxu0 0
    %366 = vmatpush1.bf16.msra.mxu0 0
    %367 = vmatprep.subr.bf16.mxu0 0
    %368 = vmatpush1.bf16.msra.mxu0 0
    %369 = vmatprep.subr.bf16.mxu0 0
    %370 = vmatpush1.bf16.msra.mxu0 0
    %371 = vmatprep.subr.bf16.mxu0 0
    %372 = vmatpush1.bf16.msra.mxu0 0
    %373 = vmatprep.subr.bf16.mxu0 0
    %374 = vmatpush1.bf16.msra.mxu0 0
    %375 = vmatprep.subr.bf16.mxu0 0
    %376 = vmatpush1.bf16.msra.mxu0 0
    %377 = vmatprep.subr.bf16.mxu0 0
    %378 = vmatpush1.bf16.msra.mxu0 0
    %379 = vmatprep.subr.bf16.mxu0 0
    %380 = vmatpush1.bf16.msra.mxu0 0
    %381 = vmatprep.subr.bf16.mxu0 0
    %382 = vmatpush1.bf16.msra.mxu0 0
    %383 = vmatprep.subr.bf16.mxu0 0
    %384 = vmatpush1.bf16.msra.mxu0 0
    %385 = vmatprep.subr.bf16.mxu0 0
    %386 = vmatpush1.bf16.msra.mxu0 0
    %387 = vmatprep.mubr.bf16.mxu0 0
    %388 = vmatmul.mubr.bf16.gmra.mrb[0].mxu0 %v349
    %v389 = vpop.f32.mrb[0].mxu0
    %v390 = vadd.f32 %v346, %v389
    %v391 = vpop.f32.mrb[0].mxu0
    %v392 = vpop.f32.mrb[0].mxu0
    %v393 = vpop.f32.mrb[0].mxu0
    %394 = vdwg.mxu0
    %v395 = vmax.f32 %v390, 0.0
    %v396 = vld [vmem:[#allocation10 + $0x20] sm:$0xff]
    %v397 = vld [vmem:[#allocation10 + $0x28] sm:$0xff]
    %v398 = vld [vmem:[#allocation10 + $0x30] sm:$0xff]
    %v399 = vld [vmem:[#allocation10 + $0x38] sm:$0xff]
    %v400 = vld [vmem:[#allocation10 + $0x40] sm:$0xff]
    %v401 = vld [vmem:[#allocation10 + $0x48] sm:$0xff]
    %v402 = vld [vmem:[#allocation10 + $0x50] sm:$0xff]
    %v403 = vld [vmem:[#allocation10 + $0x58] sm:$0xff]
    %v404 = vld [vmem:[#allocation10 + $0x60] sm:$0xff]
    %v405 = vld [vmem:[#allocation10 + $0x68] sm:$0xff]
    %v406 = vld [vmem:[#allocation10 + $0x70] sm:$0xff]
    %v407 = vld [vmem:[#allocation10 + $0x78] sm:$0xff]
    %v408 = vld [vmem:[#allocation10 + $0x80] sm:$0xff]
    %v409 = vld [vmem:[#allocation10 + $0x88] sm:$0xff]
    %v410 = vld [vmem:[#allocation10 + $0x90] sm:$0xff]
    %v411 = vld [vmem:[#allocation10 + $0x98] sm:$0xff]
    %v412 = vld [vmem:[#allocation7] sm:$0xff]
    %v413 = vpack.c.bf16 %v412, %v412
    %v414 = vpack.c.bf16 %v397, %v396
    %v415 = vpack.c.bf16 %v399, %v398
    %v416 = vpack.c.bf16 %v401, %v400
    %v417 = vpack.c.bf16 %v403, %v402
    %v418 = vpack.c.bf16 %v405, %v404
    %v419 = vpack.c.bf16 %v407, %v406
    %v420 = vpack.c.bf16 %v409, %v408
    %v421 = vpack.c.bf16 %v411, %v410
    %v422 = vld [vmem:[#allocation8 + $0x1] ss:$0 sm:$0xff]
    %423 = vmatprep.subr.bf16.mxu0 0
    %424 = vmatpush1.bf16.msra.mxu0 %v414
    %425 = vmatprep.subr.bf16.mxu0 0
    %426 = vmatpush1.bf16.msra.mxu0 %v415
    %427 = vmatprep.subr.bf16.mxu0 0
    %428 = vmatpush1.bf16.msra.mxu0 %v416
    %429 = vmatprep.subr.bf16.mxu0 0
    %430 = vmatpush1.bf16.msra.mxu0 %v417
    %431 = vmatprep.subr.bf16.mxu0 0
    %432 = vmatpush1.bf16.msra.mxu0 %v418
    %433 = vmatprep.subr.bf16.mxu0 0
    %434 = vmatpush1.bf16.msra.mxu0 %v419
    %435 = vmatprep.subr.bf16.mxu0 0
    %436 = vmatpush1.bf16.msra.mxu0 %v420
    %437 = vmatprep.subr.bf16.mxu0 0
    %438 = vmatpush1.bf16.msra.mxu0 %v421
    %439 = vmatprep.subr.bf16.mxu0 0
    %440 = vmatpush1.bf16.msra.mxu0 0
    %441 = vmatprep.subr.bf16.mxu0 0
    %442 = vmatpush1.bf16.msra.mxu0 0
    %443 = vmatprep.subr.bf16.mxu0 0
    %444 = vmatpush1.bf16.msra.mxu0 0
    %445 = vmatprep.subr.bf16.mxu0 0
    %446 = vmatpush1.bf16.msra.mxu0 0
    %447 = vmatprep.subr.bf16.mxu0 0
    %448 = vmatpush1.bf16.msra.mxu0 0
    %449 = vmatprep.subr.bf16.mxu0 0
    %450 = vmatpush1.bf16.msra.mxu0 0
    %451 = vmatprep.subr.bf16.mxu0 0
    %452 = vmatpush1.bf16.msra.mxu0 0
    %453 = vmatprep.subr.bf16.mxu0 0
    %454 = vmatpush1.bf16.msra.mxu0 0
    %455 = vmatprep.mubr.bf16.mxu0 0
    %456 = vmatmul.mubr.bf16.gmra.mrb[0].mxu0 %v413
    %v457 = vpop.f32.mrb[0].mxu0
    %v458 = vadd.f32 %v422, %v457
    %v459 = vpop.f32.mrb[0].mxu0
    %v460 = vpop.f32.mrb[0].mxu0
    %v461 = vpop.f32.mrb[0].mxu0
    %462 = vdwg.mxu0
    %v463 = vmax.f32 %v458, 0.0
    %v464 = vld [vmem:[#allocation10 + $0xa0] sm:$0xff]
    %v465 = vld [vmem:[#allocation10 + $0xa8] sm:$0xff]
    %v466 = vld [vmem:[#allocation10 + $0xb0] sm:$0xff]
    %v467 = vld [vmem:[#allocation10 + $0xb8] sm:$0xff]
    %v468 = vld [vmem:[#allocation10 + $0xc0] sm:$0xff]
    %v469 = vld [vmem:[#allocation10 + $0xc8] sm:$0xff]
    %v470 = vld [vmem:[#allocation10 + $0xd0] sm:$0xff]
    %v471 = vld [vmem:[#allocation10 + $0xd8] sm:$0xff]
    %v472 = vld [vmem:[#allocation10 + $0xe0] sm:$0xff]
    %v473 = vld [vmem:[#allocation10 + $0xe8] sm:$0xff]
    %v474 = vld [vmem:[#allocation10 + $0xf0] sm:$0xff]
    %v475 = vld [vmem:[#allocation10 + $0xf8] sm:$0xff]
    %v476 = vld [vmem:[#allocation10 + $0x100] sm:$0xff]
    %v477 = vld [vmem:[#allocation10 + $0x108] sm:$0xff]
    %v478 = vld [vmem:[#allocation10 + $0x110] sm:$0xff]
    %v479 = vld [vmem:[#allocation10 + $0x118] sm:$0xff]
    %v480 = vpack.c.bf16 %v463, %v463
    %v481 = vpack.c.bf16 %v465, %v464
    %v482 = vpack.c.bf16 %v467, %v466
    %v483 = vpack.c.bf16 %v469, %v468
    %v484 = vpack.c.bf16 %v471, %v470
    %v485 = vpack.c.bf16 %v473, %v472
    %v486 = vpack.c.bf16 %v475, %v474
    %v487 = vpack.c.bf16 %v477, %v476
    %v488 = vpack.c.bf16 %v479, %v478
    %v489 = vld [vmem:[#allocation8 + $0x2] ss:$0 sm:$0xff]
    %490 = vmatprep.subr.bf16.mxu0 0
    %491 = vmatpush1.bf16.msra.mxu0 %v481
    %492 = vmatprep.subr.bf16.mxu0 0
    %493 = vmatpush1.bf16.msra.mxu0 %v482
    %494 = vmatprep.subr.bf16.mxu0 0
    %495 = vmatpush1.bf16.msra.mxu0 %v483
    %496 = vmatprep.subr.bf16.mxu0 0
    %497 = vmatpush1.bf16.msra.mxu0 %v484
    %498 = vmatprep.subr.bf16.mxu0 0
    %499 = vmatpush1.bf16.msra.mxu0 %v485
    %500 = vmatprep.subr.bf16.mxu0 0
    %501 = vmatpush1.bf16.msra.mxu0 %v486
    %502 = vmatprep.subr.bf16.mxu0 0
    %503 = vmatpush1.bf16.msra.mxu0 %v487
    %504 = vmatprep.subr.bf16.mxu0 0
    %505 = vmatpush1.bf16.msra.mxu0 %v488
    %506 = vmatprep.subr.bf16.mxu0 0
    %507 = vmatpush1.bf16.msra.mxu0 0
    %508 = vmatprep.subr.bf16.mxu0 0
    %509 = vmatpush1.bf16.msra.mxu0 0
    %510 = vmatprep.subr.bf16.mxu0 0
    %511 = vmatpush1.bf16.msra.mxu0 0
    %512 = vmatprep.subr.bf16.mxu0 0
    %513 = vmatpush1.bf16.msra.mxu0 0
    %514 = vmatprep.subr.bf16.mxu0 0
    %515 = vmatpush1.bf16.msra.mxu0 0
    %516 = vmatprep.subr.bf16.mxu0 0
    %517 = vmatpush1.bf16.msra.mxu0 0
    %518 = vmatprep.subr.bf16.mxu0 0
    %519 = vmatpush1.bf16.msra.mxu0 0
    %520 = vmatprep.subr.bf16.mxu0 0
    %521 = vmatpush1.bf16.msra.mxu0 0
    %522 = vmatprep.mubr.bf16.mxu0 0
    %523 = vmatmul.mubr.bf16.gmra.mrb[0].mxu0 %v480
    %v524 = vpop.f32.mrb[0].mxu0
    %v525 = vadd.f32 %v489, %v524
    %v526 = vpop.f32.mrb[0].mxu0
    %v527 = vpop.f32.mrb[0].mxu0
    %v528 = vpop.f32.mrb[0].mxu0
    %529 = vdwg.mxu0
    %v530 = vld [vmem:[#allocation10 + $0x120] sm:$0xff]
    %v531 = vld [vmem:[#allocation10 + $0x128] sm:$0xff]
    %v532 = vld [vmem:[#allocation10 + $0x130] sm:$0xff]
    %v533 = vld [vmem:[#allocation10 + $0x138] sm:$0xff]
    %v534 = vld [vmem:[#allocation10 + $0x140] sm:$0xff]
    %v535 = vld [vmem:[#allocation10 + $0x148] sm:$0xff]
    %v536 = vld [vmem:[#allocation10 + $0x150] sm:$0xff]
    %v537 = vld [vmem:[#allocation10 + $0x158] sm:$0xff]
    %v538 = vld [vmem:[#allocation10 + $0x160] sm:$0xff]
    %v539 = vld [vmem:[#allocation10 + $0x168] sm:$0xff]
    %v540 = vld [vmem:[#allocation10 + $0x170] sm:$0xff]
    %v541 = vld [vmem:[#allocation10 + $0x178] sm:$0xff]
    %v542 = vld [vmem:[#allocation10 + $0x180] sm:$0xff]
    %v543 = vld [vmem:[#allocation10 + $0x188] sm:$0xff]
    %v544 = vld [vmem:[#allocation10 + $0x190] sm:$0xff]
    %v545 = vld [vmem:[#allocation10 + $0x198] sm:$0xff]
    %v546 = vpack.c.bf16 %v531, %v530
    %v547 = vpack.c.bf16 %v533, %v532
    %v548 = vpack.c.bf16 %v535, %v534
    %v549 = vpack.c.bf16 %v537, %v536
    %v550 = vpack.c.bf16 %v539, %v538
    %v551 = vpack.c.bf16 %v541, %v540
    %v552 = vpack.c.bf16 %v543, %v542
    %v553 = vpack.c.bf16 %v545, %v544
    %v554 = vld [vmem:[#allocation8 + $0x3] ss:$0 sm:$0xff]
    %555 = vmatprep.subr.bf16.mxu0 0
    %556 = vmatpush1.bf16.msra.mxu0 %v546
    %557 = vmatprep.subr.bf16.mxu0 0
    %558 = vmatpush1.bf16.msra.mxu0 %v547
    %559 = vmatprep.subr.bf16.mxu0 0
    %560 = vmatpush1.bf16.msra.mxu0 %v548
    %561 = vmatprep.subr.bf16.mxu0 0
    %562 = vmatpush1.bf16.msra.mxu0 %v549
    %563 = vmatprep.subr.bf16.mxu0 0
    %564 = vmatpush1.bf16.msra.mxu0 %v550
    %565 = vmatprep.subr.bf16.mxu0 0
    %566 = vmatpush1.bf16.msra.mxu0 %v551
    %567 = vmatprep.subr.bf16.mxu0 0
    %568 = vmatpush1.bf16.msra.mxu0 %v552
    %569 = vmatprep.subr.bf16.mxu0 0
    %570 = vmatpush1.bf16.msra.mxu0 %v553
    %571 = vmatprep.subr.bf16.mxu0 0
    %572 = vmatpush1.bf16.msra.mxu0 0
    %573 = vmatprep.subr.bf16.mxu0 0
    %574 = vmatpush1.bf16.msra.mxu0 0
    %575 = vmatprep.subr.bf16.mxu0 0
    %576 = vmatpush1.bf16.msra.mxu0 0
    %577 = vmatprep.subr.bf16.mxu0 0
    %578 = vmatpush1.bf16.msra.mxu0 0
    %579 = vmatprep.subr.bf16.mxu0 0
    %580 = vmatpush1.bf16.msra.mxu0 0
    %581 = vmatprep.subr.bf16.mxu0 0
    %582 = vmatpush1.bf16.msra.mxu0 0
    %583 = vmatprep.subr.bf16.mxu0 0
    %584 = vmatpush1.bf16.msra.mxu0 0
    %585 = vmatprep.subr.bf16.mxu0 0
    %586 = vmatpush1.bf16.msra.mxu0 0
    %587 = vmatprep.mubr.bf16.mxu0 0
    %588 = vmatmul.mubr.bf16.gmra.mrb[0].mxu0 %v480
    %v589 = vpop.f32.mrb[0].mxu0
    %v590 = vadd.f32 %v554, %v589
    %v591 = vpop.f32.mrb[0].mxu0
    %v592 = vpop.f32.mrb[0].mxu0
    %v593 = vpop.f32.mrb[0].mxu0
    %594 = vdwg.mxu0
    %v595 = vld [vmem:[#allocation11] sm:$0xff]
    %v596 = vld [vmem:[#allocation11 + $0x8] sm:$0xff]
    %v597 = vld [vmem:[#allocation11 + $0x10] sm:$0xff]
    %v598 = vld [vmem:[#allocation11 + $0x18] sm:$0xff]
    %v599 = vld [vmem:[#allocation11 + $0x20] sm:$0xff]
    %v600 = vld [vmem:[#allocation11 + $0x28] sm:$0xff]
    %v601 = vld [vmem:[#allocation11 + $0x30] sm:$0xff]
    %v602 = vld [vmem:[#allocation11 + $0x38] sm:$0xff]
    %v603 = vld [vmem:[#allocation11 + $0x40] sm:$0xff]
    %v604 = vld [vmem:[#allocation11 + $0x48] sm:$0xff]
    %v605 = vld [vmem:[#allocation11 + $0x50] sm:$0xff]
    %v606 = vld [vmem:[#allocation11 + $0x58] sm:$0xff]
    %v607 = vld [vmem:[#allocation11 + $0x60] sm:$0xff]
    %v608 = vld [vmem:[#allocation11 + $0x68] sm:$0xff]
    %v609 = vld [vmem:[#allocation11 + $0x70] sm:$0xff]
    %v610 = vld [vmem:[#allocation11 + $0x78] sm:$0xff]
    %v611 = vld [vmem:[#allocation11 + $0x80] sm:$0xff]
    %v612 = vld [vmem:[#allocation11 + $0x88] sm:$0xff]
    %v613 = vld [vmem:[#allocation11 + $0x90] sm:$0xff]
    %v614 = vld [vmem:[#allocation11 + $0x98] sm:$0xff]
    %v615 = vld [vmem:[#allocation11 + $0xa0] sm:$0xff]
    %v616 = vld [vmem:[#allocation11 + $0xa8] sm:$0xff]
    %v617 = vld [vmem:[#allocation11 + $0xb0] sm:$0xff]
    %v618 = vld [vmem:[#allocation11 + $0xb8] sm:$0xff]
    %v619 = vld [vmem:[#allocation11 + $0xc0] sm:$0xff]
    %v620 = vld [vmem:[#allocation11 + $0xc8] sm:$0xff]
    %v621 = vld [vmem:[#allocation11 + $0xd0] sm:$0xff]
    %v622 = vld [vmem:[#allocation11 + $0xd8] sm:$0xff]
    %v623 = vld [vmem:[#allocation11 + $0xe0] sm:$0xff]
    %v624 = vld [vmem:[#allocation11 + $0xe8] sm:$0xff]
    %v625 = vld [vmem:[#allocation11 + $0xf0] sm:$0xff]
    %v626 = vld [vmem:[#allocation11 + $0xf8] sm:$0xff]
    %v627 = vunpack.c.l.s8.bf16 %v595
    %v628 = vunpack.c.l.s8.bf16 %v596
    %v629 = vunpack.c.l.s8.bf16 %v597
    %v630 = vunpack.c.l.s8.bf16 %v598
    %v631 = vunpack.c.l.s8.bf16 %v599
    %v632 = vunpack.c.l.s8.bf16 %v600
    %v633 = vunpack.c.l.s8.bf16 %v601
    %v634 = vunpack.c.l.s8.bf16 %v602
    %v635 = vunpack.c.h.s8.bf16 %v595
    %v636 = vunpack.c.h.s8.bf16 %v596
    %v637 = vunpack.c.h.s8.bf16 %v597
    %v638 = vunpack.c.h.s8.bf16 %v598
    %v639 = vunpack.c.h.s8.bf16 %v599
    %v640 = vunpack.c.h.s8.bf16 %v600
    %v641 = vunpack.c.h.s8.bf16 %v601
    %v642 = vunpack.c.h.s8.bf16 %v602
    %v643 = vunpack.c.l.s8.bf16 %v603
    %v644 = vunpack.c.l.s8.bf16 %v604
    %v645 = vunpack.c.l.s8.bf16 %v605
    %v646 = vunpack.c.l.s8.bf16 %v606
    %v647 = vunpack.c.l.s8.bf16 %v607
    %v648 = vunpack.c.l.s8.bf16 %v608
    %v649 = vunpack.c.l.s8.bf16 %v609
    %v650 = vunpack.c.l.s8.bf16 %v610
    %v651 = vunpack.c.h.s8.bf16 %v603
    %v652 = vunpack.c.h.s8.bf16 %v604
    %v653 = vunpack.c.h.s8.bf16 %v605
    %v654 = vunpack.c.h.s8.bf16 %v606
    %v655 = vunpack.c.h.s8.bf16 %v607
    %v656 = vunpack.c.h.s8.bf16 %v608
    %v657 = vunpack.c.h.s8.bf16 %v609
    %v658 = vunpack.c.h.s8.bf16 %v610
    %v659 = vunpack.c.l.s8.bf16 %v611
    %v660 = vunpack.c.l.s8.bf16 %v612
    %v661 = vunpack.c.l.s8.bf16 %v613
    %v662 = vunpack.c.l.s8.bf16 %v614
    %v663 = vunpack.c.l.s8.bf16 %v615
    %v664 = vunpack.c.l.s8.bf16 %v616
    %v665 = vunpack.c.l.s8.bf16 %v617
    %v666 = vunpack.c.l.s8.bf16 %v618
    %v667 = vunpack.c.h.s8.bf16 %v611
    %v668 = vunpack.c.h.s8.bf16 %v612
    %v669 = vunpack.c.h.s8.bf16 %v613
    %v670 = vunpack.c.h.s8.bf16 %v614
    %v671 = vunpack.c.h.s8.bf16 %v615
    %v672 = vunpack.c.h.s8.bf16 %v616
    %v673 = vunpack.c.h.s8.bf16 %v617
    %v674 = vunpack.c.h.s8.bf16 %v618
    %v675 = vunpack.c.l.s8.bf16 %v619
    %v676 = vunpack.c.l.s8.bf16 %v620
    %v677 = vunpack.c.l.s8.bf16 %v621
    %v678 = vunpack.c.l.s8.bf16 %v622
    %v679 = vunpack.c.l.s8.bf16 %v623
    %v680 = vunpack.c.l.s8.bf16 %v624
    %v681 = vunpack.c.l.s8.bf16 %v625
    %v682 = vunpack.c.l.s8.bf16 %v626
    %v683 = vunpack.c.h.s8.bf16 %v619
    %v684 = vunpack.c.h.s8.bf16 %v620
    %v685 = vunpack.c.h.s8.bf16 %v621
    %v686 = vunpack.c.h.s8.bf16 %v622
    %v687 = vunpack.c.h.s8.bf16 %v623
    %v688 = vunpack.c.h.s8.bf16 %v624
    %v689 = vunpack.c.h.s8.bf16 %v625
    %v690 = vunpack.c.h.s8.bf16 %v626
    %v691 = vpack.c.bf16 %v525, %v525
    %692 = vmatprep.subr.bf16.mxu0 %v628
    %693 = vmatpush1.bf16.msra.mxu0 %v627
    %694 = vmatprep.subr.bf16.mxu0 %v636
    %695 = vmatpush1.bf16.msra.mxu0 %v635
    %696 = vmatprep.subr.bf16.mxu0 %v644
    %697 = vmatpush1.bf16.msra.mxu0 %v643
    %698 = vmatprep.subr.bf16.mxu0 %v652
    %699 = vmatpush1.bf16.msra.mxu0 %v651
    %700 = vmatprep.subr.bf16.mxu0 %v660
    %701 = vmatpush1.bf16.msra.mxu0 %v659
    %702 = vmatprep.subr.bf16.mxu0 %v668
    %703 = vmatpush1.bf16.msra.mxu0 %v667
    %704 = vmatprep.subr.bf16.mxu0 %v676
    %705 = vmatpush1.bf16.msra.mxu0 %v675
    %706 = vmatprep.subr.bf16.mxu0 %v684
    %707 = vmatpush1.bf16.msra.mxu0 %v683
    %708 = vmatprep.subr.bf16.mxu0 0
    %709 = vmatpush1.bf16.msra.mxu0 0
    %710 = vmatprep.subr.bf16.mxu0 0
    %711 = vmatpush1.bf16.msra.mxu0 0
    %712 = vmatprep.subr.bf16.mxu0 0
    %713 = vmatpush1.bf16.msra.mxu0 0
    %714 = vmatprep.subr.bf16.mxu0 0
    %715 = vmatpush1.bf16.msra.mxu0 0
    %716 = vmatprep.subr.bf16.mxu0 0
    %717 = vmatpush1.bf16.msra.mxu0 0
    %718 = vmatprep.subr.bf16.mxu0 0
    %719 = vmatpush1.bf16.msra.mxu0 0
    %720 = vmatprep.subr.bf16.mxu0 0
    %721 = vmatpush1.bf16.msra.mxu0 0
    %722 = vmatprep.subr.bf16.mxu0 0
    %723 = vmatpush1.bf16.msra.mxu0 0
    %724 = vmatprep.mubr.bf16.mxu0 0
    %725 = vmatmul.mubr.bf16.gmra.mrb[0].mxu0 %v691
    %v726 = vpop.f32.mrb[0].mxu0
    %v727 = vadd.f32 0.0, %v726
    %v728 = vpop.f32.mrb[0].mxu0
    %v729 = vadd.f32 0.0, %v728
    %v730 = vpop.f32.mrb[0].mxu0
    %v731 = vpop.f32.mrb[0].mxu0
    %732 = vdwg.mxu0
    %733 = vmatprep.subr.bf16.mxu0 %v630
    %734 = vmatpush1.bf16.msra.mxu0 %v629
    %735 = vmatprep.subr.bf16.mxu0 %v638
    %736 = vmatpush1.bf16.msra.mxu0 %v637
    %737 = vmatprep.subr.bf16.mxu0 %v646
    %738 = vmatpush1.bf16.msra.mxu0 %v645
    %739 = vmatprep.subr.bf16.mxu0 %v654
    %740 = vmatpush1.bf16.msra.mxu0 %v653
    %741 = vmatprep.subr.bf16.mxu0 %v662
    %742 = vmatpush1.bf16.msra.mxu0 %v661
    %743 = vmatprep.subr.bf16.mxu0 %v670
    %744 = vmatpush1.bf16.msra.mxu0 %v669
    %745 = vmatprep.subr.bf16.mxu0 %v678
    %746 = vmatpush1.bf16.msra.mxu0 %v677
    %747 = vmatprep.subr.bf16.mxu0 %v686
    %748 = vmatpush1.bf16.msra.mxu0 %v685
    %749 = vmatprep.subr.bf16.mxu0 0
    %750 = vmatpush1.bf16.msra.mxu0 0
    %751 = vmatprep.subr.bf16.mxu0 0
    %752 = vmatpush1.bf16.msra.mxu0 0
    %753 = vmatprep.subr.bf16.mxu0 0
    %754 = vmatpush1.bf16.msra.mxu0 0
    %755 = vmatprep.subr.bf16.mxu0 0
    %756 = vmatpush1.bf16.msra.mxu0 0
    %757 = vmatprep.subr.bf16.mxu0 0
    %758 = vmatpush1.bf16.msra.mxu0 0
    %759 = vmatprep.subr.bf16.mxu0 0
    %760 = vmatpush1.bf16.msra.mxu0 0
    %761 = vmatprep.subr.bf16.mxu0 0
    %762 = vmatpush1.bf16.msra.mxu0 0
    %763 = vmatprep.subr.bf16.mxu0 0
    %764 = vmatpush1.bf16.msra.mxu0 0
    %765 = vmatprep.mubr.bf16.mxu0 0
    %766 = vmatmul.mubr.bf16.gmra.mrb[0].mxu0 %v691
    %v767 = vpop.f32.mrb[0].mxu0
    %v768 = vadd.f32 0.0, %v767
    %v769 = vpop.f32.mrb[0].mxu0
    %v770 = vadd.f32 0.0, %v769
    %v771 = vpop.f32.mrb[0].mxu0
    %v772 = vpop.f32.mrb[0].mxu0
    %773 = vdwg.mxu0
    %774 = vmatprep.subr.bf16.mxu0 %v632
    %775 = vmatpush1.bf16.msra.mxu0 %v631
    %776 = vmatprep.subr.bf16.mxu0 %v640
    %777 = vmatpush1.bf16.msra.mxu0 %v639
    %778 = vmatprep.subr.bf16.mxu0 %v648
    %779 = vmatpush1.bf16.msra.mxu0 %v647
    %780 = vmatprep.subr.bf16.mxu0 %v656
    %781 = vmatpush1.bf16.msra.mxu0 %v655
    %782 = vmatprep.subr.bf16.mxu0 %v664
    %783 = vmatpush1.bf16.msra.mxu0 %v663
    %784 = vmatprep.subr.bf16.mxu0 %v672
    %785 = vmatpush1.bf16.msra.mxu0 %v671
    %786 = vmatprep.subr.bf16.mxu0 %v680
    %787 = vmatpush1.bf16.msra.mxu0 %v679
    %788 = vmatprep.subr.bf16.mxu0 %v688
    %789 = vmatpush1.bf16.msra.mxu0 %v687
    %790 = vmatprep.subr.bf16.mxu0 0
    %791 = vmatpush1.bf16.msra.mxu0 0
    %792 = vmatprep.subr.bf16.mxu0 0
    %793 = vmatpush1.bf16.msra.mxu0 0
    %794 = vmatprep.subr.bf16.mxu0 0
    %795 = vmatpush1.bf16.msra.mxu0 0
    %796 = vmatprep.subr.bf16.mxu0 0
    %797 = vmatpush1.bf16.msra.mxu0 0
    %798 = vmatprep.subr.bf16.mxu0 0
    %799 = vmatpush1.bf16.msra.mxu0 0
    %800 = vmatprep.subr.bf16.mxu0 0
    %801 = vmatpush1.bf16.msra.mxu0 0
    %802 = vmatprep.subr.bf16.mxu0 0
    %803 = vmatpush1.bf16.msra.mxu0 0
    %804 = vmatprep.subr.bf16.mxu0 0
    %805 = vmatpush1.bf16.msra.mxu0 0
    %806 = vmatprep.mubr.bf16.mxu0 0
    %807 = vmatmul.mubr.bf16.gmra.mrb[0].mxu0 %v691
    %v808 = vpop.f32.mrb[0].mxu0
    %v809 = vadd.f32 0.0, %v808
    %v810 = vpop.f32.mrb[0].mxu0
    %v811 = vadd.f32 0.0, %v810
    %v812 = vpop.f32.mrb[0].mxu0
    %v813 = vpop.f32.mrb[0].mxu0
    %814 = vdwg.mxu0
    %815 = vmatprep.subr.bf16.mxu0 %v634
    %816 = vmatpush1.bf16.msra.mxu0 %v633
    %817 = vmatprep.subr.bf16.mxu0 %v642
    %818 = vmatpush1.bf16.msra.mxu0 %v641
    %819 = vmatprep.subr.bf16.mxu0 %v650
    %820 = vmatpush1.bf16.msra.mxu0 %v649
    %821 = vmatprep.subr.bf16.mxu0 %v658
    %822 = vmatpush1.bf16.msra.mxu0 %v657
    %823 = vmatprep.subr.bf16.mxu0 %v666
    %824 = vmatpush1.bf16.msra.mxu0 %v665
    %825 = vmatprep.subr.bf16.mxu0 %v674
    %826 = vmatpush1.bf16.msra.mxu0 %v673
    %827 = vmatprep.subr.bf16.mxu0 %v682
    %828 = vmatpush1.bf16.msra.mxu0 %v681
    %829 = vmatprep.subr.bf16.mxu0 %v690
    %830 = vmatpush1.bf16.msra.mxu0 %v689
    %831 = vmatprep.subr.bf16.mxu0 0
    %832 = vmatpush1.bf16.msra.mxu0 0
    %833 = vmatprep.subr.bf16.mxu0 0
    %834 = vmatpush1.bf16.msra.mxu0 0
    %835 = vmatprep.subr.bf16.mxu0 0
    %836 = vmatpush1.bf16.msra.mxu0 0
    %837 = vmatprep.subr.bf16.mxu0 0
    %838 = vmatpush1.bf16.msra.mxu0 0
    %839 = vmatprep.subr.bf16.mxu0 0
    %840 = vmatpush1.bf16.msra.mxu0 0
    %841 = vmatprep.subr.bf16.mxu0 0
    %842 = vmatpush1.bf16.msra.mxu0 0
    %843 = vmatprep.subr.bf16.mxu0 0
    %844 = vmatpush1.bf16.msra.mxu0 0
    %845 = vmatprep.subr.bf16.mxu0 0
    %846 = vmatpush1.bf16.msra.mxu0 0
    %847 = vmatprep.mubr.bf16.mxu0 0
    %848 = vmatmul.mubr.bf16.gmra.mrb[0].mxu0 %v691
    %v849 = vpop.f32.mrb[0].mxu0
    %v850 = vadd.f32 0.0, %v849
    %v851 = vpop.f32.mrb[0].mxu0
    %v852 = vadd.f32 0.0, %v851
    %v853 = vpop.f32.mrb[0].mxu0
    %v854 = vpop.f32.mrb[0].mxu0
    %855 = vdwg.mxu0
    %s856 = scalar_lea.vmem [#allocation8], 64
    %v857 = vld [vmem:[%s856] ss:$8 sm:$0xf]
    %v858 = vld [vmem:[%s856] ss:$8 sm:$0xf0]
    %v859 = vor.u32 %v857, %v858
    %v861 = vlaneseq
    %v862 = vshrl.u32 %v861, 7
    %v863 = vsub.s32 0, %v862
    %v864 = vrot.slane %v859, %v863
    %v865 = vlaneseq
    %v866 = vshrl.u32 %v865, 7
    %v867 = vsub.s32 1, %v866
    %v868 = vrot.slane %v859, %v867
    %v869 = vlaneseq
    %v870 = vshrl.u32 %v869, 7
    %v871 = vsub.s32 2, %v870
    %v872 = vrot.slane %v859, %v871
    %v873 = vlaneseq
    %v874 = vshrl.u32 %v873, 7
    %v875 = vsub.s32 3, %v874
    %v876 = vrot.slane %v859, %v875
    %v877 = vlaneseq
    %v878 = vshrl.u32 %v877, 7
    %v879 = vsub.s32 4, %v878
    %v880 = vrot.slane %v859, %v879
    %v881 = vlaneseq
    %v882 = vshrl.u32 %v881, 7
    %v883 = vsub.s32 5, %v882
    %v884 = vrot.slane %v859, %v883
    %v885 = vlaneseq
    %v886 = vshrl.u32 %v885, 7
    %v887 = vsub.s32 6, %v886
    %v888 = vrot.slane %v859, %v887
    %v889 = vlaneseq
    %v890 = vshrl.u32 %v889, 7
    %v891 = vsub.s32 7, %v890
    %v892 = vrot.slane %v859, %v891
    %v901 = vmul.f32 %v727, %v864
    %v902 = vmul.f32 %v729, %v868
    %v903 = vmul.f32 %v768, %v872
    %v904 = vmul.f32 %v770, %v876
    %v905 = vmul.f32 %v809, %v880
    %v906 = vmul.f32 %v811, %v884
    %v907 = vmul.f32 %v850, %v888
    %v908 = vmul.f32 %v852, %v892
    %s909 = scalar_lea.vmem [#allocation8], 4
    %v910 = vld [vmem:[%s909] ss:$8 sm:$0xf]
    %v911 = vld [vmem:[%s909] ss:$8 sm:$0xf0]
    %v912 = vor.u32 %v910, %v911
    %v914 = vlaneseq
    %v915 = vshrl.u32 %v914, 7
    %v916 = vsub.s32 0, %v915
    %v917 = vrot.slane %v912, %v916
    %v918 = vlaneseq
    %v919 = vshrl.u32 %v918, 7
    %v920 = vsub.s32 1, %v919
    %v921 = vrot.slane %v912, %v920
    %v922 = vlaneseq
    %v923 = vshrl.u32 %v922, 7
    %v924 = vsub.s32 2, %v923
    %v925 = vrot.slane %v912, %v924
    %v926 = vlaneseq
    %v927 = vshrl.u32 %v926, 7
    %v928 = vsub.s32 3, %v927
    %v929 = vrot.slane %v912, %v928
    %v930 = vlaneseq
    %v931 = vshrl.u32 %v930, 7
    %v932 = vsub.s32 4, %v931
    %v933 = vrot.slane %v912, %v932
    %v934 = vlaneseq
    %v935 = vshrl.u32 %v934, 7
    %v936 = vsub.s32 5, %v935
    %v937 = vrot.slane %v912, %v936
    %v938 = vlaneseq
    %v939 = vshrl.u32 %v938, 7
    %v940 = vsub.s32 6, %v939
    %v941 = vrot.slane %v912, %v940
    %v942 = vlaneseq
    %v943 = vshrl.u32 %v942, 7
    %v944 = vsub.s32 7, %v943
    %v945 = vrot.slane %v912, %v944
    %v954 = vadd.f32 %v901, %v917
    %v955 = vadd.f32 %v902, %v921
    %v956 = vadd.f32 %v903, %v925
    %v957 = vadd.f32 %v904, %v929
    %v958 = vadd.f32 %v905, %v933
    %v959 = vadd.f32 %v906, %v937
    %v960 = vadd.f32 %v907, %v941
    %v961 = vadd.f32 %v908, %v945
    %v962 = vmax.f32 %v954, 0.0
    %v963 = vmax.f32 %v955, 0.0
    %v964 = vmax.f32 %v956, 0.0
    %v965 = vmax.f32 %v957, 0.0
    %v966 = vmax.f32 %v958, 0.0
    %v967 = vmax.f32 %v959, 0.0
    %v968 = vmax.f32 %v960, 0.0
    %v969 = vmax.f32 %v961, 0.0
    %s970 = scalar_lea.vmem [#allocation8], 65
    %v971 = vld [vmem:[%s970] ss:$8 sm:$0xf]
    %v972 = vld [vmem:[%s970] ss:$8 sm:$0xf0]
    %v973 = vor.u32 %v971, %v972
    %v974 = vld [vmem:[#allocation11 + $0x100] sm:$0xff]
    %v975 = vld [vmem:[#allocation11 + $0x108] sm:$0xff]
    %v976 = vld [vmem:[#allocation11 + $0x110] sm:$0xff]
    %v977 = vld [vmem:[#allocation11 + $0x118] sm:$0xff]
    %v978 = vld [vmem:[#allocation11 + $0x120] sm:$0xff]
    %v979 = vld [vmem:[#allocation11 + $0x128] sm:$0xff]
    %v980 = vld [vmem:[#allocation11 + $0x130] sm:$0xff]
    %v981 = vld [vmem:[#allocation11 + $0x138] sm:$0xff]
    %v982 = vld [vmem:[#allocation11 + $0x140] sm:$0xff]
    %v983 = vld [vmem:[#allocation11 + $0x148] sm:$0xff]
    %v984 = vld [vmem:[#allocation11 + $0x150] sm:$0xff]
    %v985 = vld [vmem:[#allocation11 + $0x158] sm:$0xff]
    %v986 = vld [vmem:[#allocation11 + $0x160] sm:$0xff]
    %v987 = vld [vmem:[#allocation11 + $0x168] sm:$0xff]
    %v988 = vld [vmem:[#allocation11 + $0x170] sm:$0xff]
    %v989 = vld [vmem:[#allocation11 + $0x178] sm:$0xff]
    %v990 = vld [vmem:[#allocation11 + $0x180] sm:$0xff]
    %v991 = vld [vmem:[#allocation11 + $0x188] sm:$0xff]
    %v992 = vld [vmem:[#allocation11 + $0x190] sm:$0xff]
    %v993 = vld [vmem:[#allocation11 + $0x198] sm:$0xff]
    %v994 = vld [vmem:[#allocation11 + $0x1a0] sm:$0xff]
    %v995 = vld [vmem:[#allocation11 + $0x1a8] sm:$0xff]
    %v996 = vld [vmem:[#allocation11 + $0x1b0] sm:$0xff]
    %v997 = vld [vmem:[#allocation11 + $0x1b8] sm:$0xff]
    %v998 = vld [vmem:[#allocation11 + $0x1c0] sm:$0xff]
    %v999 = vld [vmem:[#allocation11 + $0x1c8] sm:$0xff]
    %v1000 = vld [vmem:[#allocation11 + $0x1d0] sm:$0xff]
    %v1001 = vld [vmem:[#allocation11 + $0x1d8] sm:$0xff]
    %v1002 = vld [vmem:[#allocation11 + $0x1e0] sm:$0xff]
    %v1003 = vld [vmem:[#allocation11 + $0x1e8] sm:$0xff]
    %v1004 = vld [vmem:[#allocation11 + $0x1f0] sm:$0xff]
    %v1005 = vld [vmem:[#allocation11 + $0x1f8] sm:$0xff]
    %v1006 = vunpack.c.l.s8.bf16 %v974
    %v1007 = vunpack.c.l.s8.bf16 %v975
    %v1008 = vunpack.c.l.s8.bf16 %v976
    %v1009 = vunpack.c.l.s8.bf16 %v977
    %v1010 = vunpack.c.l.s8.bf16 %v978
    %v1011 = vunpack.c.l.s8.bf16 %v979
    %v1012 = vunpack.c.l.s8.bf16 %v980
    %v1013 = vunpack.c.l.s8.bf16 %v981
    %v1014 = vunpack.c.h.s8.bf16 %v974
    %v1015 = vunpack.c.h.s8.bf16 %v975
    %v1016 = vunpack.c.h.s8.bf16 %v976
    %v1017 = vunpack.c.h.s8.bf16 %v977
    %v1018 = vunpack.c.h.s8.bf16 %v978
    %v1019 = vunpack.c.h.s8.bf16 %v979
    %v1020 = vunpack.c.h.s8.bf16 %v980
    %v1021 = vunpack.c.h.s8.bf16 %v981
    %v1022 = vunpack.c.l.s8.bf16 %v982
    %v1023 = vunpack.c.l.s8.bf16 %v983
    %v1024 = vunpack.c.l.s8.bf16 %v984
    %v1025 = vunpack.c.l.s8.bf16 %v985
    %v1026 = vunpack.c.l.s8.bf16 %v986
    %v1027 = vunpack.c.l.s8.bf16 %v987
    %v1028 = vunpack.c.l.s8.bf16 %v988
    %v1029 = vunpack.c.l.s8.bf16 %v989
    %v1030 = vunpack.c.h.s8.bf16 %v982
    %v1031 = vunpack.c.h.s8.bf16 %v983
    %v1032 = vunpack.c.h.s8.bf16 %v984
    %v1033 = vunpack.c.h.s8.bf16 %v985
    %v1034 = vunpack.c.h.s8.bf16 %v986
    %v1035 = vunpack.c.h.s8.bf16 %v987
    %v1036 = vunpack.c.h.s8.bf16 %v988
    %v1037 = vunpack.c.h.s8.bf16 %v989
    %v1038 = vunpack.c.l.s8.bf16 %v990
    %v1039 = vunpack.c.l.s8.bf16 %v991
    %v1040 = vunpack.c.l.s8.bf16 %v992
    %v1041 = vunpack.c.l.s8.bf16 %v993
    %v1042 = vunpack.c.l.s8.bf16 %v994
    %v1043 = vunpack.c.l.s8.bf16 %v995
    %v1044 = vunpack.c.l.s8.bf16 %v996
    %v1045 = vunpack.c.l.s8.bf16 %v997
    %v1046 = vunpack.c.h.s8.bf16 %v990
    %v1047 = vunpack.c.h.s8.bf16 %v991
    %v1048 = vunpack.c.h.s8.bf16 %v992
    %v1049 = vunpack.c.h.s8.bf16 %v993
    %v1050 = vunpack.c.h.s8.bf16 %v994
    %v1051 = vunpack.c.h.s8.bf16 %v995
    %v1052 = vunpack.c.h.s8.bf16 %v996
    %v1053 = vunpack.c.h.s8.bf16 %v997
    %v1054 = vunpack.c.l.s8.bf16 %v998
    %v1055 = vunpack.c.l.s8.bf16 %v999
    %v1056 = vunpack.c.l.s8.bf16 %v1000
    %v1057 = vunpack.c.l.s8.bf16 %v1001
    %v1058 = vunpack.c.l.s8.bf16 %v1002
    %v1059 = vunpack.c.l.s8.bf16 %v1003
    %v1060 = vunpack.c.l.s8.bf16 %v1004
    %v1061 = vunpack.c.l.s8.bf16 %v1005
    %v1062 = vunpack.c.h.s8.bf16 %v998
    %v1063 = vunpack.c.h.s8.bf16 %v999
    %v1064 = vunpack.c.h.s8.bf16 %v1000
    %v1065 = vunpack.c.h.s8.bf16 %v1001
    %v1066 = vunpack.c.h.s8.bf16 %v1002
    %v1067 = vunpack.c.h.s8.bf16 %v1003
    %v1068 = vunpack.c.h.s8.bf16 %v1004
    %v1069 = vunpack.c.h.s8.bf16 %v1005
    %v1070 = vpack.c.bf16 %v395, %v395
    %v1071 = vld [vmem:[#allocation11 + $0x200] sm:$0xff]
    %v1072 = vld [vmem:[#allocation11 + $0x208] sm:$0xff]
    %v1073 = vld [vmem:[#allocation11 + $0x210] sm:$0xff]
    %v1074 = vld [vmem:[#allocation11 + $0x218] sm:$0xff]
    %v1075 = vld [vmem:[#allocation11 + $0x220] sm:$0xff]
    %v1076 = vld [vmem:[#allocation11 + $0x228] sm:$0xff]
    %v1077 = vld [vmem:[#allocation11 + $0x230] sm:$0xff]
    %v1078 = vld [vmem:[#allocation11 + $0x238] sm:$0xff]
    %v1079 = vld [vmem:[#allocation11 + $0x240] sm:$0xff]
    %v1080 = vld [vmem:[#allocation11 + $0x248] sm:$0xff]
    %v1081 = vld [vmem:[#allocation11 + $0x250] sm:$0xff]
    %v1082 = vld [vmem:[#allocation11 + $0x258] sm:$0xff]
    %v1083 = vld [vmem:[#allocation11 + $0x260] sm:$0xff]
    %v1084 = vld [vmem:[#allocation11 + $0x268] sm:$0xff]
    %v1085 = vld [vmem:[#allocation11 + $0x270] sm:$0xff]
    %v1086 = vld [vmem:[#allocation11 + $0x278] sm:$0xff]
    %v1087 = vld [vmem:[#allocation11 + $0x280] sm:$0xff]
    %v1088 = vld [vmem:[#allocation11 + $0x288] sm:$0xff]
    %v1089 = vld [vmem:[#allocation11 + $0x290] sm:$0xff]
    %v1090 = vld [vmem:[#allocation11 + $0x298] sm:$0xff]
    %v1091 = vld [vmem:[#allocation11 + $0x2a0] sm:$0xff]
    %v1092 = vld [vmem:[#allocation11 + $0x2a8] sm:$0xff]
    %v1093 = vld [vmem:[#allocation11 + $0x2b0] sm:$0xff]
    %v1094 = vld [vmem:[#allocation11 + $0x2b8] sm:$0xff]
    %v1095 = vld [vmem:[#allocation11 + $0x2c0] sm:$0xff]
    %v1096 = vld [vmem:[#allocation11 + $0x2c8] sm:$0xff]
    %v1097 = vld [vmem:[#allocation11 + $0x2d0] sm:$0xff]
    %v1098 = vld [vmem:[#allocation11 + $0x2d8] sm:$0xff]
    %v1099 = vld [vmem:[#allocation11 + $0x2e0] sm:$0xff]
    %v1100 = vld [vmem:[#allocation11 + $0x2e8] sm:$0xff]
    %v1101 = vld [vmem:[#allocation11 + $0x2f0] sm:$0xff]
    %v1102 = vld [vmem:[#allocation11 + $0x2f8] sm:$0xff]
    %v1103 = vld [vmem:[#allocation11 + $0x300] sm:$0xff]
    %v1104 = vld [vmem:[#allocation11 + $0x308] sm:$0xff]
    %v1105 = vld [vmem:[#allocation11 + $0x310] sm:$0xff]
    %v1106 = vld [vmem:[#allocation11 + $0x318] sm:$0xff]
    %v1107 = vld [vmem:[#allocation11 + $0x320] sm:$0xff]
    %v1108 = vld [vmem:[#allocation11 + $0x328] sm:$0xff]
    %v1109 = vld [vmem:[#allocation11 + $0x330] sm:$0xff]
    %v1110 = vld [vmem:[#allocation11 + $0x338] sm:$0xff]
    %v1111 = vld [vmem:[#allocation11 + $0x340] sm:$0xff]
    %v1112 = vld [vmem:[#allocation11 + $0x348] sm:$0xff]
    %v1113 = vld [vmem:[#allocation11 + $0x350] sm:$0xff]
    %v1114 = vld [vmem:[#allocation11 + $0x358] sm:$0xff]
    %v1115 = vld [vmem:[#allocation11 + $0x360] sm:$0xff]
    %v1116 = vld [vmem:[#allocation11 + $0x368] sm:$0xff]
    %v1117 = vld [vmem:[#allocation11 + $0x370] sm:$0xff]
    %v1118 = vld [vmem:[#allocation11 + $0x378] sm:$0xff]
    %v1119 = vld [vmem:[#allocation11 + $0x380] sm:$0xff]
    %v1120 = vld [vmem:[#allocation11 + $0x388] sm:$0xff]
    %v1121 = vld [vmem:[#allocation11 + $0x390] sm:$0xff]
    %v1122 = vld [vmem:[#allocation11 + $0x398] sm:$0xff]
    %v1123 = vld [vmem:[#allocation11 + $0x3a0] sm:$0xff]
    %v1124 = vld [vmem:[#allocation11 + $0x3a8] sm:$0xff]
    %v1125 = vld [vmem:[#allocation11 + $0x3b0] sm:$0xff]
    %v1126 = vld [vmem:[#allocation11 + $0x3b8] sm:$0xff]
    %v1127 = vld [vmem:[#allocation11 + $0x3c0] sm:$0xff]
    %v1128 = vld [vmem:[#allocation11 + $0x3c8] sm:$0xff]
    %v1129 = vld [vmem:[#allocation11 + $0x3d0] sm:$0xff]
    %v1130 = vld [vmem:[#allocation11 + $0x3d8] sm:$0xff]
    %v1131 = vld [vmem:[#allocation11 + $0x3e0] sm:$0xff]
    %v1132 = vld [vmem:[#allocation11 + $0x3e8] sm:$0xff]
    %v1133 = vld [vmem:[#allocation11 + $0x3f0] sm:$0xff]
    %v1134 = vld [vmem:[#allocation11 + $0x3f8] sm:$0xff]
    %v1135 = vld [vmem:[#allocation11 + $0x400] sm:$0xff]
    %v1136 = vld [vmem:[#allocation11 + $0x408] sm:$0xff]
    %v1137 = vld [vmem:[#allocation11 + $0x410] sm:$0xff]
    %v1138 = vld [vmem:[#allocation11 + $0x418] sm:$0xff]
    %v1139 = vld [vmem:[#allocation11 + $0x420] sm:$0xff]
    %v1140 = vld [vmem:[#allocation11 + $0x428] sm:$0xff]
    %v1141 = vld [vmem:[#allocation11 + $0x430] sm:$0xff]
    %v1142 = vld [vmem:[#allocation11 + $0x438] sm:$0xff]
    %v1143 = vld [vmem:[#allocation11 + $0x440] sm:$0xff]
    %v1144 = vld [vmem:[#allocation11 + $0x448] sm:$0xff]
    %v1145 = vld [vmem:[#allocation11 + $0x450] sm:$0xff]
    %v1146 = vld [vmem:[#allocation11 + $0x458] sm:$0xff]
    %v1147 = vld [vmem:[#allocation11 + $0x460] sm:$0xff]
    %v1148 = vld [vmem:[#allocation11 + $0x468] sm:$0xff]
    %v1149 = vld [vmem:[#allocation11 + $0x470] sm:$0xff]
    %v1150 = vld [vmem:[#allocation11 + $0x478] sm:$0xff]
    %v1151 = vld [vmem:[#allocation11 + $0x480] sm:$0xff]
    %v1152 = vld [vmem:[#allocation11 + $0x488] sm:$0xff]
    %v1153 = vld [vmem:[#allocation11 + $0x490] sm:$0xff]
    %v1154 = vld [vmem:[#allocation11 + $0x498] sm:$0xff]
    %v1155 = vld [vmem:[#allocation11 + $0x4a0] sm:$0xff]
    %v1156 = vld [vmem:[#allocation11 + $0x4a8] sm:$0xff]
    %v1157 = vld [vmem:[#allocation11 + $0x4b0] sm:$0xff]
    %v1158 = vld [vmem:[#allocation11 + $0x4b8] sm:$0xff]
    %v1159 = vld [vmem:[#allocation11 + $0x4c0] sm:$0xff]
    %v1160 = vld [vmem:[#allocation11 + $0x4c8] sm:$0xff]
    %v1161 = vld [vmem:[#allocation11 + $0x4d0] sm:$0xff]
    %v1162 = vld [vmem:[#allocation11 + $0x4d8] sm:$0xff]
    %v1163 = vld [vmem:[#allocation11 + $0x4e0] sm:$0xff]
    %v1164 = vld [vmem:[#allocation11 + $0x4e8] sm:$0xff]
    %v1165 = vld [vmem:[#allocation11 + $0x4f0] sm:$0xff]
    %v1166 = vld [vmem:[#allocation11 + $0x4f8] sm:$0xff]
    %v1167 = vld [vmem:[#allocation11 + $0x500] sm:$0xff]
    %v1168 = vld [vmem:[#allocation11 + $0x508] sm:$0xff]
    %v1169 = vld [vmem:[#allocation11 + $0x510] sm:$0xff]
    %v1170 = vld [vmem:[#allocation11 + $0x518] sm:$0xff]
    %v1171 = vld [vmem:[#allocation11 + $0x520] sm:$0xff]
    %v1172 = vld [vmem:[#allocation11 + $0x528] sm:$0xff]
    %v1173 = vld [vmem:[#allocation11 + $0x530] sm:$0xff]
    %v1174 = vld [vmem:[#allocation11 + $0x538] sm:$0xff]
    %v1175 = vld [vmem:[#allocation11 + $0x540] sm:$0xff]
    %v1176 = vld [vmem:[#allocation11 + $0x548] sm:$0xff]
    %v1177 = vld [vmem:[#allocation11 + $0x550] sm:$0xff]
    %v1178 = vld [vmem:[#allocation11 + $0x558] sm:$0xff]
    %v1179 = vld [vmem:[#allocation11 + $0x560] sm:$0xff]
    %v1180 = vld [vmem:[#allocation11 + $0x568] sm:$0xff]
    %v1181 = vld [vmem:[#allocation11 + $0x570] sm:$0xff]
    %v1182 = vld [vmem:[#allocation11 + $0x578] sm:$0xff]
    %v1183 = vld [vmem:[#allocation11 + $0x580] sm:$0xff]
    %v1184 = vld [vmem:[#allocation11 + $0x588] sm:$0xff]
    %v1185 = vld [vmem:[#allocation11 + $0x590] sm:$0xff]
    %v1186 = vld [vmem:[#allocation11 + $0x598] sm:$0xff]
    %v1187 = vld [vmem:[#allocation11 + $0x5a0] sm:$0xff]
    %v1188 = vld [vmem:[#allocation11 + $0x5a8] sm:$0xff]
    %v1189 = vld [vmem:[#allocation11 + $0x5b0] sm:$0xff]
    %v1190 = vld [vmem:[#allocation11 + $0x5b8] sm:$0xff]
    %v1191 = vld [vmem:[#allocation11 + $0x5c0] sm:$0xff]
    %v1192 = vld [vmem:[#allocation11 + $0x5c8] sm:$0xff]
    %v1193 = vld [vmem:[#allocation11 + $0x5d0] sm:$0xff]
    %v1194 = vld [vmem:[#allocation11 + $0x5d8] sm:$0xff]
    %v1195 = vld [vmem:[#allocation11 + $0x5e0] sm:$0xff]
    %v1196 = vld [vmem:[#allocation11 + $0x5e8] sm:$0xff]
    %v1197 = vld [vmem:[#allocation11 + $0x5f0] sm:$0xff]
    %v1198 = vld [vmem:[#allocation11 + $0x5f8] sm:$0xff]
    %v1199 = vld [vmem:[#allocation11 + $0x600] sm:$0xff]
    %v1200 = vld [vmem:[#allocation11 + $0x608] sm:$0xff]
    %v1201 = vld [vmem:[#allocation11 + $0x610] sm:$0xff]
    %v1202 = vld [vmem:[#allocation11 + $0x618] sm:$0xff]
    %v1203 = vld [vmem:[#allocation11 + $0x620] sm:$0xff]
    %v1204 = vld [vmem:[#allocation11 + $0x628] sm:$0xff]
    %v1205 = vld [vmem:[#allocation11 + $0x630] sm:$0xff]
    %v1206 = vld [vmem:[#allocation11 + $0x638] sm:$0xff]
    %v1207 = vld [vmem:[#allocation11 + $0x640] sm:$0xff]
    %v1208 = vld [vmem:[#allocation11 + $0x648] sm:$0xff]
    %v1209 = vld [vmem:[#allocation11 + $0x650] sm:$0xff]
    %v1210 = vld [vmem:[#allocation11 + $0x658] sm:$0xff]
    %v1211 = vld [vmem:[#allocation11 + $0x660] sm:$0xff]
    %v1212 = vld [vmem:[#allocation11 + $0x668] sm:$0xff]
    %v1213 = vld [vmem:[#allocation11 + $0x670] sm:$0xff]
    %v1214 = vld [vmem:[#allocation11 + $0x678] sm:$0xff]
    %v1215 = vld [vmem:[#allocation11 + $0x680] sm:$0xff]
    %v1216 = vld [vmem:[#allocation11 + $0x688] sm:$0xff]
    %v1217 = vld [vmem:[#allocation11 + $0x690] sm:$0xff]
    %v1218 = vld [vmem:[#allocation11 + $0x698] sm:$0xff]
    %v1219 = vld [vmem:[#allocation11 + $0x6a0] sm:$0xff]
    %v1220 = vld [vmem:[#allocation11 + $0x6a8] sm:$0xff]
    %v1221 = vld [vmem:[#allocation11 + $0x6b0] sm:$0xff]
    %v1222 = vld [vmem:[#allocation11 + $0x6b8] sm:$0xff]
    %v1223 = vld [vmem:[#allocation11 + $0x6c0] sm:$0xff]
    %v1224 = vld [vmem:[#allocation11 + $0x6c8] sm:$0xff]
    %v1225 = vld [vmem:[#allocation11 + $0x6d0] sm:$0xff]
    %v1226 = vld [vmem:[#allocation11 + $0x6d8] sm:$0xff]
    %v1227 = vld [vmem:[#allocation11 + $0x6e0] sm:$0xff]
    %v1228 = vld [vmem:[#allocation11 + $0x6e8] sm:$0xff]
    %v1229 = vld [vmem:[#allocation11 + $0x6f0] sm:$0xff]
    %v1230 = vld [vmem:[#allocation11 + $0x6f8] sm:$0xff]
    %v1231 = vld [vmem:[#allocation11 + $0x700] sm:$0xff]
    %v1232 = vld [vmem:[#allocation11 + $0x708] sm:$0xff]
    %v1233 = vld [vmem:[#allocation11 + $0x710] sm:$0xff]
    %v1234 = vld [vmem:[#allocation11 + $0x718] sm:$0xff]
    %v1235 = vld [vmem:[#allocation11 + $0x720] sm:$0xff]
    %v1236 = vld [vmem:[#allocation11 + $0x728] sm:$0xff]
    %v1237 = vld [vmem:[#allocation11 + $0x730] sm:$0xff]
    %v1238 = vld [vmem:[#allocation11 + $0x738] sm:$0xff]
    %v1239 = vld [vmem:[#allocation11 + $0x740] sm:$0xff]
    %v1240 = vld [vmem:[#allocation11 + $0x748] sm:$0xff]
    %v1241 = vld [vmem:[#allocation11 + $0x750] sm:$0xff]
    %v1242 = vld [vmem:[#allocation11 + $0x758] sm:$0xff]
    %v1243 = vld [vmem:[#allocation11 + $0x760] sm:$0xff]
    %v1244 = vld [vmem:[#allocation11 + $0x768] sm:$0xff]
    %v1245 = vld [vmem:[#allocation11 + $0x770] sm:$0xff]
    %v1246 = vld [vmem:[#allocation11 + $0x778] sm:$0xff]
    %v1247 = vld [vmem:[#allocation11 + $0x780] sm:$0xff]
    %v1248 = vld [vmem:[#allocation11 + $0x788] sm:$0xff]
    %v1249 = vld [vmem:[#allocation11 + $0x790] sm:$0xff]
    %v1250 = vld [vmem:[#allocation11 + $0x798] sm:$0xff]
    %v1251 = vld [vmem:[#allocation11 + $0x7a0] sm:$0xff]
    %v1252 = vld [vmem:[#allocation11 + $0x7a8] sm:$0xff]
    %v1253 = vld [vmem:[#allocation11 + $0x7b0] sm:$0xff]
    %v1254 = vld [vmem:[#allocation11 + $0x7b8] sm:$0xff]
    %v1255 = vld [vmem:[#allocation11 + $0x7c0] sm:$0xff]
    %v1256 = vld [vmem:[#allocation11 + $0x7c8] sm:$0xff]
    %v1257 = vld [vmem:[#allocation11 + $0x7d0] sm:$0xff]
    %v1258 = vld [vmem:[#allocation11 + $0x7d8] sm:$0xff]
    %v1259 = vld [vmem:[#allocation11 + $0x7e0] sm:$0xff]
    %v1260 = vld [vmem:[#allocation11 + $0x7e8] sm:$0xff]
    %v1261 = vld [vmem:[#allocation11 + $0x7f0] sm:$0xff]
    %v1262 = vld [vmem:[#allocation11 + $0x7f8] sm:$0xff]
    %v1263 = vld [vmem:[#allocation11 + $0x800] sm:$0xff]
    %v1264 = vld [vmem:[#allocation11 + $0x808] sm:$0xff]
    %v1265 = vld [vmem:[#allocation11 + $0x810] sm:$0xff]
    %v1266 = vld [vmem:[#allocation11 + $0x818] sm:$0xff]
    %v1267 = vld [vmem:[#allocation11 + $0x820] sm:$0xff]
    %v1268 = vld [vmem:[#allocation11 + $0x828] sm:$0xff]
    %v1269 = vld [vmem:[#allocation11 + $0x830] sm:$0xff]
    %v1270 = vld [vmem:[#allocation11 + $0x838] sm:$0xff]
    %v1271 = vld [vmem:[#allocation11 + $0x840] sm:$0xff]
    %v1272 = vld [vmem:[#allocation11 + $0x848] sm:$0xff]
    %v1273 = vld [vmem:[#allocation11 + $0x850] sm:$0xff]
    %v1274 = vld [vmem:[#allocation11 + $0x858] sm:$0xff]
    %v1275 = vld [vmem:[#allocation11 + $0x860] sm:$0xff]
    %v1276 = vld [vmem:[#allocation11 + $0x868] sm:$0xff]
    %v1277 = vld [vmem:[#allocation11 + $0x870] sm:$0xff]
    %v1278 = vld [vmem:[#allocation11 + $0x878] sm:$0xff]
    %v1279 = vld [vmem:[#allocation11 + $0x880] sm:$0xff]
    %v1280 = vld [vmem:[#allocation11 + $0x888] sm:$0xff]
    %v1281 = vld [vmem:[#allocation11 + $0x890] sm:$0xff]
    %v1282 = vld [vmem:[#allocation11 + $0x898] sm:$0xff]
    %v1283 = vld [vmem:[#allocation11 + $0x8a0] sm:$0xff]
    %v1284 = vld [vmem:[#allocation11 + $0x8a8] sm:$0xff]
    %v1285 = vld [vmem:[#allocation11 + $0x8b0] sm:$0xff]
    %v1286 = vld [vmem:[#allocation11 + $0x8b8] sm:$0xff]
    %v1287 = vld [vmem:[#allocation11 + $0x8c0] sm:$0xff]
    %v1288 = vld [vmem:[#allocation11 + $0x8c8] sm:$0xff]
    %v1289 = vld [vmem:[#allocation11 + $0x8d0] sm:$0xff]
    %v1290 = vld [vmem:[#allocation11 + $0x8d8] sm:$0xff]
    %v1291 = vld [vmem:[#allocation11 + $0x8e0] sm:$0xff]
    %v1292 = vld [vmem:[#allocation11 + $0x8e8] sm:$0xff]
    %v1293 = vld [vmem:[#allocation11 + $0x8f0] sm:$0xff]
    %v1294 = vld [vmem:[#allocation11 + $0x8f8] sm:$0xff]
    %v1295 = vld [vmem:[#allocation11 + $0x900] sm:$0xff]
    %v1296 = vld [vmem:[#allocation11 + $0x908] sm:$0xff]
    %v1297 = vld [vmem:[#allocation11 + $0x910] sm:$0xff]
    %v1298 = vld [vmem:[#allocation11 + $0x918] sm:$0xff]
    %v1299 = vld [vmem:[#allocation11 + $0x920] sm:$0xff]
    %v1300 = vld [vmem:[#allocation11 + $0x928] sm:$0xff]
    %v1301 = vld [vmem:[#allocation11 + $0x930] sm:$0xff]
    %v1302 = vld [vmem:[#allocation11 + $0x938] sm:$0xff]
    %v1303 = vld [vmem:[#allocation11 + $0x940] sm:$0xff]
    %v1304 = vld [vmem:[#allocation11 + $0x948] sm:$0xff]
    %v1305 = vld [vmem:[#allocation11 + $0x950] sm:$0xff]
    %v1306 = vld [vmem:[#allocation11 + $0x958] sm:$0xff]
    %v1307 = vld [vmem:[#allocation11 + $0x960] sm:$0xff]
    %v1308 = vld [vmem:[#allocation11 + $0x968] sm:$0xff]
    %v1309 = vld [vmem:[#allocation11 + $0x970] sm:$0xff]
    %v1310 = vld [vmem:[#allocation11 + $0x978] sm:$0xff]
    %v1311 = vld [vmem:[#allocation11 + $0x980] sm:$0xff]
    %v1312 = vld [vmem:[#allocation11 + $0x988] sm:$0xff]
    %v1313 = vld [vmem:[#allocation11 + $0x990] sm:$0xff]
    %v1314 = vld [vmem:[#allocation11 + $0x998] sm:$0xff]
    %v1315 = vld [vmem:[#allocation11 + $0x9a0] sm:$0xff]
    %v1316 = vld [vmem:[#allocation11 + $0x9a8] sm:$0xff]
    %v1317 = vld [vmem:[#allocation11 + $0x9b0] sm:$0xff]
    %v1318 = vld [vmem:[#allocation11 + $0x9b8] sm:$0xff]
    %v1319 = vld [vmem:[#allocation11 + $0x9c0] sm:$0xff]
    %v1320 = vld [vmem:[#allocation11 + $0x9c8] sm:$0xff]
    %v1321 = vld [vmem:[#allocation11 + $0x9d0] sm:$0xff]
    %v1322 = vld [vmem:[#allocation11 + $0x9d8] sm:$0xff]
    %v1323 = vld [vmem:[#allocation11 + $0x9e0] sm:$0xff]
    %v1324 = vld [vmem:[#allocation11 + $0x9e8] sm:$0xff]
    %v1325 = vld [vmem:[#allocation11 + $0x9f0] sm:$0xff]
    %v1326 = vld [vmem:[#allocation11 + $0x9f8] sm:$0xff]
    %v1327 = vunpack.c.l.s8.bf16 %v1071
    %v1328 = vunpack.c.l.s8.bf16 %v1072
    %v1329 = vunpack.c.l.s8.bf16 %v1073
    %v1330 = vunpack.c.l.s8.bf16 %v1074
    %v1331 = vunpack.c.l.s8.bf16 %v1075
    %v1332 = vunpack.c.l.s8.bf16 %v1076
    %v1333 = vunpack.c.l.s8.bf16 %v1077
    %v1334 = vunpack.c.l.s8.bf16 %v1078
    %v1335 = vunpack.c.h.s8.bf16 %v1071
    %v1336 = vunpack.c.h.s8.bf16 %v1072
    %v1337 = vunpack.c.h.s8.bf16 %v1073
    %v1338 = vunpack.c.h.s8.bf16 %v1074
    %v1339 = vunpack.c.h.s8.bf16 %v1075
    %v1340 = vunpack.c.h.s8.bf16 %v1076
    %v1341 = vunpack.c.h.s8.bf16 %v1077
    %v1342 = vunpack.c.h.s8.bf16 %v1078
    %v1343 = vunpack.c.l.s8.bf16 %v1079
    %v1344 = vunpack.c.l.s8.bf16 %v1080
    %v1345 = vunpack.c.l.s8.bf16 %v1081
    %v1346 = vunpack.c.l.s8.bf16 %v1082
    %v1347 = vunpack.c.l.s8.bf16 %v1083
    %v1348 = vunpack.c.l.s8.bf16 %v1084
    %v1349 = vunpack.c.l.s8.bf16 %v1085
    %v1350 = vunpack.c.l.s8.bf16 %v1086
    %v1351 = vunpack.c.h.s8.bf16 %v1079
    %v1352 = vunpack.c.h.s8.bf16 %v1080
    %v1353 = vunpack.c.h.s8.bf16 %v1081
    %v1354 = vunpack.c.h.s8.bf16 %v1082
    %v1355 = vunpack.c.h.s8.bf16 %v1083
    %v1356 = vunpack.c.h.s8.bf16 %v1084
    %v1357 = vunpack.c.h.s8.bf16 %v1085
    %v1358 = vunpack.c.h.s8.bf16 %v1086
    %v1359 = vunpack.c.l.s8.bf16 %v1087
    %v1360 = vunpack.c.l.s8.bf16 %v1088
    %v1361 = vunpack.c.l.s8.bf16 %v1089
    %v1362 = vunpack.c.l.s8.bf16 %v1090
    %v1363 = vunpack.c.l.s8.bf16 %v1091
    %v1364 = vunpack.c.l.s8.bf16 %v1092
    %v1365 = vunpack.c.l.s8.bf16 %v1093
    %v1366 = vunpack.c.l.s8.bf16 %v1094
    %v1367 = vunpack.c.h.s8.bf16 %v1087
    %v1368 = vunpack.c.h.s8.bf16 %v1088
    %v1369 = vunpack.c.h.s8.bf16 %v1089
    %v1370 = vunpack.c.h.s8.bf16 %v1090
    %v1371 = vunpack.c.h.s8.bf16 %v1091
    %v1372 = vunpack.c.h.s8.bf16 %v1092
    %v1373 = vunpack.c.h.s8.bf16 %v1093
    %v1374 = vunpack.c.h.s8.bf16 %v1094
    %v1375 = vunpack.c.l.s8.bf16 %v1095
    %v1376 = vunpack.c.l.s8.bf16 %v1096
    %v1377 = vunpack.c.l.s8.bf16 %v1097
    %v1378 = vunpack.c.l.s8.bf16 %v1098
    %v1379 = vunpack.c.l.s8.bf16 %v1099
    %v1380 = vunpack.c.l.s8.bf16 %v1100
    %v1381 = vunpack.c.l.s8.bf16 %v1101
    %v1382 = vunpack.c.l.s8.bf16 %v1102
    %v1383 = vunpack.c.h.s8.bf16 %v1095
    %v1384 = vunpack.c.h.s8.bf16 %v1096
    %v1385 = vunpack.c.h.s8.bf16 %v1097
    %v1386 = vunpack.c.h.s8.bf16 %v1098
    %v1387 = vunpack.c.h.s8.bf16 %v1099
    %v1388 = vunpack.c.h.s8.bf16 %v1100
    %v1389 = vunpack.c.h.s8.bf16 %v1101
    %v1390 = vunpack.c.h.s8.bf16 %v1102
    %v1391 = vunpack.c.l.s8.bf16 %v1103
    %v1392 = vunpack.c.l.s8.bf16 %v1104
    %v1393 = vunpack.c.l.s8.bf16 %v1105
    %v1394 = vunpack.c.l.s8.bf16 %v1106
    %v1395 = vunpack.c.l.s8.bf16 %v1107
    %v1396 = vunpack.c.l.s8.bf16 %v1108
    %v1397 = vunpack.c.l.s8.bf16 %v1109
    %v1398 = vunpack.c.l.s8.bf16 %v1110
    %v1399 = vunpack.c.h.s8.bf16 %v1103
    %v1400 = vunpack.c.h.s8.bf16 %v1104
    %v1401 = vunpack.c.h.s8.bf16 %v1105
    %v1402 = vunpack.c.h.s8.bf16 %v1106
    %v1403 = vunpack.c.h.s8.bf16 %v1107
    %v1404 = vunpack.c.h.s8.bf16 %v1108
    %v1405 = vunpack.c.h.s8.bf16 %v1109
    %v1406 = vunpack.c.h.s8.bf16 %v1110
    %v1407 = vunpack.c.l.s8.bf16 %v1111
    %v1408 = vunpack.c.l.s8.bf16 %v1112
    %v1409 = vunpack.c.l.s8.bf16 %v1113
    %v1410 = vunpack.c.l.s8.bf16 %v1114
    %v1411 = vunpack.c.l.s8.bf16 %v1115
    %v1412 = vunpack.c.l.s8.bf16 %v1116
    %v1413 = vunpack.c.l.s8.bf16 %v1117
    %v1414 = vunpack.c.l.s8.bf16 %v1118
    %v1415 = vunpack.c.h.s8.bf16 %v1111
    %v1416 = vunpack.c.h.s8.bf16 %v1112
    %v1417 = vunpack.c.h.s8.bf16 %v1113
    %v1418 = vunpack.c.h.s8.bf16 %v1114
    %v1419 = vunpack.c.h.s8.bf16 %v1115
    %v1420 = vunpack.c.h.s8.bf16 %v1116
    %v1421 = vunpack.c.h.s8.bf16 %v1117
    %v1422 = vunpack.c.h.s8.bf16 %v1118
    %v1423 = vunpack.c.l.s8.bf16 %v1119
    %v1424 = vunpack.c.l.s8.bf16 %v1120
    %v1425 = vunpack.c.l.s8.bf16 %v1121
    %v1426 = vunpack.c.l.s8.bf16 %v1122
    %v1427 = vunpack.c.l.s8.bf16 %v1123
    %v1428 = vunpack.c.l.s8.bf16 %v1124
    %v1429 = vunpack.c.l.s8.bf16 %v1125
    %v1430 = vunpack.c.l.s8.bf16 %v1126
    %v1431 = vunpack.c.h.s8.bf16 %v1119
    %v1432 = vunpack.c.h.s8.bf16 %v1120
    %v1433 = vunpack.c.h.s8.bf16 %v1121
    %v1434 = vunpack.c.h.s8.bf16 %v1122
    %v1435 = vunpack.c.h.s8.bf16 %v1123
    %v1436 = vunpack.c.h.s8.bf16 %v1124
    %v1437 = vunpack.c.h.s8.bf16 %v1125
    %v1438 = vunpack.c.h.s8.bf16 %v1126
    %v1439 = vunpack.c.l.s8.bf16 %v1127
    %v1440 = vunpack.c.l.s8.bf16 %v1128
    %v1441 = vunpack.c.l.s8.bf16 %v1129
    %v1442 = vunpack.c.l.s8.bf16 %v1130
    %v1443 = vunpack.c.l.s8.bf16 %v1131
    %v1444 = vunpack.c.l.s8.bf16 %v1132
    %v1445 = vunpack.c.l.s8.bf16 %v1133
    %v1446 = vunpack.c.l.s8.bf16 %v1134
    %v1447 = vunpack.c.h.s8.bf16 %v1127
    %v1448 = vunpack.c.h.s8.bf16 %v1128
    %v1449 = vunpack.c.h.s8.bf16 %v1129
    %v1450 = vunpack.c.h.s8.bf16 %v1130
    %v1451 = vunpack.c.h.s8.bf16 %v1131
    %v1452 = vunpack.c.h.s8.bf16 %v1132
    %v1453 = vunpack.c.h.s8.bf16 %v1133
    %v1454 = vunpack.c.h.s8.bf16 %v1134
    %v1455 = vunpack.c.l.s8.bf16 %v1135
    %v1456 = vunpack.c.l.s8.bf16 %v1136
    %v1457 = vunpack.c.l.s8.bf16 %v1137
    %v1458 = vunpack.c.l.s8.bf16 %v1138
    %v1459 = vunpack.c.l.s8.bf16 %v1139
    %v1460 = vunpack.c.l.s8.bf16 %v1140
    %v1461 = vunpack.c.l.s8.bf16 %v1141
    %v1462 = vunpack.c.l.s8.bf16 %v1142
    %v1463 = vunpack.c.h.s8.bf16 %v1135
    %v1464 = vunpack.c.h.s8.bf16 %v1136
    %v1465 = vunpack.c.h.s8.bf16 %v1137
    %v1466 = vunpack.c.h.s8.bf16 %v1138
    %v1467 = vunpack.c.h.s8.bf16 %v1139
    %v1468 = vunpack.c.h.s8.bf16 %v1140
    %v1469 = vunpack.c.h.s8.bf16 %v1141
    %v1470 = vunpack.c.h.s8.bf16 %v1142
    %v1471 = vunpack.c.l.s8.bf16 %v1143
    %v1472 = vunpack.c.l.s8.bf16 %v1144
    %v1473 = vunpack.c.l.s8.bf16 %v1145
    %v1474 = vunpack.c.l.s8.bf16 %v1146
    %v1475 = vunpack.c.l.s8.bf16 %v1147
    %v1476 = vunpack.c.l.s8.bf16 %v1148
    %v1477 = vunpack.c.l.s8.bf16 %v1149
    %v1478 = vunpack.c.l.s8.bf16 %v1150
    %v1479 = vunpack.c.h.s8.bf16 %v1143
    %v1480 = vunpack.c.h.s8.bf16 %v1144
    %v1481 = vunpack.c.h.s8.bf16 %v1145
    %v1482 = vunpack.c.h.s8.bf16 %v1146
    %v1483 = vunpack.c.h.s8.bf16 %v1147
    %v1484 = vunpack.c.h.s8.bf16 %v1148
    %v1485 = vunpack.c.h.s8.bf16 %v1149
    %v1486 = vunpack.c.h.s8.bf16 %v1150
    %v1487 = vunpack.c.l.s8.bf16 %v1151
    %v1488 = vunpack.c.l.s8.bf16 %v1152
    %v1489 = vunpack.c.l.s8.bf16 %v1153
    %v1490 = vunpack.c.l.s8.bf16 %v1154
    %v1491 = vunpack.c.l.s8.bf16 %v1155
    %v1492 = vunpack.c.l.s8.bf16 %v1156
    %v1493 = vunpack.c.l.s8.bf16 %v1157
    %v1494 = vunpack.c.l.s8.bf16 %v1158
    %v1495 = vunpack.c.h.s8.bf16 %v1151
    %v1496 = vunpack.c.h.s8.bf16 %v1152
    %v1497 = vunpack.c.h.s8.bf16 %v1153
    %v1498 = vunpack.c.h.s8.bf16 %v1154
    %v1499 = vunpack.c.h.s8.bf16 %v1155
    %v1500 = vunpack.c.h.s8.bf16 %v1156
    %v1501 = vunpack.c.h.s8.bf16 %v1157
    %v1502 = vunpack.c.h.s8.bf16 %v1158
    %v1503 = vunpack.c.l.s8.bf16 %v1159
    %v1504 = vunpack.c.l.s8.bf16 %v1160
    %v1505 = vunpack.c.l.s8.bf16 %v1161
    %v1506 = vunpack.c.l.s8.bf16 %v1162
    %v1507 = vunpack.c.l.s8.bf16 %v1163
    %v1508 = vunpack.c.l.s8.bf16 %v1164
    %v1509 = vunpack.c.l.s8.bf16 %v1165
    %v1510 = vunpack.c.l.s8.bf16 %v1166
    %v1511 = vunpack.c.h.s8.bf16 %v1159
    %v1512 = vunpack.c.h.s8.bf16 %v1160
    %v1513 = vunpack.c.h.s8.bf16 %v1161
    %v1514 = vunpack.c.h.s8.bf16 %v1162
    %v1515 = vunpack.c.h.s8.bf16 %v1163
    %v1516 = vunpack.c.h.s8.bf16 %v1164
    %v1517 = vunpack.c.h.s8.bf16 %v1165
    %v1518 = vunpack.c.h.s8.bf16 %v1166
    %v1519 = vunpack.c.l.s8.bf16 %v1167
    %v1520 = vunpack.c.l.s8.bf16 %v1168
    %v1521 = vunpack.c.l.s8.bf16 %v1169
    %v1522 = vunpack.c.l.s8.bf16 %v1170
    %v1523 = vunpack.c.l.s8.bf16 %v1171
    %v1524 = vunpack.c.l.s8.bf16 %v1172
    %v1525 = vunpack.c.l.s8.bf16 %v1173
    %v1526 = vunpack.c.l.s8.bf16 %v1174
    %v1527 = vunpack.c.h.s8.bf16 %v1167
    %v1528 = vunpack.c.h.s8.bf16 %v1168
    %v1529 = vunpack.c.h.s8.bf16 %v1169
    %v1530 = vunpack.c.h.s8.bf16 %v1170
    %v1531 = vunpack.c.h.s8.bf16 %v1171
    %v1532 = vunpack.c.h.s8.bf16 %v1172
    %v1533 = vunpack.c.h.s8.bf16 %v1173
    %v1534 = vunpack.c.h.s8.bf16 %v1174
    %v1535 = vunpack.c.l.s8.bf16 %v1175
    %v1536 = vunpack.c.l.s8.bf16 %v1176
    %v1537 = vunpack.c.l.s8.bf16 %v1177
    %v1538 = vunpack.c.l.s8.bf16 %v1178
    %v1539 = vunpack.c.l.s8.bf16 %v1179
    %v1540 = vunpack.c.l.s8.bf16 %v1180
    %v1541 = vunpack.c.l.s8.bf16 %v1181
    %v1542 = vunpack.c.l.s8.bf16 %v1182
    %v1543 = vunpack.c.h.s8.bf16 %v1175
    %v1544 = vunpack.c.h.s8.bf16 %v1176
    %v1545 = vunpack.c.h.s8.bf16 %v1177
    %v1546 = vunpack.c.h.s8.bf16 %v1178
    %v1547 = vunpack.c.h.s8.bf16 %v1179
    %v1548 = vunpack.c.h.s8.bf16 %v1180
    %v1549 = vunpack.c.h.s8.bf16 %v1181
    %v1550 = vunpack.c.h.s8.bf16 %v1182
    %v1551 = vunpack.c.l.s8.bf16 %v1183
    %v1552 = vunpack.c.l.s8.bf16 %v1184
    %v1553 = vunpack.c.l.s8.bf16 %v1185
    %v1554 = vunpack.c.l.s8.bf16 %v1186
    %v1555 = vunpack.c.l.s8.bf16 %v1187
    %v1556 = vunpack.c.l.s8.bf16 %v1188
    %v1557 = vunpack.c.l.s8.bf16 %v1189
    %v1558 = vunpack.c.l.s8.bf16 %v1190
    %v1559 = vunpack.c.h.s8.bf16 %v1183
    %v1560 = vunpack.c.h.s8.bf16 %v1184
    %v1561 = vunpack.c.h.s8.bf16 %v1185
    %v1562 = vunpack.c.h.s8.bf16 %v1186
    %v1563 = vunpack.c.h.s8.bf16 %v1187
    %v1564 = vunpack.c.h.s8.bf16 %v1188
    %v1565 = vunpack.c.h.s8.bf16 %v1189
    %v1566 = vunpack.c.h.s8.bf16 %v1190
    %v1567 = vunpack.c.l.s8.bf16 %v1191
    %v1568 = vunpack.c.l.s8.bf16 %v1192
    %v1569 = vunpack.c.l.s8.bf16 %v1193
    %v1570 = vunpack.c.l.s8.bf16 %v1194
    %v1571 = vunpack.c.l.s8.bf16 %v1195
    %v1572 = vunpack.c.l.s8.bf16 %v1196
    %v1573 = vunpack.c.l.s8.bf16 %v1197
    %v1574 = vunpack.c.l.s8.bf16 %v1198
    %v1575 = vunpack.c.h.s8.bf16 %v1191
    %v1576 = vunpack.c.h.s8.bf16 %v1192
    %v1577 = vunpack.c.h.s8.bf16 %v1193
    %v1578 = vunpack.c.h.s8.bf16 %v1194
    %v1579 = vunpack.c.h.s8.bf16 %v1195
    %v1580 = vunpack.c.h.s8.bf16 %v1196
    %v1581 = vunpack.c.h.s8.bf16 %v1197
    %v1582 = vunpack.c.h.s8.bf16 %v1198
    %v1583 = vunpack.c.l.s8.bf16 %v1199
    %v1584 = vunpack.c.l.s8.bf16 %v1200
    %v1585 = vunpack.c.l.s8.bf16 %v1201
    %v1586 = vunpack.c.l.s8.bf16 %v1202
    %v1587 = vunpack.c.l.s8.bf16 %v1203
    %v1588 = vunpack.c.l.s8.bf16 %v1204
    %v1589 = vunpack.c.l.s8.bf16 %v1205
    %v1590 = vunpack.c.l.s8.bf16 %v1206
    %v1591 = vunpack.c.h.s8.bf16 %v1199
    %v1592 = vunpack.c.h.s8.bf16 %v1200
    %v1593 = vunpack.c.h.s8.bf16 %v1201
    %v1594 = vunpack.c.h.s8.bf16 %v1202
    %v1595 = vunpack.c.h.s8.bf16 %v1203
    %v1596 = vunpack.c.h.s8.bf16 %v1204
    %v1597 = vunpack.c.h.s8.bf16 %v1205
    %v1598 = vunpack.c.h.s8.bf16 %v1206
    %v1599 = vunpack.c.l.s8.bf16 %v1207
    %v1600 = vunpack.c.l.s8.bf16 %v1208
    %v1601 = vunpack.c.l.s8.bf16 %v1209
    %v1602 = vunpack.c.l.s8.bf16 %v1210
    %v1603 = vunpack.c.l.s8.bf16 %v1211
    %v1604 = vunpack.c.l.s8.bf16 %v1212
    %v1605 = vunpack.c.l.s8.bf16 %v1213
    %v1606 = vunpack.c.l.s8.bf16 %v1214
    %v1607 = vunpack.c.h.s8.bf16 %v1207
    %v1608 = vunpack.c.h.s8.bf16 %v1208
    %v1609 = vunpack.c.h.s8.bf16 %v1209
    %v1610 = vunpack.c.h.s8.bf16 %v1210
    %v1611 = vunpack.c.h.s8.bf16 %v1211
    %v1612 = vunpack.c.h.s8.bf16 %v1212
    %v1613 = vunpack.c.h.s8.bf16 %v1213
    %v1614 = vunpack.c.h.s8.bf16 %v1214
    %v1615 = vunpack.c.l.s8.bf16 %v1215
    %v1616 = vunpack.c.l.s8.bf16 %v1216
    %v1617 = vunpack.c.l.s8.bf16 %v1217
    %v1618 = vunpack.c.l.s8.bf16 %v1218
    %v1619 = vunpack.c.l.s8.bf16 %v1219
    %v1620 = vunpack.c.l.s8.bf16 %v1220
    %v1621 = vunpack.c.l.s8.bf16 %v1221
    %v1622 = vunpack.c.l.s8.bf16 %v1222
    %v1623 = vunpack.c.h.s8.bf16 %v1215
    %v1624 = vunpack.c.h.s8.bf16 %v1216
    %v1625 = vunpack.c.h.s8.bf16 %v1217
    %v1626 = vunpack.c.h.s8.bf16 %v1218
    %v1627 = vunpack.c.h.s8.bf16 %v1219
    %v1628 = vunpack.c.h.s8.bf16 %v1220
    %v1629 = vunpack.c.h.s8.bf16 %v1221
    %v1630 = vunpack.c.h.s8.bf16 %v1222
    %v1631 = vunpack.c.l.s8.bf16 %v1223
    %v1632 = vunpack.c.l.s8.bf16 %v1224
    %v1633 = vunpack.c.l.s8.bf16 %v1225
    %v1634 = vunpack.c.l.s8.bf16 %v1226
    %v1635 = vunpack.c.l.s8.bf16 %v1227
    %v1636 = vunpack.c.l.s8.bf16 %v1228
    %v1637 = vunpack.c.l.s8.bf16 %v1229
    %v1638 = vunpack.c.l.s8.bf16 %v1230
    %v1639 = vunpack.c.h.s8.bf16 %v1223
    %v1640 = vunpack.c.h.s8.bf16 %v1224
    %v1641 = vunpack.c.h.s8.bf16 %v1225
    %v1642 = vunpack.c.h.s8.bf16 %v1226
    %v1643 = vunpack.c.h.s8.bf16 %v1227
    %v1644 = vunpack.c.h.s8.bf16 %v1228
    %v1645 = vunpack.c.h.s8.bf16 %v1229
    %v1646 = vunpack.c.h.s8.bf16 %v1230
    %v1647 = vunpack.c.l.s8.bf16 %v1231
    %v1648 = vunpack.c.l.s8.bf16 %v1232
    %v1649 = vunpack.c.l.s8.bf16 %v1233
    %v1650 = vunpack.c.l.s8.bf16 %v1234
    %v1651 = vunpack.c.l.s8.bf16 %v1235
    %v1652 = vunpack.c.l.s8.bf16 %v1236
    %v1653 = vunpack.c.l.s8.bf16 %v1237
    %v1654 = vunpack.c.l.s8.bf16 %v1238
    %v1655 = vunpack.c.h.s8.bf16 %v1231
    %v1656 = vunpack.c.h.s8.bf16 %v1232
    %v1657 = vunpack.c.h.s8.bf16 %v1233
    %v1658 = vunpack.c.h.s8.bf16 %v1234
    %v1659 = vunpack.c.h.s8.bf16 %v1235
    %v1660 = vunpack.c.h.s8.bf16 %v1236
    %v1661 = vunpack.c.h.s8.bf16 %v1237
    %v1662 = vunpack.c.h.s8.bf16 %v1238
    %v1663 = vunpack.c.l.s8.bf16 %v1239
    %v1664 = vunpack.c.l.s8.bf16 %v1240
    %v1665 = vunpack.c.l.s8.bf16 %v1241
    %v1666 = vunpack.c.l.s8.bf16 %v1242
    %v1667 = vunpack.c.l.s8.bf16 %v1243
    %v1668 = vunpack.c.l.s8.bf16 %v1244
    %v1669 = vunpack.c.l.s8.bf16 %v1245
    %v1670 = vunpack.c.l.s8.bf16 %v1246
    %v1671 = vunpack.c.h.s8.bf16 %v1239
    %v1672 = vunpack.c.h.s8.bf16 %v1240
    %v1673 = vunpack.c.h.s8.bf16 %v1241
    %v1674 = vunpack.c.h.s8.bf16 %v1242
    %v1675 = vunpack.c.h.s8.bf16 %v1243
    %v1676 = vunpack.c.h.s8.bf16 %v1244
    %v1677 = vunpack.c.h.s8.bf16 %v1245
    %v1678 = vunpack.c.h.s8.bf16 %v1246
    %v1679 = vunpack.c.l.s8.bf16 %v1247
    %v1680 = vunpack.c.l.s8.bf16 %v1248
    %v1681 = vunpack.c.l.s8.bf16 %v1249
    %v1682 = vunpack.c.l.s8.bf16 %v1250
    %v1683 = vunpack.c.l.s8.bf16 %v1251
    %v1684 = vunpack.c.l.s8.bf16 %v1252
    %v1685 = vunpack.c.l.s8.bf16 %v1253
    %v1686 = vunpack.c.l.s8.bf16 %v1254
    %v1687 = vunpack.c.h.s8.bf16 %v1247
    %v1688 = vunpack.c.h.s8.bf16 %v1248
    %v1689 = vunpack.c.h.s8.bf16 %v1249
    %v1690 = vunpack.c.h.s8.bf16 %v1250
    %v1691 = vunpack.c.h.s8.bf16 %v1251
    %v1692 = vunpack.c.h.s8.bf16 %v1252
    %v1693 = vunpack.c.h.s8.bf16 %v1253
    %v1694 = vunpack.c.h.s8.bf16 %v1254
    %v1695 = vunpack.c.l.s8.bf16 %v1255
    %v1696 = vunpack.c.l.s8.bf16 %v1256
    %v1697 = vunpack.c.l.s8.bf16 %v1257
    %v1698 = vunpack.c.l.s8.bf16 %v1258
    %v1699 = vunpack.c.l.s8.bf16 %v1259
    %v1700 = vunpack.c.l.s8.bf16 %v1260
    %v1701 = vunpack.c.l.s8.bf16 %v1261
    %v1702 = vunpack.c.l.s8.bf16 %v1262
    %v1703 = vunpack.c.h.s8.bf16 %v1255
    %v1704 = vunpack.c.h.s8.bf16 %v1256
    %v1705 = vunpack.c.h.s8.bf16 %v1257
    %v1706 = vunpack.c.h.s8.bf16 %v1258
    %v1707 = vunpack.c.h.s8.bf16 %v1259
    %v1708 = vunpack.c.h.s8.bf16 %v1260
    %v1709 = vunpack.c.h.s8.bf16 %v1261
    %v1710 = vunpack.c.h.s8.bf16 %v1262
    %v1711 = vunpack.c.l.s8.bf16 %v1263
    %v1712 = vunpack.c.l.s8.bf16 %v1264
    %v1713 = vunpack.c.l.s8.bf16 %v1265
    %v1714 = vunpack.c.l.s8.bf16 %v1266
    %v1715 = vunpack.c.l.s8.bf16 %v1267
    %v1716 = vunpack.c.l.s8.bf16 %v1268
    %v1717 = vunpack.c.l.s8.bf16 %v1269
    %v1718 = vunpack.c.l.s8.bf16 %v1270
    %v1719 = vunpack.c.h.s8.bf16 %v1263
    %v1720 = vunpack.c.h.s8.bf16 %v1264
    %v1721 = vunpack.c.h.s8.bf16 %v1265
    %v1722 = vunpack.c.h.s8.bf16 %v1266
    %v1723 = vunpack.c.h.s8.bf16 %v1267
    %v1724 = vunpack.c.h.s8.bf16 %v1268
    %v1725 = vunpack.c.h.s8.bf16 %v1269
    %v1726 = vunpack.c.h.s8.bf16 %v1270
    %v1727 = vunpack.c.l.s8.bf16 %v1271
    %v1728 = vunpack.c.l.s8.bf16 %v1272
    %v1729 = vunpack.c.l.s8.bf16 %v1273
    %v1730 = vunpack.c.l.s8.bf16 %v1274
    %v1731 = vunpack.c.l.s8.bf16 %v1275
    %v1732 = vunpack.c.l.s8.bf16 %v1276
    %v1733 = vunpack.c.l.s8.bf16 %v1277
    %v1734 = vunpack.c.l.s8.bf16 %v1278
    %v1735 = vunpack.c.h.s8.bf16 %v1271
    %v1736 = vunpack.c.h.s8.bf16 %v1272
    %v1737 = vunpack.c.h.s8.bf16 %v1273
    %v1738 = vunpack.c.h.s8.bf16 %v1274
    %v1739 = vunpack.c.h.s8.bf16 %v1275
    %v1740 = vunpack.c.h.s8.bf16 %v1276
    %v1741 = vunpack.c.h.s8.bf16 %v1277
    %v1742 = vunpack.c.h.s8.bf16 %v1278
    %v1743 = vunpack.c.l.s8.bf16 %v1279
    %v1744 = vunpack.c.l.s8.bf16 %v1280
    %v1745 = vunpack.c.l.s8.bf16 %v1281
    %v1746 = vunpack.c.l.s8.bf16 %v1282
    %v1747 = vunpack.c.l.s8.bf16 %v1283
    %v1748 = vunpack.c.l.s8.bf16 %v1284
    %v1749 = vunpack.c.l.s8.bf16 %v1285
    %v1750 = vunpack.c.l.s8.bf16 %v1286
    %v1751 = vunpack.c.h.s8.bf16 %v1279
    %v1752 = vunpack.c.h.s8.bf16 %v1280
    %v1753 = vunpack.c.h.s8.bf16 %v1281
    %v1754 = vunpack.c.h.s8.bf16 %v1282
    %v1755 = vunpack.c.h.s8.bf16 %v1283
    %v1756 = vunpack.c.h.s8.bf16 %v1284
    %v1757 = vunpack.c.h.s8.bf16 %v1285
    %v1758 = vunpack.c.h.s8.bf16 %v1286
    %v1759 = vunpack.c.l.s8.bf16 %v1287
    %v1760 = vunpack.c.l.s8.bf16 %v1288
    %v1761 = vunpack.c.l.s8.bf16 %v1289
    %v1762 = vunpack.c.l.s8.bf16 %v1290
    %v1763 = vunpack.c.l.s8.bf16 %v1291
    %v1764 = vunpack.c.l.s8.bf16 %v1292
    %v1765 = vunpack.c.l.s8.bf16 %v1293
    %v1766 = vunpack.c.l.s8.bf16 %v1294
    %v1767 = vunpack.c.h.s8.bf16 %v1287
    %v1768 = vunpack.c.h.s8.bf16 %v1288
    %v1769 = vunpack.c.h.s8.bf16 %v1289
    %v1770 = vunpack.c.h.s8.bf16 %v1290
    %v1771 = vunpack.c.h.s8.bf16 %v1291
    %v1772 = vunpack.c.h.s8.bf16 %v1292
    %v1773 = vunpack.c.h.s8.bf16 %v1293
    %v1774 = vunpack.c.h.s8.bf16 %v1294
    %v1775 = vunpack.c.l.s8.bf16 %v1295
    %v1776 = vunpack.c.l.s8.bf16 %v1296
    %v1777 = vunpack.c.l.s8.bf16 %v1297
    %v1778 = vunpack.c.l.s8.bf16 %v1298
    %v1779 = vunpack.c.l.s8.bf16 %v1299
    %v1780 = vunpack.c.l.s8.bf16 %v1300
    %v1781 = vunpack.c.l.s8.bf16 %v1301
    %v1782 = vunpack.c.l.s8.bf16 %v1302
    %v1783 = vunpack.c.h.s8.bf16 %v1295
    %v1784 = vunpack.c.h.s8.bf16 %v1296
    %v1785 = vunpack.c.h.s8.bf16 %v1297
    %v1786 = vunpack.c.h.s8.bf16 %v1298
    %v1787 = vunpack.c.h.s8.bf16 %v1299
    %v1788 = vunpack.c.h.s8.bf16 %v1300
    %v1789 = vunpack.c.h.s8.bf16 %v1301
    %v1790 = vunpack.c.h.s8.bf16 %v1302
    %v1791 = vunpack.c.l.s8.bf16 %v1303
    %v1792 = vunpack.c.l.s8.bf16 %v1304
    %v1793 = vunpack.c.l.s8.bf16 %v1305
    %v1794 = vunpack.c.l.s8.bf16 %v1306
    %v1795 = vunpack.c.l.s8.bf16 %v1307
    %v1796 = vunpack.c.l.s8.bf16 %v1308
    %v1797 = vunpack.c.l.s8.bf16 %v1309
    %v1798 = vunpack.c.l.s8.bf16 %v1310
    %v1799 = vunpack.c.h.s8.bf16 %v1303
    %v1800 = vunpack.c.h.s8.bf16 %v1304
    %v1801 = vunpack.c.h.s8.bf16 %v1305
    %v1802 = vunpack.c.h.s8.bf16 %v1306
    %v1803 = vunpack.c.h.s8.bf16 %v1307
    %v1804 = vunpack.c.h.s8.bf16 %v1308
    %v1805 = vunpack.c.h.s8.bf16 %v1309
    %v1806 = vunpack.c.h.s8.bf16 %v1310
    %v1807 = vunpack.c.l.s8.bf16 %v1311
    %v1808 = vunpack.c.l.s8.bf16 %v1312
    %v1809 = vunpack.c.l.s8.bf16 %v1313
    %v1810 = vunpack.c.l.s8.bf16 %v1314
    %v1811 = vunpack.c.l.s8.bf16 %v1315
    %v1812 = vunpack.c.l.s8.bf16 %v1316
    %v1813 = vunpack.c.l.s8.bf16 %v1317
    %v1814 = vunpack.c.l.s8.bf16 %v1318
    %v1815 = vunpack.c.h.s8.bf16 %v1311
    %v1816 = vunpack.c.h.s8.bf16 %v1312
    %v1817 = vunpack.c.h.s8.bf16 %v1313
    %v1818 = vunpack.c.h.s8.bf16 %v1314
    %v1819 = vunpack.c.h.s8.bf16 %v1315
    %v1820 = vunpack.c.h.s8.bf16 %v1316
    %v1821 = vunpack.c.h.s8.bf16 %v1317
    %v1822 = vunpack.c.h.s8.bf16 %v1318
    %v1823 = vunpack.c.l.s8.bf16 %v1319
    %v1824 = vunpack.c.l.s8.bf16 %v1320
    %v1825 = vunpack.c.l.s8.bf16 %v1321
    %v1826 = vunpack.c.l.s8.bf16 %v1322
    %v1827 = vunpack.c.l.s8.bf16 %v1323
    %v1828 = vunpack.c.l.s8.bf16 %v1324
    %v1829 = vunpack.c.l.s8.bf16 %v1325
    %v1830 = vunpack.c.l.s8.bf16 %v1326
    %v1831 = vunpack.c.h.s8.bf16 %v1319
    %v1832 = vunpack.c.h.s8.bf16 %v1320
    %v1833 = vunpack.c.h.s8.bf16 %v1321
    %v1834 = vunpack.c.h.s8.bf16 %v1322
    %v1835 = vunpack.c.h.s8.bf16 %v1323
    %v1836 = vunpack.c.h.s8.bf16 %v1324
    %v1837 = vunpack.c.h.s8.bf16 %v1325
    %v1838 = vunpack.c.h.s8.bf16 %v1326
    %v1839 = vpack.c.bf16 %v962, %v962
    %v1840 = vpack.c.bf16 %v963, %v963
    %v1841 = vpack.c.bf16 %v964, %v964
    %v1842 = vpack.c.bf16 %v965, %v965
    %v1843 = vpack.c.bf16 %v966, %v966
    %v1844 = vpack.c.bf16 %v967, %v967
    %v1845 = vpack.c.bf16 %v968, %v968
    %v1846 = vpack.c.bf16 %v969, %v969
    %1847 = vmatprep.subr.bf16.mxu0 %v1328
    %1848 = vmatpush1.bf16.msra.mxu0 %v1327
    %1849 = vmatprep.subr.bf16.mxu0 %v1336
    %1850 = vmatpush1.bf16.msra.mxu0 %v1335
    %1851 = vmatprep.subr.bf16.mxu0 %v1344
    %1852 = vmatpush1.bf16.msra.mxu0 %v1343
    %1853 = vmatprep.subr.bf16.mxu0 %v1352
    %1854 = vmatpush1.bf16.msra.mxu0 %v1351
    %1855 = vmatprep.subr.bf16.mxu0 %v1360
    %1856 = vmatpush1.bf16.msra.mxu0 %v1359
    %1857 = vmatprep.subr.bf16.mxu0 %v1368
    %1858 = vmatpush1.bf16.msra.mxu0 %v1367
    %1859 = vmatprep.subr.bf16.mxu0 %v1376
    %1860 = vmatpush1.bf16.msra.mxu0 %v1375
    %1861 = vmatprep.subr.bf16.mxu0 %v1384
    %1862 = vmatpush1.bf16.msra.mxu0 %v1383
    %1863 = vmatprep.subr.bf16.mxu0 %v1392
    %1864 = vmatpush1.bf16.msra.mxu0 %v1391
    %1865 = vmatprep.subr.bf16.mxu0 %v1400
    %1866 = vmatpush1.bf16.msra.mxu0 %v1399
    %1867 = vmatprep.subr.bf16.mxu0 %v1408
    %1868 = vmatpush1.bf16.msra.mxu0 %v1407
    %1869 = vmatprep.subr.bf16.mxu0 %v1416
    %1870 = vmatpush1.bf16.msra.mxu0 %v1415
    %1871 = vmatprep.subr.bf16.mxu0 %v1424
    %1872 = vmatpush1.bf16.msra.mxu0 %v1423
    %1873 = vmatprep.subr.bf16.mxu0 %v1432
    %1874 = vmatpush1.bf16.msra.mxu0 %v1431
    %1875 = vmatprep.subr.bf16.mxu0 %v1440
    %1876 = vmatpush1.bf16.msra.mxu0 %v1439
    %1877 = vmatprep.subr.bf16.mxu0 %v1448
    %1878 = vmatpush1.bf16.msra.mxu0 %v1447
    %1879 = vmatprep.mubr.bf16.mxu0 %v1840
    %1880 = vmatmul.mubr.bf16.gmra.mrb[0].mxu0 %v1839
    %v1881 = vpop.f32.mrb[0].mxu0
    %v1882 = vadd.f32 0.0, %v1881
    %v1883 = vpop.f32.mrb[0].mxu0
    %v1884 = vadd.f32 0.0, %v1883
    %v1885 = vpop.f32.mrb[0].mxu0
    %v1886 = vpop.f32.mrb[0].mxu0
    %1887 = vdwg.mxu0
    %1888 = vmatprep.subr.bf16.mxu0 %v1456
    %1889 = vmatpush1.bf16.msra.mxu0 %v1455
    %1890 = vmatprep.subr.bf16.mxu0 %v1464
    %1891 = vmatpush1.bf16.msra.mxu0 %v1463
    %1892 = vmatprep.subr.bf16.mxu0 %v1472
    %1893 = vmatpush1.bf16.msra.mxu0 %v1471
    %1894 = vmatprep.subr.bf16.mxu0 %v1480
    %1895 = vmatpush1.bf16.msra.mxu0 %v1479
    %1896 = vmatprep.subr.bf16.mxu0 %v1488
    %1897 = vmatpush1.bf16.msra.mxu0 %v1487
    %1898 = vmatprep.subr.bf16.mxu0 %v1496
    %1899 = vmatpush1.bf16.msra.mxu0 %v1495
    %1900 = vmatprep.subr.bf16.mxu0 %v1504
    %1901 = vmatpush1.bf16.msra.mxu0 %v1503
    %1902 = vmatprep.subr.bf16.mxu0 %v1512
    %1903 = vmatpush1.bf16.msra.mxu0 %v1511
    %1904 = vmatprep.subr.bf16.mxu0 %v1520
    %1905 = vmatpush1.bf16.msra.mxu0 %v1519
    %1906 = vmatprep.subr.bf16.mxu0 %v1528
    %1907 = vmatpush1.bf16.msra.mxu0 %v1527
    %1908 = vmatprep.subr.bf16.mxu0 %v1536
    %1909 = vmatpush1.bf16.msra.mxu0 %v1535
    %1910 = vmatprep.subr.bf16.mxu0 %v1544
    %1911 = vmatpush1.bf16.msra.mxu0 %v1543
    %1912 = vmatprep.subr.bf16.mxu0 %v1552
    %1913 = vmatpush1.bf16.msra.mxu0 %v1551
    %1914 = vmatprep.subr.bf16.mxu0 %v1560
    %1915 = vmatpush1.bf16.msra.mxu0 %v1559
    %1916 = vmatprep.subr.bf16.mxu0 %v1568
    %1917 = vmatpush1.bf16.msra.mxu0 %v1567
    %1918 = vmatprep.subr.bf16.mxu0 %v1576
    %1919 = vmatpush1.bf16.msra.mxu0 %v1575
    %1920 = vmatprep.mubr.bf16.mxu0 %v1842
    %1921 = vmatmul.mubr.bf16.gmra.mrb[0].mxu0 %v1841
    %v1922 = vpop.f32.mrb[0].mxu0
    %v1923 = vadd.f32 %v1882, %v1922
    %v1924 = vpop.f32.mrb[0].mxu0
    %v1925 = vadd.f32 %v1884, %v1924
    %v1926 = vpop.f32.mrb[0].mxu0
    %v1927 = vpop.f32.mrb[0].mxu0
    %1928 = vdwg.mxu0
    %1929 = vmatprep.subr.bf16.mxu0 %v1584
    %1930 = vmatpush1.bf16.msra.mxu0 %v1583
    %1931 = vmatprep.subr.bf16.mxu0 %v1592
    %1932 = vmatpush1.bf16.msra.mxu0 %v1591
    %1933 = vmatprep.subr.bf16.mxu0 %v1600
    %1934 = vmatpush1.bf16.msra.mxu0 %v1599
    %1935 = vmatprep.subr.bf16.mxu0 %v1608
    %1936 = vmatpush1.bf16.msra.mxu0 %v1607
    %1937 = vmatprep.subr.bf16.mxu0 %v1616
    %1938 = vmatpush1.bf16.msra.mxu0 %v1615
    %1939 = vmatprep.subr.bf16.mxu0 %v1624
    %1940 = vmatpush1.bf16.msra.mxu0 %v1623
    %1941 = vmatprep.subr.bf16.mxu0 %v1632
    %1942 = vmatpush1.bf16.msra.mxu0 %v1631
    %1943 = vmatprep.subr.bf16.mxu0 %v1640
    %1944 = vmatpush1.bf16.msra.mxu0 %v1639
    %1945 = vmatprep.subr.bf16.mxu0 %v1648
    %1946 = vmatpush1.bf16.msra.mxu0 %v1647
    %1947 = vmatprep.subr.bf16.mxu0 %v1656
    %1948 = vmatpush1.bf16.msra.mxu0 %v1655
    %1949 = vmatprep.subr.bf16.mxu0 %v1664
    %1950 = vmatpush1.bf16.msra.mxu0 %v1663
    %1951 = vmatprep.subr.bf16.mxu0 %v1672
    %1952 = vmatpush1.bf16.msra.mxu0 %v1671
    %1953 = vmatprep.subr.bf16.mxu0 %v1680
    %1954 = vmatpush1.bf16.msra.mxu0 %v1679
    %1955 = vmatprep.subr.bf16.mxu0 %v1688
    %1956 = vmatpush1.bf16.msra.mxu0 %v1687
    %1957 = vmatprep.subr.bf16.mxu0 %v1696
    %1958 = vmatpush1.bf16.msra.mxu0 %v1695
    %1959 = vmatprep.subr.bf16.mxu0 %v1704
    %1960 = vmatpush1.bf16.msra.mxu0 %v1703
    %1961 = vmatprep.mubr.bf16.mxu0 %v1844
    %1962 = vmatmul.mubr.bf16.gmra.mrb[0].mxu0 %v1843
    %v1963 = vpop.f32.mrb[0].mxu0
    %v1964 = vadd.f32 %v1923, %v1963
    %v1965 = vpop.f32.mrb[0].mxu0
    %v1966 = vadd.f32 %v1925, %v1965
    %v1967 = vpop.f32.mrb[0].mxu0
    %v1968 = vpop.f32.mrb[0].mxu0
    %1969 = vdwg.mxu0
    %1970 = vmatprep.subr.bf16.mxu0 %v1712
    %1971 = vmatpush1.bf16.msra.mxu0 %v1711
    %1972 = vmatprep.subr.bf16.mxu0 %v1720
    %1973 = vmatpush1.bf16.msra.mxu0 %v1719
    %1974 = vmatprep.subr.bf16.mxu0 %v1728
    %1975 = vmatpush1.bf16.msra.mxu0 %v1727
    %1976 = vmatprep.subr.bf16.mxu0 %v1736
    %1977 = vmatpush1.bf16.msra.mxu0 %v1735
    %1978 = vmatprep.subr.bf16.mxu0 %v1744
    %1979 = vmatpush1.bf16.msra.mxu0 %v1743
    %1980 = vmatprep.subr.bf16.mxu0 %v1752
    %1981 = vmatpush1.bf16.msra.mxu0 %v1751
    %1982 = vmatprep.subr.bf16.mxu0 %v1760
    %1983 = vmatpush1.bf16.msra.mxu0 %v1759
    %1984 = vmatprep.subr.bf16.mxu0 %v1768
    %1985 = vmatpush1.bf16.msra.mxu0 %v1767
    %1986 = vmatprep.subr.bf16.mxu0 %v1776
    %1987 = vmatpush1.bf16.msra.mxu0 %v1775
    %1988 = vmatprep.subr.bf16.mxu0 %v1784
    %1989 = vmatpush1.bf16.msra.mxu0 %v1783
    %1990 = vmatprep.subr.bf16.mxu0 %v1792
    %1991 = vmatpush1.bf16.msra.mxu0 %v1791
    %1992 = vmatprep.subr.bf16.mxu0 %v1800
    %1993 = vmatpush1.bf16.msra.mxu0 %v1799
    %1994 = vmatprep.subr.bf16.mxu0 %v1808
    %1995 = vmatpush1.bf16.msra.mxu0 %v1807
    %1996 = vmatprep.subr.bf16.mxu0 %v1816
    %1997 = vmatpush1.bf16.msra.mxu0 %v1815
    %1998 = vmatprep.subr.bf16.mxu0 %v1824
    %1999 = vmatpush1.bf16.msra.mxu0 %v1823
    %2000 = vmatprep.subr.bf16.mxu0 %v1832
    %2001 = vmatpush1.bf16.msra.mxu0 %v1831
    %2002 = vmatprep.mubr.bf16.mxu0 %v1846
    %2003 = vmatmul.mubr.bf16.gmra.mrb[0].mxu0 %v1845
    %v2004 = vpop.f32.mrb[0].mxu0
    %v2005 = vadd.f32 %v1964, %v2004
    %v2006 = vpop.f32.mrb[0].mxu0
    %v2007 = vadd.f32 %v1966, %v2006
    %v2008 = vpop.f32.mrb[0].mxu0
    %v2009 = vpop.f32.mrb[0].mxu0
    %2010 = vdwg.mxu0
    %2011 = vmatprep.subr.bf16.mxu0 %v1330
    %2012 = vmatpush1.bf16.msra.mxu0 %v1329
    %2013 = vmatprep.subr.bf16.mxu0 %v1338
    %2014 = vmatpush1.bf16.msra.mxu0 %v1337
    %2015 = vmatprep.subr.bf16.mxu0 %v1346
    %2016 = vmatpush1.bf16.msra.mxu0 %v1345
    %2017 = vmatprep.subr.bf16.mxu0 %v1354
    %2018 = vmatpush1.bf16.msra.mxu0 %v1353
    %2019 = vmatprep.subr.bf16.mxu0 %v1362
    %2020 = vmatpush1.bf16.msra.mxu0 %v1361
    %2021 = vmatprep.subr.bf16.mxu0 %v1370
    %2022 = vmatpush1.bf16.msra.mxu0 %v1369
    %2023 = vmatprep.subr.bf16.mxu0 %v1378
    %2024 = vmatpush1.bf16.msra.mxu0 %v1377
    %2025 = vmatprep.subr.bf16.mxu0 %v1386
    %2026 = vmatpush1.bf16.msra.mxu0 %v1385
    %2027 = vmatprep.subr.bf16.mxu0 %v1394
    %2028 = vmatpush1.bf16.msra.mxu0 %v1393
    %2029 = vmatprep.subr.bf16.mxu0 %v1402
    %2030 = vmatpush1.bf16.msra.mxu0 %v1401
    %2031 = vmatprep.subr.bf16.mxu0 %v1410
    %2032 = vmatpush1.bf16.msra.mxu0 %v1409
    %2033 = vmatprep.subr.bf16.mxu0 %v1418
    %2034 = vmatpush1.bf16.msra.mxu0 %v1417
    %2035 = vmatprep.subr.bf16.mxu0 %v1426
    %2036 = vmatpush1.bf16.msra.mxu0 %v1425
    %2037 = vmatprep.subr.bf16.mxu0 %v1434
    %2038 = vmatpush1.bf16.msra.mxu0 %v1433
    %2039 = vmatprep.subr.bf16.mxu0 %v1442
    %2040 = vmatpush1.bf16.msra.mxu0 %v1441
    %2041 = vmatprep.subr.bf16.mxu0 %v1450
    %2042 = vmatpush1.bf16.msra.mxu0 %v1449
    %2043 = vmatprep.mubr.bf16.mxu0 %v1840
    %2044 = vmatmul.mubr.bf16.gmra.mrb[0].mxu0 %v1839
    %v2045 = vpop.f32.mrb[0].mxu0
    %v2046 = vadd.f32 0.0, %v2045
    %v2047 = vpop.f32.mrb[0].mxu0
    %v2048 = vadd.f32 0.0, %v2047
    %v2049 = vpop.f32.mrb[0].mxu0
    %v2050 = vpop.f32.mrb[0].mxu0
    %2051 = vdwg.mxu0
    %2052 = vmatprep.subr.bf16.mxu0 %v1458
    %2053 = vmatpush1.bf16.msra.mxu0 %v1457
    %2054 = vmatprep.subr.bf16.mxu0 %v1466
    %2055 = vmatpush1.bf16.msra.mxu0 %v1465
    %2056 = vmatprep.subr.bf16.mxu0 %v1474
    %2057 = vmatpush1.bf16.msra.mxu0 %v1473
    %2058 = vmatprep.subr.bf16.mxu0 %v1482
    %2059 = vmatpush1.bf16.msra.mxu0 %v1481
    %2060 = vmatprep.subr.bf16.mxu0 %v1490
    %2061 = vmatpush1.bf16.msra.mxu0 %v1489
    %2062 = vmatprep.subr.bf16.mxu0 %v1498
    %2063 = vmatpush1.bf16.msra.mxu0 %v1497
    %2064 = vmatprep.subr.bf16.mxu0 %v1506
    %2065 = vmatpush1.bf16.msra.mxu0 %v1505
    %2066 = vmatprep.subr.bf16.mxu0 %v1514
    %2067 = vmatpush1.bf16.msra.mxu0 %v1513
    %2068 = vmatprep.subr.bf16.mxu0 %v1522
    %2069 = vmatpush1.bf16.msra.mxu0 %v1521
    %2070 = vmatprep.subr.bf16.mxu0 %v1530
    %2071 = vmatpush1.bf16.msra.mxu0 %v1529
    %2072 = vmatprep.subr.bf16.mxu0 %v1538
    %2073 = vmatpush1.bf16.msra.mxu0 %v1537
    %2074 = vmatprep.subr.bf16.mxu0 %v1546
    %2075 = vmatpush1.bf16.msra.mxu0 %v1545
    %2076 = vmatprep.subr.bf16.mxu0 %v1554
    %2077 = vmatpush1.bf16.msra.mxu0 %v1553
    %2078 = vmatprep.subr.bf16.mxu0 %v1562
    %2079 = vmatpush1.bf16.msra.mxu0 %v1561
    %2080 = vmatprep.subr.bf16.mxu0 %v1570
    %2081 = vmatpush1.bf16.msra.mxu0 %v1569
    %2082 = vmatprep.subr.bf16.mxu0 %v1578
    %2083 = vmatpush1.bf16.msra.mxu0 %v1577
    %2084 = vmatprep.mubr.bf16.mxu0 %v1842
    %2085 = vmatmul.mubr.bf16.gmra.mrb[0].mxu0 %v1841
    %v2086 = vpop.f32.mrb[0].mxu0
    %v2087 = vadd.f32 %v2046, %v2086
    %v2088 = vpop.f32.mrb[0].mxu0
    %v2089 = vadd.f32 %v2048, %v2088
    %v2090 = vpop.f32.mrb[0].mxu0
    %v2091 = vpop.f32.mrb[0].mxu0
    %2092 = vdwg.mxu0
    %2093 = vmatprep.subr.bf16.mxu0 %v1586
    %2094 = vmatpush1.bf16.msra.mxu0 %v1585
    %2095 = vmatprep.subr.bf16.mxu0 %v1594
    %2096 = vmatpush1.bf16.msra.mxu0 %v1593
    %2097 = vmatprep.subr.bf16.mxu0 %v1602
    %2098 = vmatpush1.bf16.msra.mxu0 %v1601
    %2099 = vmatprep.subr.bf16.mxu0 %v1610
    %2100 = vmatpush1.bf16.msra.mxu0 %v1609
    %2101 = vmatprep.subr.bf16.mxu0 %v1618
    %2102 = vmatpush1.bf16.msra.mxu0 %v1617
    %2103 = vmatprep.subr.bf16.mxu0 %v1626
    %2104 = vmatpush1.bf16.msra.mxu0 %v1625
    %2105 = vmatprep.subr.bf16.mxu0 %v1634
    %2106 = vmatpush1.bf16.msra.mxu0 %v1633
    %2107 = vmatprep.subr.bf16.mxu0 %v1642
    %2108 = vmatpush1.bf16.msra.mxu0 %v1641
    %2109 = vmatprep.subr.bf16.mxu0 %v1650
    %2110 = vmatpush1.bf16.msra.mxu0 %v1649
    %2111 = vmatprep.subr.bf16.mxu0 %v1658
    %2112 = vmatpush1.bf16.msra.mxu0 %v1657
    %2113 = vmatprep.subr.bf16.mxu0 %v1666
    %2114 = vmatpush1.bf16.msra.mxu0 %v1665
    %2115 = vmatprep.subr.bf16.mxu0 %v1674
    %2116 = vmatpush1.bf16.msra.mxu0 %v1673
    %2117 = vmatprep.subr.bf16.mxu0 %v1682
    %2118 = vmatpush1.bf16.msra.mxu0 %v1681
    %2119 = vmatprep.subr.bf16.mxu0 %v1690
    %2120 = vmatpush1.bf16.msra.mxu0 %v1689
    %2121 = vmatprep.subr.bf16.mxu0 %v1698
    %2122 = vmatpush1.bf16.msra.mxu0 %v1697
    %2123 = vmatprep.subr.bf16.mxu0 %v1706
    %2124 = vmatpush1.bf16.msra.mxu0 %v1705
    %2125 = vmatprep.mubr.bf16.mxu0 %v1844
    %2126 = vmatmul.mubr.bf16.gmra.mrb[0].mxu0 %v1843
    %v2127 = vpop.f32.mrb[0].mxu0
    %v2128 = vadd.f32 %v2087, %v2127
    %v2129 = vpop.f32.mrb[0].mxu0
    %v2130 = vadd.f32 %v2089, %v2129
    %v2131 = vpop.f32.mrb[0].mxu0
    %v2132 = vpop.f32.mrb[0].mxu0
    %2133 = vdwg.mxu0
    %2134 = vmatprep.subr.bf16.mxu0 %v1714
    %2135 = vmatpush1.bf16.msra.mxu0 %v1713
    %2136 = vmatprep.subr.bf16.mxu0 %v1722
    %2137 = vmatpush1.bf16.msra.mxu0 %v1721
    %2138 = vmatprep.subr.bf16.mxu0 %v1730
    %2139 = vmatpush1.bf16.msra.mxu0 %v1729
    %2140 = vmatprep.subr.bf16.mxu0 %v1738
    %2141 = vmatpush1.bf16.msra.mxu0 %v1737
    %2142 = vmatprep.subr.bf16.mxu0 %v1746
    %2143 = vmatpush1.bf16.msra.mxu0 %v1745
    %2144 = vmatprep.subr.bf16.mxu0 %v1754
    %2145 = vmatpush1.bf16.msra.mxu0 %v1753
    %2146 = vmatprep.subr.bf16.mxu0 %v1762
    %2147 = vmatpush1.bf16.msra.mxu0 %v1761
    %2148 = vmatprep.subr.bf16.mxu0 %v1770
    %2149 = vmatpush1.bf16.msra.mxu0 %v1769
    %2150 = vmatprep.subr.bf16.mxu0 %v1778
    %2151 = vmatpush1.bf16.msra.mxu0 %v1777
    %2152 = vmatprep.subr.bf16.mxu0 %v1786
    %2153 = vmatpush1.bf16.msra.mxu0 %v1785
    %2154 = vmatprep.subr.bf16.mxu0 %v1794
    %2155 = vmatpush1.bf16.msra.mxu0 %v1793
    %2156 = vmatprep.subr.bf16.mxu0 %v1802
    %2157 = vmatpush1.bf16.msra.mxu0 %v1801
    %2158 = vmatprep.subr.bf16.mxu0 %v1810
    %2159 = vmatpush1.bf16.msra.mxu0 %v1809
    %2160 = vmatprep.subr.bf16.mxu0 %v1818
    %2161 = vmatpush1.bf16.msra.mxu0 %v1817
    %2162 = vmatprep.subr.bf16.mxu0 %v1826
    %2163 = vmatpush1.bf16.msra.mxu0 %v1825
    %2164 = vmatprep.subr.bf16.mxu0 %v1834
    %2165 = vmatpush1.bf16.msra.mxu0 %v1833
    %2166 = vmatprep.mubr.bf16.mxu0 %v1846
    %2167 = vmatmul.mubr.bf16.gmra.mrb[0].mxu0 %v1845
    %v2168 = vpop.f32.mrb[0].mxu0
    %v2169 = vadd.f32 %v2128, %v2168
    %v2170 = vpop.f32.mrb[0].mxu0
    %v2171 = vadd.f32 %v2130, %v2170
    %v2172 = vpop.f32.mrb[0].mxu0
    %v2173 = vpop.f32.mrb[0].mxu0
    %2174 = vdwg.mxu0
    %2175 = vmatprep.subr.bf16.mxu0 %v1332
    %2176 = vmatpush1.bf16.msra.mxu0 %v1331
    %2177 = vmatprep.subr.bf16.mxu0 %v1340
    %2178 = vmatpush1.bf16.msra.mxu0 %v1339
    %2179 = vmatprep.subr.bf16.mxu0 %v1348
    %2180 = vmatpush1.bf16.msra.mxu0 %v1347
    %2181 = vmatprep.subr.bf16.mxu0 %v1356
    %2182 = vmatpush1.bf16.msra.mxu0 %v1355
    %2183 = vmatprep.subr.bf16.mxu0 %v1364
    %2184 = vmatpush1.bf16.msra.mxu0 %v1363
    %2185 = vmatprep.subr.bf16.mxu0 %v1372
    %2186 = vmatpush1.bf16.msra.mxu0 %v1371
    %2187 = vmatprep.subr.bf16.mxu0 %v1380
    %2188 = vmatpush1.bf16.msra.mxu0 %v1379
    %2189 = vmatprep.subr.bf16.mxu0 %v1388
    %2190 = vmatpush1.bf16.msra.mxu0 %v1387
    %2191 = vmatprep.subr.bf16.mxu0 %v1396
    %2192 = vmatpush1.bf16.msra.mxu0 %v1395
    %2193 = vmatprep.subr.bf16.mxu0 %v1404
    %2194 = vmatpush1.bf16.msra.mxu0 %v1403
    %2195 = vmatprep.subr.bf16.mxu0 %v1412
    %2196 = vmatpush1.bf16.msra.mxu0 %v1411
    %2197 = vmatprep.subr.bf16.mxu0 %v1420
    %2198 = vmatpush1.bf16.msra.mxu0 %v1419
    %2199 = vmatprep.subr.bf16.mxu0 %v1428
    %2200 = vmatpush1.bf16.msra.mxu0 %v1427
    %2201 = vmatprep.subr.bf16.mxu0 %v1436
    %2202 = vmatpush1.bf16.msra.mxu0 %v1435
    %2203 = vmatprep.subr.bf16.mxu0 %v1444
    %2204 = vmatpush1.bf16.msra.mxu0 %v1443
    %2205 = vmatprep.subr.bf16.mxu0 %v1452
    %2206 = vmatpush1.bf16.msra.mxu0 %v1451
    %2207 = vmatprep.mubr.bf16.mxu0 %v1840
    %2208 = vmatmul.mubr.bf16.gmra.mrb[0].mxu0 %v1839
    %v2209 = vpop.f32.mrb[0].mxu0
    %v2210 = vadd.f32 0.0, %v2209
    %v2211 = vpop.f32.mrb[0].mxu0
    %v2212 = vadd.f32 0.0, %v2211
    %v2213 = vpop.f32.mrb[0].mxu0
    %v2214 = vpop.f32.mrb[0].mxu0
    %2215 = vdwg.mxu0
    %2216 = vmatprep.subr.bf16.mxu0 %v1460
    %2217 = vmatpush1.bf16.msra.mxu0 %v1459
    %2218 = vmatprep.subr.bf16.mxu0 %v1468
    %2219 = vmatpush1.bf16.msra.mxu0 %v1467
    %2220 = vmatprep.subr.bf16.mxu0 %v1476
    %2221 = vmatpush1.bf16.msra.mxu0 %v1475
    %2222 = vmatprep.subr.bf16.mxu0 %v1484
    %2223 = vmatpush1.bf16.msra.mxu0 %v1483
    %2224 = vmatprep.subr.bf16.mxu0 %v1492
    %2225 = vmatpush1.bf16.msra.mxu0 %v1491
    %2226 = vmatprep.subr.bf16.mxu0 %v1500
    %2227 = vmatpush1.bf16.msra.mxu0 %v1499
    %2228 = vmatprep.subr.bf16.mxu0 %v1508
    %2229 = vmatpush1.bf16.msra.mxu0 %v1507
    %2230 = vmatprep.subr.bf16.mxu0 %v1516
    %2231 = vmatpush1.bf16.msra.mxu0 %v1515
    %2232 = vmatprep.subr.bf16.mxu0 %v1524
    %2233 = vmatpush1.bf16.msra.mxu0 %v1523
    %2234 = vmatprep.subr.bf16.mxu0 %v1532
    %2235 = vmatpush1.bf16.msra.mxu0 %v1531
    %2236 = vmatprep.subr.bf16.mxu0 %v1540
    %2237 = vmatpush1.bf16.msra.mxu0 %v1539
    %2238 = vmatprep.subr.bf16.mxu0 %v1548
    %2239 = vmatpush1.bf16.msra.mxu0 %v1547
    %2240 = vmatprep.subr.bf16.mxu0 %v1556
    %2241 = vmatpush1.bf16.msra.mxu0 %v1555
    %2242 = vmatprep.subr.bf16.mxu0 %v1564
    %2243 = vmatpush1.bf16.msra.mxu0 %v1563
    %2244 = vmatprep.subr.bf16.mxu0 %v1572
    %2245 = vmatpush1.bf16.msra.mxu0 %v1571
    %2246 = vmatprep.subr.bf16.mxu0 %v1580
    %2247 = vmatpush1.bf16.msra.mxu0 %v1579
    %2248 = vmatprep.mubr.bf16.mxu0 %v1842
    %2249 = vmatmul.mubr.bf16.gmra.mrb[0].mxu0 %v1841
    %v2250 = vpop.f32.mrb[0].mxu0
    %v2251 = vadd.f32 %v2210, %v2250
    %v2252 = vpop.f32.mrb[0].mxu0
    %v2253 = vadd.f32 %v2212, %v2252
    %v2254 = vpop.f32.mrb[0].mxu0
    %v2255 = vpop.f32.mrb[0].mxu0
    %2256 = vdwg.mxu0
    %2257 = vmatprep.subr.bf16.mxu0 %v1588
    %2258 = vmatpush1.bf16.msra.mxu0 %v1587
    %2259 = vmatprep.subr.bf16.mxu0 %v1596
    %2260 = vmatpush1.bf16.msra.mxu0 %v1595
    %2261 = vmatprep.subr.bf16.mxu0 %v1604
    %2262 = vmatpush1.bf16.msra.mxu0 %v1603
    %2263 = vmatprep.subr.bf16.mxu0 %v1612
    %2264 = vmatpush1.bf16.msra.mxu0 %v1611
    %2265 = vmatprep.subr.bf16.mxu0 %v1620
    %2266 = vmatpush1.bf16.msra.mxu0 %v1619
    %2267 = vmatprep.subr.bf16.mxu0 %v1628
    %2268 = vmatpush1.bf16.msra.mxu0 %v1627
    %2269 = vmatprep.subr.bf16.mxu0 %v1636
    %2270 = vmatpush1.bf16.msra.mxu0 %v1635
    %2271 = vmatprep.subr.bf16.mxu0 %v1644
    %2272 = vmatpush1.bf16.msra.mxu0 %v1643
    %2273 = vmatprep.subr.bf16.mxu0 %v1652
    %2274 = vmatpush1.bf16.msra.mxu0 %v1651
    %2275 = vmatprep.subr.bf16.mxu0 %v1660
    %2276 = vmatpush1.bf16.msra.mxu0 %v1659
    %2277 = vmatprep.subr.bf16.mxu0 %v1668
    %2278 = vmatpush1.bf16.msra.mxu0 %v1667
    %2279 = vmatprep.subr.bf16.mxu0 %v1676
    %2280 = vmatpush1.bf16.msra.mxu0 %v1675
    %2281 = vmatprep.subr.bf16.mxu0 %v1684
    %2282 = vmatpush1.bf16.msra.mxu0 %v1683
    %2283 = vmatprep.subr.bf16.mxu0 %v1692
    %2284 = vmatpush1.bf16.msra.mxu0 %v1691
    %2285 = vmatprep.subr.bf16.mxu0 %v1700
    %2286 = vmatpush1.bf16.msra.mxu0 %v1699
    %2287 = vmatprep.subr.bf16.mxu0 %v1708
    %2288 = vmatpush1.bf16.msra.mxu0 %v1707
    %2289 = vmatprep.mubr.bf16.mxu0 %v1844
    %2290 = vmatmul.mubr.bf16.gmra.mrb[0].mxu0 %v1843
    %v2291 = vpop.f32.mrb[0].mxu0
    %v2292 = vadd.f32 %v2251, %v2291
    %v2293 = vpop.f32.mrb[0].mxu0
    %v2294 = vadd.f32 %v2253, %v2293
    %v2295 = vpop.f32.mrb[0].mxu0
    %v2296 = vpop.f32.mrb[0].mxu0
    %2297 = vdwg.mxu0
    %2298 = vmatprep.subr.bf16.mxu0 %v1716
    %2299 = vmatpush1.bf16.msra.mxu0 %v1715
    %2300 = vmatprep.subr.bf16.mxu0 %v1724
    %2301 = vmatpush1.bf16.msra.mxu0 %v1723
    %2302 = vmatprep.subr.bf16.mxu0 %v1732
    %2303 = vmatpush1.bf16.msra.mxu0 %v1731
    %2304 = vmatprep.subr.bf16.mxu0 %v1740
    %2305 = vmatpush1.bf16.msra.mxu0 %v1739
    %2306 = vmatprep.subr.bf16.mxu0 %v1748
    %2307 = vmatpush1.bf16.msra.mxu0 %v1747
    %2308 = vmatprep.subr.bf16.mxu0 %v1756
    %2309 = vmatpush1.bf16.msra.mxu0 %v1755
    %2310 = vmatprep.subr.bf16.mxu0 %v1764
    %2311 = vmatpush1.bf16.msra.mxu0 %v1763
    %2312 = vmatprep.subr.bf16.mxu0 %v1772
    %2313 = vmatpush1.bf16.msra.mxu0 %v1771
    %2314 = vmatprep.subr.bf16.mxu0 %v1780
    %2315 = vmatpush1.bf16.msra.mxu0 %v1779
    %2316 = vmatprep.subr.bf16.mxu0 %v1788
    %2317 = vmatpush1.bf16.msra.mxu0 %v1787
    %2318 = vmatprep.subr.bf16.mxu0 %v1796
    %2319 = vmatpush1.bf16.msra.mxu0 %v1795
    %2320 = vmatprep.subr.bf16.mxu0 %v1804
    %2321 = vmatpush1.bf16.msra.mxu0 %v1803
    %2322 = vmatprep.subr.bf16.mxu0 %v1812
    %2323 = vmatpush1.bf16.msra.mxu0 %v1811
    %2324 = vmatprep.subr.bf16.mxu0 %v1820
    %2325 = vmatpush1.bf16.msra.mxu0 %v1819
    %2326 = vmatprep.subr.bf16.mxu0 %v1828
    %2327 = vmatpush1.bf16.msra.mxu0 %v1827
    %2328 = vmatprep.subr.bf16.mxu0 %v1836
    %2329 = vmatpush1.bf16.msra.mxu0 %v1835
    %2330 = vmatprep.mubr.bf16.mxu0 %v1846
    %2331 = vmatmul.mubr.bf16.gmra.mrb[0].mxu0 %v1845
    %v2332 = vpop.f32.mrb[0].mxu0
    %v2333 = vadd.f32 %v2292, %v2332
    %v2334 = vpop.f32.mrb[0].mxu0
    %v2335 = vadd.f32 %v2294, %v2334
    %v2336 = vpop.f32.mrb[0].mxu0
    %v2337 = vpop.f32.mrb[0].mxu0
    %2338 = vdwg.mxu0
    %2339 = vmatprep.subr.bf16.mxu0 %v1334
    %2340 = vmatpush1.bf16.msra.mxu0 %v1333
    %2341 = vmatprep.subr.bf16.mxu0 %v1342
    %2342 = vmatpush1.bf16.msra.mxu0 %v1341
    %2343 = vmatprep.subr.bf16.mxu0 %v1350
    %2344 = vmatpush1.bf16.msra.mxu0 %v1349
    %2345 = vmatprep.subr.bf16.mxu0 %v1358
    %2346 = vmatpush1.bf16.msra.mxu0 %v1357
    %2347 = vmatprep.subr.bf16.mxu0 %v1366
    %2348 = vmatpush1.bf16.msra.mxu0 %v1365
    %2349 = vmatprep.subr.bf16.mxu0 %v1374
    %2350 = vmatpush1.bf16.msra.mxu0 %v1373
    %2351 = vmatprep.subr.bf16.mxu0 %v1382
    %2352 = vmatpush1.bf16.msra.mxu0 %v1381
    %2353 = vmatprep.subr.bf16.mxu0 %v1390
    %2354 = vmatpush1.bf16.msra.mxu0 %v1389
    %2355 = vmatprep.subr.bf16.mxu0 %v1398
    %2356 = vmatpush1.bf16.msra.mxu0 %v1397
    %2357 = vmatprep.subr.bf16.mxu0 %v1406
    %2358 = vmatpush1.bf16.msra.mxu0 %v1405
    %2359 = vmatprep.subr.bf16.mxu0 %v1414
    %2360 = vmatpush1.bf16.msra.mxu0 %v1413
    %2361 = vmatprep.subr.bf16.mxu0 %v1422
    %2362 = vmatpush1.bf16.msra.mxu0 %v1421
    %2363 = vmatprep.subr.bf16.mxu0 %v1430
    %2364 = vmatpush1.bf16.msra.mxu0 %v1429
    %2365 = vmatprep.subr.bf16.mxu0 %v1438
    %2366 = vmatpush1.bf16.msra.mxu0 %v1437
    %2367 = vmatprep.subr.bf16.mxu0 %v1446
    %2368 = vmatpush1.bf16.msra.mxu0 %v1445
    %2369 = vmatprep.subr.bf16.mxu0 %v1454
    %2370 = vmatpush1.bf16.msra.mxu0 %v1453
    %2371 = vmatprep.mubr.bf16.mxu0 %v1840
    %2372 = vmatmul.mubr.bf16.gmra.mrb[0].mxu0 %v1839
    %v2373 = vpop.f32.mrb[0].mxu0
    %v2374 = vadd.f32 0.0, %v2373
    %v2375 = vpop.f32.mrb[0].mxu0
    %v2376 = vadd.f32 0.0, %v2375
    %v2377 = vpop.f32.mrb[0].mxu0
    %v2378 = vpop.f32.mrb[0].mxu0
    %2379 = vdwg.mxu0
    %2380 = vmatprep.subr.bf16.mxu0 %v1462
    %2381 = vmatpush1.bf16.msra.mxu0 %v1461
    %2382 = vmatprep.subr.bf16.mxu0 %v1470
    %2383 = vmatpush1.bf16.msra.mxu0 %v1469
    %2384 = vmatprep.subr.bf16.mxu0 %v1478
    %2385 = vmatpush1.bf16.msra.mxu0 %v1477
    %2386 = vmatprep.subr.bf16.mxu0 %v1486
    %2387 = vmatpush1.bf16.msra.mxu0 %v1485
    %2388 = vmatprep.subr.bf16.mxu0 %v1494
    %2389 = vmatpush1.bf16.msra.mxu0 %v1493
    %2390 = vmatprep.subr.bf16.mxu0 %v1502
    %2391 = vmatpush1.bf16.msra.mxu0 %v1501
    %2392 = vmatprep.subr.bf16.mxu0 %v1510
    %2393 = vmatpush1.bf16.msra.mxu0 %v1509
    %2394 = vmatprep.subr.bf16.mxu0 %v1518
    %2395 = vmatpush1.bf16.msra.mxu0 %v1517
    %2396 = vmatprep.subr.bf16.mxu0 %v1526
    %2397 = vmatpush1.bf16.msra.mxu0 %v1525
    %2398 = vmatprep.subr.bf16.mxu0 %v1534
    %2399 = vmatpush1.bf16.msra.mxu0 %v1533
    %2400 = vmatprep.subr.bf16.mxu0 %v1542
    %2401 = vmatpush1.bf16.msra.mxu0 %v1541
    %2402 = vmatprep.subr.bf16.mxu0 %v1550
    %2403 = vmatpush1.bf16.msra.mxu0 %v1549
    %2404 = vmatprep.subr.bf16.mxu0 %v1558
    %2405 = vmatpush1.bf16.msra.mxu0 %v1557
    %2406 = vmatprep.subr.bf16.mxu0 %v1566
    %2407 = vmatpush1.bf16.msra.mxu0 %v1565
    %2408 = vmatprep.subr.bf16.mxu0 %v1574
    %2409 = vmatpush1.bf16.msra.mxu0 %v1573
    %2410 = vmatprep.subr.bf16.mxu0 %v1582
    %2411 = vmatpush1.bf16.msra.mxu0 %v1581
    %2412 = vmatprep.mubr.bf16.mxu0 %v1842
    %2413 = vmatmul.mubr.bf16.gmra.mrb[0].mxu0 %v1841
    %v2414 = vpop.f32.mrb[0].mxu0
    %v2415 = vadd.f32 %v2374, %v2414
    %v2416 = vpop.f32.mrb[0].mxu0
    %v2417 = vadd.f32 %v2376, %v2416
    %v2418 = vpop.f32.mrb[0].mxu0
    %v2419 = vpop.f32.mrb[0].mxu0
    %2420 = vdwg.mxu0
    %2421 = vmatprep.subr.bf16.mxu0 %v1590
    %2422 = vmatpush1.bf16.msra.mxu0 %v1589
    %2423 = vmatprep.subr.bf16.mxu0 %v1598
    %2424 = vmatpush1.bf16.msra.mxu0 %v1597
    %2425 = vmatprep.subr.bf16.mxu0 %v1606
    %2426 = vmatpush1.bf16.msra.mxu0 %v1605
    %2427 = vmatprep.subr.bf16.mxu0 %v1614
    %2428 = vmatpush1.bf16.msra.mxu0 %v1613
    %2429 = vmatprep.subr.bf16.mxu0 %v1622
    %2430 = vmatpush1.bf16.msra.mxu0 %v1621
    %2431 = vmatprep.subr.bf16.mxu0 %v1630
    %2432 = vmatpush1.bf16.msra.mxu0 %v1629
    %2433 = vmatprep.subr.bf16.mxu0 %v1638
    %2434 = vmatpush1.bf16.msra.mxu0 %v1637
    %2435 = vmatprep.subr.bf16.mxu0 %v1646
    %2436 = vmatpush1.bf16.msra.mxu0 %v1645
    %2437 = vmatprep.subr.bf16.mxu0 %v1654
    %2438 = vmatpush1.bf16.msra.mxu0 %v1653
    %2439 = vmatprep.subr.bf16.mxu0 %v1662
    %2440 = vmatpush1.bf16.msra.mxu0 %v1661
    %2441 = vmatprep.subr.bf16.mxu0 %v1670
    %2442 = vmatpush1.bf16.msra.mxu0 %v1669
    %2443 = vmatprep.subr.bf16.mxu0 %v1678
    %2444 = vmatpush1.bf16.msra.mxu0 %v1677
    %2445 = vmatprep.subr.bf16.mxu0 %v1686
    %2446 = vmatpush1.bf16.msra.mxu0 %v1685
    %2447 = vmatprep.subr.bf16.mxu0 %v1694
    %2448 = vmatpush1.bf16.msra.mxu0 %v1693
    %2449 = vmatprep.subr.bf16.mxu0 %v1702
    %2450 = vmatpush1.bf16.msra.mxu0 %v1701
    %2451 = vmatprep.subr.bf16.mxu0 %v1710
    %2452 = vmatpush1.bf16.msra.mxu0 %v1709
    %2453 = vmatprep.mubr.bf16.mxu0 %v1844
    %2454 = vmatmul.mubr.bf16.gmra.mrb[0].mxu0 %v1843
    %v2455 = vpop.f32.mrb[0].mxu0
    %v2456 = vadd.f32 %v2415, %v2455
    %v2457 = vpop.f32.mrb[0].mxu0
    %v2458 = vadd.f32 %v2417, %v2457
    %v2459 = vpop.f32.mrb[0].mxu0
    %v2460 = vpop.f32.mrb[0].mxu0
    %2461 = vdwg.mxu0
    %2462 = vmatprep.subr.bf16.mxu0 %v1718
    %2463 = vmatpush1.bf16.msra.mxu0 %v1717
    %2464 = vmatprep.subr.bf16.mxu0 %v1726
    %2465 = vmatpush1.bf16.msra.mxu0 %v1725
    %2466 = vmatprep.subr.bf16.mxu0 %v1734
    %2467 = vmatpush1.bf16.msra.mxu0 %v1733
    %2468 = vmatprep.subr.bf16.mxu0 %v1742
    %2469 = vmatpush1.bf16.msra.mxu0 %v1741
    %2470 = vmatprep.subr.bf16.mxu0 %v1750
    %2471 = vmatpush1.bf16.msra.mxu0 %v1749
    %2472 = vmatprep.subr.bf16.mxu0 %v1758
    %2473 = vmatpush1.bf16.msra.mxu0 %v1757
    %2474 = vmatprep.subr.bf16.mxu0 %v1766
    %2475 = vmatpush1.bf16.msra.mxu0 %v1765
    %2476 = vmatprep.subr.bf16.mxu0 %v1774
    %2477 = vmatpush1.bf16.msra.mxu0 %v1773
    %2478 = vmatprep.subr.bf16.mxu0 %v1782
    %2479 = vmatpush1.bf16.msra.mxu0 %v1781
    %2480 = vmatprep.subr.bf16.mxu0 %v1790
    %2481 = vmatpush1.bf16.msra.mxu0 %v1789
    %2482 = vmatprep.subr.bf16.mxu0 %v1798
    %2483 = vmatpush1.bf16.msra.mxu0 %v1797
    %2484 = vmatprep.subr.bf16.mxu0 %v1806
    %2485 = vmatpush1.bf16.msra.mxu0 %v1805
    %2486 = vmatprep.subr.bf16.mxu0 %v1814
    %2487 = vmatpush1.bf16.msra.mxu0 %v1813
    %2488 = vmatprep.subr.bf16.mxu0 %v1822
    %2489 = vmatpush1.bf16.msra.mxu0 %v1821
    %2490 = vmatprep.subr.bf16.mxu0 %v1830
    %2491 = vmatpush1.bf16.msra.mxu0 %v1829
    %2492 = vmatprep.subr.bf16.mxu0 %v1838
    %2493 = vmatpush1.bf16.msra.mxu0 %v1837
    %2494 = vmatprep.mubr.bf16.mxu0 %v1846
    %2495 = vmatmul.mubr.bf16.gmra.mrb[0].mxu0 %v1845
    %v2496 = vpop.f32.mrb[0].mxu0
    %v2497 = vadd.f32 %v2456, %v2496
    %v2498 = vpop.f32.mrb[0].mxu0
    %v2499 = vadd.f32 %v2458, %v2498
    %v2500 = vpop.f32.mrb[0].mxu0
    %v2501 = vpop.f32.mrb[0].mxu0
    %2502 = vdwg.mxu0
    %2503 = vmatprep.subr.bf16.mxu0 %v1007
    %2504 = vmatpush1.bf16.msra.mxu0 %v1006
    %2505 = vmatprep.subr.bf16.mxu0 %v1015
    %2506 = vmatpush1.bf16.msra.mxu0 %v1014
    %2507 = vmatprep.subr.bf16.mxu0 %v1023
    %2508 = vmatpush1.bf16.msra.mxu0 %v1022
    %2509 = vmatprep.subr.bf16.mxu0 %v1031
    %2510 = vmatpush1.bf16.msra.mxu0 %v1030
    %2511 = vmatprep.subr.bf16.mxu0 %v1039
    %2512 = vmatpush1.bf16.msra.mxu0 %v1038
    %2513 = vmatprep.subr.bf16.mxu0 %v1047
    %2514 = vmatpush1.bf16.msra.mxu0 %v1046
    %2515 = vmatprep.subr.bf16.mxu0 %v1055
    %2516 = vmatpush1.bf16.msra.mxu0 %v1054
    %2517 = vmatprep.subr.bf16.mxu0 %v1063
    %2518 = vmatpush1.bf16.msra.mxu0 %v1062
    %2519 = vmatprep.subr.bf16.mxu0 0
    %2520 = vmatpush1.bf16.msra.mxu0 0
    %2521 = vmatprep.subr.bf16.mxu0 0
    %2522 = vmatpush1.bf16.msra.mxu0 0
    %2523 = vmatprep.subr.bf16.mxu0 0
    %2524 = vmatpush1.bf16.msra.mxu0 0
    %2525 = vmatprep.subr.bf16.mxu0 0
    %2526 = vmatpush1.bf16.msra.mxu0 0
    %2527 = vmatprep.subr.bf16.mxu0 0
    %2528 = vmatpush1.bf16.msra.mxu0 0
    %2529 = vmatprep.subr.bf16.mxu0 0
    %2530 = vmatpush1.bf16.msra.mxu0 0
    %2531 = vmatprep.subr.bf16.mxu0 0
    %2532 = vmatpush1.bf16.msra.mxu0 0
    %2533 = vmatprep.subr.bf16.mxu0 0
    %2534 = vmatpush1.bf16.msra.mxu0 0
    %2535 = vmatprep.mubr.bf16.mxu0 0
    %2536 = vmatmul.mubr.bf16.gmra.mrb[0].mxu0 %v1070
    %v2537 = vpop.f32.mrb[0].mxu0
    %v2538 = vadd.f32 %v2005, %v2537
    %v2539 = vpop.f32.mrb[0].mxu0
    %v2540 = vadd.f32 %v2007, %v2539
    %v2541 = vpop.f32.mrb[0].mxu0
    %v2542 = vpop.f32.mrb[0].mxu0
    %2543 = vdwg.mxu0
    %2544 = vmatprep.subr.bf16.mxu0 %v1009
    %2545 = vmatpush1.bf16.msra.mxu0 %v1008
    %2546 = vmatprep.subr.bf16.mxu0 %v1017
    %2547 = vmatpush1.bf16.msra.mxu0 %v1016
    %2548 = vmatprep.subr.bf16.mxu0 %v1025
    %2549 = vmatpush1.bf16.msra.mxu0 %v1024
    %2550 = vmatprep.subr.bf16.mxu0 %v1033
    %2551 = vmatpush1.bf16.msra.mxu0 %v1032
    %2552 = vmatprep.subr.bf16.mxu0 %v1041
    %2553 = vmatpush1.bf16.msra.mxu0 %v1040
    %2554 = vmatprep.subr.bf16.mxu0 %v1049
    %2555 = vmatpush1.bf16.msra.mxu0 %v1048
    %2556 = vmatprep.subr.bf16.mxu0 %v1057
    %2557 = vmatpush1.bf16.msra.mxu0 %v1056
    %2558 = vmatprep.subr.bf16.mxu0 %v1065
    %2559 = vmatpush1.bf16.msra.mxu0 %v1064
    %2560 = vmatprep.subr.bf16.mxu0 0
    %2561 = vmatpush1.bf16.msra.mxu0 0
    %2562 = vmatprep.subr.bf16.mxu0 0
    %2563 = vmatpush1.bf16.msra.mxu0 0
    %2564 = vmatprep.subr.bf16.mxu0 0
    %2565 = vmatpush1.bf16.msra.mxu0 0
    %2566 = vmatprep.subr.bf16.mxu0 0
    %2567 = vmatpush1.bf16.msra.mxu0 0
    %2568 = vmatprep.subr.bf16.mxu0 0
    %2569 = vmatpush1.bf16.msra.mxu0 0
    %2570 = vmatprep.subr.bf16.mxu0 0
    %2571 = vmatpush1.bf16.msra.mxu0 0
    %2572 = vmatprep.subr.bf16.mxu0 0
    %2573 = vmatpush1.bf16.msra.mxu0 0
    %2574 = vmatprep.subr.bf16.mxu0 0
    %2575 = vmatpush1.bf16.msra.mxu0 0
    %2576 = vmatprep.mubr.bf16.mxu0 0
    %2577 = vmatmul.mubr.bf16.gmra.mrb[0].mxu0 %v1070
    %v2578 = vpop.f32.mrb[0].mxu0
    %v2579 = vadd.f32 %v2169, %v2578
    %v2580 = vpop.f32.mrb[0].mxu0
    %v2581 = vadd.f32 %v2171, %v2580
    %v2582 = vpop.f32.mrb[0].mxu0
    %v2583 = vpop.f32.mrb[0].mxu0
    %2584 = vdwg.mxu0
    %2585 = vmatprep.subr.bf16.mxu0 %v1011
    %2586 = vmatpush1.bf16.msra.mxu0 %v1010
    %2587 = vmatprep.subr.bf16.mxu0 %v1019
    %2588 = vmatpush1.bf16.msra.mxu0 %v1018
    %2589 = vmatprep.subr.bf16.mxu0 %v1027
    %2590 = vmatpush1.bf16.msra.mxu0 %v1026
    %2591 = vmatprep.subr.bf16.mxu0 %v1035
    %2592 = vmatpush1.bf16.msra.mxu0 %v1034
    %2593 = vmatprep.subr.bf16.mxu0 %v1043
    %2594 = vmatpush1.bf16.msra.mxu0 %v1042
    %2595 = vmatprep.subr.bf16.mxu0 %v1051
    %2596 = vmatpush1.bf16.msra.mxu0 %v1050
    %2597 = vmatprep.subr.bf16.mxu0 %v1059
    %2598 = vmatpush1.bf16.msra.mxu0 %v1058
    %2599 = vmatprep.subr.bf16.mxu0 %v1067
    %2600 = vmatpush1.bf16.msra.mxu0 %v1066
    %2601 = vmatprep.subr.bf16.mxu0 0
    %2602 = vmatpush1.bf16.msra.mxu0 0
    %2603 = vmatprep.subr.bf16.mxu0 0
    %2604 = vmatpush1.bf16.msra.mxu0 0
    %2605 = vmatprep.subr.bf16.mxu0 0
    %2606 = vmatpush1.bf16.msra.mxu0 0
    %2607 = vmatprep.subr.bf16.mxu0 0
    %2608 = vmatpush1.bf16.msra.mxu0 0
    %2609 = vmatprep.subr.bf16.mxu0 0
    %2610 = vmatpush1.bf16.msra.mxu0 0
    %2611 = vmatprep.subr.bf16.mxu0 0
    %2612 = vmatpush1.bf16.msra.mxu0 0
    %2613 = vmatprep.subr.bf16.mxu0 0
    %2614 = vmatpush1.bf16.msra.mxu0 0
    %2615 = vmatprep.subr.bf16.mxu0 0
    %2616 = vmatpush1.bf16.msra.mxu0 0
    %2617 = vmatprep.mubr.bf16.mxu0 0
    %2618 = vmatmul.mubr.bf16.gmra.mrb[0].mxu0 %v1070
    %v2619 = vpop.f32.mrb[0].mxu0
    %v2620 = vadd.f32 %v2333, %v2619
    %v2621 = vpop.f32.mrb[0].mxu0
    %v2622 = vadd.f32 %v2335, %v2621
    %v2623 = vpop.f32.mrb[0].mxu0
    %v2624 = vpop.f32.mrb[0].mxu0
    %2625 = vdwg.mxu0
    %2626 = vmatprep.subr.bf16.mxu0 %v1013
    %2627 = vmatpush1.bf16.msra.mxu0 %v1012
    %2628 = vmatprep.subr.bf16.mxu0 %v1021
    %2629 = vmatpush1.bf16.msra.mxu0 %v1020
    %2630 = vmatprep.subr.bf16.mxu0 %v1029
    %2631 = vmatpush1.bf16.msra.mxu0 %v1028
    %2632 = vmatprep.subr.bf16.mxu0 %v1037
    %2633 = vmatpush1.bf16.msra.mxu0 %v1036
    %2634 = vmatprep.subr.bf16.mxu0 %v1045
    %2635 = vmatpush1.bf16.msra.mxu0 %v1044
    %2636 = vmatprep.subr.bf16.mxu0 %v1053
    %2637 = vmatpush1.bf16.msra.mxu0 %v1052
    %2638 = vmatprep.subr.bf16.mxu0 %v1061
    %2639 = vmatpush1.bf16.msra.mxu0 %v1060
    %2640 = vmatprep.subr.bf16.mxu0 %v1069
    %2641 = vmatpush1.bf16.msra.mxu0 %v1068
    %2642 = vmatprep.subr.bf16.mxu0 0
    %2643 = vmatpush1.bf16.msra.mxu0 0
    %2644 = vmatprep.subr.bf16.mxu0 0
    %2645 = vmatpush1.bf16.msra.mxu0 0
    %2646 = vmatprep.subr.bf16.mxu0 0
    %2647 = vmatpush1.bf16.msra.mxu0 0
    %2648 = vmatprep.subr.bf16.mxu0 0
    %2649 = vmatpush1.bf16.msra.mxu0 0
    %2650 = vmatprep.subr.bf16.mxu0 0
    %2651 = vmatpush1.bf16.msra.mxu0 0
    %2652 = vmatprep.subr.bf16.mxu0 0
    %2653 = vmatpush1.bf16.msra.mxu0 0
    %2654 = vmatprep.subr.bf16.mxu0 0
    %2655 = vmatpush1.bf16.msra.mxu0 0
    %2656 = vmatprep.subr.bf16.mxu0 0
    %2657 = vmatpush1.bf16.msra.mxu0 0
    %2658 = vmatprep.mubr.bf16.mxu0 0
    %2659 = vmatmul.mubr.bf16.gmra.mrb[0].mxu0 %v1070
    %v2660 = vpop.f32.mrb[0].mxu0
    %v2661 = vadd.f32 %v2497, %v2660
    %v2662 = vpop.f32.mrb[0].mxu0
    %v2663 = vadd.f32 %v2499, %v2662
    %v2664 = vpop.f32.mrb[0].mxu0
    %v2665 = vpop.f32.mrb[0].mxu0
    %2666 = vdwg.mxu0
    %v2668 = vlaneseq
    %v2669 = vshrl.u32 %v2668, 7
    %v2670 = vsub.s32 0, %v2669
    %v2671 = vrot.slane %v973, %v2670
    %v2672 = vlaneseq
    %v2673 = vshrl.u32 %v2672, 7
    %v2674 = vsub.s32 1, %v2673
    %v2675 = vrot.slane %v973, %v2674
    %v2676 = vlaneseq
    %v2677 = vshrl.u32 %v2676, 7
    %v2678 = vsub.s32 2, %v2677
    %v2679 = vrot.slane %v973, %v2678
    %v2680 = vlaneseq
    %v2681 = vshrl.u32 %v2680, 7
    %v2682 = vsub.s32 3, %v2681
    %v2683 = vrot.slane %v973, %v2682
    %v2684 = vlaneseq
    %v2685 = vshrl.u32 %v2684, 7
    %v2686 = vsub.s32 4, %v2685
    %v2687 = vrot.slane %v973, %v2686
    %v2688 = vlaneseq
    %v2689 = vshrl.u32 %v2688, 7
    %v2690 = vsub.s32 5, %v2689
    %v2691 = vrot.slane %v973, %v2690
    %v2692 = vlaneseq
    %v2693 = vshrl.u32 %v2692, 7
    %v2694 = vsub.s32 6, %v2693
    %v2695 = vrot.slane %v973, %v2694
    %v2696 = vlaneseq
    %v2697 = vshrl.u32 %v2696, 7
    %v2698 = vsub.s32 7, %v2697
    %v2699 = vrot.slane %v973, %v2698
    %v2708 = vmul.f32 %v2538, %v2671
    %v2709 = vmul.f32 %v2540, %v2675
    %v2710 = vmul.f32 %v2579, %v2679
    %v2711 = vmul.f32 %v2581, %v2683
    %v2712 = vmul.f32 %v2620, %v2687
    %v2713 = vmul.f32 %v2622, %v2691
    %v2714 = vmul.f32 %v2661, %v2695
    %v2715 = vmul.f32 %v2663, %v2699
    %s2716 = scalar_lea.vmem [#allocation8], 5
    %v2717 = vld [vmem:[%s2716] ss:$8 sm:$0xf]
    %v2718 = vld [vmem:[%s2716] ss:$8 sm:$0xf0]
    %v2719 = vor.u32 %v2717, %v2718
    %v2721 = vlaneseq
    %v2722 = vshrl.u32 %v2721, 7
    %v2723 = vsub.s32 0, %v2722
    %v2724 = vrot.slane %v2719, %v2723
    %v2725 = vlaneseq
    %v2726 = vshrl.u32 %v2725, 7
    %v2727 = vsub.s32 1, %v2726
    %v2728 = vrot.slane %v2719, %v2727
    %v2729 = vlaneseq
    %v2730 = vshrl.u32 %v2729, 7
    %v2731 = vsub.s32 2, %v2730
    %v2732 = vrot.slane %v2719, %v2731
    %v2733 = vlaneseq
    %v2734 = vshrl.u32 %v2733, 7
    %v2735 = vsub.s32 3, %v2734
    %v2736 = vrot.slane %v2719, %v2735
    %v2737 = vlaneseq
    %v2738 = vshrl.u32 %v2737, 7
    %v2739 = vsub.s32 4, %v2738
    %v2740 = vrot.slane %v2719, %v2739
    %v2741 = vlaneseq
    %v2742 = vshrl.u32 %v2741, 7
    %v2743 = vsub.s32 5, %v2742
    %v2744 = vrot.slane %v2719, %v2743
    %v2745 = vlaneseq
    %v2746 = vshrl.u32 %v2745, 7
    %v2747 = vsub.s32 6, %v2746
    %v2748 = vrot.slane %v2719, %v2747
    %v2749 = vlaneseq
    %v2750 = vshrl.u32 %v2749, 7
    %v2751 = vsub.s32 7, %v2750
    %v2752 = vrot.slane %v2719, %v2751
    %v2761 = vadd.f32 %v2708, %v2724
    %v2762 = vadd.f32 %v2709, %v2728
    %v2763 = vadd.f32 %v2710, %v2732
    %v2764 = vadd.f32 %v2711, %v2736
    %v2765 = vadd.f32 %v2712, %v2740
    %v2766 = vadd.f32 %v2713, %v2744
    %v2767 = vadd.f32 %v2714, %v2748
    %v2768 = vadd.f32 %v2715, %v2752
    %v2769 = vld [vmem:[#allocation11 + $0xa00] sm:$0xff]
    %v2770 = vld [vmem:[#allocation11 + $0xa08] sm:$0xff]
    %v2771 = vld [vmem:[#allocation11 + $0xa10] sm:$0xff]
    %v2772 = vld [vmem:[#allocation11 + $0xa18] sm:$0xff]
    %v2773 = vld [vmem:[#allocation11 + $0xa20] sm:$0xff]
    %v2774 = vld [vmem:[#allocation11 + $0xa28] sm:$0xff]
    %v2775 = vld [vmem:[#allocation11 + $0xa30] sm:$0xff]
    %v2776 = vld [vmem:[#allocation11 + $0xa38] sm:$0xff]
    %v2777 = vld [vmem:[#allocation11 + $0xa40] sm:$0xff]
    %v2778 = vld [vmem:[#allocation11 + $0xa48] sm:$0xff]
    %v2779 = vld [vmem:[#allocation11 + $0xa50] sm:$0xff]
    %v2780 = vld [vmem:[#allocation11 + $0xa58] sm:$0xff]
    %v2781 = vld [vmem:[#allocation11 + $0xa60] sm:$0xff]
    %v2782 = vld [vmem:[#allocation11 + $0xa68] sm:$0xff]
    %v2783 = vld [vmem:[#allocation11 + $0xa70] sm:$0xff]
    %v2784 = vld [vmem:[#allocation11 + $0xa78] sm:$0xff]
    %v2785 = vld [vmem:[#allocation11 + $0xa80] sm:$0xff]
    %v2786 = vld [vmem:[#allocation11 + $0xa88] sm:$0xff]
    %v2787 = vld [vmem:[#allocation11 + $0xa90] sm:$0xff]
    %v2788 = vld [vmem:[#allocation11 + $0xa98] sm:$0xff]
    %v2789 = vld [vmem:[#allocation11 + $0xaa0] sm:$0xff]
    %v2790 = vld [vmem:[#allocation11 + $0xaa8] sm:$0xff]
    %v2791 = vld [vmem:[#allocation11 + $0xab0] sm:$0xff]
    %v2792 = vld [vmem:[#allocation11 + $0xab8] sm:$0xff]
    %v2793 = vld [vmem:[#allocation11 + $0xac0] sm:$0xff]
    %v2794 = vld [vmem:[#allocation11 + $0xac8] sm:$0xff]
    %v2795 = vld [vmem:[#allocation11 + $0xad0] sm:$0xff]
    %v2796 = vld [vmem:[#allocation11 + $0xad8] sm:$0xff]
    %v2797 = vld [vmem:[#allocation11 + $0xae0] sm:$0xff]
    %v2798 = vld [vmem:[#allocation11 + $0xae8] sm:$0xff]
    %v2799 = vld [vmem:[#allocation11 + $0xaf0] sm:$0xff]
    %v2800 = vld [vmem:[#allocation11 + $0xaf8] sm:$0xff]
    %v2801 = vld [vmem:[#allocation11 + $0xb00] sm:$0xff]
    %v2802 = vld [vmem:[#allocation11 + $0xb08] sm:$0xff]
    %v2803 = vld [vmem:[#allocation11 + $0xb10] sm:$0xff]
    %v2804 = vld [vmem:[#allocation11 + $0xb18] sm:$0xff]
    %v2805 = vld [vmem:[#allocation11 + $0xb20] sm:$0xff]
    %v2806 = vld [vmem:[#allocation11 + $0xb28] sm:$0xff]
    %v2807 = vld [vmem:[#allocation11 + $0xb30] sm:$0xff]
    %v2808 = vld [vmem:[#allocation11 + $0xb38] sm:$0xff]
    %v2809 = vld [vmem:[#allocation11 + $0xb40] sm:$0xff]
    %v2810 = vld [vmem:[#allocation11 + $0xb48] sm:$0xff]
    %v2811 = vld [vmem:[#allocation11 + $0xb50] sm:$0xff]
    %v2812 = vld [vmem:[#allocation11 + $0xb58] sm:$0xff]
    %v2813 = vld [vmem:[#allocation11 + $0xb60] sm:$0xff]
    %v2814 = vld [vmem:[#allocation11 + $0xb68] sm:$0xff]
    %v2815 = vld [vmem:[#allocation11 + $0xb70] sm:$0xff]
    %v2816 = vld [vmem:[#allocation11 + $0xb78] sm:$0xff]
    %v2817 = vld [vmem:[#allocation11 + $0xb80] sm:$0xff]
    %v2818 = vld [vmem:[#allocation11 + $0xb88] sm:$0xff]
    %v2819 = vld [vmem:[#allocation11 + $0xb90] sm:$0xff]
    %v2820 = vld [vmem:[#allocation11 + $0xb98] sm:$0xff]
    %v2821 = vld [vmem:[#allocation11 + $0xba0] sm:$0xff]
    %v2822 = vld [vmem:[#allocation11 + $0xba8] sm:$0xff]
    %v2823 = vld [vmem:[#allocation11 + $0xbb0] sm:$0xff]
    %v2824 = vld [vmem:[#allocation11 + $0xbb8] sm:$0xff]
    %v2825 = vld [vmem:[#allocation11 + $0xbc0] sm:$0xff]
    %v2826 = vld [vmem:[#allocation11 + $0xbc8] sm:$0xff]
    %v2827 = vld [vmem:[#allocation11 + $0xbd0] sm:$0xff]
    %v2828 = vld [vmem:[#allocation11 + $0xbd8] sm:$0xff]
    %v2829 = vld [vmem:[#allocation11 + $0xbe0] sm:$0xff]
    %v2830 = vld [vmem:[#allocation11 + $0xbe8] sm:$0xff]
    %v2831 = vld [vmem:[#allocation11 + $0xbf0] sm:$0xff]
    %v2832 = vld [vmem:[#allocation11 + $0xbf8] sm:$0xff]
    %v2833 = vunpack.c.l.s8.bf16 %v2769
    %v2834 = vunpack.c.l.s8.bf16 %v2770
    %v2835 = vunpack.c.l.s8.bf16 %v2771
    %v2836 = vunpack.c.l.s8.bf16 %v2772
    %v2837 = vunpack.c.l.s8.bf16 %v2773
    %v2838 = vunpack.c.l.s8.bf16 %v2774
    %v2839 = vunpack.c.l.s8.bf16 %v2775
    %v2840 = vunpack.c.l.s8.bf16 %v2776
    %v2841 = vunpack.c.h.s8.bf16 %v2769
    %v2842 = vunpack.c.h.s8.bf16 %v2770
    %v2843 = vunpack.c.h.s8.bf16 %v2771
    %v2844 = vunpack.c.h.s8.bf16 %v2772
    %v2845 = vunpack.c.h.s8.bf16 %v2773
    %v2846 = vunpack.c.h.s8.bf16 %v2774
    %v2847 = vunpack.c.h.s8.bf16 %v2775
    %v2848 = vunpack.c.h.s8.bf16 %v2776
    %v2849 = vunpack.c.l.s8.bf16 %v2777
    %v2850 = vunpack.c.l.s8.bf16 %v2778
    %v2851 = vunpack.c.l.s8.bf16 %v2779
    %v2852 = vunpack.c.l.s8.bf16 %v2780
    %v2853 = vunpack.c.l.s8.bf16 %v2781
    %v2854 = vunpack.c.l.s8.bf16 %v2782
    %v2855 = vunpack.c.l.s8.bf16 %v2783
    %v2856 = vunpack.c.l.s8.bf16 %v2784
    %v2857 = vunpack.c.h.s8.bf16 %v2777
    %v2858 = vunpack.c.h.s8.bf16 %v2778
    %v2859 = vunpack.c.h.s8.bf16 %v2779
    %v2860 = vunpack.c.h.s8.bf16 %v2780
    %v2861 = vunpack.c.h.s8.bf16 %v2781
    %v2862 = vunpack.c.h.s8.bf16 %v2782
    %v2863 = vunpack.c.h.s8.bf16 %v2783
    %v2864 = vunpack.c.h.s8.bf16 %v2784
    %v2865 = vunpack.c.l.s8.bf16 %v2785
    %v2866 = vunpack.c.l.s8.bf16 %v2786
    %v2867 = vunpack.c.l.s8.bf16 %v2787
    %v2868 = vunpack.c.l.s8.bf16 %v2788
    %v2869 = vunpack.c.l.s8.bf16 %v2789
    %v2870 = vunpack.c.l.s8.bf16 %v2790
    %v2871 = vunpack.c.l.s8.bf16 %v2791
    %v2872 = vunpack.c.l.s8.bf16 %v2792
    %v2873 = vunpack.c.h.s8.bf16 %v2785
    %v2874 = vunpack.c.h.s8.bf16 %v2786
    %v2875 = vunpack.c.h.s8.bf16 %v2787
    %v2876 = vunpack.c.h.s8.bf16 %v2788
    %v2877 = vunpack.c.h.s8.bf16 %v2789
    %v2878 = vunpack.c.h.s8.bf16 %v2790
    %v2879 = vunpack.c.h.s8.bf16 %v2791
    %v2880 = vunpack.c.h.s8.bf16 %v2792
    %v2881 = vunpack.c.l.s8.bf16 %v2793
    %v2882 = vunpack.c.l.s8.bf16 %v2794
    %v2883 = vunpack.c.l.s8.bf16 %v2795
    %v2884 = vunpack.c.l.s8.bf16 %v2796
    %v2885 = vunpack.c.l.s8.bf16 %v2797
    %v2886 = vunpack.c.l.s8.bf16 %v2798
    %v2887 = vunpack.c.l.s8.bf16 %v2799
    %v2888 = vunpack.c.l.s8.bf16 %v2800
    %v2889 = vunpack.c.h.s8.bf16 %v2793
    %v2890 = vunpack.c.h.s8.bf16 %v2794
    %v2891 = vunpack.c.h.s8.bf16 %v2795
    %v2892 = vunpack.c.h.s8.bf16 %v2796
    %v2893 = vunpack.c.h.s8.bf16 %v2797
    %v2894 = vunpack.c.h.s8.bf16 %v2798
    %v2895 = vunpack.c.h.s8.bf16 %v2799
    %v2896 = vunpack.c.h.s8.bf16 %v2800
    %v2897 = vunpack.c.l.s8.bf16 %v2801
    %v2898 = vunpack.c.l.s8.bf16 %v2802
    %v2899 = vunpack.c.l.s8.bf16 %v2803
    %v2900 = vunpack.c.l.s8.bf16 %v2804
    %v2901 = vunpack.c.l.s8.bf16 %v2805
    %v2902 = vunpack.c.l.s8.bf16 %v2806
    %v2903 = vunpack.c.l.s8.bf16 %v2807
    %v2904 = vunpack.c.l.s8.bf16 %v2808
    %v2905 = vunpack.c.h.s8.bf16 %v2801
    %v2906 = vunpack.c.h.s8.bf16 %v2802
    %v2907 = vunpack.c.h.s8.bf16 %v2803
    %v2908 = vunpack.c.h.s8.bf16 %v2804
    %v2909 = vunpack.c.h.s8.bf16 %v2805
    %v2910 = vunpack.c.h.s8.bf16 %v2806
    %v2911 = vunpack.c.h.s8.bf16 %v2807
    %v2912 = vunpack.c.h.s8.bf16 %v2808
    %v2913 = vunpack.c.l.s8.bf16 %v2809
    %v2914 = vunpack.c.l.s8.bf16 %v2810
    %v2915 = vunpack.c.l.s8.bf16 %v2811
    %v2916 = vunpack.c.l.s8.bf16 %v2812
    %v2917 = vunpack.c.l.s8.bf16 %v2813
    %v2918 = vunpack.c.l.s8.bf16 %v2814
    %v2919 = vunpack.c.l.s8.bf16 %v2815
    %v2920 = vunpack.c.l.s8.bf16 %v2816
    %v2921 = vunpack.c.h.s8.bf16 %v2809
    %v2922 = vunpack.c.h.s8.bf16 %v2810
    %v2923 = vunpack.c.h.s8.bf16 %v2811
    %v2924 = vunpack.c.h.s8.bf16 %v2812
    %v2925 = vunpack.c.h.s8.bf16 %v2813
    %v2926 = vunpack.c.h.s8.bf16 %v2814
    %v2927 = vunpack.c.h.s8.bf16 %v2815
    %v2928 = vunpack.c.h.s8.bf16 %v2816
    %v2929 = vunpack.c.l.s8.bf16 %v2817
    %v2930 = vunpack.c.l.s8.bf16 %v2818
    %v2931 = vunpack.c.l.s8.bf16 %v2819
    %v2932 = vunpack.c.l.s8.bf16 %v2820
    %v2933 = vunpack.c.l.s8.bf16 %v2821
    %v2934 = vunpack.c.l.s8.bf16 %v2822
    %v2935 = vunpack.c.l.s8.bf16 %v2823
    %v2936 = vunpack.c.l.s8.bf16 %v2824
    %v2937 = vunpack.c.h.s8.bf16 %v2817
    %v2938 = vunpack.c.h.s8.bf16 %v2818
    %v2939 = vunpack.c.h.s8.bf16 %v2819
    %v2940 = vunpack.c.h.s8.bf16 %v2820
    %v2941 = vunpack.c.h.s8.bf16 %v2821
    %v2942 = vunpack.c.h.s8.bf16 %v2822
    %v2943 = vunpack.c.h.s8.bf16 %v2823
    %v2944 = vunpack.c.h.s8.bf16 %v2824
    %v2945 = vunpack.c.l.s8.bf16 %v2825
    %v2946 = vunpack.c.l.s8.bf16 %v2826
    %v2947 = vunpack.c.l.s8.bf16 %v2827
    %v2948 = vunpack.c.l.s8.bf16 %v2828
    %v2949 = vunpack.c.l.s8.bf16 %v2829
    %v2950 = vunpack.c.l.s8.bf16 %v2830
    %v2951 = vunpack.c.l.s8.bf16 %v2831
    %v2952 = vunpack.c.l.s8.bf16 %v2832
    %v2953 = vunpack.c.h.s8.bf16 %v2825
    %v2954 = vunpack.c.h.s8.bf16 %v2826
    %v2955 = vunpack.c.h.s8.bf16 %v2827
    %v2956 = vunpack.c.h.s8.bf16 %v2828
    %v2957 = vunpack.c.h.s8.bf16 %v2829
    %v2958 = vunpack.c.h.s8.bf16 %v2830
    %v2959 = vunpack.c.h.s8.bf16 %v2831
    %v2960 = vunpack.c.h.s8.bf16 %v2832
    %v2961 = vld [vmem:[#allocation11 + $0xc00] sm:$0xff]
    %v2962 = vld [vmem:[#allocation11 + $0xc08] sm:$0xff]
    %v2963 = vld [vmem:[#allocation11 + $0xc10] sm:$0xff]
    %v2964 = vld [vmem:[#allocation11 + $0xc18] sm:$0xff]
    %v2965 = vld [vmem:[#allocation11 + $0xc20] sm:$0xff]
    %v2966 = vld [vmem:[#allocation11 + $0xc28] sm:$0xff]
    %v2967 = vld [vmem:[#allocation11 + $0xc30] sm:$0xff]
    %v2968 = vld [vmem:[#allocation11 + $0xc38] sm:$0xff]
    %v2969 = vld [vmem:[#allocation11 + $0xc40] sm:$0xff]
    %v2970 = vld [vmem:[#allocation11 + $0xc48] sm:$0xff]
    %v2971 = vld [vmem:[#allocation11 + $0xc50] sm:$0xff]
    %v2972 = vld [vmem:[#allocation11 + $0xc58] sm:$0xff]
    %v2973 = vld [vmem:[#allocation11 + $0xc60] sm:$0xff]
    %v2974 = vld [vmem:[#allocation11 + $0xc68] sm:$0xff]
    %v2975 = vld [vmem:[#allocation11 + $0xc70] sm:$0xff]
    %v2976 = vld [vmem:[#allocation11 + $0xc78] sm:$0xff]
    %v2977 = vld [vmem:[#allocation11 + $0xc80] sm:$0xff]
    %v2978 = vld [vmem:[#allocation11 + $0xc88] sm:$0xff]
    %v2979 = vld [vmem:[#allocation11 + $0xc90] sm:$0xff]
    %v2980 = vld [vmem:[#allocation11 + $0xc98] sm:$0xff]
    %v2981 = vld [vmem:[#allocation11 + $0xca0] sm:$0xff]
    %v2982 = vld [vmem:[#allocation11 + $0xca8] sm:$0xff]
    %v2983 = vld [vmem:[#allocation11 + $0xcb0] sm:$0xff]
    %v2984 = vld [vmem:[#allocation11 + $0xcb8] sm:$0xff]
    %v2985 = vld [vmem:[#allocation11 + $0xcc0] sm:$0xff]
    %v2986 = vld [vmem:[#allocation11 + $0xcc8] sm:$0xff]
    %v2987 = vld [vmem:[#allocation11 + $0xcd0] sm:$0xff]
    %v2988 = vld [vmem:[#allocation11 + $0xcd8] sm:$0xff]
    %v2989 = vld [vmem:[#allocation11 + $0xce0] sm:$0xff]
    %v2990 = vld [vmem:[#allocation11 + $0xce8] sm:$0xff]
    %v2991 = vld [vmem:[#allocation11 + $0xcf0] sm:$0xff]
    %v2992 = vld [vmem:[#allocation11 + $0xcf8] sm:$0xff]
    %v2993 = vld [vmem:[#allocation11 + $0xd00] sm:$0xff]
    %v2994 = vld [vmem:[#allocation11 + $0xd08] sm:$0xff]
    %v2995 = vld [vmem:[#allocation11 + $0xd10] sm:$0xff]
    %v2996 = vld [vmem:[#allocation11 + $0xd18] sm:$0xff]
    %v2997 = vld [vmem:[#allocation11 + $0xd20] sm:$0xff]
    %v2998 = vld [vmem:[#allocation11 + $0xd28] sm:$0xff]
    %v2999 = vld [vmem:[#allocation11 + $0xd30] sm:$0xff]
    %v3000 = vld [vmem:[#allocation11 + $0xd38] sm:$0xff]
    %v3001 = vld [vmem:[#allocation11 + $0xd40] sm:$0xff]
    %v3002 = vld [vmem:[#allocation11 + $0xd48] sm:$0xff]
    %v3003 = vld [vmem:[#allocation11 + $0xd50] sm:$0xff]
    %v3004 = vld [vmem:[#allocation11 + $0xd58] sm:$0xff]
    %v3005 = vld [vmem:[#allocation11 + $0xd60] sm:$0xff]
    %v3006 = vld [vmem:[#allocation11 + $0xd68] sm:$0xff]
    %v3007 = vld [vmem:[#allocation11 + $0xd70] sm:$0xff]
    %v3008 = vld [vmem:[#allocation11 + $0xd78] sm:$0xff]
    %v3009 = vld [vmem:[#allocation11 + $0xd80] sm:$0xff]
    %v3010 = vld [vmem:[#allocation11 + $0xd88] sm:$0xff]
    %v3011 = vld [vmem:[#allocation11 + $0xd90] sm:$0xff]
    %v3012 = vld [vmem:[#allocation11 + $0xd98] sm:$0xff]
    %v3013 = vld [vmem:[#allocation11 + $0xda0] sm:$0xff]
    %v3014 = vld [vmem:[#allocation11 + $0xda8] sm:$0xff]
    %v3015 = vld [vmem:[#allocation11 + $0xdb0] sm:$0xff]
    %v3016 = vld [vmem:[#allocation11 + $0xdb8] sm:$0xff]
    %v3017 = vld [vmem:[#allocation11 + $0xdc0] sm:$0xff]
    %v3018 = vld [vmem:[#allocation11 + $0xdc8] sm:$0xff]
    %v3019 = vld [vmem:[#allocation11 + $0xdd0] sm:$0xff]
    %v3020 = vld [vmem:[#allocation11 + $0xdd8] sm:$0xff]
    %v3021 = vld [vmem:[#allocation11 + $0xde0] sm:$0xff]
    %v3022 = vld [vmem:[#allocation11 + $0xde8] sm:$0xff]
    %v3023 = vld [vmem:[#allocation11 + $0xdf0] sm:$0xff]
    %v3024 = vld [vmem:[#allocation11 + $0xdf8] sm:$0xff]
    %v3025 = vld [vmem:[#allocation11 + $0xe00] sm:$0xff]
    %v3026 = vld [vmem:[#allocation11 + $0xe08] sm:$0xff]
    %v3027 = vld [vmem:[#allocation11 + $0xe10] sm:$0xff]
    %v3028 = vld [vmem:[#allocation11 + $0xe18] sm:$0xff]
    %v3029 = vld [vmem:[#allocation11 + $0xe20] sm:$0xff]
    %v3030 = vld [vmem:[#allocation11 + $0xe28] sm:$0xff]
    %v3031 = vld [vmem:[#allocation11 + $0xe30] sm:$0xff]
    %v3032 = vld [vmem:[#allocation11 + $0xe38] sm:$0xff]
    %v3033 = vld [vmem:[#allocation11 + $0xe40] sm:$0xff]
    %v3034 = vld [vmem:[#allocation11 + $0xe48] sm:$0xff]
    %v3035 = vld [vmem:[#allocation11 + $0xe50] sm:$0xff]
    %v3036 = vld [vmem:[#allocation11 + $0xe58] sm:$0xff]
    %v3037 = vld [vmem:[#allocation11 + $0xe60] sm:$0xff]
    %v3038 = vld [vmem:[#allocation11 + $0xe68] sm:$0xff]
    %v3039 = vld [vmem:[#allocation11 + $0xe70] sm:$0xff]
    %v3040 = vld [vmem:[#allocation11 + $0xe78] sm:$0xff]
    %v3041 = vld [vmem:[#allocation11 + $0xe80] sm:$0xff]
    %v3042 = vld [vmem:[#allocation11 + $0xe88] sm:$0xff]
    %v3043 = vld [vmem:[#allocation11 + $0xe90] sm:$0xff]
    %v3044 = vld [vmem:[#allocation11 + $0xe98] sm:$0xff]
    %v3045 = vld [vmem:[#allocation11 + $0xea0] sm:$0xff]
    %v3046 = vld [vmem:[#allocation11 + $0xea8] sm:$0xff]
    %v3047 = vld [vmem:[#allocation11 + $0xeb0] sm:$0xff]
    %v3048 = vld [vmem:[#allocation11 + $0xeb8] sm:$0xff]
    %v3049 = vld [vmem:[#allocation11 + $0xec0] sm:$0xff]
    %v3050 = vld [vmem:[#allocation11 + $0xec8] sm:$0xff]
    %v3051 = vld [vmem:[#allocation11 + $0xed0] sm:$0xff]
    %v3052 = vld [vmem:[#allocation11 + $0xed8] sm:$0xff]
    %v3053 = vld [vmem:[#allocation11 + $0xee0] sm:$0xff]
    %v3054 = vld [vmem:[#allocation11 + $0xee8] sm:$0xff]
    %v3055 = vld [vmem:[#allocation11 + $0xef0] sm:$0xff]
    %v3056 = vld [vmem:[#allocation11 + $0xef8] sm:$0xff]
    %v3057 = vld [vmem:[#allocation11 + $0xf00] sm:$0xff]
    %v3058 = vld [vmem:[#allocation11 + $0xf08] sm:$0xff]
    %v3059 = vld [vmem:[#allocation11 + $0xf10] sm:$0xff]
    %v3060 = vld [vmem:[#allocation11 + $0xf18] sm:$0xff]
    %v3061 = vld [vmem:[#allocation11 + $0xf20] sm:$0xff]
    %v3062 = vld [vmem:[#allocation11 + $0xf28] sm:$0xff]
    %v3063 = vld [vmem:[#allocation11 + $0xf30] sm:$0xff]
    %v3064 = vld [vmem:[#allocation11 + $0xf38] sm:$0xff]
    %v3065 = vld [vmem:[#allocation11 + $0xf40] sm:$0xff]
    %v3066 = vld [vmem:[#allocation11 + $0xf48] sm:$0xff]
    %v3067 = vld [vmem:[#allocation11 + $0xf50] sm:$0xff]
    %v3068 = vld [vmem:[#allocation11 + $0xf58] sm:$0xff]
    %v3069 = vld [vmem:[#allocation11 + $0xf60] sm:$0xff]
    %v3070 = vld [vmem:[#allocation11 + $0xf68] sm:$0xff]
    %v3071 = vld [vmem:[#allocation11 + $0xf70] sm:$0xff]
    %v3072 = vld [vmem:[#allocation11 + $0xf78] sm:$0xff]
    %v3073 = vld [vmem:[#allocation11 + $0xf80] sm:$0xff]
    %v3074 = vld [vmem:[#allocation11 + $0xf88] sm:$0xff]
    %v3075 = vld [vmem:[#allocation11 + $0xf90] sm:$0xff]
    %v3076 = vld [vmem:[#allocation11 + $0xf98] sm:$0xff]
    %v3077 = vld [vmem:[#allocation11 + $0xfa0] sm:$0xff]
    %v3078 = vld [vmem:[#allocation11 + $0xfa8] sm:$0xff]
    %v3079 = vld [vmem:[#allocation11 + $0xfb0] sm:$0xff]
    %v3080 = vld [vmem:[#allocation11 + $0xfb8] sm:$0xff]
    %v3081 = vld [vmem:[#allocation11 + $0xfc0] sm:$0xff]
    %v3082 = vld [vmem:[#allocation11 + $0xfc8] sm:$0xff]
    %v3083 = vld [vmem:[#allocation11 + $0xfd0] sm:$0xff]
    %v3084 = vld [vmem:[#allocation11 + $0xfd8] sm:$0xff]
    %v3085 = vld [vmem:[#allocation11 + $0xfe0] sm:$0xff]
    %v3086 = vld [vmem:[#allocation11 + $0xfe8] sm:$0xff]
    %v3087 = vld [vmem:[#allocation11 + $0xff0] sm:$0xff]
    %v3088 = vld [vmem:[#allocation11 + $0xff8] sm:$0xff]
    %v3089 = vld [vmem:[#allocation11 + $0x1000] sm:$0xff]
    %v3090 = vld [vmem:[#allocation11 + $0x1008] sm:$0xff]
    %v3091 = vld [vmem:[#allocation11 + $0x1010] sm:$0xff]
    %v3092 = vld [vmem:[#allocation11 + $0x1018] sm:$0xff]
    %v3093 = vld [vmem:[#allocation11 + $0x1020] sm:$0xff]
    %v3094 = vld [vmem:[#allocation11 + $0x1028] sm:$0xff]
    %v3095 = vld [vmem:[#allocation11 + $0x1030] sm:$0xff]
    %v3096 = vld [vmem:[#allocation11 + $0x1038] sm:$0xff]
    %v3097 = vld [vmem:[#allocation11 + $0x1040] sm:$0xff]
    %v3098 = vld [vmem:[#allocation11 + $0x1048] sm:$0xff]
    %v3099 = vld [vmem:[#allocation11 + $0x1050] sm:$0xff]
    %v3100 = vld [vmem:[#allocation11 + $0x1058] sm:$0xff]
    %v3101 = vld [vmem:[#allocation11 + $0x1060] sm:$0xff]
    %v3102 = vld [vmem:[#allocation11 + $0x1068] sm:$0xff]
    %v3103 = vld [vmem:[#allocation11 + $0x1070] sm:$0xff]
    %v3104 = vld [vmem:[#allocation11 + $0x1078] sm:$0xff]
    %v3105 = vld [vmem:[#allocation11 + $0x1080] sm:$0xff]
    %v3106 = vld [vmem:[#allocation11 + $0x1088] sm:$0xff]
    %v3107 = vld [vmem:[#allocation11 + $0x1090] sm:$0xff]
    %v3108 = vld [vmem:[#allocation11 + $0x1098] sm:$0xff]
    %v3109 = vld [vmem:[#allocation11 + $0x10a0] sm:$0xff]
    %v3110 = vld [vmem:[#allocation11 + $0x10a8] sm:$0xff]
    %v3111 = vld [vmem:[#allocation11 + $0x10b0] sm:$0xff]
    %v3112 = vld [vmem:[#allocation11 + $0x10b8] sm:$0xff]
    %v3113 = vld [vmem:[#allocation11 + $0x10c0] sm:$0xff]
    %v3114 = vld [vmem:[#allocation11 + $0x10c8] sm:$0xff]
    %v3115 = vld [vmem:[#allocation11 + $0x10d0] sm:$0xff]
    %v3116 = vld [vmem:[#allocation11 + $0x10d8] sm:$0xff]
    %v3117 = vld [vmem:[#allocation11 + $0x10e0] sm:$0xff]
    %v3118 = vld [vmem:[#allocation11 + $0x10e8] sm:$0xff]
    %v3119 = vld [vmem:[#allocation11 + $0x10f0] sm:$0xff]
    %v3120 = vld [vmem:[#allocation11 + $0x10f8] sm:$0xff]
    %v3121 = vld [vmem:[#allocation11 + $0x1100] sm:$0xff]
    %v3122 = vld [vmem:[#allocation11 + $0x1108] sm:$0xff]
    %v3123 = vld [vmem:[#allocation11 + $0x1110] sm:$0xff]
    %v3124 = vld [vmem:[#allocation11 + $0x1118] sm:$0xff]
    %v3125 = vld [vmem:[#allocation11 + $0x1120] sm:$0xff]
    %v3126 = vld [vmem:[#allocation11 + $0x1128] sm:$0xff]
    %v3127 = vld [vmem:[#allocation11 + $0x1130] sm:$0xff]
    %v3128 = vld [vmem:[#allocation11 + $0x1138] sm:$0xff]
    %v3129 = vld [vmem:[#allocation11 + $0x1140] sm:$0xff]
    %v3130 = vld [vmem:[#allocation11 + $0x1148] sm:$0xff]
    %v3131 = vld [vmem:[#allocation11 + $0x1150] sm:$0xff]
    %v3132 = vld [vmem:[#allocation11 + $0x1158] sm:$0xff]
    %v3133 = vld [vmem:[#allocation11 + $0x1160] sm:$0xff]
    %v3134 = vld [vmem:[#allocation11 + $0x1168] sm:$0xff]
    %v3135 = vld [vmem:[#allocation11 + $0x1170] sm:$0xff]
    %v3136 = vld [vmem:[#allocation11 + $0x1178] sm:$0xff]
    %v3137 = vld [vmem:[#allocation11 + $0x1180] sm:$0xff]
    %v3138 = vld [vmem:[#allocation11 + $0x1188] sm:$0xff]
    %v3139 = vld [vmem:[#allocation11 + $0x1190] sm:$0xff]
    %v3140 = vld [vmem:[#allocation11 + $0x1198] sm:$0xff]
    %v3141 = vld [vmem:[#allocation11 + $0x11a0] sm:$0xff]
    %v3142 = vld [vmem:[#allocation11 + $0x11a8] sm:$0xff]
    %v3143 = vld [vmem:[#allocation11 + $0x11b0] sm:$0xff]
    %v3144 = vld [vmem:[#allocation11 + $0x11b8] sm:$0xff]
    %v3145 = vld [vmem:[#allocation11 + $0x11c0] sm:$0xff]
    %v3146 = vld [vmem:[#allocation11 + $0x11c8] sm:$0xff]
    %v3147 = vld [vmem:[#allocation11 + $0x11d0] sm:$0xff]
    %v3148 = vld [vmem:[#allocation11 + $0x11d8] sm:$0xff]
    %v3149 = vld [vmem:[#allocation11 + $0x11e0] sm:$0xff]
    %v3150 = vld [vmem:[#allocation11 + $0x11e8] sm:$0xff]
    %v3151 = vld [vmem:[#allocation11 + $0x11f0] sm:$0xff]
    %v3152 = vld [vmem:[#allocation11 + $0x11f8] sm:$0xff]
    %v3153 = vld [vmem:[#allocation11 + $0x1200] sm:$0xff]
    %v3154 = vld [vmem:[#allocation11 + $0x1208] sm:$0xff]
    %v3155 = vld [vmem:[#allocation11 + $0x1210] sm:$0xff]
    %v3156 = vld [vmem:[#allocation11 + $0x1218] sm:$0xff]
    %v3157 = vld [vmem:[#allocation11 + $0x1220] sm:$0xff]
    %v3158 = vld [vmem:[#allocation11 + $0x1228] sm:$0xff]
    %v3159 = vld [vmem:[#allocation11 + $0x1230] sm:$0xff]
    %v3160 = vld [vmem:[#allocation11 + $0x1238] sm:$0xff]
    %v3161 = vld [vmem:[#allocation11 + $0x1240] sm:$0xff]
    %v3162 = vld [vmem:[#allocation11 + $0x1248] sm:$0xff]
    %v3163 = vld [vmem:[#allocation11 + $0x1250] sm:$0xff]
    %v3164 = vld [vmem:[#allocation11 + $0x1258] sm:$0xff]
    %v3165 = vld [vmem:[#allocation11 + $0x1260] sm:$0xff]
    %v3166 = vld [vmem:[#allocation11 + $0x1268] sm:$0xff]
    %v3167 = vld [vmem:[#allocation11 + $0x1270] sm:$0xff]
    %v3168 = vld [vmem:[#allocation11 + $0x1278] sm:$0xff]
    %v3169 = vld [vmem:[#allocation11 + $0x1280] sm:$0xff]
    %v3170 = vld [vmem:[#allocation11 + $0x1288] sm:$0xff]
    %v3171 = vld [vmem:[#allocation11 + $0x1290] sm:$0xff]
    %v3172 = vld [vmem:[#allocation11 + $0x1298] sm:$0xff]
    %v3173 = vld [vmem:[#allocation11 + $0x12a0] sm:$0xff]
    %v3174 = vld [vmem:[#allocation11 + $0x12a8] sm:$0xff]
    %v3175 = vld [vmem:[#allocation11 + $0x12b0] sm:$0xff]
    %v3176 = vld [vmem:[#allocation11 + $0x12b8] sm:$0xff]
    %v3177 = vld [vmem:[#allocation11 + $0x12c0] sm:$0xff]
    %v3178 = vld [vmem:[#allocation11 + $0x12c8] sm:$0xff]
    %v3179 = vld [vmem:[#allocation11 + $0x12d0] sm:$0xff]
    %v3180 = vld [vmem:[#allocation11 + $0x12d8] sm:$0xff]
    %v3181 = vld [vmem:[#allocation11 + $0x12e0] sm:$0xff]
    %v3182 = vld [vmem:[#allocation11 + $0x12e8] sm:$0xff]
    %v3183 = vld [vmem:[#allocation11 + $0x12f0] sm:$0xff]
    %v3184 = vld [vmem:[#allocation11 + $0x12f8] sm:$0xff]
    %v3185 = vld [vmem:[#allocation11 + $0x1300] sm:$0xff]
    %v3186 = vld [vmem:[#allocation11 + $0x1308] sm:$0xff]
    %v3187 = vld [vmem:[#allocation11 + $0x1310] sm:$0xff]
    %v3188 = vld [vmem:[#allocation11 + $0x1318] sm:$0xff]
    %v3189 = vld [vmem:[#allocation11 + $0x1320] sm:$0xff]
    %v3190 = vld [vmem:[#allocation11 + $0x1328] sm:$0xff]
    %v3191 = vld [vmem:[#allocation11 + $0x1330] sm:$0xff]
    %v3192 = vld [vmem:[#allocation11 + $0x1338] sm:$0xff]
    %v3193 = vld [vmem:[#allocation11 + $0x1340] sm:$0xff]
    %v3194 = vld [vmem:[#allocation11 + $0x1348] sm:$0xff]
    %v3195 = vld [vmem:[#allocation11 + $0x1350] sm:$0xff]
    %v3196 = vld [vmem:[#allocation11 + $0x1358] sm:$0xff]
    %v3197 = vld [vmem:[#allocation11 + $0x1360] sm:$0xff]
    %v3198 = vld [vmem:[#allocation11 + $0x1368] sm:$0xff]
    %v3199 = vld [vmem:[#allocation11 + $0x1370] sm:$0xff]
    %v3200 = vld [vmem:[#allocation11 + $0x1378] sm:$0xff]
    %v3201 = vld [vmem:[#allocation11 + $0x1380] sm:$0xff]
    %v3202 = vld [vmem:[#allocation11 + $0x1388] sm:$0xff]
    %v3203 = vld [vmem:[#allocation11 + $0x1390] sm:$0xff]
    %v3204 = vld [vmem:[#allocation11 + $0x1398] sm:$0xff]
    %v3205 = vld [vmem:[#allocation11 + $0x13a0] sm:$0xff]
    %v3206 = vld [vmem:[#allocation11 + $0x13a8] sm:$0xff]
    %v3207 = vld [vmem:[#allocation11 + $0x13b0] sm:$0xff]
    %v3208 = vld [vmem:[#allocation11 + $0x13b8] sm:$0xff]
    %v3209 = vld [vmem:[#allocation11 + $0x13c0] sm:$0xff]
    %v3210 = vld [vmem:[#allocation11 + $0x13c8] sm:$0xff]
    %v3211 = vld [vmem:[#allocation11 + $0x13d0] sm:$0xff]
    %v3212 = vld [vmem:[#allocation11 + $0x13d8] sm:$0xff]
    %v3213 = vld [vmem:[#allocation11 + $0x13e0] sm:$0xff]
    %v3214 = vld [vmem:[#allocation11 + $0x13e8] sm:$0xff]
    %v3215 = vld [vmem:[#allocation11 + $0x13f0] sm:$0xff]
    %v3216 = vld [vmem:[#allocation11 + $0x13f8] sm:$0xff]
    %v3217 = vunpack.c.l.s8.bf16 %v2961
    %v3218 = vunpack.c.l.s8.bf16 %v2962
    %v3219 = vunpack.c.l.s8.bf16 %v2963
    %v3220 = vunpack.c.l.s8.bf16 %v2964
    %v3221 = vunpack.c.l.s8.bf16 %v2965
    %v3222 = vunpack.c.l.s8.bf16 %v2966
    %v3223 = vunpack.c.l.s8.bf16 %v2967
    %v3224 = vunpack.c.l.s8.bf16 %v2968
    %v3225 = vunpack.c.h.s8.bf16 %v2961
    %v3226 = vunpack.c.h.s8.bf16 %v2962
    %v3227 = vunpack.c.h.s8.bf16 %v2963
    %v3228 = vunpack.c.h.s8.bf16 %v2964
    %v3229 = vunpack.c.h.s8.bf16 %v2965
    %v3230 = vunpack.c.h.s8.bf16 %v2966
    %v3231 = vunpack.c.h.s8.bf16 %v2967
    %v3232 = vunpack.c.h.s8.bf16 %v2968
    %v3233 = vunpack.c.l.s8.bf16 %v2969
    %v3234 = vunpack.c.l.s8.bf16 %v2970
    %v3235 = vunpack.c.l.s8.bf16 %v2971
    %v3236 = vunpack.c.l.s8.bf16 %v2972
    %v3237 = vunpack.c.l.s8.bf16 %v2973
    %v3238 = vunpack.c.l.s8.bf16 %v2974
    %v3239 = vunpack.c.l.s8.bf16 %v2975
    %v3240 = vunpack.c.l.s8.bf16 %v2976
    %v3241 = vunpack.c.h.s8.bf16 %v2969
    %v3242 = vunpack.c.h.s8.bf16 %v2970
    %v3243 = vunpack.c.h.s8.bf16 %v2971
    %v3244 = vunpack.c.h.s8.bf16 %v2972
    %v3245 = vunpack.c.h.s8.bf16 %v2973
    %v3246 = vunpack.c.h.s8.bf16 %v2974
    %v3247 = vunpack.c.h.s8.bf16 %v2975
    %v3248 = vunpack.c.h.s8.bf16 %v2976
    %v3249 = vunpack.c.l.s8.bf16 %v2977
    %v3250 = vunpack.c.l.s8.bf16 %v2978
    %v3251 = vunpack.c.l.s8.bf16 %v2979
    %v3252 = vunpack.c.l.s8.bf16 %v2980
    %v3253 = vunpack.c.l.s8.bf16 %v2981
    %v3254 = vunpack.c.l.s8.bf16 %v2982
    %v3255 = vunpack.c.l.s8.bf16 %v2983
    %v3256 = vunpack.c.l.s8.bf16 %v2984
    %v3257 = vunpack.c.h.s8.bf16 %v2977
    %v3258 = vunpack.c.h.s8.bf16 %v2978
    %v3259 = vunpack.c.h.s8.bf16 %v2979
    %v3260 = vunpack.c.h.s8.bf16 %v2980
    %v3261 = vunpack.c.h.s8.bf16 %v2981
    %v3262 = vunpack.c.h.s8.bf16 %v2982
    %v3263 = vunpack.c.h.s8.bf16 %v2983
    %v3264 = vunpack.c.h.s8.bf16 %v2984
    %v3265 = vunpack.c.l.s8.bf16 %v2985
    %v3266 = vunpack.c.l.s8.bf16 %v2986
    %v3267 = vunpack.c.l.s8.bf16 %v2987
    %v3268 = vunpack.c.l.s8.bf16 %v2988
    %v3269 = vunpack.c.l.s8.bf16 %v2989
    %v3270 = vunpack.c.l.s8.bf16 %v2990
    %v3271 = vunpack.c.l.s8.bf16 %v2991
    %v3272 = vunpack.c.l.s8.bf16 %v2992
    %v3273 = vunpack.c.h.s8.bf16 %v2985
    %v3274 = vunpack.c.h.s8.bf16 %v2986
    %v3275 = vunpack.c.h.s8.bf16 %v2987
    %v3276 = vunpack.c.h.s8.bf16 %v2988
    %v3277 = vunpack.c.h.s8.bf16 %v2989
    %v3278 = vunpack.c.h.s8.bf16 %v2990
    %v3279 = vunpack.c.h.s8.bf16 %v2991
    %v3280 = vunpack.c.h.s8.bf16 %v2992
    %v3281 = vunpack.c.l.s8.bf16 %v2993
    %v3282 = vunpack.c.l.s8.bf16 %v2994
    %v3283 = vunpack.c.l.s8.bf16 %v2995
    %v3284 = vunpack.c.l.s8.bf16 %v2996
    %v3285 = vunpack.c.l.s8.bf16 %v2997
    %v3286 = vunpack.c.l.s8.bf16 %v2998
    %v3287 = vunpack.c.l.s8.bf16 %v2999
    %v3288 = vunpack.c.l.s8.bf16 %v3000
    %v3289 = vunpack.c.h.s8.bf16 %v2993
    %v3290 = vunpack.c.h.s8.bf16 %v2994
    %v3291 = vunpack.c.h.s8.bf16 %v2995
    %v3292 = vunpack.c.h.s8.bf16 %v2996
    %v3293 = vunpack.c.h.s8.bf16 %v2997
    %v3294 = vunpack.c.h.s8.bf16 %v2998
    %v3295 = vunpack.c.h.s8.bf16 %v2999
    %v3296 = vunpack.c.h.s8.bf16 %v3000
    %v3297 = vunpack.c.l.s8.bf16 %v3001
    %v3298 = vunpack.c.l.s8.bf16 %v3002
    %v3299 = vunpack.c.l.s8.bf16 %v3003
    %v3300 = vunpack.c.l.s8.bf16 %v3004
    %v3301 = vunpack.c.l.s8.bf16 %v3005
    %v3302 = vunpack.c.l.s8.bf16 %v3006
    %v3303 = vunpack.c.l.s8.bf16 %v3007
    %v3304 = vunpack.c.l.s8.bf16 %v3008
    %v3305 = vunpack.c.h.s8.bf16 %v3001
    %v3306 = vunpack.c.h.s8.bf16 %v3002
    %v3307 = vunpack.c.h.s8.bf16 %v3003
    %v3308 = vunpack.c.h.s8.bf16 %v3004
    %v3309 = vunpack.c.h.s8.bf16 %v3005
    %v3310 = vunpack.c.h.s8.bf16 %v3006
    %v3311 = vunpack.c.h.s8.bf16 %v3007
    %v3312 = vunpack.c.h.s8.bf16 %v3008
    %v3313 = vunpack.c.l.s8.bf16 %v3009
    %v3314 = vunpack.c.l.s8.bf16 %v3010
    %v3315 = vunpack.c.l.s8.bf16 %v3011
    %v3316 = vunpack.c.l.s8.bf16 %v3012
    %v3317 = vunpack.c.l.s8.bf16 %v3013
    %v3318 = vunpack.c.l.s8.bf16 %v3014
    %v3319 = vunpack.c.l.s8.bf16 %v3015
    %v3320 = vunpack.c.l.s8.bf16 %v3016
    %v3321 = vunpack.c.h.s8.bf16 %v3009
    %v3322 = vunpack.c.h.s8.bf16 %v3010
    %v3323 = vunpack.c.h.s8.bf16 %v3011
    %v3324 = vunpack.c.h.s8.bf16 %v3012
    %v3325 = vunpack.c.h.s8.bf16 %v3013
    %v3326 = vunpack.c.h.s8.bf16 %v3014
    %v3327 = vunpack.c.h.s8.bf16 %v3015
    %v3328 = vunpack.c.h.s8.bf16 %v3016
    %v3329 = vunpack.c.l.s8.bf16 %v3017
    %v3330 = vunpack.c.l.s8.bf16 %v3018
    %v3331 = vunpack.c.l.s8.bf16 %v3019
    %v3332 = vunpack.c.l.s8.bf16 %v3020
    %v3333 = vunpack.c.l.s8.bf16 %v3021
    %v3334 = vunpack.c.l.s8.bf16 %v3022
    %v3335 = vunpack.c.l.s8.bf16 %v3023
    %v3336 = vunpack.c.l.s8.bf16 %v3024
    %v3337 = vunpack.c.h.s8.bf16 %v3017
    %v3338 = vunpack.c.h.s8.bf16 %v3018
    %v3339 = vunpack.c.h.s8.bf16 %v3019
    %v3340 = vunpack.c.h.s8.bf16 %v3020
    %v3341 = vunpack.c.h.s8.bf16 %v3021
    %v3342 = vunpack.c.h.s8.bf16 %v3022
    %v3343 = vunpack.c.h.s8.bf16 %v3023
    %v3344 = vunpack.c.h.s8.bf16 %v3024
    %v3345 = vunpack.c.l.s8.bf16 %v3025
    %v3346 = vunpack.c.l.s8.bf16 %v3026
    %v3347 = vunpack.c.l.s8.bf16 %v3027
    %v3348 = vunpack.c.l.s8.bf16 %v3028
    %v3349 = vunpack.c.l.s8.bf16 %v3029
    %v3350 = vunpack.c.l.s8.bf16 %v3030
    %v3351 = vunpack.c.l.s8.bf16 %v3031
    %v3352 = vunpack.c.l.s8.bf16 %v3032
    %v3353 = vunpack.c.h.s8.bf16 %v3025
    %v3354 = vunpack.c.h.s8.bf16 %v3026
    %v3355 = vunpack.c.h.s8.bf16 %v3027
    %v3356 = vunpack.c.h.s8.bf16 %v3028
    %v3357 = vunpack.c.h.s8.bf16 %v3029
    %v3358 = vunpack.c.h.s8.bf16 %v3030
    %v3359 = vunpack.c.h.s8.bf16 %v3031
    %v3360 = vunpack.c.h.s8.bf16 %v3032
    %v3361 = vunpack.c.l.s8.bf16 %v3033
    %v3362 = vunpack.c.l.s8.bf16 %v3034
    %v3363 = vunpack.c.l.s8.bf16 %v3035
    %v3364 = vunpack.c.l.s8.bf16 %v3036
    %v3365 = vunpack.c.l.s8.bf16 %v3037
    %v3366 = vunpack.c.l.s8.bf16 %v3038
    %v3367 = vunpack.c.l.s8.bf16 %v3039
    %v3368 = vunpack.c.l.s8.bf16 %v3040
    %v3369 = vunpack.c.h.s8.bf16 %v3033
    %v3370 = vunpack.c.h.s8.bf16 %v3034
    %v3371 = vunpack.c.h.s8.bf16 %v3035
    %v3372 = vunpack.c.h.s8.bf16 %v3036
    %v3373 = vunpack.c.h.s8.bf16 %v3037
    %v3374 = vunpack.c.h.s8.bf16 %v3038
    %v3375 = vunpack.c.h.s8.bf16 %v3039
    %v3376 = vunpack.c.h.s8.bf16 %v3040
    %v3377 = vunpack.c.l.s8.bf16 %v3041
    %v3378 = vunpack.c.l.s8.bf16 %v3042
    %v3379 = vunpack.c.l.s8.bf16 %v3043
    %v3380 = vunpack.c.l.s8.bf16 %v3044
    %v3381 = vunpack.c.l.s8.bf16 %v3045
    %v3382 = vunpack.c.l.s8.bf16 %v3046
    %v3383 = vunpack.c.l.s8.bf16 %v3047
    %v3384 = vunpack.c.l.s8.bf16 %v3048
    %v3385 = vunpack.c.h.s8.bf16 %v3041
    %v3386 = vunpack.c.h.s8.bf16 %v3042
    %v3387 = vunpack.c.h.s8.bf16 %v3043
    %v3388 = vunpack.c.h.s8.bf16 %v3044
    %v3389 = vunpack.c.h.s8.bf16 %v3045
    %v3390 = vunpack.c.h.s8.bf16 %v3046
    %v3391 = vunpack.c.h.s8.bf16 %v3047
    %v3392 = vunpack.c.h.s8.bf16 %v3048
    %v3393 = vunpack.c.l.s8.bf16 %v3049
    %v3394 = vunpack.c.l.s8.bf16 %v3050
    %v3395 = vunpack.c.l.s8.bf16 %v3051
    %v3396 = vunpack.c.l.s8.bf16 %v3052
    %v3397 = vunpack.c.l.s8.bf16 %v3053
    %v3398 = vunpack.c.l.s8.bf16 %v3054
    %v3399 = vunpack.c.l.s8.bf16 %v3055
    %v3400 = vunpack.c.l.s8.bf16 %v3056
    %v3401 = vunpack.c.h.s8.bf16 %v3049
    %v3402 = vunpack.c.h.s8.bf16 %v3050
    %v3403 = vunpack.c.h.s8.bf16 %v3051
    %v3404 = vunpack.c.h.s8.bf16 %v3052
    %v3405 = vunpack.c.h.s8.bf16 %v3053
    %v3406 = vunpack.c.h.s8.bf16 %v3054
    %v3407 = vunpack.c.h.s8.bf16 %v3055
    %v3408 = vunpack.c.h.s8.bf16 %v3056
    %v3409 = vunpack.c.l.s8.bf16 %v3057
    %v3410 = vunpack.c.l.s8.bf16 %v3058
    %v3411 = vunpack.c.l.s8.bf16 %v3059
    %v3412 = vunpack.c.l.s8.bf16 %v3060
    %v3413 = vunpack.c.l.s8.bf16 %v3061
    %v3414 = vunpack.c.l.s8.bf16 %v3062
    %v3415 = vunpack.c.l.s8.bf16 %v3063
    %v3416 = vunpack.c.l.s8.bf16 %v3064
    %v3417 = vunpack.c.h.s8.bf16 %v3057
    %v3418 = vunpack.c.h.s8.bf16 %v3058
    %v3419 = vunpack.c.h.s8.bf16 %v3059
    %v3420 = vunpack.c.h.s8.bf16 %v3060
    %v3421 = vunpack.c.h.s8.bf16 %v3061
    %v3422 = vunpack.c.h.s8.bf16 %v3062
    %v3423 = vunpack.c.h.s8.bf16 %v3063
    %v3424 = vunpack.c.h.s8.bf16 %v3064
    %v3425 = vunpack.c.l.s8.bf16 %v3065
    %v3426 = vunpack.c.l.s8.bf16 %v3066
    %v3427 = vunpack.c.l.s8.bf16 %v3067
    %v3428 = vunpack.c.l.s8.bf16 %v3068
    %v3429 = vunpack.c.l.s8.bf16 %v3069
    %v3430 = vunpack.c.l.s8.bf16 %v3070
    %v3431 = vunpack.c.l.s8.bf16 %v3071
    %v3432 = vunpack.c.l.s8.bf16 %v3072
    %v3433 = vunpack.c.h.s8.bf16 %v3065
    %v3434 = vunpack.c.h.s8.bf16 %v3066
    %v3435 = vunpack.c.h.s8.bf16 %v3067
    %v3436 = vunpack.c.h.s8.bf16 %v3068
    %v3437 = vunpack.c.h.s8.bf16 %v3069
    %v3438 = vunpack.c.h.s8.bf16 %v3070
    %v3439 = vunpack.c.h.s8.bf16 %v3071
    %v3440 = vunpack.c.h.s8.bf16 %v3072
    %v3441 = vunpack.c.l.s8.bf16 %v3073
    %v3442 = vunpack.c.l.s8.bf16 %v3074
    %v3443 = vunpack.c.l.s8.bf16 %v3075
    %v3444 = vunpack.c.l.s8.bf16 %v3076
    %v3445 = vunpack.c.l.s8.bf16 %v3077
    %v3446 = vunpack.c.l.s8.bf16 %v3078
    %v3447 = vunpack.c.l.s8.bf16 %v3079
    %v3448 = vunpack.c.l.s8.bf16 %v3080
    %v3449 = vunpack.c.h.s8.bf16 %v3073
    %v3450 = vunpack.c.h.s8.bf16 %v3074
    %v3451 = vunpack.c.h.s8.bf16 %v3075
    %v3452 = vunpack.c.h.s8.bf16 %v3076
    %v3453 = vunpack.c.h.s8.bf16 %v3077
    %v3454 = vunpack.c.h.s8.bf16 %v3078
    %v3455 = vunpack.c.h.s8.bf16 %v3079
    %v3456 = vunpack.c.h.s8.bf16 %v3080
    %v3457 = vunpack.c.l.s8.bf16 %v3081
    %v3458 = vunpack.c.l.s8.bf16 %v3082
    %v3459 = vunpack.c.l.s8.bf16 %v3083
    %v3460 = vunpack.c.l.s8.bf16 %v3084
    %v3461 = vunpack.c.l.s8.bf16 %v3085
    %v3462 = vunpack.c.l.s8.bf16 %v3086
    %v3463 = vunpack.c.l.s8.bf16 %v3087
    %v3464 = vunpack.c.l.s8.bf16 %v3088
    %v3465 = vunpack.c.h.s8.bf16 %v3081
    %v3466 = vunpack.c.h.s8.bf16 %v3082
    %v3467 = vunpack.c.h.s8.bf16 %v3083
    %v3468 = vunpack.c.h.s8.bf16 %v3084
    %v3469 = vunpack.c.h.s8.bf16 %v3085
    %v3470 = vunpack.c.h.s8.bf16 %v3086
    %v3471 = vunpack.c.h.s8.bf16 %v3087
    %v3472 = vunpack.c.h.s8.bf16 %v3088
    %v3473 = vunpack.c.l.s8.bf16 %v3089
    %v3474 = vunpack.c.l.s8.bf16 %v3090
    %v3475 = vunpack.c.l.s8.bf16 %v3091
    %v3476 = vunpack.c.l.s8.bf16 %v3092
    %v3477 = vunpack.c.l.s8.bf16 %v3093
    %v3478 = vunpack.c.l.s8.bf16 %v3094
    %v3479 = vunpack.c.l.s8.bf16 %v3095
    %v3480 = vunpack.c.l.s8.bf16 %v3096
    %v3481 = vunpack.c.h.s8.bf16 %v3089
    %v3482 = vunpack.c.h.s8.bf16 %v3090
    %v3483 = vunpack.c.h.s8.bf16 %v3091
    %v3484 = vunpack.c.h.s8.bf16 %v3092
    %v3485 = vunpack.c.h.s8.bf16 %v3093
    %v3486 = vunpack.c.h.s8.bf16 %v3094
    %v3487 = vunpack.c.h.s8.bf16 %v3095
    %v3488 = vunpack.c.h.s8.bf16 %v3096
    %v3489 = vunpack.c.l.s8.bf16 %v3097
    %v3490 = vunpack.c.l.s8.bf16 %v3098
    %v3491 = vunpack.c.l.s8.bf16 %v3099
    %v3492 = vunpack.c.l.s8.bf16 %v3100
    %v3493 = vunpack.c.l.s8.bf16 %v3101
    %v3494 = vunpack.c.l.s8.bf16 %v3102
    %v3495 = vunpack.c.l.s8.bf16 %v3103
    %v3496 = vunpack.c.l.s8.bf16 %v3104
    %v3497 = vunpack.c.h.s8.bf16 %v3097
    %v3498 = vunpack.c.h.s8.bf16 %v3098
    %v3499 = vunpack.c.h.s8.bf16 %v3099
    %v3500 = vunpack.c.h.s8.bf16 %v3100
    %v3501 = vunpack.c.h.s8.bf16 %v3101
    %v3502 = vunpack.c.h.s8.bf16 %v3102
    %v3503 = vunpack.c.h.s8.bf16 %v3103
    %v3504 = vunpack.c.h.s8.bf16 %v3104
    %v3505 = vunpack.c.l.s8.bf16 %v3105
    %v3506 = vunpack.c.l.s8.bf16 %v3106
    %v3507 = vunpack.c.l.s8.bf16 %v3107
    %v3508 = vunpack.c.l.s8.bf16 %v3108
    %v3509 = vunpack.c.l.s8.bf16 %v3109
    %v3510 = vunpack.c.l.s8.bf16 %v3110
    %v3511 = vunpack.c.l.s8.bf16 %v3111
    %v3512 = vunpack.c.l.s8.bf16 %v3112
    %v3513 = vunpack.c.h.s8.bf16 %v3105
    %v3514 = vunpack.c.h.s8.bf16 %v3106
    %v3515 = vunpack.c.h.s8.bf16 %v3107
    %v3516 = vunpack.c.h.s8.bf16 %v3108
    %v3517 = vunpack.c.h.s8.bf16 %v3109
    %v3518 = vunpack.c.h.s8.bf16 %v3110
    %v3519 = vunpack.c.h.s8.bf16 %v3111
    %v3520 = vunpack.c.h.s8.bf16 %v3112
    %v3521 = vunpack.c.l.s8.bf16 %v3113
    %v3522 = vunpack.c.l.s8.bf16 %v3114
    %v3523 = vunpack.c.l.s8.bf16 %v3115
    %v3524 = vunpack.c.l.s8.bf16 %v3116
    %v3525 = vunpack.c.l.s8.bf16 %v3117
    %v3526 = vunpack.c.l.s8.bf16 %v3118
    %v3527 = vunpack.c.l.s8.bf16 %v3119
    %v3528 = vunpack.c.l.s8.bf16 %v3120
    %v3529 = vunpack.c.h.s8.bf16 %v3113
    %v3530 = vunpack.c.h.s8.bf16 %v3114
    %v3531 = vunpack.c.h.s8.bf16 %v3115
    %v3532 = vunpack.c.h.s8.bf16 %v3116
    %v3533 = vunpack.c.h.s8.bf16 %v3117
    %v3534 = vunpack.c.h.s8.bf16 %v3118
    %v3535 = vunpack.c.h.s8.bf16 %v3119
    %v3536 = vunpack.c.h.s8.bf16 %v3120
    %v3537 = vunpack.c.l.s8.bf16 %v3121
    %v3538 = vunpack.c.l.s8.bf16 %v3122
    %v3539 = vunpack.c.l.s8.bf16 %v3123
    %v3540 = vunpack.c.l.s8.bf16 %v3124
    %v3541 = vunpack.c.l.s8.bf16 %v3125
    %v3542 = vunpack.c.l.s8.bf16 %v3126
    %v3543 = vunpack.c.l.s8.bf16 %v3127
    %v3544 = vunpack.c.l.s8.bf16 %v3128
    %v3545 = vunpack.c.h.s8.bf16 %v3121
    %v3546 = vunpack.c.h.s8.bf16 %v3122
    %v3547 = vunpack.c.h.s8.bf16 %v3123
    %v3548 = vunpack.c.h.s8.bf16 %v3124
    %v3549 = vunpack.c.h.s8.bf16 %v3125
    %v3550 = vunpack.c.h.s8.bf16 %v3126
    %v3551 = vunpack.c.h.s8.bf16 %v3127
    %v3552 = vunpack.c.h.s8.bf16 %v3128
    %v3553 = vunpack.c.l.s8.bf16 %v3129
    %v3554 = vunpack.c.l.s8.bf16 %v3130
    %v3555 = vunpack.c.l.s8.bf16 %v3131
    %v3556 = vunpack.c.l.s8.bf16 %v3132
    %v3557 = vunpack.c.l.s8.bf16 %v3133
    %v3558 = vunpack.c.l.s8.bf16 %v3134
    %v3559 = vunpack.c.l.s8.bf16 %v3135
    %v3560 = vunpack.c.l.s8.bf16 %v3136
    %v3561 = vunpack.c.h.s8.bf16 %v3129
    %v3562 = vunpack.c.h.s8.bf16 %v3130
    %v3563 = vunpack.c.h.s8.bf16 %v3131
    %v3564 = vunpack.c.h.s8.bf16 %v3132
    %v3565 = vunpack.c.h.s8.bf16 %v3133
    %v3566 = vunpack.c.h.s8.bf16 %v3134
    %v3567 = vunpack.c.h.s8.bf16 %v3135
    %v3568 = vunpack.c.h.s8.bf16 %v3136
    %v3569 = vunpack.c.l.s8.bf16 %v3137
    %v3570 = vunpack.c.l.s8.bf16 %v3138
    %v3571 = vunpack.c.l.s8.bf16 %v3139
    %v3572 = vunpack.c.l.s8.bf16 %v3140
    %v3573 = vunpack.c.l.s8.bf16 %v3141
    %v3574 = vunpack.c.l.s8.bf16 %v3142
    %v3575 = vunpack.c.l.s8.bf16 %v3143
    %v3576 = vunpack.c.l.s8.bf16 %v3144
    %v3577 = vunpack.c.h.s8.bf16 %v3137
    %v3578 = vunpack.c.h.s8.bf16 %v3138
    %v3579 = vunpack.c.h.s8.bf16 %v3139
    %v3580 = vunpack.c.h.s8.bf16 %v3140
    %v3581 = vunpack.c.h.s8.bf16 %v3141
    %v3582 = vunpack.c.h.s8.bf16 %v3142
    %v3583 = vunpack.c.h.s8.bf16 %v3143
    %v3584 = vunpack.c.h.s8.bf16 %v3144
    %v3585 = vunpack.c.l.s8.bf16 %v3145
    %v3586 = vunpack.c.l.s8.bf16 %v3146
    %v3587 = vunpack.c.l.s8.bf16 %v3147
    %v3588 = vunpack.c.l.s8.bf16 %v3148
    %v3589 = vunpack.c.l.s8.bf16 %v3149
    %v3590 = vunpack.c.l.s8.bf16 %v3150
    %v3591 = vunpack.c.l.s8.bf16 %v3151
    %v3592 = vunpack.c.l.s8.bf16 %v3152
    %v3593 = vunpack.c.h.s8.bf16 %v3145
    %v3594 = vunpack.c.h.s8.bf16 %v3146
    %v3595 = vunpack.c.h.s8.bf16 %v3147
    %v3596 = vunpack.c.h.s8.bf16 %v3148
    %v3597 = vunpack.c.h.s8.bf16 %v3149
    %v3598 = vunpack.c.h.s8.bf16 %v3150
    %v3599 = vunpack.c.h.s8.bf16 %v3151
    %v3600 = vunpack.c.h.s8.bf16 %v3152
    %v3601 = vunpack.c.l.s8.bf16 %v3153
    %v3602 = vunpack.c.l.s8.bf16 %v3154
    %v3603 = vunpack.c.l.s8.bf16 %v3155
    %v3604 = vunpack.c.l.s8.bf16 %v3156
    %v3605 = vunpack.c.l.s8.bf16 %v3157
    %v3606 = vunpack.c.l.s8.bf16 %v3158
    %v3607 = vunpack.c.l.s8.bf16 %v3159
    %v3608 = vunpack.c.l.s8.bf16 %v3160
    %v3609 = vunpack.c.h.s8.bf16 %v3153
    %v3610 = vunpack.c.h.s8.bf16 %v3154
    %v3611 = vunpack.c.h.s8.bf16 %v3155
    %v3612 = vunpack.c.h.s8.bf16 %v3156
    %v3613 = vunpack.c.h.s8.bf16 %v3157
    %v3614 = vunpack.c.h.s8.bf16 %v3158
    %v3615 = vunpack.c.h.s8.bf16 %v3159
    %v3616 = vunpack.c.h.s8.bf16 %v3160
    %v3617 = vunpack.c.l.s8.bf16 %v3161
    %v3618 = vunpack.c.l.s8.bf16 %v3162
    %v3619 = vunpack.c.l.s8.bf16 %v3163
    %v3620 = vunpack.c.l.s8.bf16 %v3164
    %v3621 = vunpack.c.l.s8.bf16 %v3165
    %v3622 = vunpack.c.l.s8.bf16 %v3166
    %v3623 = vunpack.c.l.s8.bf16 %v3167
    %v3624 = vunpack.c.l.s8.bf16 %v3168
    %v3625 = vunpack.c.h.s8.bf16 %v3161
    %v3626 = vunpack.c.h.s8.bf16 %v3162
    %v3627 = vunpack.c.h.s8.bf16 %v3163
    %v3628 = vunpack.c.h.s8.bf16 %v3164
    %v3629 = vunpack.c.h.s8.bf16 %v3165
    %v3630 = vunpack.c.h.s8.bf16 %v3166
    %v3631 = vunpack.c.h.s8.bf16 %v3167
    %v3632 = vunpack.c.h.s8.bf16 %v3168
    %v3633 = vunpack.c.l.s8.bf16 %v3169
    %v3634 = vunpack.c.l.s8.bf16 %v3170
    %v3635 = vunpack.c.l.s8.bf16 %v3171
    %v3636 = vunpack.c.l.s8.bf16 %v3172
    %v3637 = vunpack.c.l.s8.bf16 %v3173
    %v3638 = vunpack.c.l.s8.bf16 %v3174
    %v3639 = vunpack.c.l.s8.bf16 %v3175
    %v3640 = vunpack.c.l.s8.bf16 %v3176
    %v3641 = vunpack.c.h.s8.bf16 %v3169
    %v3642 = vunpack.c.h.s8.bf16 %v3170
    %v3643 = vunpack.c.h.s8.bf16 %v3171
    %v3644 = vunpack.c.h.s8.bf16 %v3172
    %v3645 = vunpack.c.h.s8.bf16 %v3173
    %v3646 = vunpack.c.h.s8.bf16 %v3174
    %v3647 = vunpack.c.h.s8.bf16 %v3175
    %v3648 = vunpack.c.h.s8.bf16 %v3176
    %v3649 = vunpack.c.l.s8.bf16 %v3177
    %v3650 = vunpack.c.l.s8.bf16 %v3178
    %v3651 = vunpack.c.l.s8.bf16 %v3179
    %v3652 = vunpack.c.l.s8.bf16 %v3180
    %v3653 = vunpack.c.l.s8.bf16 %v3181
    %v3654 = vunpack.c.l.s8.bf16 %v3182
    %v3655 = vunpack.c.l.s8.bf16 %v3183
    %v3656 = vunpack.c.l.s8.bf16 %v3184
    %v3657 = vunpack.c.h.s8.bf16 %v3177
    %v3658 = vunpack.c.h.s8.bf16 %v3178
    %v3659 = vunpack.c.h.s8.bf16 %v3179
    %v3660 = vunpack.c.h.s8.bf16 %v3180
    %v3661 = vunpack.c.h.s8.bf16 %v3181
    %v3662 = vunpack.c.h.s8.bf16 %v3182
    %v3663 = vunpack.c.h.s8.bf16 %v3183
    %v3664 = vunpack.c.h.s8.bf16 %v3184
    %v3665 = vunpack.c.l.s8.bf16 %v3185
    %v3666 = vunpack.c.l.s8.bf16 %v3186
    %v3667 = vunpack.c.l.s8.bf16 %v3187
    %v3668 = vunpack.c.l.s8.bf16 %v3188
    %v3669 = vunpack.c.l.s8.bf16 %v3189
    %v3670 = vunpack.c.l.s8.bf16 %v3190
    %v3671 = vunpack.c.l.s8.bf16 %v3191
    %v3672 = vunpack.c.l.s8.bf16 %v3192
    %v3673 = vunpack.c.h.s8.bf16 %v3185
    %v3674 = vunpack.c.h.s8.bf16 %v3186
    %v3675 = vunpack.c.h.s8.bf16 %v3187
    %v3676 = vunpack.c.h.s8.bf16 %v3188
    %v3677 = vunpack.c.h.s8.bf16 %v3189
    %v3678 = vunpack.c.h.s8.bf16 %v3190
    %v3679 = vunpack.c.h.s8.bf16 %v3191
    %v3680 = vunpack.c.h.s8.bf16 %v3192
    %v3681 = vunpack.c.l.s8.bf16 %v3193
    %v3682 = vunpack.c.l.s8.bf16 %v3194
    %v3683 = vunpack.c.l.s8.bf16 %v3195
    %v3684 = vunpack.c.l.s8.bf16 %v3196
    %v3685 = vunpack.c.l.s8.bf16 %v3197
    %v3686 = vunpack.c.l.s8.bf16 %v3198
    %v3687 = vunpack.c.l.s8.bf16 %v3199
    %v3688 = vunpack.c.l.s8.bf16 %v3200
    %v3689 = vunpack.c.h.s8.bf16 %v3193
    %v3690 = vunpack.c.h.s8.bf16 %v3194
    %v3691 = vunpack.c.h.s8.bf16 %v3195
    %v3692 = vunpack.c.h.s8.bf16 %v3196
    %v3693 = vunpack.c.h.s8.bf16 %v3197
    %v3694 = vunpack.c.h.s8.bf16 %v3198
    %v3695 = vunpack.c.h.s8.bf16 %v3199
    %v3696 = vunpack.c.h.s8.bf16 %v3200
    %v3697 = vunpack.c.l.s8.bf16 %v3201
    %v3698 = vunpack.c.l.s8.bf16 %v3202
    %v3699 = vunpack.c.l.s8.bf16 %v3203
    %v3700 = vunpack.c.l.s8.bf16 %v3204
    %v3701 = vunpack.c.l.s8.bf16 %v3205
    %v3702 = vunpack.c.l.s8.bf16 %v3206
    %v3703 = vunpack.c.l.s8.bf16 %v3207
    %v3704 = vunpack.c.l.s8.bf16 %v3208
    %v3705 = vunpack.c.h.s8.bf16 %v3201
    %v3706 = vunpack.c.h.s8.bf16 %v3202
    %v3707 = vunpack.c.h.s8.bf16 %v3203
    %v3708 = vunpack.c.h.s8.bf16 %v3204
    %v3709 = vunpack.c.h.s8.bf16 %v3205
    %v3710 = vunpack.c.h.s8.bf16 %v3206
    %v3711 = vunpack.c.h.s8.bf16 %v3207
    %v3712 = vunpack.c.h.s8.bf16 %v3208
    %v3713 = vunpack.c.l.s8.bf16 %v3209
    %v3714 = vunpack.c.l.s8.bf16 %v3210
    %v3715 = vunpack.c.l.s8.bf16 %v3211
    %v3716 = vunpack.c.l.s8.bf16 %v3212
    %v3717 = vunpack.c.l.s8.bf16 %v3213
    %v3718 = vunpack.c.l.s8.bf16 %v3214
    %v3719 = vunpack.c.l.s8.bf16 %v3215
    %v3720 = vunpack.c.l.s8.bf16 %v3216
    %v3721 = vunpack.c.h.s8.bf16 %v3209
    %v3722 = vunpack.c.h.s8.bf16 %v3210
    %v3723 = vunpack.c.h.s8.bf16 %v3211
    %v3724 = vunpack.c.h.s8.bf16 %v3212
    %v3725 = vunpack.c.h.s8.bf16 %v3213
    %v3726 = vunpack.c.h.s8.bf16 %v3214
    %v3727 = vunpack.c.h.s8.bf16 %v3215
    %v3728 = vunpack.c.h.s8.bf16 %v3216
    %v3729 = vld [vmem:[#allocation11 + $0x1400] sm:$0xff]
    %v3730 = vld [vmem:[#allocation11 + $0x1408] sm:$0xff]
    %v3731 = vld [vmem:[#allocation11 + $0x1410] sm:$0xff]
    %v3732 = vld [vmem:[#allocation11 + $0x1418] sm:$0xff]
    %v3733 = vld [vmem:[#allocation11 + $0x1420] sm:$0xff]
    %v3734 = vld [vmem:[#allocation11 + $0x1428] sm:$0xff]
    %v3735 = vld [vmem:[#allocation11 + $0x1430] sm:$0xff]
    %v3736 = vld [vmem:[#allocation11 + $0x1438] sm:$0xff]
    %v3737 = vld [vmem:[#allocation11 + $0x1440] sm:$0xff]
    %v3738 = vld [vmem:[#allocation11 + $0x1448] sm:$0xff]
    %v3739 = vld [vmem:[#allocation11 + $0x1450] sm:$0xff]
    %v3740 = vld [vmem:[#allocation11 + $0x1458] sm:$0xff]
    %v3741 = vld [vmem:[#allocation11 + $0x1460] sm:$0xff]
    %v3742 = vld [vmem:[#allocation11 + $0x1468] sm:$0xff]
    %v3743 = vld [vmem:[#allocation11 + $0x1470] sm:$0xff]
    %v3744 = vld [vmem:[#allocation11 + $0x1478] sm:$0xff]
    %v3745 = vld [vmem:[#allocation11 + $0x1480] sm:$0xff]
    %v3746 = vld [vmem:[#allocation11 + $0x1488] sm:$0xff]
    %v3747 = vld [vmem:[#allocation11 + $0x1490] sm:$0xff]
    %v3748 = vld [vmem:[#allocation11 + $0x1498] sm:$0xff]
    %v3749 = vld [vmem:[#allocation11 + $0x14a0] sm:$0xff]
    %v3750 = vld [vmem:[#allocation11 + $0x14a8] sm:$0xff]
    %v3751 = vld [vmem:[#allocation11 + $0x14b0] sm:$0xff]
    %v3752 = vld [vmem:[#allocation11 + $0x14b8] sm:$0xff]
    %v3753 = vld [vmem:[#allocation11 + $0x14c0] sm:$0xff]
    %v3754 = vld [vmem:[#allocation11 + $0x14c8] sm:$0xff]
    %v3755 = vld [vmem:[#allocation11 + $0x14d0] sm:$0xff]
    %v3756 = vld [vmem:[#allocation11 + $0x14d8] sm:$0xff]
    %v3757 = vld [vmem:[#allocation11 + $0x14e0] sm:$0xff]
    %v3758 = vld [vmem:[#allocation11 + $0x14e8] sm:$0xff]
    %v3759 = vld [vmem:[#allocation11 + $0x14f0] sm:$0xff]
    %v3760 = vld [vmem:[#allocation11 + $0x14f8] sm:$0xff]
    %v3761 = vld [vmem:[#allocation11 + $0x1500] sm:$0xff]
    %v3762 = vld [vmem:[#allocation11 + $0x1508] sm:$0xff]
    %v3763 = vld [vmem:[#allocation11 + $0x1510] sm:$0xff]
    %v3764 = vld [vmem:[#allocation11 + $0x1518] sm:$0xff]
    %v3765 = vld [vmem:[#allocation11 + $0x1520] sm:$0xff]
    %v3766 = vld [vmem:[#allocation11 + $0x1528] sm:$0xff]
    %v3767 = vld [vmem:[#allocation11 + $0x1530] sm:$0xff]
    %v3768 = vld [vmem:[#allocation11 + $0x1538] sm:$0xff]
    %v3769 = vld [vmem:[#allocation11 + $0x1540] sm:$0xff]
    %v3770 = vld [vmem:[#allocation11 + $0x1548] sm:$0xff]
    %v3771 = vld [vmem:[#allocation11 + $0x1550] sm:$0xff]
    %v3772 = vld [vmem:[#allocation11 + $0x1558] sm:$0xff]
    %v3773 = vld [vmem:[#allocation11 + $0x1560] sm:$0xff]
    %v3774 = vld [vmem:[#allocation11 + $0x1568] sm:$0xff]
    %v3775 = vld [vmem:[#allocation11 + $0x1570] sm:$0xff]
    %v3776 = vld [vmem:[#allocation11 + $0x1578] sm:$0xff]
    %v3777 = vld [vmem:[#allocation11 + $0x1580] sm:$0xff]
    %v3778 = vld [vmem:[#allocation11 + $0x1588] sm:$0xff]
    %v3779 = vld [vmem:[#allocation11 + $0x1590] sm:$0xff]
    %v3780 = vld [vmem:[#allocation11 + $0x1598] sm:$0xff]
    %v3781 = vld [vmem:[#allocation11 + $0x15a0] sm:$0xff]
    %v3782 = vld [vmem:[#allocation11 + $0x15a8] sm:$0xff]
    %v3783 = vld [vmem:[#allocation11 + $0x15b0] sm:$0xff]
    %v3784 = vld [vmem:[#allocation11 + $0x15b8] sm:$0xff]
    %v3785 = vld [vmem:[#allocation11 + $0x15c0] sm:$0xff]
    %v3786 = vld [vmem:[#allocation11 + $0x15c8] sm:$0xff]
    %v3787 = vld [vmem:[#allocation11 + $0x15d0] sm:$0xff]
    %v3788 = vld [vmem:[#allocation11 + $0x15d8] sm:$0xff]
    %v3789 = vld [vmem:[#allocation11 + $0x15e0] sm:$0xff]
    %v3790 = vld [vmem:[#allocation11 + $0x15e8] sm:$0xff]
    %v3791 = vld [vmem:[#allocation11 + $0x15f0] sm:$0xff]
    %v3792 = vld [vmem:[#allocation11 + $0x15f8] sm:$0xff]
    %v3793 = vunpack.c.l.s8.bf16 %v3729
    %v3794 = vunpack.c.l.s8.bf16 %v3730
    %v3795 = vunpack.c.l.s8.bf16 %v3731
    %v3796 = vunpack.c.l.s8.bf16 %v3732
    %v3797 = vunpack.c.l.s8.bf16 %v3733
    %v3798 = vunpack.c.l.s8.bf16 %v3734
    %v3799 = vunpack.c.l.s8.bf16 %v3735
    %v3800 = vunpack.c.l.s8.bf16 %v3736
    %v3801 = vunpack.c.h.s8.bf16 %v3729
    %v3802 = vunpack.c.h.s8.bf16 %v3730
    %v3803 = vunpack.c.h.s8.bf16 %v3731
    %v3804 = vunpack.c.h.s8.bf16 %v3732
    %v3805 = vunpack.c.h.s8.bf16 %v3733
    %v3806 = vunpack.c.h.s8.bf16 %v3734
    %v3807 = vunpack.c.h.s8.bf16 %v3735
    %v3808 = vunpack.c.h.s8.bf16 %v3736
    %v3809 = vunpack.c.l.s8.bf16 %v3737
    %v3810 = vunpack.c.l.s8.bf16 %v3738
    %v3811 = vunpack.c.l.s8.bf16 %v3739
    %v3812 = vunpack.c.l.s8.bf16 %v3740
    %v3813 = vunpack.c.l.s8.bf16 %v3741
    %v3814 = vunpack.c.l.s8.bf16 %v3742
    %v3815 = vunpack.c.l.s8.bf16 %v3743
    %v3816 = vunpack.c.l.s8.bf16 %v3744
    %v3817 = vunpack.c.h.s8.bf16 %v3737
    %v3818 = vunpack.c.h.s8.bf16 %v3738
    %v3819 = vunpack.c.h.s8.bf16 %v3739
    %v3820 = vunpack.c.h.s8.bf16 %v3740
    %v3821 = vunpack.c.h.s8.bf16 %v3741
    %v3822 = vunpack.c.h.s8.bf16 %v3742
    %v3823 = vunpack.c.h.s8.bf16 %v3743
    %v3824 = vunpack.c.h.s8.bf16 %v3744
    %v3825 = vunpack.c.l.s8.bf16 %v3745
    %v3826 = vunpack.c.l.s8.bf16 %v3746
    %v3827 = vunpack.c.l.s8.bf16 %v3747
    %v3828 = vunpack.c.l.s8.bf16 %v3748
    %v3829 = vunpack.c.l.s8.bf16 %v3749
    %v3830 = vunpack.c.l.s8.bf16 %v3750
    %v3831 = vunpack.c.l.s8.bf16 %v3751
    %v3832 = vunpack.c.l.s8.bf16 %v3752
    %v3833 = vunpack.c.h.s8.bf16 %v3745
    %v3834 = vunpack.c.h.s8.bf16 %v3746
    %v3835 = vunpack.c.h.s8.bf16 %v3747
    %v3836 = vunpack.c.h.s8.bf16 %v3748
    %v3837 = vunpack.c.h.s8.bf16 %v3749
    %v3838 = vunpack.c.h.s8.bf16 %v3750
    %v3839 = vunpack.c.h.s8.bf16 %v3751
    %v3840 = vunpack.c.h.s8.bf16 %v3752
    %v3841 = vunpack.c.l.s8.bf16 %v3753
    %v3842 = vunpack.c.l.s8.bf16 %v3754
    %v3843 = vunpack.c.l.s8.bf16 %v3755
    %v3844 = vunpack.c.l.s8.bf16 %v3756
    %v3845 = vunpack.c.l.s8.bf16 %v3757
    %v3846 = vunpack.c.l.s8.bf16 %v3758
    %v3847 = vunpack.c.l.s8.bf16 %v3759
    %v3848 = vunpack.c.l.s8.bf16 %v3760
    %v3849 = vunpack.c.h.s8.bf16 %v3753
    %v3850 = vunpack.c.h.s8.bf16 %v3754
    %v3851 = vunpack.c.h.s8.bf16 %v3755
    %v3852 = vunpack.c.h.s8.bf16 %v3756
    %v3853 = vunpack.c.h.s8.bf16 %v3757
    %v3854 = vunpack.c.h.s8.bf16 %v3758
    %v3855 = vunpack.c.h.s8.bf16 %v3759
    %v3856 = vunpack.c.h.s8.bf16 %v3760
    %v3857 = vunpack.c.l.s8.bf16 %v3761
    %v3858 = vunpack.c.l.s8.bf16 %v3762
    %v3859 = vunpack.c.l.s8.bf16 %v3763
    %v3860 = vunpack.c.l.s8.bf16 %v3764
    %v3861 = vunpack.c.l.s8.bf16 %v3765
    %v3862 = vunpack.c.l.s8.bf16 %v3766
    %v3863 = vunpack.c.l.s8.bf16 %v3767
    %v3864 = vunpack.c.l.s8.bf16 %v3768
    %v3865 = vunpack.c.h.s8.bf16 %v3761
    %v3866 = vunpack.c.h.s8.bf16 %v3762
    %v3867 = vunpack.c.h.s8.bf16 %v3763
    %v3868 = vunpack.c.h.s8.bf16 %v3764
    %v3869 = vunpack.c.h.s8.bf16 %v3765
    %v3870 = vunpack.c.h.s8.bf16 %v3766
    %v3871 = vunpack.c.h.s8.bf16 %v3767
    %v3872 = vunpack.c.h.s8.bf16 %v3768
    %v3873 = vunpack.c.l.s8.bf16 %v3769
    %v3874 = vunpack.c.l.s8.bf16 %v3770
    %v3875 = vunpack.c.l.s8.bf16 %v3771
    %v3876 = vunpack.c.l.s8.bf16 %v3772
    %v3877 = vunpack.c.l.s8.bf16 %v3773
    %v3878 = vunpack.c.l.s8.bf16 %v3774
    %v3879 = vunpack.c.l.s8.bf16 %v3775
    %v3880 = vunpack.c.l.s8.bf16 %v3776
    %v3881 = vunpack.c.h.s8.bf16 %v3769
    %v3882 = vunpack.c.h.s8.bf16 %v3770
    %v3883 = vunpack.c.h.s8.bf16 %v3771
    %v3884 = vunpack.c.h.s8.bf16 %v3772
    %v3885 = vunpack.c.h.s8.bf16 %v3773
    %v3886 = vunpack.c.h.s8.bf16 %v3774
    %v3887 = vunpack.c.h.s8.bf16 %v3775
    %v3888 = vunpack.c.h.s8.bf16 %v3776
    %v3889 = vunpack.c.l.s8.bf16 %v3777
    %v3890 = vunpack.c.l.s8.bf16 %v3778
    %v3891 = vunpack.c.l.s8.bf16 %v3779
    %v3892 = vunpack.c.l.s8.bf16 %v3780
    %v3893 = vunpack.c.l.s8.bf16 %v3781
    %v3894 = vunpack.c.l.s8.bf16 %v3782
    %v3895 = vunpack.c.l.s8.bf16 %v3783
    %v3896 = vunpack.c.l.s8.bf16 %v3784
    %v3897 = vunpack.c.h.s8.bf16 %v3777
    %v3898 = vunpack.c.h.s8.bf16 %v3778
    %v3899 = vunpack.c.h.s8.bf16 %v3779
    %v3900 = vunpack.c.h.s8.bf16 %v3780
    %v3901 = vunpack.c.h.s8.bf16 %v3781
    %v3902 = vunpack.c.h.s8.bf16 %v3782
    %v3903 = vunpack.c.h.s8.bf16 %v3783
    %v3904 = vunpack.c.h.s8.bf16 %v3784
    %v3905 = vunpack.c.l.s8.bf16 %v3785
    %v3906 = vunpack.c.l.s8.bf16 %v3786
    %v3907 = vunpack.c.l.s8.bf16 %v3787
    %v3908 = vunpack.c.l.s8.bf16 %v3788
    %v3909 = vunpack.c.l.s8.bf16 %v3789
    %v3910 = vunpack.c.l.s8.bf16 %v3790
    %v3911 = vunpack.c.l.s8.bf16 %v3791
    %v3912 = vunpack.c.l.s8.bf16 %v3792
    %v3913 = vunpack.c.h.s8.bf16 %v3785
    %v3914 = vunpack.c.h.s8.bf16 %v3786
    %v3915 = vunpack.c.h.s8.bf16 %v3787
    %v3916 = vunpack.c.h.s8.bf16 %v3788
    %v3917 = vunpack.c.h.s8.bf16 %v3789
    %v3918 = vunpack.c.h.s8.bf16 %v3790
    %v3919 = vunpack.c.h.s8.bf16 %v3791
    %v3920 = vunpack.c.h.s8.bf16 %v3792
    %s3921 = scalar_lea.vmem [#allocation8], 66
    %v3922 = vld [vmem:[%s3921] ss:$8 sm:$0xf]
    %v3923 = vld [vmem:[%s3921] ss:$8 sm:$0xf0]
    %v3924 = vor.u32 %v3922, %v3923
    %s3925 = scalar_lea.vmem [#allocation8], 67
    %v3926 = vld [vmem:[%s3925] ss:$8 sm:$0x3]
    %s3927 = scalar_lea.vmem [#allocation8], 6
    %v3928 = vld [vmem:[%s3927] ss:$8 sm:$0xf]
    %v3929 = vld [vmem:[%s3927] ss:$8 sm:$0xf0]
    %v3930 = vor.u32 %v3928, %v3929
    %v3932 = vlaneseq
    %v3933 = vshrl.u32 %v3932, 7
    %v3934 = vsub.s32 0, %v3933
    %v3935 = vrot.slane %v3930, %v3934
    %v3936 = vlaneseq
    %v3937 = vshrl.u32 %v3936, 7
    %v3938 = vsub.s32 1, %v3937
    %v3939 = vrot.slane %v3930, %v3938
    %v3940 = vlaneseq
    %v3941 = vshrl.u32 %v3940, 7
    %v3942 = vsub.s32 2, %v3941
    %v3943 = vrot.slane %v3930, %v3942
    %v3944 = vlaneseq
    %v3945 = vshrl.u32 %v3944, 7
    %v3946 = vsub.s32 3, %v3945
    %v3947 = vrot.slane %v3930, %v3946
    %v3948 = vlaneseq
    %v3949 = vshrl.u32 %v3948, 7
    %v3950 = vsub.s32 4, %v3949
    %v3951 = vrot.slane %v3930, %v3950
    %v3952 = vlaneseq
    %v3953 = vshrl.u32 %v3952, 7
    %v3954 = vsub.s32 5, %v3953
    %v3955 = vrot.slane %v3930, %v3954
    %v3956 = vlaneseq
    %v3957 = vshrl.u32 %v3956, 7
    %v3958 = vsub.s32 6, %v3957
    %v3959 = vrot.slane %v3930, %v3958
    %v3960 = vlaneseq
    %v3961 = vshrl.u32 %v3960, 7
    %v3962 = vsub.s32 7, %v3961
    %v3963 = vrot.slane %v3930, %v3962
    %s3972 = scalar_lea.vmem [#allocation8], 7
    %v3973 = vld [vmem:[%s3972] ss:$8 sm:$0x3]
    %v3975 = vlaneseq
    %v3976 = vshrl.u32 %v3975, 7
    %v3977 = vsub.s32 0, %v3976
    %v3978 = vrot.slane %v3973, %v3977
    %v3979 = vlaneseq
    %v3980 = vshrl.u32 %v3979, 7
    %v3981 = vsub.s32 1, %v3980
    %v3982 = vrot.slane %v3973, %v3981
    %s3985 = scalar_lea.vmem [#allocation8], 68
    %v3986 = vld [vmem:[%s3985] ss:$8 sm:$0x3]
    %v3988 = vlaneseq
    %v3989 = vshrl.u32 %v3988, 7
    %v3990 = vsub.s32 0, %v3989
    %v3991 = vrot.slane %v3986, %v3990
    %v3992 = vlaneseq
    %v3993 = vshrl.u32 %v3992, 7
    %v3994 = vsub.s32 1, %v3993
    %v3995 = vrot.slane %v3986, %v3994
    %v3998 = vpack.c.bf16 %v3991, %v3991
    %v3999 = vpack.c.bf16 %v3995, %v3995
    %4000 = vmatprep.subr.bf16.mxu0 %v2834
    %4001 = vmatpush1.bf16.msra.mxu0 %v2833
    %4002 = vmatprep.subr.bf16.mxu0 %v2842
    %4003 = vmatpush1.bf16.msra.mxu0 %v2841
    %4004 = vmatprep.subr.bf16.mxu0 %v2850
    %4005 = vmatpush1.bf16.msra.mxu0 %v2849
    %4006 = vmatprep.subr.bf16.mxu0 %v2858
    %4007 = vmatpush1.bf16.msra.mxu0 %v2857
    %4008 = vmatprep.subr.bf16.mxu0 %v2866
    %4009 = vmatpush1.bf16.msra.mxu0 %v2865
    %4010 = vmatprep.subr.bf16.mxu0 %v2874
    %4011 = vmatpush1.bf16.msra.mxu0 %v2873
    %4012 = vmatprep.subr.bf16.mxu0 %v2882
    %4013 = vmatpush1.bf16.msra.mxu0 %v2881
    %4014 = vmatprep.subr.bf16.mxu0 %v2890
    %4015 = vmatpush1.bf16.msra.mxu0 %v2889
    %4016 = vmatprep.subr.bf16.mxu0 %v2898
    %4017 = vmatpush1.bf16.msra.mxu0 %v2897
    %4018 = vmatprep.subr.bf16.mxu0 %v2906
    %4019 = vmatpush1.bf16.msra.mxu0 %v2905
    %4020 = vmatprep.subr.bf16.mxu0 %v2914
    %4021 = vmatpush1.bf16.msra.mxu0 %v2913
    %4022 = vmatprep.subr.bf16.mxu0 %v2922
    %4023 = vmatpush1.bf16.msra.mxu0 %v2921
    %4024 = vmatprep.subr.bf16.mxu0 %v2930
    %4025 = vmatpush1.bf16.msra.mxu0 %v2929
    %4026 = vmatprep.subr.bf16.mxu0 %v2938
    %4027 = vmatpush1.bf16.msra.mxu0 %v2937
    %4028 = vmatprep.subr.bf16.mxu0 %v2946
    %4029 = vmatpush1.bf16.msra.mxu0 %v2945
    %4030 = vmatprep.subr.bf16.mxu0 %v2954
    %4031 = vmatpush1.bf16.msra.mxu0 %v2953
    %4032 = vmatprep.mubr.bf16.mxu0 %v3999
    %4033 = vmatmul.mubr.bf16.gmra.mrb[0].mxu0 %v3998
    %v4034 = vpop.f32.mrb[0].mxu0
    %v4035 = vadd.f32 0.0, %v4034
    %v4036 = vpop.f32.mrb[0].mxu0
    %v4037 = vadd.f32 0.0, %v4036
    %v4038 = vpop.f32.mrb[0].mxu0
    %v4039 = vpop.f32.mrb[0].mxu0
    %4040 = vdwg.mxu0
    %4041 = vmatprep.subr.bf16.mxu0 %v2836
    %4042 = vmatpush1.bf16.msra.mxu0 %v2835
    %4043 = vmatprep.subr.bf16.mxu0 %v2844
    %4044 = vmatpush1.bf16.msra.mxu0 %v2843
    %4045 = vmatprep.subr.bf16.mxu0 %v2852
    %4046 = vmatpush1.bf16.msra.mxu0 %v2851
    %4047 = vmatprep.subr.bf16.mxu0 %v2860
    %4048 = vmatpush1.bf16.msra.mxu0 %v2859
    %4049 = vmatprep.subr.bf16.mxu0 %v2868
    %4050 = vmatpush1.bf16.msra.mxu0 %v2867
    %4051 = vmatprep.subr.bf16.mxu0 %v2876
    %4052 = vmatpush1.bf16.msra.mxu0 %v2875
    %4053 = vmatprep.subr.bf16.mxu0 %v2884
    %4054 = vmatpush1.bf16.msra.mxu0 %v2883
    %4055 = vmatprep.subr.bf16.mxu0 %v2892
    %4056 = vmatpush1.bf16.msra.mxu0 %v2891
    %4057 = vmatprep.subr.bf16.mxu0 %v2900
    %4058 = vmatpush1.bf16.msra.mxu0 %v2899
    %4059 = vmatprep.subr.bf16.mxu0 %v2908
    %4060 = vmatpush1.bf16.msra.mxu0 %v2907
    %4061 = vmatprep.subr.bf16.mxu0 %v2916
    %4062 = vmatpush1.bf16.msra.mxu0 %v2915
    %4063 = vmatprep.subr.bf16.mxu0 %v2924
    %4064 = vmatpush1.bf16.msra.mxu0 %v2923
    %4065 = vmatprep.subr.bf16.mxu0 %v2932
    %4066 = vmatpush1.bf16.msra.mxu0 %v2931
    %4067 = vmatprep.subr.bf16.mxu0 %v2940
    %4068 = vmatpush1.bf16.msra.mxu0 %v2939
    %4069 = vmatprep.subr.bf16.mxu0 %v2948
    %4070 = vmatpush1.bf16.msra.mxu0 %v2947
    %4071 = vmatprep.subr.bf16.mxu0 %v2956
    %4072 = vmatpush1.bf16.msra.mxu0 %v2955
    %4073 = vmatprep.mubr.bf16.mxu0 %v3999
    %4074 = vmatmul.mubr.bf16.gmra.mrb[0].mxu0 %v3998
    %v4075 = vpop.f32.mrb[0].mxu0
    %v4076 = vadd.f32 0.0, %v4075
    %v4077 = vpop.f32.mrb[0].mxu0
    %v4078 = vadd.f32 0.0, %v4077
    %v4079 = vpop.f32.mrb[0].mxu0
    %v4080 = vpop.f32.mrb[0].mxu0
    %4081 = vdwg.mxu0
    %4082 = vmatprep.subr.bf16.mxu0 %v2838
    %4083 = vmatpush1.bf16.msra.mxu0 %v2837
    %4084 = vmatprep.subr.bf16.mxu0 %v2846
    %4085 = vmatpush1.bf16.msra.mxu0 %v2845
    %4086 = vmatprep.subr.bf16.mxu0 %v2854
    %4087 = vmatpush1.bf16.msra.mxu0 %v2853
    %4088 = vmatprep.subr.bf16.mxu0 %v2862
    %4089 = vmatpush1.bf16.msra.mxu0 %v2861
    %4090 = vmatprep.subr.bf16.mxu0 %v2870
    %4091 = vmatpush1.bf16.msra.mxu0 %v2869
    %4092 = vmatprep.subr.bf16.mxu0 %v2878
    %4093 = vmatpush1.bf16.msra.mxu0 %v2877
    %4094 = vmatprep.subr.bf16.mxu0 %v2886
    %4095 = vmatpush1.bf16.msra.mxu0 %v2885
    %4096 = vmatprep.subr.bf16.mxu0 %v2894
    %4097 = vmatpush1.bf16.msra.mxu0 %v2893
    %4098 = vmatprep.subr.bf16.mxu0 %v2902
    %4099 = vmatpush1.bf16.msra.mxu0 %v2901
    %4100 = vmatprep.subr.bf16.mxu0 %v2910
    %4101 = vmatpush1.bf16.msra.mxu0 %v2909
    %4102 = vmatprep.subr.bf16.mxu0 %v2918
    %4103 = vmatpush1.bf16.msra.mxu0 %v2917
    %4104 = vmatprep.subr.bf16.mxu0 %v2926
    %4105 = vmatpush1.bf16.msra.mxu0 %v2925
    %4106 = vmatprep.subr.bf16.mxu0 %v2934
    %4107 = vmatpush1.bf16.msra.mxu0 %v2933
    %4108 = vmatprep.subr.bf16.mxu0 %v2942
    %4109 = vmatpush1.bf16.msra.mxu0 %v2941
    %4110 = vmatprep.subr.bf16.mxu0 %v2950
    %4111 = vmatpush1.bf16.msra.mxu0 %v2949
    %4112 = vmatprep.subr.bf16.mxu0 %v2958
    %4113 = vmatpush1.bf16.msra.mxu0 %v2957
    %4114 = vmatprep.mubr.bf16.mxu0 %v3999
    %4115 = vmatmul.mubr.bf16.gmra.mrb[0].mxu0 %v3998
    %v4116 = vpop.f32.mrb[0].mxu0
    %v4117 = vadd.f32 0.0, %v4116
    %v4118 = vpop.f32.mrb[0].mxu0
    %v4119 = vadd.f32 0.0, %v4118
    %v4120 = vpop.f32.mrb[0].mxu0
    %v4121 = vpop.f32.mrb[0].mxu0
    %4122 = vdwg.mxu0
    %4123 = vmatprep.subr.bf16.mxu0 %v2840
    %4124 = vmatpush1.bf16.msra.mxu0 %v2839
    %4125 = vmatprep.subr.bf16.mxu0 %v2848
    %4126 = vmatpush1.bf16.msra.mxu0 %v2847
    %4127 = vmatprep.subr.bf16.mxu0 %v2856
    %4128 = vmatpush1.bf16.msra.mxu0 %v2855
    %4129 = vmatprep.subr.bf16.mxu0 %v2864
    %4130 = vmatpush1.bf16.msra.mxu0 %v2863
    %4131 = vmatprep.subr.bf16.mxu0 %v2872
    %4132 = vmatpush1.bf16.msra.mxu0 %v2871
    %4133 = vmatprep.subr.bf16.mxu0 %v2880
    %4134 = vmatpush1.bf16.msra.mxu0 %v2879
    %4135 = vmatprep.subr.bf16.mxu0 %v2888
    %4136 = vmatpush1.bf16.msra.mxu0 %v2887
    %4137 = vmatprep.subr.bf16.mxu0 %v2896
    %4138 = vmatpush1.bf16.msra.mxu0 %v2895
    %4139 = vmatprep.subr.bf16.mxu0 %v2904
    %4140 = vmatpush1.bf16.msra.mxu0 %v2903
    %4141 = vmatprep.subr.bf16.mxu0 %v2912
    %4142 = vmatpush1.bf16.msra.mxu0 %v2911
    %4143 = vmatprep.subr.bf16.mxu0 %v2920
    %4144 = vmatpush1.bf16.msra.mxu0 %v2919
    %4145 = vmatprep.subr.bf16.mxu0 %v2928
    %4146 = vmatpush1.bf16.msra.mxu0 %v2927
    %4147 = vmatprep.subr.bf16.mxu0 %v2936
    %4148 = vmatpush1.bf16.msra.mxu0 %v2935
    %4149 = vmatprep.subr.bf16.mxu0 %v2944
    %4150 = vmatpush1.bf16.msra.mxu0 %v2943
    %4151 = vmatprep.subr.bf16.mxu0 %v2952
    %4152 = vmatpush1.bf16.msra.mxu0 %v2951
    %4153 = vmatprep.subr.bf16.mxu0 %v2960
    %4154 = vmatpush1.bf16.msra.mxu0 %v2959
    %4155 = vmatprep.mubr.bf16.mxu0 %v3999
    %4156 = vmatmul.mubr.bf16.gmra.mrb[0].mxu0 %v3998
    %v4157 = vpop.f32.mrb[0].mxu0
    %v4158 = vadd.f32 0.0, %v4157
    %v4159 = vpop.f32.mrb[0].mxu0
    %v4160 = vadd.f32 0.0, %v4159
    %v4161 = vpop.f32.mrb[0].mxu0
    %v4162 = vpop.f32.mrb[0].mxu0
    %4163 = vdwg.mxu0
    %v4164 = vmul.f32 %v4035, %v2671
    %v4165 = vmul.f32 %v4037, %v2675
    %v4166 = vmul.f32 %v4076, %v2679
    %v4167 = vmul.f32 %v4078, %v2683
    %v4168 = vmul.f32 %v4117, %v2687
    %v4169 = vmul.f32 %v4119, %v2691
    %v4170 = vmul.f32 %v4158, %v2695
    %v4171 = vmul.f32 %v4160, %v2699
    %v4172 = vadd.f32 %v2761, %v4164
    %v4173 = vadd.f32 %v2762, %v4165
    %v4174 = vadd.f32 %v2763, %v4166
    %v4175 = vadd.f32 %v2764, %v4167
    %v4176 = vadd.f32 %v2765, %v4168
    %v4177 = vadd.f32 %v2766, %v4169
    %v4178 = vadd.f32 %v2767, %v4170
    %v4179 = vadd.f32 %v2768, %v4171
    %v4180 = vpack.c.bf16 %v4172, %v4172
    %v4181 = vpack.c.bf16 %v4173, %v4173
    %v4182 = vpack.c.bf16 %v4174, %v4174
    %v4183 = vpack.c.bf16 %v4175, %v4175
    %v4184 = vpack.c.bf16 %v4176, %v4176
    %v4185 = vpack.c.bf16 %v4177, %v4177
    %v4186 = vpack.c.bf16 %v4178, %v4178
    %v4187 = vpack.c.bf16 %v4179, %v4179
    %4188 = vmatprep.subr.bf16.mxu0 %v3218
    %4189 = vmatpush1.bf16.msra.mxu0 %v3217
    %4190 = vmatprep.subr.bf16.mxu0 %v3226
    %4191 = vmatpush1.bf16.msra.mxu0 %v3225
    %4192 = vmatprep.subr.bf16.mxu0 %v3234
    %4193 = vmatpush1.bf16.msra.mxu0 %v3233
    %4194 = vmatprep.subr.bf16.mxu0 %v3242
    %4195 = vmatpush1.bf16.msra.mxu0 %v3241
    %4196 = vmatprep.subr.bf16.mxu0 %v3250
    %4197 = vmatpush1.bf16.msra.mxu0 %v3249
    %4198 = vmatprep.subr.bf16.mxu0 %v3258
    %4199 = vmatpush1.bf16.msra.mxu0 %v3257
    %4200 = vmatprep.subr.bf16.mxu0 %v3266
    %4201 = vmatpush1.bf16.msra.mxu0 %v3265
    %4202 = vmatprep.subr.bf16.mxu0 %v3274
    %4203 = vmatpush1.bf16.msra.mxu0 %v3273
    %4204 = vmatprep.subr.bf16.mxu0 %v3282
    %4205 = vmatpush1.bf16.msra.mxu0 %v3281
    %4206 = vmatprep.subr.bf16.mxu0 %v3290
    %4207 = vmatpush1.bf16.msra.mxu0 %v3289
    %4208 = vmatprep.subr.bf16.mxu0 %v3298
    %4209 = vmatpush1.bf16.msra.mxu0 %v3297
    %4210 = vmatprep.subr.bf16.mxu0 %v3306
    %4211 = vmatpush1.bf16.msra.mxu0 %v3305
    %4212 = vmatprep.subr.bf16.mxu0 %v3314
    %4213 = vmatpush1.bf16.msra.mxu0 %v3313
    %4214 = vmatprep.subr.bf16.mxu0 %v3322
    %4215 = vmatpush1.bf16.msra.mxu0 %v3321
    %4216 = vmatprep.subr.bf16.mxu0 %v3330
    %4217 = vmatpush1.bf16.msra.mxu0 %v3329
    %4218 = vmatprep.subr.bf16.mxu0 %v3338
    %4219 = vmatpush1.bf16.msra.mxu0 %v3337
    %4220 = vmatprep.mubr.bf16.mxu0 %v4181
    %4221 = vmatmul.mubr.bf16.gmra.mrb[0].mxu0 %v4180
    %v4222 = vpop.f32.mrb[0].mxu0
    %v4223 = vadd.f32 0.0, %v4222
    %v4224 = vpop.f32.mrb[0].mxu0
    %v4225 = vadd.f32 0.0, %v4224
    %v4226 = vpop.f32.mrb[0].mxu0
    %v4227 = vpop.f32.mrb[0].mxu0
    %4228 = vdwg.mxu0
    %4229 = vmatprep.subr.bf16.mxu0 %v3346
    %4230 = vmatpush1.bf16.msra.mxu0 %v3345
    %4231 = vmatprep.subr.bf16.mxu0 %v3354
    %4232 = vmatpush1.bf16.msra.mxu0 %v3353
    %4233 = vmatprep.subr.bf16.mxu0 %v3362
    %4234 = vmatpush1.bf16.msra.mxu0 %v3361
    %4235 = vmatprep.subr.bf16.mxu0 %v3370
    %4236 = vmatpush1.bf16.msra.mxu0 %v3369
    %4237 = vmatprep.subr.bf16.mxu0 %v3378
    %4238 = vmatpush1.bf16.msra.mxu0 %v3377
    %4239 = vmatprep.subr.bf16.mxu0 %v3386
    %4240 = vmatpush1.bf16.msra.mxu0 %v3385
    %4241 = vmatprep.subr.bf16.mxu0 %v3394
    %4242 = vmatpush1.bf16.msra.mxu0 %v3393
    %4243 = vmatprep.subr.bf16.mxu0 %v3402
    %4244 = vmatpush1.bf16.msra.mxu0 %v3401
    %4245 = vmatprep.subr.bf16.mxu0 %v3410
    %4246 = vmatpush1.bf16.msra.mxu0 %v3409
    %4247 = vmatprep.subr.bf16.mxu0 %v3418
    %4248 = vmatpush1.bf16.msra.mxu0 %v3417
    %4249 = vmatprep.subr.bf16.mxu0 %v3426
    %4250 = vmatpush1.bf16.msra.mxu0 %v3425
    %4251 = vmatprep.subr.bf16.mxu0 %v3434
    %4252 = vmatpush1.bf16.msra.mxu0 %v3433
    %4253 = vmatprep.subr.bf16.mxu0 %v3442
    %4254 = vmatpush1.bf16.msra.mxu0 %v3441
    %4255 = vmatprep.subr.bf16.mxu0 %v3450
    %4256 = vmatpush1.bf16.msra.mxu0 %v3449
    %4257 = vmatprep.subr.bf16.mxu0 %v3458
    %4258 = vmatpush1.bf16.msra.mxu0 %v3457
    %4259 = vmatprep.subr.bf16.mxu0 %v3466
    %4260 = vmatpush1.bf16.msra.mxu0 %v3465
    %4261 = vmatprep.mubr.bf16.mxu0 %v4183
    %4262 = vmatmul.mubr.bf16.gmra.mrb[0].mxu0 %v4182
    %v4263 = vpop.f32.mrb[0].mxu0
    %v4264 = vadd.f32 %v4223, %v4263
    %v4265 = vpop.f32.mrb[0].mxu0
    %v4266 = vadd.f32 %v4225, %v4265
    %v4267 = vpop.f32.mrb[0].mxu0
    %v4268 = vpop.f32.mrb[0].mxu0
    %4269 = vdwg.mxu0
    %4270 = vmatprep.subr.bf16.mxu0 %v3474
    %4271 = vmatpush1.bf16.msra.mxu0 %v3473
    %4272 = vmatprep.subr.bf16.mxu0 %v3482
    %4273 = vmatpush1.bf16.msra.mxu0 %v3481
    %4274 = vmatprep.subr.bf16.mxu0 %v3490
    %4275 = vmatpush1.bf16.msra.mxu0 %v3489
    %4276 = vmatprep.subr.bf16.mxu0 %v3498
    %4277 = vmatpush1.bf16.msra.mxu0 %v3497
    %4278 = vmatprep.subr.bf16.mxu0 %v3506
    %4279 = vmatpush1.bf16.msra.mxu0 %v3505
    %4280 = vmatprep.subr.bf16.mxu0 %v3514
    %4281 = vmatpush1.bf16.msra.mxu0 %v3513
    %4282 = vmatprep.subr.bf16.mxu0 %v3522
    %4283 = vmatpush1.bf16.msra.mxu0 %v3521
    %4284 = vmatprep.subr.bf16.mxu0 %v3530
    %4285 = vmatpush1.bf16.msra.mxu0 %v3529
    %4286 = vmatprep.subr.bf16.mxu0 %v3538
    %4287 = vmatpush1.bf16.msra.mxu0 %v3537
    %4288 = vmatprep.subr.bf16.mxu0 %v3546
    %4289 = vmatpush1.bf16.msra.mxu0 %v3545
    %4290 = vmatprep.subr.bf16.mxu0 %v3554
    %4291 = vmatpush1.bf16.msra.mxu0 %v3553
    %4292 = vmatprep.subr.bf16.mxu0 %v3562
    %4293 = vmatpush1.bf16.msra.mxu0 %v3561
    %4294 = vmatprep.subr.bf16.mxu0 %v3570
    %4295 = vmatpush1.bf16.msra.mxu0 %v3569
    %4296 = vmatprep.subr.bf16.mxu0 %v3578
    %4297 = vmatpush1.bf16.msra.mxu0 %v3577
    %4298 = vmatprep.subr.bf16.mxu0 %v3586
    %4299 = vmatpush1.bf16.msra.mxu0 %v3585
    %4300 = vmatprep.subr.bf16.mxu0 %v3594
    %4301 = vmatpush1.bf16.msra.mxu0 %v3593
    %4302 = vmatprep.mubr.bf16.mxu0 %v4185
    %4303 = vmatmul.mubr.bf16.gmra.mrb[0].mxu0 %v4184
    %v4304 = vpop.f32.mrb[0].mxu0
    %v4305 = vadd.f32 %v4264, %v4304
    %v4306 = vpop.f32.mrb[0].mxu0
    %v4307 = vadd.f32 %v4266, %v4306
    %v4308 = vpop.f32.mrb[0].mxu0
    %v4309 = vpop.f32.mrb[0].mxu0
    %4310 = vdwg.mxu0
    %4311 = vmatprep.subr.bf16.mxu0 %v3602
    %4312 = vmatpush1.bf16.msra.mxu0 %v3601
    %4313 = vmatprep.subr.bf16.mxu0 %v3610
    %4314 = vmatpush1.bf16.msra.mxu0 %v3609
    %4315 = vmatprep.subr.bf16.mxu0 %v3618
    %4316 = vmatpush1.bf16.msra.mxu0 %v3617
    %4317 = vmatprep.subr.bf16.mxu0 %v3626
    %4318 = vmatpush1.bf16.msra.mxu0 %v3625
    %4319 = vmatprep.subr.bf16.mxu0 %v3634
    %4320 = vmatpush1.bf16.msra.mxu0 %v3633
    %4321 = vmatprep.subr.bf16.mxu0 %v3642
    %4322 = vmatpush1.bf16.msra.mxu0 %v3641
    %4323 = vmatprep.subr.bf16.mxu0 %v3650
    %4324 = vmatpush1.bf16.msra.mxu0 %v3649
    %4325 = vmatprep.subr.bf16.mxu0 %v3658
    %4326 = vmatpush1.bf16.msra.mxu0 %v3657
    %4327 = vmatprep.subr.bf16.mxu0 %v3666
    %4328 = vmatpush1.bf16.msra.mxu0 %v3665
    %4329 = vmatprep.subr.bf16.mxu0 %v3674
    %4330 = vmatpush1.bf16.msra.mxu0 %v3673
    %4331 = vmatprep.subr.bf16.mxu0 %v3682
    %4332 = vmatpush1.bf16.msra.mxu0 %v3681
    %4333 = vmatprep.subr.bf16.mxu0 %v3690
    %4334 = vmatpush1.bf16.msra.mxu0 %v3689
    %4335 = vmatprep.subr.bf16.mxu0 %v3698
    %4336 = vmatpush1.bf16.msra.mxu0 %v3697
    %4337 = vmatprep.subr.bf16.mxu0 %v3706
    %4338 = vmatpush1.bf16.msra.mxu0 %v3705
    %4339 = vmatprep.subr.bf16.mxu0 %v3714
    %4340 = vmatpush1.bf16.msra.mxu0 %v3713
    %4341 = vmatprep.subr.bf16.mxu0 %v3722
    %4342 = vmatpush1.bf16.msra.mxu0 %v3721
    %4343 = vmatprep.mubr.bf16.mxu0 %v4187
    %4344 = vmatmul.mubr.bf16.gmra.mrb[0].mxu0 %v4186
    %v4345 = vpop.f32.mrb[0].mxu0
    %v4346 = vadd.f32 %v4305, %v4345
    %v4347 = vpop.f32.mrb[0].mxu0
    %v4348 = vadd.f32 %v4307, %v4347
    %v4349 = vpop.f32.mrb[0].mxu0
    %v4350 = vpop.f32.mrb[0].mxu0
    %4351 = vdwg.mxu0
    %4352 = vmatprep.subr.bf16.mxu0 %v3220
    %4353 = vmatpush1.bf16.msra.mxu0 %v3219
    %4354 = vmatprep.subr.bf16.mxu0 %v3228
    %4355 = vmatpush1.bf16.msra.mxu0 %v3227
    %4356 = vmatprep.subr.bf16.mxu0 %v3236
    %4357 = vmatpush1.bf16.msra.mxu0 %v3235
    %4358 = vmatprep.subr.bf16.mxu0 %v3244
    %4359 = vmatpush1.bf16.msra.mxu0 %v3243
    %4360 = vmatprep.subr.bf16.mxu0 %v3252
    %4361 = vmatpush1.bf16.msra.mxu0 %v3251
    %4362 = vmatprep.subr.bf16.mxu0 %v3260
    %4363 = vmatpush1.bf16.msra.mxu0 %v3259
    %4364 = vmatprep.subr.bf16.mxu0 %v3268
    %4365 = vmatpush1.bf16.msra.mxu0 %v3267
    %4366 = vmatprep.subr.bf16.mxu0 %v3276
    %4367 = vmatpush1.bf16.msra.mxu0 %v3275
    %4368 = vmatprep.subr.bf16.mxu0 %v3284
    %4369 = vmatpush1.bf16.msra.mxu0 %v3283
    %4370 = vmatprep.subr.bf16.mxu0 %v3292
    %4371 = vmatpush1.bf16.msra.mxu0 %v3291
    %4372 = vmatprep.subr.bf16.mxu0 %v3300
    %4373 = vmatpush1.bf16.msra.mxu0 %v3299
    %4374 = vmatprep.subr.bf16.mxu0 %v3308
    %4375 = vmatpush1.bf16.msra.mxu0 %v3307
    %4376 = vmatprep.subr.bf16.mxu0 %v3316
    %4377 = vmatpush1.bf16.msra.mxu0 %v3315
    %4378 = vmatprep.subr.bf16.mxu0 %v3324
    %4379 = vmatpush1.bf16.msra.mxu0 %v3323
    %4380 = vmatprep.subr.bf16.mxu0 %v3332
    %4381 = vmatpush1.bf16.msra.mxu0 %v3331
    %4382 = vmatprep.subr.bf16.mxu0 %v3340
    %4383 = vmatpush1.bf16.msra.mxu0 %v3339
    %4384 = vmatprep.mubr.bf16.mxu0 %v4181
    %4385 = vmatmul.mubr.bf16.gmra.mrb[0].mxu0 %v4180
    %v4386 = vpop.f32.mrb[0].mxu0
    %v4387 = vadd.f32 0.0, %v4386
    %v4388 = vpop.f32.mrb[0].mxu0
    %v4389 = vadd.f32 0.0, %v4388
    %v4390 = vpop.f32.mrb[0].mxu0
    %v4391 = vpop.f32.mrb[0].mxu0
    %4392 = vdwg.mxu0
    %4393 = vmatprep.subr.bf16.mxu0 %v3348
    %4394 = vmatpush1.bf16.msra.mxu0 %v3347
    %4395 = vmatprep.subr.bf16.mxu0 %v3356
    %4396 = vmatpush1.bf16.msra.mxu0 %v3355
    %4397 = vmatprep.subr.bf16.mxu0 %v3364
    %4398 = vmatpush1.bf16.msra.mxu0 %v3363
    %4399 = vmatprep.subr.bf16.mxu0 %v3372
    %4400 = vmatpush1.bf16.msra.mxu0 %v3371
    %4401 = vmatprep.subr.bf16.mxu0 %v3380
    %4402 = vmatpush1.bf16.msra.mxu0 %v3379
    %4403 = vmatprep.subr.bf16.mxu0 %v3388
    %4404 = vmatpush1.bf16.msra.mxu0 %v3387
    %4405 = vmatprep.subr.bf16.mxu0 %v3396
    %4406 = vmatpush1.bf16.msra.mxu0 %v3395
    %4407 = vmatprep.subr.bf16.mxu0 %v3404
    %4408 = vmatpush1.bf16.msra.mxu0 %v3403
    %4409 = vmatprep.subr.bf16.mxu0 %v3412
    %4410 = vmatpush1.bf16.msra.mxu0 %v3411
    %4411 = vmatprep.subr.bf16.mxu0 %v3420
    %4412 = vmatpush1.bf16.msra.mxu0 %v3419
    %4413 = vmatprep.subr.bf16.mxu0 %v3428
    %4414 = vmatpush1.bf16.msra.mxu0 %v3427
    %4415 = vmatprep.subr.bf16.mxu0 %v3436
    %4416 = vmatpush1.bf16.msra.mxu0 %v3435
    %4417 = vmatprep.subr.bf16.mxu0 %v3444
    %4418 = vmatpush1.bf16.msra.mxu0 %v3443
    %4419 = vmatprep.subr.bf16.mxu0 %v3452
    %4420 = vmatpush1.bf16.msra.mxu0 %v3451
    %4421 = vmatprep.subr.bf16.mxu0 %v3460
    %4422 = vmatpush1.bf16.msra.mxu0 %v3459
    %4423 = vmatprep.subr.bf16.mxu0 %v3468
    %4424 = vmatpush1.bf16.msra.mxu0 %v3467
    %4425 = vmatprep.mubr.bf16.mxu0 %v4183
    %4426 = vmatmul.mubr.bf16.gmra.mrb[0].mxu0 %v4182
    %v4427 = vpop.f32.mrb[0].mxu0
    %v4428 = vadd.f32 %v4387, %v4427
    %v4429 = vpop.f32.mrb[0].mxu0
    %v4430 = vadd.f32 %v4389, %v4429
    %v4431 = vpop.f32.mrb[0].mxu0
    %v4432 = vpop.f32.mrb[0].mxu0
    %4433 = vdwg.mxu0
    %4434 = vmatprep.subr.bf16.mxu0 %v3476
    %4435 = vmatpush1.bf16.msra.mxu0 %v3475
    %4436 = vmatprep.subr.bf16.mxu0 %v3484
    %4437 = vmatpush1.bf16.msra.mxu0 %v3483
    %4438 = vmatprep.subr.bf16.mxu0 %v3492
    %4439 = vmatpush1.bf16.msra.mxu0 %v3491
    %4440 = vmatprep.subr.bf16.mxu0 %v3500
    %4441 = vmatpush1.bf16.msra.mxu0 %v3499
    %4442 = vmatprep.subr.bf16.mxu0 %v3508
    %4443 = vmatpush1.bf16.msra.mxu0 %v3507
    %4444 = vmatprep.subr.bf16.mxu0 %v3516
    %4445 = vmatpush1.bf16.msra.mxu0 %v3515
    %4446 = vmatprep.subr.bf16.mxu0 %v3524
    %4447 = vmatpush1.bf16.msra.mxu0 %v3523
    %4448 = vmatprep.subr.bf16.mxu0 %v3532
    %4449 = vmatpush1.bf16.msra.mxu0 %v3531
    %4450 = vmatprep.subr.bf16.mxu0 %v3540
    %4451 = vmatpush1.bf16.msra.mxu0 %v3539
    %4452 = vmatprep.subr.bf16.mxu0 %v3548
    %4453 = vmatpush1.bf16.msra.mxu0 %v3547
    %4454 = vmatprep.subr.bf16.mxu0 %v3556
    %4455 = vmatpush1.bf16.msra.mxu0 %v3555
    %4456 = vmatprep.subr.bf16.mxu0 %v3564
    %4457 = vmatpush1.bf16.msra.mxu0 %v3563
    %4458 = vmatprep.subr.bf16.mxu0 %v3572
    %4459 = vmatpush1.bf16.msra.mxu0 %v3571
    %4460 = vmatprep.subr.bf16.mxu0 %v3580
    %4461 = vmatpush1.bf16.msra.mxu0 %v3579
    %4462 = vmatprep.subr.bf16.mxu0 %v3588
    %4463 = vmatpush1.bf16.msra.mxu0 %v3587
    %4464 = vmatprep.subr.bf16.mxu0 %v3596
    %4465 = vmatpush1.bf16.msra.mxu0 %v3595
    %4466 = vmatprep.mubr.bf16.mxu0 %v4185
    %4467 = vmatmul.mubr.bf16.gmra.mrb[0].mxu0 %v4184
    %v4468 = vpop.f32.mrb[0].mxu0
    %v4469 = vadd.f32 %v4428, %v4468
    %v4470 = vpop.f32.mrb[0].mxu0
    %v4471 = vadd.f32 %v4430, %v4470
    %v4472 = vpop.f32.mrb[0].mxu0
    %v4473 = vpop.f32.mrb[0].mxu0
    %4474 = vdwg.mxu0
    %4475 = vmatprep.subr.bf16.mxu0 %v3604
    %4476 = vmatpush1.bf16.msra.mxu0 %v3603
    %4477 = vmatprep.subr.bf16.mxu0 %v3612
    %4478 = vmatpush1.bf16.msra.mxu0 %v3611
    %4479 = vmatprep.subr.bf16.mxu0 %v3620
    %4480 = vmatpush1.bf16.msra.mxu0 %v3619
    %4481 = vmatprep.subr.bf16.mxu0 %v3628
    %4482 = vmatpush1.bf16.msra.mxu0 %v3627
    %4483 = vmatprep.subr.bf16.mxu0 %v3636
    %4484 = vmatpush1.bf16.msra.mxu0 %v3635
    %4485 = vmatprep.subr.bf16.mxu0 %v3644
    %4486 = vmatpush1.bf16.msra.mxu0 %v3643
    %4487 = vmatprep.subr.bf16.mxu0 %v3652
    %4488 = vmatpush1.bf16.msra.mxu0 %v3651
    %4489 = vmatprep.subr.bf16.mxu0 %v3660
    %4490 = vmatpush1.bf16.msra.mxu0 %v3659
    %4491 = vmatprep.subr.bf16.mxu0 %v3668
    %4492 = vmatpush1.bf16.msra.mxu0 %v3667
    %4493 = vmatprep.subr.bf16.mxu0 %v3676
    %4494 = vmatpush1.bf16.msra.mxu0 %v3675
    %4495 = vmatprep.subr.bf16.mxu0 %v3684
    %4496 = vmatpush1.bf16.msra.mxu0 %v3683
    %4497 = vmatprep.subr.bf16.mxu0 %v3692
    %4498 = vmatpush1.bf16.msra.mxu0 %v3691
    %4499 = vmatprep.subr.bf16.mxu0 %v3700
    %4500 = vmatpush1.bf16.msra.mxu0 %v3699
    %4501 = vmatprep.subr.bf16.mxu0 %v3708
    %4502 = vmatpush1.bf16.msra.mxu0 %v3707
    %4503 = vmatprep.subr.bf16.mxu0 %v3716
    %4504 = vmatpush1.bf16.msra.mxu0 %v3715
    %4505 = vmatprep.subr.bf16.mxu0 %v3724
    %4506 = vmatpush1.bf16.msra.mxu0 %v3723
    %4507 = vmatprep.mubr.bf16.mxu0 %v4187
    %4508 = vmatmul.mubr.bf16.gmra.mrb[0].mxu0 %v4186
    %v4509 = vpop.f32.mrb[0].mxu0
    %v4510 = vadd.f32 %v4469, %v4509
    %v4511 = vpop.f32.mrb[0].mxu0
    %v4512 = vadd.f32 %v4471, %v4511
    %v4513 = vpop.f32.mrb[0].mxu0
    %v4514 = vpop.f32.mrb[0].mxu0
    %4515 = vdwg.mxu0
    %4516 = vmatprep.subr.bf16.mxu0 %v3222
    %4517 = vmatpush1.bf16.msra.mxu0 %v3221
    %4518 = vmatprep.subr.bf16.mxu0 %v3230
    %4519 = vmatpush1.bf16.msra.mxu0 %v3229
    %4520 = vmatprep.subr.bf16.mxu0 %v3238
    %4521 = vmatpush1.bf16.msra.mxu0 %v3237
    %4522 = vmatprep.subr.bf16.mxu0 %v3246
    %4523 = vmatpush1.bf16.msra.mxu0 %v3245
    %4524 = vmatprep.subr.bf16.mxu0 %v3254
    %4525 = vmatpush1.bf16.msra.mxu0 %v3253
    %4526 = vmatprep.subr.bf16.mxu0 %v3262
    %4527 = vmatpush1.bf16.msra.mxu0 %v3261
    %4528 = vmatprep.subr.bf16.mxu0 %v3270
    %4529 = vmatpush1.bf16.msra.mxu0 %v3269
    %4530 = vmatprep.subr.bf16.mxu0 %v3278
    %4531 = vmatpush1.bf16.msra.mxu0 %v3277
    %4532 = vmatprep.subr.bf16.mxu0 %v3286
    %4533 = vmatpush1.bf16.msra.mxu0 %v3285
    %4534 = vmatprep.subr.bf16.mxu0 %v3294
    %4535 = vmatpush1.bf16.msra.mxu0 %v3293
    %4536 = vmatprep.subr.bf16.mxu0 %v3302
    %4537 = vmatpush1.bf16.msra.mxu0 %v3301
    %4538 = vmatprep.subr.bf16.mxu0 %v3310
    %4539 = vmatpush1.bf16.msra.mxu0 %v3309
    %4540 = vmatprep.subr.bf16.mxu0 %v3318
    %4541 = vmatpush1.bf16.msra.mxu0 %v3317
    %4542 = vmatprep.subr.bf16.mxu0 %v3326
    %4543 = vmatpush1.bf16.msra.mxu0 %v3325
    %4544 = vmatprep.subr.bf16.mxu0 %v3334
    %4545 = vmatpush1.bf16.msra.mxu0 %v3333
    %4546 = vmatprep.subr.bf16.mxu0 %v3342
    %4547 = vmatpush1.bf16.msra.mxu0 %v3341
    %4548 = vmatprep.mubr.bf16.mxu0 %v4181
    %4549 = vmatmul.mubr.bf16.gmra.mrb[0].mxu0 %v4180
    %v4550 = vpop.f32.mrb[0].mxu0
    %v4551 = vadd.f32 0.0, %v4550
    %v4552 = vpop.f32.mrb[0].mxu0
    %v4553 = vadd.f32 0.0, %v4552
    %v4554 = vpop.f32.mrb[0].mxu0
    %v4555 = vpop.f32.mrb[0].mxu0
    %4556 = vdwg.mxu0
    %4557 = vmatprep.subr.bf16.mxu0 %v3350
    %4558 = vmatpush1.bf16.msra.mxu0 %v3349
    %4559 = vmatprep.subr.bf16.mxu0 %v3358
    %4560 = vmatpush1.bf16.msra.mxu0 %v3357
    %4561 = vmatprep.subr.bf16.mxu0 %v3366
    %4562 = vmatpush1.bf16.msra.mxu0 %v3365
    %4563 = vmatprep.subr.bf16.mxu0 %v3374
    %4564 = vmatpush1.bf16.msra.mxu0 %v3373
    %4565 = vmatprep.subr.bf16.mxu0 %v3382
    %4566 = vmatpush1.bf16.msra.mxu0 %v3381
    %4567 = vmatprep.subr.bf16.mxu0 %v3390
    %4568 = vmatpush1.bf16.msra.mxu0 %v3389
    %4569 = vmatprep.subr.bf16.mxu0 %v3398
    %4570 = vmatpush1.bf16.msra.mxu0 %v3397
    %4571 = vmatprep.subr.bf16.mxu0 %v3406
    %4572 = vmatpush1.bf16.msra.mxu0 %v3405
    %4573 = vmatprep.subr.bf16.mxu0 %v3414
    %4574 = vmatpush1.bf16.msra.mxu0 %v3413
    %4575 = vmatprep.subr.bf16.mxu0 %v3422
    %4576 = vmatpush1.bf16.msra.mxu0 %v3421
    %4577 = vmatprep.subr.bf16.mxu0 %v3430
    %4578 = vmatpush1.bf16.msra.mxu0 %v3429
    %4579 = vmatprep.subr.bf16.mxu0 %v3438
    %4580 = vmatpush1.bf16.msra.mxu0 %v3437
    %4581 = vmatprep.subr.bf16.mxu0 %v3446
    %4582 = vmatpush1.bf16.msra.mxu0 %v3445
    %4583 = vmatprep.subr.bf16.mxu0 %v3454
    %4584 = vmatpush1.bf16.msra.mxu0 %v3453
    %4585 = vmatprep.subr.bf16.mxu0 %v3462
    %4586 = vmatpush1.bf16.msra.mxu0 %v3461
    %4587 = vmatprep.subr.bf16.mxu0 %v3470
    %4588 = vmatpush1.bf16.msra.mxu0 %v3469
    %4589 = vmatprep.mubr.bf16.mxu0 %v4183
    %4590 = vmatmul.mubr.bf16.gmra.mrb[0].mxu0 %v4182
    %v4591 = vpop.f32.mrb[0].mxu0
    %v4592 = vadd.f32 %v4551, %v4591
    %v4593 = vpop.f32.mrb[0].mxu0
    %v4594 = vadd.f32 %v4553, %v4593
    %v4595 = vpop.f32.mrb[0].mxu0
    %v4596 = vpop.f32.mrb[0].mxu0
    %4597 = vdwg.mxu0
    %4598 = vmatprep.subr.bf16.mxu0 %v3478
    %4599 = vmatpush1.bf16.msra.mxu0 %v3477
    %4600 = vmatprep.subr.bf16.mxu0 %v3486
    %4601 = vmatpush1.bf16.msra.mxu0 %v3485
    %4602 = vmatprep.subr.bf16.mxu0 %v3494
    %4603 = vmatpush1.bf16.msra.mxu0 %v3493
    %4604 = vmatprep.subr.bf16.mxu0 %v3502
    %4605 = vmatpush1.bf16.msra.mxu0 %v3501
    %4606 = vmatprep.subr.bf16.mxu0 %v3510
    %4607 = vmatpush1.bf16.msra.mxu0 %v3509
    %4608 = vmatprep.subr.bf16.mxu0 %v3518
    %4609 = vmatpush1.bf16.msra.mxu0 %v3517
    %4610 = vmatprep.subr.bf16.mxu0 %v3526
    %4611 = vmatpush1.bf16.msra.mxu0 %v3525
    %4612 = vmatprep.subr.bf16.mxu0 %v3534
    %4613 = vmatpush1.bf16.msra.mxu0 %v3533
    %4614 = vmatprep.subr.bf16.mxu0 %v3542
    %4615 = vmatpush1.bf16.msra.mxu0 %v3541
    %4616 = vmatprep.subr.bf16.mxu0 %v3550
    %4617 = vmatpush1.bf16.msra.mxu0 %v3549
    %4618 = vmatprep.subr.bf16.mxu0 %v3558
    %4619 = vmatpush1.bf16.msra.mxu0 %v3557
    %4620 = vmatprep.subr.bf16.mxu0 %v3566
    %4621 = vmatpush1.bf16.msra.mxu0 %v3565
    %4622 = vmatprep.subr.bf16.mxu0 %v3574
    %4623 = vmatpush1.bf16.msra.mxu0 %v3573
    %4624 = vmatprep.subr.bf16.mxu0 %v3582
    %4625 = vmatpush1.bf16.msra.mxu0 %v3581
    %4626 = vmatprep.subr.bf16.mxu0 %v3590
    %4627 = vmatpush1.bf16.msra.mxu0 %v3589
    %4628 = vmatprep.subr.bf16.mxu0 %v3598
    %4629 = vmatpush1.bf16.msra.mxu0 %v3597
    %4630 = vmatprep.mubr.bf16.mxu0 %v4185
    %4631 = vmatmul.mubr.bf16.gmra.mrb[0].mxu0 %v4184
    %v4632 = vpop.f32.mrb[0].mxu0
    %v4633 = vadd.f32 %v4592, %v4632
    %v4634 = vpop.f32.mrb[0].mxu0
    %v4635 = vadd.f32 %v4594, %v4634
    %v4636 = vpop.f32.mrb[0].mxu0
    %v4637 = vpop.f32.mrb[0].mxu0
    %4638 = vdwg.mxu0
    %4639 = vmatprep.subr.bf16.mxu0 %v3606
    %4640 = vmatpush1.bf16.msra.mxu0 %v3605
    %4641 = vmatprep.subr.bf16.mxu0 %v3614
    %4642 = vmatpush1.bf16.msra.mxu0 %v3613
    %4643 = vmatprep.subr.bf16.mxu0 %v3622
    %4644 = vmatpush1.bf16.msra.mxu0 %v3621
    %4645 = vmatprep.subr.bf16.mxu0 %v3630
    %4646 = vmatpush1.bf16.msra.mxu0 %v3629
    %4647 = vmatprep.subr.bf16.mxu0 %v3638
    %4648 = vmatpush1.bf16.msra.mxu0 %v3637
    %4649 = vmatprep.subr.bf16.mxu0 %v3646
    %4650 = vmatpush1.bf16.msra.mxu0 %v3645
    %4651 = vmatprep.subr.bf16.mxu0 %v3654
    %4652 = vmatpush1.bf16.msra.mxu0 %v3653
    %4653 = vmatprep.subr.bf16.mxu0 %v3662
    %4654 = vmatpush1.bf16.msra.mxu0 %v3661
    %4655 = vmatprep.subr.bf16.mxu0 %v3670
    %4656 = vmatpush1.bf16.msra.mxu0 %v3669
    %4657 = vmatprep.subr.bf16.mxu0 %v3678
    %4658 = vmatpush1.bf16.msra.mxu0 %v3677
    %4659 = vmatprep.subr.bf16.mxu0 %v3686
    %4660 = vmatpush1.bf16.msra.mxu0 %v3685
    %4661 = vmatprep.subr.bf16.mxu0 %v3694
    %4662 = vmatpush1.bf16.msra.mxu0 %v3693
    %4663 = vmatprep.subr.bf16.mxu0 %v3702
    %4664 = vmatpush1.bf16.msra.mxu0 %v3701
    %4665 = vmatprep.subr.bf16.mxu0 %v3710
    %4666 = vmatpush1.bf16.msra.mxu0 %v3709
    %4667 = vmatprep.subr.bf16.mxu0 %v3718
    %4668 = vmatpush1.bf16.msra.mxu0 %v3717
    %4669 = vmatprep.subr.bf16.mxu0 %v3726
    %4670 = vmatpush1.bf16.msra.mxu0 %v3725
    %4671 = vmatprep.mubr.bf16.mxu0 %v4187
    %4672 = vmatmul.mubr.bf16.gmra.mrb[0].mxu0 %v4186
    %v4673 = vpop.f32.mrb[0].mxu0
    %v4674 = vadd.f32 %v4633, %v4673
    %v4675 = vpop.f32.mrb[0].mxu0
    %v4676 = vadd.f32 %v4635, %v4675
    %v4677 = vpop.f32.mrb[0].mxu0
    %v4678 = vpop.f32.mrb[0].mxu0
    %4679 = vdwg.mxu0
    %4680 = vmatprep.subr.bf16.mxu0 %v3224
    %4681 = vmatpush1.bf16.msra.mxu0 %v3223
    %4682 = vmatprep.subr.bf16.mxu0 %v3232
    %4683 = vmatpush1.bf16.msra.mxu0 %v3231
    %4684 = vmatprep.subr.bf16.mxu0 %v3240
    %4685 = vmatpush1.bf16.msra.mxu0 %v3239
    %4686 = vmatprep.subr.bf16.mxu0 %v3248
    %4687 = vmatpush1.bf16.msra.mxu0 %v3247
    %4688 = vmatprep.subr.bf16.mxu0 %v3256
    %4689 = vmatpush1.bf16.msra.mxu0 %v3255
    %4690 = vmatprep.subr.bf16.mxu0 %v3264
    %4691 = vmatpush1.bf16.msra.mxu0 %v3263
    %4692 = vmatprep.subr.bf16.mxu0 %v3272
    %4693 = vmatpush1.bf16.msra.mxu0 %v3271
    %4694 = vmatprep.subr.bf16.mxu0 %v3280
    %4695 = vmatpush1.bf16.msra.mxu0 %v3279
    %4696 = vmatprep.subr.bf16.mxu0 %v3288
    %4697 = vmatpush1.bf16.msra.mxu0 %v3287
    %4698 = vmatprep.subr.bf16.mxu0 %v3296
    %4699 = vmatpush1.bf16.msra.mxu0 %v3295
    %4700 = vmatprep.subr.bf16.mxu0 %v3304
    %4701 = vmatpush1.bf16.msra.mxu0 %v3303
    %4702 = vmatprep.subr.bf16.mxu0 %v3312
    %4703 = vmatpush1.bf16.msra.mxu0 %v3311
    %4704 = vmatprep.subr.bf16.mxu0 %v3320
    %4705 = vmatpush1.bf16.msra.mxu0 %v3319
    %4706 = vmatprep.subr.bf16.mxu0 %v3328
    %4707 = vmatpush1.bf16.msra.mxu0 %v3327
    %4708 = vmatprep.subr.bf16.mxu0 %v3336
    %4709 = vmatpush1.bf16.msra.mxu0 %v3335
    %4710 = vmatprep.subr.bf16.mxu0 %v3344
    %4711 = vmatpush1.bf16.msra.mxu0 %v3343
    %4712 = vmatprep.mubr.bf16.mxu0 %v4181
    %4713 = vmatmul.mubr.bf16.gmra.mrb[0].mxu0 %v4180
    %v4714 = vpop.f32.mrb[0].mxu0
    %v4715 = vadd.f32 0.0, %v4714
    %v4716 = vpop.f32.mrb[0].mxu0
    %v4717 = vadd.f32 0.0, %v4716
    %v4718 = vpop.f32.mrb[0].mxu0
    %v4719 = vpop.f32.mrb[0].mxu0
    %4720 = vdwg.mxu0
    %4721 = vmatprep.subr.bf16.mxu0 %v3352
    %4722 = vmatpush1.bf16.msra.mxu0 %v3351
    %4723 = vmatprep.subr.bf16.mxu0 %v3360
    %4724 = vmatpush1.bf16.msra.mxu0 %v3359
    %4725 = vmatprep.subr.bf16.mxu0 %v3368
    %4726 = vmatpush1.bf16.msra.mxu0 %v3367
    %4727 = vmatprep.subr.bf16.mxu0 %v3376
    %4728 = vmatpush1.bf16.msra.mxu0 %v3375
    %4729 = vmatprep.subr.bf16.mxu0 %v3384
    %4730 = vmatpush1.bf16.msra.mxu0 %v3383
    %4731 = vmatprep.subr.bf16.mxu0 %v3392
    %4732 = vmatpush1.bf16.msra.mxu0 %v3391
    %4733 = vmatprep.subr.bf16.mxu0 %v3400
    %4734 = vmatpush1.bf16.msra.mxu0 %v3399
    %4735 = vmatprep.subr.bf16.mxu0 %v3408
    %4736 = vmatpush1.bf16.msra.mxu0 %v3407
    %4737 = vmatprep.subr.bf16.mxu0 %v3416
    %4738 = vmatpush1.bf16.msra.mxu0 %v3415
    %4739 = vmatprep.subr.bf16.mxu0 %v3424
    %4740 = vmatpush1.bf16.msra.mxu0 %v3423
    %4741 = vmatprep.subr.bf16.mxu0 %v3432
    %4742 = vmatpush1.bf16.msra.mxu0 %v3431
    %4743 = vmatprep.subr.bf16.mxu0 %v3440
    %4744 = vmatpush1.bf16.msra.mxu0 %v3439
    %4745 = vmatprep.subr.bf16.mxu0 %v3448
    %4746 = vmatpush1.bf16.msra.mxu0 %v3447
    %4747 = vmatprep.subr.bf16.mxu0 %v3456
    %4748 = vmatpush1.bf16.msra.mxu0 %v3455
    %4749 = vmatprep.subr.bf16.mxu0 %v3464
    %4750 = vmatpush1.bf16.msra.mxu0 %v3463
    %4751 = vmatprep.subr.bf16.mxu0 %v3472
    %4752 = vmatpush1.bf16.msra.mxu0 %v3471
    %4753 = vmatprep.mubr.bf16.mxu0 %v4183
    %4754 = vmatmul.mubr.bf16.gmra.mrb[0].mxu0 %v4182
    %v4755 = vpop.f32.mrb[0].mxu0
    %v4756 = vadd.f32 %v4715, %v4755
    %v4757 = vpop.f32.mrb[0].mxu0
    %v4758 = vadd.f32 %v4717, %v4757
    %v4759 = vpop.f32.mrb[0].mxu0
    %v4760 = vpop.f32.mrb[0].mxu0
    %4761 = vdwg.mxu0
    %4762 = vmatprep.subr.bf16.mxu0 %v3480
    %4763 = vmatpush1.bf16.msra.mxu0 %v3479
    %4764 = vmatprep.subr.bf16.mxu0 %v3488
    %4765 = vmatpush1.bf16.msra.mxu0 %v3487
    %4766 = vmatprep.subr.bf16.mxu0 %v3496
    %4767 = vmatpush1.bf16.msra.mxu0 %v3495
    %4768 = vmatprep.subr.bf16.mxu0 %v3504
    %4769 = vmatpush1.bf16.msra.mxu0 %v3503
    %4770 = vmatprep.subr.bf16.mxu0 %v3512
    %4771 = vmatpush1.bf16.msra.mxu0 %v3511
    %4772 = vmatprep.subr.bf16.mxu0 %v3520
    %4773 = vmatpush1.bf16.msra.mxu0 %v3519
    %4774 = vmatprep.subr.bf16.mxu0 %v3528
    %4775 = vmatpush1.bf16.msra.mxu0 %v3527
    %4776 = vmatprep.subr.bf16.mxu0 %v3536
    %4777 = vmatpush1.bf16.msra.mxu0 %v3535
    %4778 = vmatprep.subr.bf16.mxu0 %v3544
    %4779 = vmatpush1.bf16.msra.mxu0 %v3543
    %4780 = vmatprep.subr.bf16.mxu0 %v3552
    %4781 = vmatpush1.bf16.msra.mxu0 %v3551
    %4782 = vmatprep.subr.bf16.mxu0 %v3560
    %4783 = vmatpush1.bf16.msra.mxu0 %v3559
    %4784 = vmatprep.subr.bf16.mxu0 %v3568
    %4785 = vmatpush1.bf16.msra.mxu0 %v3567
    %4786 = vmatprep.subr.bf16.mxu0 %v3576
    %4787 = vmatpush1.bf16.msra.mxu0 %v3575
    %4788 = vmatprep.subr.bf16.mxu0 %v3584
    %4789 = vmatpush1.bf16.msra.mxu0 %v3583
    %4790 = vmatprep.subr.bf16.mxu0 %v3592
    %4791 = vmatpush1.bf16.msra.mxu0 %v3591
    %4792 = vmatprep.subr.bf16.mxu0 %v3600
    %4793 = vmatpush1.bf16.msra.mxu0 %v3599
    %4794 = vmatprep.mubr.bf16.mxu0 %v4185
    %4795 = vmatmul.mubr.bf16.gmra.mrb[0].mxu0 %v4184
    %v4796 = vpop.f32.mrb[0].mxu0
    %v4797 = vadd.f32 %v4756, %v4796
    %v4798 = vpop.f32.mrb[0].mxu0
    %v4799 = vadd.f32 %v4758, %v4798
    %v4800 = vpop.f32.mrb[0].mxu0
    %v4801 = vpop.f32.mrb[0].mxu0
    %4802 = vdwg.mxu0
    %4803 = vmatprep.subr.bf16.mxu0 %v3608
    %4804 = vmatpush1.bf16.msra.mxu0 %v3607
    %4805 = vmatprep.subr.bf16.mxu0 %v3616
    %4806 = vmatpush1.bf16.msra.mxu0 %v3615
    %4807 = vmatprep.subr.bf16.mxu0 %v3624
    %4808 = vmatpush1.bf16.msra.mxu0 %v3623
    %4809 = vmatprep.subr.bf16.mxu0 %v3632
    %4810 = vmatpush1.bf16.msra.mxu0 %v3631
    %4811 = vmatprep.subr.bf16.mxu0 %v3640
    %4812 = vmatpush1.bf16.msra.mxu0 %v3639
    %4813 = vmatprep.subr.bf16.mxu0 %v3648
    %4814 = vmatpush1.bf16.msra.mxu0 %v3647
    %4815 = vmatprep.subr.bf16.mxu0 %v3656
    %4816 = vmatpush1.bf16.msra.mxu0 %v3655
    %4817 = vmatprep.subr.bf16.mxu0 %v3664
    %4818 = vmatpush1.bf16.msra.mxu0 %v3663
    %4819 = vmatprep.subr.bf16.mxu0 %v3672
    %4820 = vmatpush1.bf16.msra.mxu0 %v3671
    %4821 = vmatprep.subr.bf16.mxu0 %v3680
    %4822 = vmatpush1.bf16.msra.mxu0 %v3679
    %4823 = vmatprep.subr.bf16.mxu0 %v3688
    %4824 = vmatpush1.bf16.msra.mxu0 %v3687
    %4825 = vmatprep.subr.bf16.mxu0 %v3696
    %4826 = vmatpush1.bf16.msra.mxu0 %v3695
    %4827 = vmatprep.subr.bf16.mxu0 %v3704
    %4828 = vmatpush1.bf16.msra.mxu0 %v3703
    %4829 = vmatprep.subr.bf16.mxu0 %v3712
    %4830 = vmatpush1.bf16.msra.mxu0 %v3711
    %4831 = vmatprep.subr.bf16.mxu0 %v3720
    %4832 = vmatpush1.bf16.msra.mxu0 %v3719
    %4833 = vmatprep.subr.bf16.mxu0 %v3728
    %4834 = vmatpush1.bf16.msra.mxu0 %v3727
    %4835 = vmatprep.mubr.bf16.mxu0 %v4187
    %4836 = vmatmul.mubr.bf16.gmra.mrb[0].mxu0 %v4186
    %v4837 = vpop.f32.mrb[0].mxu0
    %v4838 = vadd.f32 %v4797, %v4837
    %v4839 = vpop.f32.mrb[0].mxu0
    %v4840 = vadd.f32 %v4799, %v4839
    %v4841 = vpop.f32.mrb[0].mxu0
    %v4842 = vpop.f32.mrb[0].mxu0
    %4843 = vdwg.mxu0
    %v4845 = vlaneseq
    %v4846 = vshrl.u32 %v4845, 7
    %v4847 = vsub.s32 0, %v4846
    %v4848 = vrot.slane %v3924, %v4847
    %v4849 = vlaneseq
    %v4850 = vshrl.u32 %v4849, 7
    %v4851 = vsub.s32 1, %v4850
    %v4852 = vrot.slane %v3924, %v4851
    %v4853 = vlaneseq
    %v4854 = vshrl.u32 %v4853, 7
    %v4855 = vsub.s32 2, %v4854
    %v4856 = vrot.slane %v3924, %v4855
    %v4857 = vlaneseq
    %v4858 = vshrl.u32 %v4857, 7
    %v4859 = vsub.s32 3, %v4858
    %v4860 = vrot.slane %v3924, %v4859
    %v4861 = vlaneseq
    %v4862 = vshrl.u32 %v4861, 7
    %v4863 = vsub.s32 4, %v4862
    %v4864 = vrot.slane %v3924, %v4863
    %v4865 = vlaneseq
    %v4866 = vshrl.u32 %v4865, 7
    %v4867 = vsub.s32 5, %v4866
    %v4868 = vrot.slane %v3924, %v4867
    %v4869 = vlaneseq
    %v4870 = vshrl.u32 %v4869, 7
    %v4871 = vsub.s32 6, %v4870
    %v4872 = vrot.slane %v3924, %v4871
    %v4873 = vlaneseq
    %v4874 = vshrl.u32 %v4873, 7
    %v4875 = vsub.s32 7, %v4874
    %v4876 = vrot.slane %v3924, %v4875
    %v4885 = vmul.f32 %v4346, %v4848
    %v4886 = vmul.f32 %v4348, %v4852
    %v4887 = vmul.f32 %v4510, %v4856
    %v4888 = vmul.f32 %v4512, %v4860
    %v4889 = vmul.f32 %v4674, %v4864
    %v4890 = vmul.f32 %v4676, %v4868
    %v4891 = vmul.f32 %v4838, %v4872
    %v4892 = vmul.f32 %v4840, %v4876
    %v4893 = vadd.f32 %v4885, %v3935
    %v4894 = vadd.f32 %v4886, %v3939
    %v4895 = vadd.f32 %v4887, %v3943
    %v4896 = vadd.f32 %v4888, %v3947
    %v4897 = vadd.f32 %v4889, %v3951
    %v4898 = vadd.f32 %v4890, %v3955
    %v4899 = vadd.f32 %v4891, %v3959
    %v4900 = vadd.f32 %v4892, %v3963
    %v4901 = vpack.c.bf16 %v4893, %v4893
    %v4902 = vpack.c.bf16 %v4894, %v4894
    %v4903 = vpack.c.bf16 %v4895, %v4895
    %v4904 = vpack.c.bf16 %v4896, %v4896
    %v4905 = vpack.c.bf16 %v4897, %v4897
    %v4906 = vpack.c.bf16 %v4898, %v4898
    %v4907 = vpack.c.bf16 %v4899, %v4899
    %v4908 = vpack.c.bf16 %v4900, %v4900
    %4909 = vmatprep.subr.bf16.mxu0 %v3794
    %4910 = vmatpush1.bf16.xpose.msra.mxu0 %v3793
    %4911 = vmatprep.subr.bf16.mxu0 %v3802
    %4912 = vmatpush1.bf16.xpose.msra.mxu0 %v3801
    %4913 = vmatprep.subr.bf16.mxu0 %v3810
    %4914 = vmatpush1.bf16.xpose.msra.mxu0 %v3809
    %4915 = vmatprep.subr.bf16.mxu0 %v3818
    %4916 = vmatpush1.bf16.xpose.msra.mxu0 %v3817
    %4917 = vmatprep.subr.bf16.mxu0 %v3826
    %4918 = vmatpush1.bf16.xpose.msra.mxu0 %v3825
    %4919 = vmatprep.subr.bf16.mxu0 %v3834
    %4920 = vmatpush1.bf16.xpose.msra.mxu0 %v3833
    %4921 = vmatprep.subr.bf16.mxu0 %v3842
    %4922 = vmatpush1.bf16.xpose.msra.mxu0 %v3841
    %4923 = vmatprep.subr.bf16.mxu0 %v3850
    %4924 = vmatpush1.bf16.xpose.msra.mxu0 %v3849
    %4925 = vmatprep.subr.bf16.mxu0 %v3858
    %4926 = vmatpush1.bf16.xpose.msra.mxu0 %v3857
    %4927 = vmatprep.subr.bf16.mxu0 %v3866
    %4928 = vmatpush1.bf16.xpose.msra.mxu0 %v3865
    %4929 = vmatprep.subr.bf16.mxu0 %v3874
    %4930 = vmatpush1.bf16.xpose.msra.mxu0 %v3873
    %4931 = vmatprep.subr.bf16.mxu0 %v3882
    %4932 = vmatpush1.bf16.xpose.msra.mxu0 %v3881
    %4933 = vmatprep.subr.bf16.mxu0 %v3890
    %4934 = vmatpush1.bf16.xpose.msra.mxu0 %v3889
    %4935 = vmatprep.subr.bf16.mxu0 %v3898
    %4936 = vmatpush1.bf16.xpose.msra.mxu0 %v3897
    %4937 = vmatprep.subr.bf16.mxu0 %v3906
    %4938 = vmatpush1.bf16.xpose.msra.mxu0 %v3905
    %4939 = vmatprep.subr.bf16.mxu0 %v3914
    %4940 = vmatpush1.bf16.xpose.msra.mxu0 %v3913
    %4941 = vmatprep.mubr.bf16.mxu0 %v4902
    %4942 = vmatmul.mubr.bf16.gmra.mrb[0].mxu0 %v4901
    %v4943 = vpop.f32.mrb[0].mxu0
    %v4944 = vadd.f32 0.0, %v4943
    %v4945 = vpop.f32.mrb[0].mxu0
    %v4946 = vadd.f32 0.0, %v4945
    %v4947 = vpop.f32.mrb[0].mxu0
    %v4948 = vpop.f32.mrb[0].mxu0
    %4949 = vdwg.mxu0
    %4950 = vmatprep.subr.bf16.mxu0 %v3796
    %4951 = vmatpush1.bf16.xpose.msra.mxu0 %v3795
    %4952 = vmatprep.subr.bf16.mxu0 %v3804
    %4953 = vmatpush1.bf16.xpose.msra.mxu0 %v3803
    %4954 = vmatprep.subr.bf16.mxu0 %v3812
    %4955 = vmatpush1.bf16.xpose.msra.mxu0 %v3811
    %4956 = vmatprep.subr.bf16.mxu0 %v3820
    %4957 = vmatpush1.bf16.xpose.msra.mxu0 %v3819
    %4958 = vmatprep.subr.bf16.mxu0 %v3828
    %4959 = vmatpush1.bf16.xpose.msra.mxu0 %v3827
    %4960 = vmatprep.subr.bf16.mxu0 %v3836
    %4961 = vmatpush1.bf16.xpose.msra.mxu0 %v3835
    %4962 = vmatprep.subr.bf16.mxu0 %v3844
    %4963 = vmatpush1.bf16.xpose.msra.mxu0 %v3843
    %4964 = vmatprep.subr.bf16.mxu0 %v3852
    %4965 = vmatpush1.bf16.xpose.msra.mxu0 %v3851
    %4966 = vmatprep.subr.bf16.mxu0 %v3860
    %4967 = vmatpush1.bf16.xpose.msra.mxu0 %v3859
    %4968 = vmatprep.subr.bf16.mxu0 %v3868
    %4969 = vmatpush1.bf16.xpose.msra.mxu0 %v3867
    %4970 = vmatprep.subr.bf16.mxu0 %v3876
    %4971 = vmatpush1.bf16.xpose.msra.mxu0 %v3875
    %4972 = vmatprep.subr.bf16.mxu0 %v3884
    %4973 = vmatpush1.bf16.xpose.msra.mxu0 %v3883
    %4974 = vmatprep.subr.bf16.mxu0 %v3892
    %4975 = vmatpush1.bf16.xpose.msra.mxu0 %v3891
    %4976 = vmatprep.subr.bf16.mxu0 %v3900
    %4977 = vmatpush1.bf16.xpose.msra.mxu0 %v3899
    %4978 = vmatprep.subr.bf16.mxu0 %v3908
    %4979 = vmatpush1.bf16.xpose.msra.mxu0 %v3907
    %4980 = vmatprep.subr.bf16.mxu0 %v3916
    %4981 = vmatpush1.bf16.xpose.msra.mxu0 %v3915
    %4982 = vmatprep.mubr.bf16.mxu0 %v4904
    %4983 = vmatmul.mubr.bf16.gmra.mrb[0].mxu0 %v4903
    %v4984 = vpop.f32.mrb[0].mxu0
    %v4985 = vadd.f32 %v4944, %v4984
    %v4986 = vpop.f32.mrb[0].mxu0
    %v4987 = vadd.f32 %v4946, %v4986
    %v4988 = vpop.f32.mrb[0].mxu0
    %v4989 = vpop.f32.mrb[0].mxu0
    %4990 = vdwg.mxu0
    %4991 = vmatprep.subr.bf16.mxu0 %v3798
    %4992 = vmatpush1.bf16.xpose.msra.mxu0 %v3797
    %4993 = vmatprep.subr.bf16.mxu0 %v3806
    %4994 = vmatpush1.bf16.xpose.msra.mxu0 %v3805
    %4995 = vmatprep.subr.bf16.mxu0 %v3814
    %4996 = vmatpush1.bf16.xpose.msra.mxu0 %v3813
    %4997 = vmatprep.subr.bf16.mxu0 %v3822
    %4998 = vmatpush1.bf16.xpose.msra.mxu0 %v3821
    %4999 = vmatprep.subr.bf16.mxu0 %v3830
    %5000 = vmatpush1.bf16.xpose.msra.mxu0 %v3829
    %5001 = vmatprep.subr.bf16.mxu0 %v3838
    %5002 = vmatpush1.bf16.xpose.msra.mxu0 %v3837
    %5003 = vmatprep.subr.bf16.mxu0 %v3846
    %5004 = vmatpush1.bf16.xpose.msra.mxu0 %v3845
    %5005 = vmatprep.subr.bf16.mxu0 %v3854
    %5006 = vmatpush1.bf16.xpose.msra.mxu0 %v3853
    %5007 = vmatprep.subr.bf16.mxu0 %v3862
    %5008 = vmatpush1.bf16.xpose.msra.mxu0 %v3861
    %5009 = vmatprep.subr.bf16.mxu0 %v3870
    %5010 = vmatpush1.bf16.xpose.msra.mxu0 %v3869
    %5011 = vmatprep.subr.bf16.mxu0 %v3878
    %5012 = vmatpush1.bf16.xpose.msra.mxu0 %v3877
    %5013 = vmatprep.subr.bf16.mxu0 %v3886
    %5014 = vmatpush1.bf16.xpose.msra.mxu0 %v3885
    %5015 = vmatprep.subr.bf16.mxu0 %v3894
    %5016 = vmatpush1.bf16.xpose.msra.mxu0 %v3893
    %5017 = vmatprep.subr.bf16.mxu0 %v3902
    %5018 = vmatpush1.bf16.xpose.msra.mxu0 %v3901
    %5019 = vmatprep.subr.bf16.mxu0 %v3910
    %5020 = vmatpush1.bf16.xpose.msra.mxu0 %v3909
    %5021 = vmatprep.subr.bf16.mxu0 %v3918
    %5022 = vmatpush1.bf16.xpose.msra.mxu0 %v3917
    %5023 = vmatprep.mubr.bf16.mxu0 %v4906
    %5024 = vmatmul.mubr.bf16.gmra.mrb[0].mxu0 %v4905
    %v5025 = vpop.f32.mrb[0].mxu0
    %v5026 = vadd.f32 %v4985, %v5025
    %v5027 = vpop.f32.mrb[0].mxu0
    %v5028 = vadd.f32 %v4987, %v5027
    %v5029 = vpop.f32.mrb[0].mxu0
    %v5030 = vpop.f32.mrb[0].mxu0
    %5031 = vdwg.mxu0
    %5032 = vmatprep.subr.bf16.mxu0 %v3800
    %5033 = vmatpush1.bf16.xpose.msra.mxu0 %v3799
    %5034 = vmatprep.subr.bf16.mxu0 %v3808
    %5035 = vmatpush1.bf16.xpose.msra.mxu0 %v3807
    %5036 = vmatprep.subr.bf16.mxu0 %v3816
    %5037 = vmatpush1.bf16.xpose.msra.mxu0 %v3815
    %5038 = vmatprep.subr.bf16.mxu0 %v3824
    %5039 = vmatpush1.bf16.xpose.msra.mxu0 %v3823
    %5040 = vmatprep.subr.bf16.mxu0 %v3832
    %5041 = vmatpush1.bf16.xpose.msra.mxu0 %v3831
    %5042 = vmatprep.subr.bf16.mxu0 %v3840
    %5043 = vmatpush1.bf16.xpose.msra.mxu0 %v3839
    %5044 = vmatprep.subr.bf16.mxu0 %v3848
    %5045 = vmatpush1.bf16.xpose.msra.mxu0 %v3847
    %5046 = vmatprep.subr.bf16.mxu0 %v3856
    %5047 = vmatpush1.bf16.xpose.msra.mxu0 %v3855
    %5048 = vmatprep.subr.bf16.mxu0 %v3864
    %5049 = vmatpush1.bf16.xpose.msra.mxu0 %v3863
    %5050 = vmatprep.subr.bf16.mxu0 %v3872
    %5051 = vmatpush1.bf16.xpose.msra.mxu0 %v3871
    %5052 = vmatprep.subr.bf16.mxu0 %v3880
    %5053 = vmatpush1.bf16.xpose.msra.mxu0 %v3879
    %5054 = vmatprep.subr.bf16.mxu0 %v3888
    %5055 = vmatpush1.bf16.xpose.msra.mxu0 %v3887
    %5056 = vmatprep.subr.bf16.mxu0 %v3896
    %5057 = vmatpush1.bf16.xpose.msra.mxu0 %v3895
    %5058 = vmatprep.subr.bf16.mxu0 %v3904
    %5059 = vmatpush1.bf16.xpose.msra.mxu0 %v3903
    %5060 = vmatprep.subr.bf16.mxu0 %v3912
    %5061 = vmatpush1.bf16.xpose.msra.mxu0 %v3911
    %5062 = vmatprep.subr.bf16.mxu0 %v3920
    %5063 = vmatpush1.bf16.xpose.msra.mxu0 %v3919
    %5064 = vmatprep.mubr.bf16.mxu0 %v4908
    %5065 = vmatmul.mubr.bf16.gmra.mrb[0].mxu0 %v4907
    %v5066 = vpop.f32.mrb[0].mxu0
    %v5067 = vadd.f32 %v5026, %v5066
    %v5068 = vpop.f32.mrb[0].mxu0
    %v5069 = vadd.f32 %v5028, %v5068
    %v5070 = vpop.f32.mrb[0].mxu0
    %v5071 = vpop.f32.mrb[0].mxu0
    %5072 = vdwg.mxu0
    %v5074 = vlaneseq
    %v5075 = vshrl.u32 %v5074, 7
    %v5076 = vsub.s32 0, %v5075
    %v5077 = vrot.slane %v3926, %v5076
    %v5078 = vlaneseq
    %v5079 = vshrl.u32 %v5078, 7
    %v5080 = vsub.s32 1, %v5079
    %v5081 = vrot.slane %v3926, %v5080
    %v5084 = vmul.f32 %v5067, %v5077
    %v5085 = vmul.f32 %v5069, %v5081
    %v5086 = vadd.f32 %v3991, %v5084
    %v5087 = vadd.f32 %v3995, %v5085
    %v5088 = vadd.f32 %v5086, %v3978
    %v5089 = vadd.f32 %v5087, %v3982
    %v5090 = vpack.c.bf16 %v5088, %v5088
    %v5091 = vpack.c.bf16 %v5089, %v5089
    %5092 = vmatprep.subr.bf16.mxu0 %v2834
    %5093 = vmatpush1.bf16.msra.mxu0 %v2833
    %5094 = vmatprep.subr.bf16.mxu0 %v2842
    %5095 = vmatpush1.bf16.msra.mxu0 %v2841
    %5096 = vmatprep.subr.bf16.mxu0 %v2850
    %5097 = vmatpush1.bf16.msra.mxu0 %v2849
    %5098 = vmatprep.subr.bf16.mxu0 %v2858
    %5099 = vmatpush1.bf16.msra.mxu0 %v2857
    %5100 = vmatprep.subr.bf16.mxu0 %v2866
    %5101 = vmatpush1.bf16.msra.mxu0 %v2865
    %5102 = vmatprep.subr.bf16.mxu0 %v2874
    %5103 = vmatpush1.bf16.msra.mxu0 %v2873
    %5104 = vmatprep.subr.bf16.mxu0 %v2882
    %5105 = vmatpush1.bf16.msra.mxu0 %v2881
    %5106 = vmatprep.subr.bf16.mxu0 %v2890
    %5107 = vmatpush1.bf16.msra.mxu0 %v2889
    %5108 = vmatprep.subr.bf16.mxu0 %v2898
    %5109 = vmatpush1.bf16.msra.mxu0 %v2897
    %5110 = vmatprep.subr.bf16.mxu0 %v2906
    %5111 = vmatpush1.bf16.msra.mxu0 %v2905
    %5112 = vmatprep.subr.bf16.mxu0 %v2914
    %5113 = vmatpush1.bf16.msra.mxu0 %v2913
    %5114 = vmatprep.subr.bf16.mxu0 %v2922
    %5115 = vmatpush1.bf16.msra.mxu0 %v2921
    %5116 = vmatprep.subr.bf16.mxu0 %v2930
    %5117 = vmatpush1.bf16.msra.mxu0 %v2929
    %5118 = vmatprep.subr.bf16.mxu0 %v2938
    %5119 = vmatpush1.bf16.msra.mxu0 %v2937
    %5120 = vmatprep.subr.bf16.mxu0 %v2946
    %5121 = vmatpush1.bf16.msra.mxu0 %v2945
    %5122 = vmatprep.subr.bf16.mxu0 %v2954
    %5123 = vmatpush1.bf16.msra.mxu0 %v2953
    %5124 = vmatprep.mubr.bf16.mxu0 %v5091
    %5125 = vmatmul.mubr.bf16.gmra.mrb[0].mxu0 %v5090
    %v5126 = vpop.f32.mrb[0].mxu0
    %v5127 = vadd.f32 0.0, %v5126
    %v5128 = vpop.f32.mrb[0].mxu0
    %v5129 = vadd.f32 0.0, %v5128
    %v5130 = vpop.f32.mrb[0].mxu0
    %v5131 = vpop.f32.mrb[0].mxu0
    %5132 = vdwg.mxu0
    %5133 = vmatprep.subr.bf16.mxu0 %v2836
    %5134 = vmatpush1.bf16.msra.mxu0 %v2835
    %5135 = vmatprep.subr.bf16.mxu0 %v2844
    %5136 = vmatpush1.bf16.msra.mxu0 %v2843
    %5137 = vmatprep.subr.bf16.mxu0 %v2852
    %5138 = vmatpush1.bf16.msra.mxu0 %v2851
    %5139 = vmatprep.subr.bf16.mxu0 %v2860
    %5140 = vmatpush1.bf16.msra.mxu0 %v2859
    %5141 = vmatprep.subr.bf16.mxu0 %v2868
    %5142 = vmatpush1.bf16.msra.mxu0 %v2867
    %5143 = vmatprep.subr.bf16.mxu0 %v2876
    %5144 = vmatpush1.bf16.msra.mxu0 %v2875
    %5145 = vmatprep.subr.bf16.mxu0 %v2884
    %5146 = vmatpush1.bf16.msra.mxu0 %v2883
    %5147 = vmatprep.subr.bf16.mxu0 %v2892
    %5148 = vmatpush1.bf16.msra.mxu0 %v2891
    %5149 = vmatprep.subr.bf16.mxu0 %v2900
    %5150 = vmatpush1.bf16.msra.mxu0 %v2899
    %5151 = vmatprep.subr.bf16.mxu0 %v2908
    %5152 = vmatpush1.bf16.msra.mxu0 %v2907
    %5153 = vmatprep.subr.bf16.mxu0 %v2916
    %5154 = vmatpush1.bf16.msra.mxu0 %v2915
    %5155 = vmatprep.subr.bf16.mxu0 %v2924
    %5156 = vmatpush1.bf16.msra.mxu0 %v2923
    %5157 = vmatprep.subr.bf16.mxu0 %v2932
    %5158 = vmatpush1.bf16.msra.mxu0 %v2931
    %5159 = vmatprep.subr.bf16.mxu0 %v2940
    %5160 = vmatpush1.bf16.msra.mxu0 %v2939
    %5161 = vmatprep.subr.bf16.mxu0 %v2948
    %5162 = vmatpush1.bf16.msra.mxu0 %v2947
    %5163 = vmatprep.subr.bf16.mxu0 %v2956
    %5164 = vmatpush1.bf16.msra.mxu0 %v2955
    %5165 = vmatprep.mubr.bf16.mxu0 %v5091
    %5166 = vmatmul.mubr.bf16.gmra.mrb[0].mxu0 %v5090
    %v5167 = vpop.f32.mrb[0].mxu0
    %v5168 = vadd.f32 0.0, %v5167
    %v5169 = vpop.f32.mrb[0].mxu0
    %v5170 = vadd.f32 0.0, %v5169
    %v5171 = vpop.f32.mrb[0].mxu0
    %v5172 = vpop.f32.mrb[0].mxu0
    %5173 = vdwg.mxu0
    %5174 = vmatprep.subr.bf16.mxu0 %v2838
    %5175 = vmatpush1.bf16.msra.mxu0 %v2837
    %5176 = vmatprep.subr.bf16.mxu0 %v2846
    %5177 = vmatpush1.bf16.msra.mxu0 %v2845
    %5178 = vmatprep.subr.bf16.mxu0 %v2854
    %5179 = vmatpush1.bf16.msra.mxu0 %v2853
    %5180 = vmatprep.subr.bf16.mxu0 %v2862
    %5181 = vmatpush1.bf16.msra.mxu0 %v2861
    %5182 = vmatprep.subr.bf16.mxu0 %v2870
    %5183 = vmatpush1.bf16.msra.mxu0 %v2869
    %5184 = vmatprep.subr.bf16.mxu0 %v2878
    %5185 = vmatpush1.bf16.msra.mxu0 %v2877
    %5186 = vmatprep.subr.bf16.mxu0 %v2886
    %5187 = vmatpush1.bf16.msra.mxu0 %v2885
    %5188 = vmatprep.subr.bf16.mxu0 %v2894
    %5189 = vmatpush1.bf16.msra.mxu0 %v2893
    %5190 = vmatprep.subr.bf16.mxu0 %v2902
    %5191 = vmatpush1.bf16.msra.mxu0 %v2901
    %5192 = vmatprep.subr.bf16.mxu0 %v2910
    %5193 = vmatpush1.bf16.msra.mxu0 %v2909
    %5194 = vmatprep.subr.bf16.mxu0 %v2918
    %5195 = vmatpush1.bf16.msra.mxu0 %v2917
    %5196 = vmatprep.subr.bf16.mxu0 %v2926
    %5197 = vmatpush1.bf16.msra.mxu0 %v2925
    %5198 = vmatprep.subr.bf16.mxu0 %v2934
    %5199 = vmatpush1.bf16.msra.mxu0 %v2933
    %5200 = vmatprep.subr.bf16.mxu0 %v2942
    %5201 = vmatpush1.bf16.msra.mxu0 %v2941
    %5202 = vmatprep.subr.bf16.mxu0 %v2950
    %5203 = vmatpush1.bf16.msra.mxu0 %v2949
    %5204 = vmatprep.subr.bf16.mxu0 %v2958
    %5205 = vmatpush1.bf16.msra.mxu0 %v2957
    %5206 = vmatprep.mubr.bf16.mxu0 %v5091
    %5207 = vmatmul.mubr.bf16.gmra.mrb[0].mxu0 %v5090
    %v5208 = vpop.f32.mrb[0].mxu0
    %v5209 = vadd.f32 0.0, %v5208
    %v5210 = vpop.f32.mrb[0].mxu0
    %v5211 = vadd.f32 0.0, %v5210
    %v5212 = vpop.f32.mrb[0].mxu0
    %v5213 = vpop.f32.mrb[0].mxu0
    %5214 = vdwg.mxu0
    %5215 = vmatprep.subr.bf16.mxu0 %v2840
    %5216 = vmatpush1.bf16.msra.mxu0 %v2839
    %5217 = vmatprep.subr.bf16.mxu0 %v2848
    %5218 = vmatpush1.bf16.msra.mxu0 %v2847
    %5219 = vmatprep.subr.bf16.mxu0 %v2856
    %5220 = vmatpush1.bf16.msra.mxu0 %v2855
    %5221 = vmatprep.subr.bf16.mxu0 %v2864
    %5222 = vmatpush1.bf16.msra.mxu0 %v2863
    %5223 = vmatprep.subr.bf16.mxu0 %v2872
    %5224 = vmatpush1.bf16.msra.mxu0 %v2871
    %5225 = vmatprep.subr.bf16.mxu0 %v2880
    %5226 = vmatpush1.bf16.msra.mxu0 %v2879
    %5227 = vmatprep.subr.bf16.mxu0 %v2888
    %5228 = vmatpush1.bf16.msra.mxu0 %v2887
    %5229 = vmatprep.subr.bf16.mxu0 %v2896
    %5230 = vmatpush1.bf16.msra.mxu0 %v2895
    %5231 = vmatprep.subr.bf16.mxu0 %v2904
    %5232 = vmatpush1.bf16.msra.mxu0 %v2903
    %5233 = vmatprep.subr.bf16.mxu0 %v2912
    %5234 = vmatpush1.bf16.msra.mxu0 %v2911
    %5235 = vmatprep.subr.bf16.mxu0 %v2920
    %5236 = vmatpush1.bf16.msra.mxu0 %v2919
    %5237 = vmatprep.subr.bf16.mxu0 %v2928
    %5238 = vmatpush1.bf16.msra.mxu0 %v2927
    %5239 = vmatprep.subr.bf16.mxu0 %v2936
    %5240 = vmatpush1.bf16.msra.mxu0 %v2935
    %5241 = vmatprep.subr.bf16.mxu0 %v2944
    %5242 = vmatpush1.bf16.msra.mxu0 %v2943
    %5243 = vmatprep.subr.bf16.mxu0 %v2952
    %5244 = vmatpush1.bf16.msra.mxu0 %v2951
    %5245 = vmatprep.subr.bf16.mxu0 %v2960
    %5246 = vmatpush1.bf16.msra.mxu0 %v2959
    %5247 = vmatprep.mubr.bf16.mxu0 %v5091
    %5248 = vmatmul.mubr.bf16.gmra.mrb[0].mxu0 %v5090
    %v5249 = vpop.f32.mrb[0].mxu0
    %v5250 = vadd.f32 0.0, %v5249
    %v5251 = vpop.f32.mrb[0].mxu0
    %v5252 = vadd.f32 0.0, %v5251
    %v5253 = vpop.f32.mrb[0].mxu0
    %v5254 = vpop.f32.mrb[0].mxu0
    %5255 = vdwg.mxu0
    %v5256 = vmul.f32 %v5127, %v2671
    %v5257 = vmul.f32 %v5129, %v2675
    %v5258 = vmul.f32 %v5168, %v2679
    %v5259 = vmul.f32 %v5170, %v2683
    %v5260 = vmul.f32 %v5209, %v2687
    %v5261 = vmul.f32 %v5211, %v2691
    %v5262 = vmul.f32 %v5250, %v2695
    %v5263 = vmul.f32 %v5252, %v2699
    %v5264 = vadd.f32 %v2761, %v5256
    %v5265 = vadd.f32 %v2762, %v5257
    %v5266 = vadd.f32 %v2763, %v5258
    %v5267 = vadd.f32 %v2764, %v5259
    %v5268 = vadd.f32 %v2765, %v5260
    %v5269 = vadd.f32 %v2766, %v5261
    %v5270 = vadd.f32 %v2767, %v5262
    %v5271 = vadd.f32 %v2768, %v5263
    %v5272 = vpack.c.bf16 %v5264, %v5264
    %v5273 = vpack.c.bf16 %v5265, %v5265
    %v5274 = vpack.c.bf16 %v5266, %v5266
    %v5275 = vpack.c.bf16 %v5267, %v5267
    %v5276 = vpack.c.bf16 %v5268, %v5268
    %v5277 = vpack.c.bf16 %v5269, %v5269
    %v5278 = vpack.c.bf16 %v5270, %v5270
    %v5279 = vpack.c.bf16 %v5271, %v5271
    %5280 = vmatprep.subr.bf16.mxu0 %v3218
    %5281 = vmatpush1.bf16.msra.mxu0 %v3217
    %5282 = vmatprep.subr.bf16.mxu0 %v3226
    %5283 = vmatpush1.bf16.msra.mxu0 %v3225
    %5284 = vmatprep.subr.bf16.mxu0 %v3234
    %5285 = vmatpush1.bf16.msra.mxu0 %v3233
    %5286 = vmatprep.subr.bf16.mxu0 %v3242
    %5287 = vmatpush1.bf16.msra.mxu0 %v3241
    %5288 = vmatprep.subr.bf16.mxu0 %v3250
    %5289 = vmatpush1.bf16.msra.mxu0 %v3249
    %5290 = vmatprep.subr.bf16.mxu0 %v3258
    %5291 = vmatpush1.bf16.msra.mxu0 %v3257
    %5292 = vmatprep.subr.bf16.mxu0 %v3266
    %5293 = vmatpush1.bf16.msra.mxu0 %v3265
    %5294 = vmatprep.subr.bf16.mxu0 %v3274
    %5295 = vmatpush1.bf16.msra.mxu0 %v3273
    %5296 = vmatprep.subr.bf16.mxu0 %v3282
    %5297 = vmatpush1.bf16.msra.mxu0 %v3281
    %5298 = vmatprep.subr.bf16.mxu0 %v3290
    %5299 = vmatpush1.bf16.msra.mxu0 %v3289
    %5300 = vmatprep.subr.bf16.mxu0 %v3298
    %5301 = vmatpush1.bf16.msra.mxu0 %v3297
    %5302 = vmatprep.subr.bf16.mxu0 %v3306
    %5303 = vmatpush1.bf16.msra.mxu0 %v3305
    %5304 = vmatprep.subr.bf16.mxu0 %v3314
    %5305 = vmatpush1.bf16.msra.mxu0 %v3313
    %5306 = vmatprep.subr.bf16.mxu0 %v3322
    %5307 = vmatpush1.bf16.msra.mxu0 %v3321
    %5308 = vmatprep.subr.bf16.mxu0 %v3330
    %5309 = vmatpush1.bf16.msra.mxu0 %v3329
    %5310 = vmatprep.subr.bf16.mxu0 %v3338
    %5311 = vmatpush1.bf16.msra.mxu0 %v3337
    %5312 = vmatprep.mubr.bf16.mxu0 %v5273
    %5313 = vmatmul.mubr.bf16.gmra.mrb[0].mxu0 %v5272
    %v5314 = vpop.f32.mrb[0].mxu0
    %v5315 = vadd.f32 0.0, %v5314
    %v5316 = vpop.f32.mrb[0].mxu0
    %v5317 = vadd.f32 0.0, %v5316
    %v5318 = vpop.f32.mrb[0].mxu0
    %v5319 = vpop.f32.mrb[0].mxu0
    %5320 = vdwg.mxu0
    %5321 = vmatprep.subr.bf16.mxu0 %v3346
    %5322 = vmatpush1.bf16.msra.mxu0 %v3345
    %5323 = vmatprep.subr.bf16.mxu0 %v3354
    %5324 = vmatpush1.bf16.msra.mxu0 %v3353
    %5325 = vmatprep.subr.bf16.mxu0 %v3362
    %5326 = vmatpush1.bf16.msra.mxu0 %v3361
    %5327 = vmatprep.subr.bf16.mxu0 %v3370
    %5328 = vmatpush1.bf16.msra.mxu0 %v3369
    %5329 = vmatprep.subr.bf16.mxu0 %v3378
    %5330 = vmatpush1.bf16.msra.mxu0 %v3377
    %5331 = vmatprep.subr.bf16.mxu0 %v3386
    %5332 = vmatpush1.bf16.msra.mxu0 %v3385
    %5333 = vmatprep.subr.bf16.mxu0 %v3394
    %5334 = vmatpush1.bf16.msra.mxu0 %v3393
    %5335 = vmatprep.subr.bf16.mxu0 %v3402
    %5336 = vmatpush1.bf16.msra.mxu0 %v3401
    %5337 = vmatprep.subr.bf16.mxu0 %v3410
    %5338 = vmatpush1.bf16.msra.mxu0 %v3409
    %5339 = vmatprep.subr.bf16.mxu0 %v3418
    %5340 = vmatpush1.bf16.msra.mxu0 %v3417
    %5341 = vmatprep.subr.bf16.mxu0 %v3426
    %5342 = vmatpush1.bf16.msra.mxu0 %v3425
    %5343 = vmatprep.subr.bf16.mxu0 %v3434
    %5344 = vmatpush1.bf16.msra.mxu0 %v3433
    %5345 = vmatprep.subr.bf16.mxu0 %v3442
    %5346 = vmatpush1.bf16.msra.mxu0 %v3441
    %5347 = vmatprep.subr.bf16.mxu0 %v3450
    %5348 = vmatpush1.bf16.msra.mxu0 %v3449
    %5349 = vmatprep.subr.bf16.mxu0 %v3458
    %5350 = vmatpush1.bf16.msra.mxu0 %v3457
    %5351 = vmatprep.subr.bf16.mxu0 %v3466
    %5352 = vmatpush1.bf16.msra.mxu0 %v3465
    %5353 = vmatprep.mubr.bf16.mxu0 %v5275
    %5354 = vmatmul.mubr.bf16.gmra.mrb[0].mxu0 %v5274
    %v5355 = vpop.f32.mrb[0].mxu0
    %v5356 = vadd.f32 %v5315, %v5355
    %v5357 = vpop.f32.mrb[0].mxu0
    %v5358 = vadd.f32 %v5317, %v5357
    %v5359 = vpop.f32.mrb[0].mxu0
    %v5360 = vpop.f32.mrb[0].mxu0
    %5361 = vdwg.mxu0
    %5362 = vmatprep.subr.bf16.mxu0 %v3474
    %5363 = vmatpush1.bf16.msra.mxu0 %v3473
    %5364 = vmatprep.subr.bf16.mxu0 %v3482
    %5365 = vmatpush1.bf16.msra.mxu0 %v3481
    %5366 = vmatprep.subr.bf16.mxu0 %v3490
    %5367 = vmatpush1.bf16.msra.mxu0 %v3489
    %5368 = vmatprep.subr.bf16.mxu0 %v3498
    %5369 = vmatpush1.bf16.msra.mxu0 %v3497
    %5370 = vmatprep.subr.bf16.mxu0 %v3506
    %5371 = vmatpush1.bf16.msra.mxu0 %v3505
    %5372 = vmatprep.subr.bf16.mxu0 %v3514
    %5373 = vmatpush1.bf16.msra.mxu0 %v3513
    %5374 = vmatprep.subr.bf16.mxu0 %v3522
    %5375 = vmatpush1.bf16.msra.mxu0 %v3521
    %5376 = vmatprep.subr.bf16.mxu0 %v3530
    %5377 = vmatpush1.bf16.msra.mxu0 %v3529
    %5378 = vmatprep.subr.bf16.mxu0 %v3538
    %5379 = vmatpush1.bf16.msra.mxu0 %v3537
    %5380 = vmatprep.subr.bf16.mxu0 %v3546
    %5381 = vmatpush1.bf16.msra.mxu0 %v3545
    %5382 = vmatprep.subr.bf16.mxu0 %v3554
    %5383 = vmatpush1.bf16.msra.mxu0 %v3553
    %5384 = vmatprep.subr.bf16.mxu0 %v3562
    %5385 = vmatpush1.bf16.msra.mxu0 %v3561
    %5386 = vmatprep.subr.bf16.mxu0 %v3570
    %5387 = vmatpush1.bf16.msra.mxu0 %v3569
    %5388 = vmatprep.subr.bf16.mxu0 %v3578
    %5389 = vmatpush1.bf16.msra.mxu0 %v3577
    %5390 = vmatprep.subr.bf16.mxu0 %v3586
    %5391 = vmatpush1.bf16.msra.mxu0 %v3585
    %5392 = vmatprep.subr.bf16.mxu0 %v3594
    %5393 = vmatpush1.bf16.msra.mxu0 %v3593
    %5394 = vmatprep.mubr.bf16.mxu0 %v5277
    %5395 = vmatmul.mubr.bf16.gmra.mrb[0].mxu0 %v5276
    %v5396 = vpop.f32.mrb[0].mxu0
    %v5397 = vadd.f32 %v5356, %v5396
    %v5398 = vpop.f32.mrb[0].mxu0
    %v5399 = vadd.f32 %v5358, %v5398
    %v5400 = vpop.f32.mrb[0].mxu0
    %v5401 = vpop.f32.mrb[0].mxu0
    %5402 = vdwg.mxu0
    %5403 = vmatprep.subr.bf16.mxu0 %v3602
    %5404 = vmatpush1.bf16.msra.mxu0 %v3601
    %5405 = vmatprep.subr.bf16.mxu0 %v3610
    %5406 = vmatpush1.bf16.msra.mxu0 %v3609
    %5407 = vmatprep.subr.bf16.mxu0 %v3618
    %5408 = vmatpush1.bf16.msra.mxu0 %v3617
    %5409 = vmatprep.subr.bf16.mxu0 %v3626
    %5410 = vmatpush1.bf16.msra.mxu0 %v3625
    %5411 = vmatprep.subr.bf16.mxu0 %v3634
    %5412 = vmatpush1.bf16.msra.mxu0 %v3633
    %5413 = vmatprep.subr.bf16.mxu0 %v3642
    %5414 = vmatpush1.bf16.msra.mxu0 %v3641
    %5415 = vmatprep.subr.bf16.mxu0 %v3650
    %5416 = vmatpush1.bf16.msra.mxu0 %v3649
    %5417 = vmatprep.subr.bf16.mxu0 %v3658
    %5418 = vmatpush1.bf16.msra.mxu0 %v3657
    %5419 = vmatprep.subr.bf16.mxu0 %v3666
    %5420 = vmatpush1.bf16.msra.mxu0 %v3665
    %5421 = vmatprep.subr.bf16.mxu0 %v3674
    %5422 = vmatpush1.bf16.msra.mxu0 %v3673
    %5423 = vmatprep.subr.bf16.mxu0 %v3682
    %5424 = vmatpush1.bf16.msra.mxu0 %v3681
    %5425 = vmatprep.subr.bf16.mxu0 %v3690
    %5426 = vmatpush1.bf16.msra.mxu0 %v3689
    %5427 = vmatprep.subr.bf16.mxu0 %v3698
    %5428 = vmatpush1.bf16.msra.mxu0 %v3697
    %5429 = vmatprep.subr.bf16.mxu0 %v3706
    %5430 = vmatpush1.bf16.msra.mxu0 %v3705
    %5431 = vmatprep.subr.bf16.mxu0 %v3714
    %5432 = vmatpush1.bf16.msra.mxu0 %v3713
    %5433 = vmatprep.subr.bf16.mxu0 %v3722
    %5434 = vmatpush1.bf16.msra.mxu0 %v3721
    %5435 = vmatprep.mubr.bf16.mxu0 %v5279
    %5436 = vmatmul.mubr.bf16.gmra.mrb[0].mxu0 %v5278
    %v5437 = vpop.f32.mrb[0].mxu0
    %v5438 = vadd.f32 %v5397, %v5437
    %v5439 = vpop.f32.mrb[0].mxu0
    %v5440 = vadd.f32 %v5399, %v5439
    %v5441 = vpop.f32.mrb[0].mxu0
    %v5442 = vpop.f32.mrb[0].mxu0
    %5443 = vdwg.mxu0
    %5444 = vmatprep.subr.bf16.mxu0 %v3220
    %5445 = vmatpush1.bf16.msra.mxu0 %v3219
    %5446 = vmatprep.subr.bf16.mxu0 %v3228
    %5447 = vmatpush1.bf16.msra.mxu0 %v3227
    %5448 = vmatprep.subr.bf16.mxu0 %v3236
    %5449 = vmatpush1.bf16.msra.mxu0 %v3235
    %5450 = vmatprep.subr.bf16.mxu0 %v3244
    %5451 = vmatpush1.bf16.msra.mxu0 %v3243
    %5452 = vmatprep.subr.bf16.mxu0 %v3252
    %5453 = vmatpush1.bf16.msra.mxu0 %v3251
    %5454 = vmatprep.subr.bf16.mxu0 %v3260
    %5455 = vmatpush1.bf16.msra.mxu0 %v3259
    %5456 = vmatprep.subr.bf16.mxu0 %v3268
    %5457 = vmatpush1.bf16.msra.mxu0 %v3267
    %5458 = vmatprep.subr.bf16.mxu0 %v3276
    %5459 = vmatpush1.bf16.msra.mxu0 %v3275
    %5460 = vmatprep.subr.bf16.mxu0 %v3284
    %5461 = vmatpush1.bf16.msra.mxu0 %v3283
    %5462 = vmatprep.subr.bf16.mxu0 %v3292
    %5463 = vmatpush1.bf16.msra.mxu0 %v3291
    %5464 = vmatprep.subr.bf16.mxu0 %v3300
    %5465 = vmatpush1.bf16.msra.mxu0 %v3299
    %5466 = vmatprep.subr.bf16.mxu0 %v3308
    %5467 = vmatpush1.bf16.msra.mxu0 %v3307
    %5468 = vmatprep.subr.bf16.mxu0 %v3316
    %5469 = vmatpush1.bf16.msra.mxu0 %v3315
    %5470 = vmatprep.subr.bf16.mxu0 %v3324
    %5471 = vmatpush1.bf16.msra.mxu0 %v3323
    %5472 = vmatprep.subr.bf16.mxu0 %v3332
    %5473 = vmatpush1.bf16.msra.mxu0 %v3331
    %5474 = vmatprep.subr.bf16.mxu0 %v3340
    %5475 = vmatpush1.bf16.msra.mxu0 %v3339
    %5476 = vmatprep.mubr.bf16.mxu0 %v5273
    %5477 = vmatmul.mubr.bf16.gmra.mrb[0].mxu0 %v5272
    %v5478 = vpop.f32.mrb[0].mxu0
    %v5479 = vadd.f32 0.0, %v5478
    %v5480 = vpop.f32.mrb[0].mxu0
    %v5481 = vadd.f32 0.0, %v5480
    %v5482 = vpop.f32.mrb[0].mxu0
    %v5483 = vpop.f32.mrb[0].mxu0
    %5484 = vdwg.mxu0
    %5485 = vmatprep.subr.bf16.mxu0 %v3348
    %5486 = vmatpush1.bf16.msra.mxu0 %v3347
    %5487 = vmatprep.subr.bf16.mxu0 %v3356
    %5488 = vmatpush1.bf16.msra.mxu0 %v3355
    %5489 = vmatprep.subr.bf16.mxu0 %v3364
    %5490 = vmatpush1.bf16.msra.mxu0 %v3363
    %5491 = vmatprep.subr.bf16.mxu0 %v3372
    %5492 = vmatpush1.bf16.msra.mxu0 %v3371
    %5493 = vmatprep.subr.bf16.mxu0 %v3380
    %5494 = vmatpush1.bf16.msra.mxu0 %v3379
    %5495 = vmatprep.subr.bf16.mxu0 %v3388
    %5496 = vmatpush1.bf16.msra.mxu0 %v3387
    %5497 = vmatprep.subr.bf16.mxu0 %v3396
    %5498 = vmatpush1.bf16.msra.mxu0 %v3395
    %5499 = vmatprep.subr.bf16.mxu0 %v3404
    %5500 = vmatpush1.bf16.msra.mxu0 %v3403
    %5501 = vmatprep.subr.bf16.mxu0 %v3412
    %5502 = vmatpush1.bf16.msra.mxu0 %v3411
    %5503 = vmatprep.subr.bf16.mxu0 %v3420
    %5504 = vmatpush1.bf16.msra.mxu0 %v3419
    %5505 = vmatprep.subr.bf16.mxu0 %v3428
    %5506 = vmatpush1.bf16.msra.mxu0 %v3427
    %5507 = vmatprep.subr.bf16.mxu0 %v3436
    %5508 = vmatpush1.bf16.msra.mxu0 %v3435
    %5509 = vmatprep.subr.bf16.mxu0 %v3444
    %5510 = vmatpush1.bf16.msra.mxu0 %v3443
    %5511 = vmatprep.subr.bf16.mxu0 %v3452
    %5512 = vmatpush1.bf16.msra.mxu0 %v3451
    %5513 = vmatprep.subr.bf16.mxu0 %v3460
    %5514 = vmatpush1.bf16.msra.mxu0 %v3459
    %5515 = vmatprep.subr.bf16.mxu0 %v3468
    %5516 = vmatpush1.bf16.msra.mxu0 %v3467
    %5517 = vmatprep.mubr.bf16.mxu0 %v5275
    %5518 = vmatmul.mubr.bf16.gmra.mrb[0].mxu0 %v5274
    %v5519 = vpop.f32.mrb[0].mxu0
    %v5520 = vadd.f32 %v5479, %v5519
    %v5521 = vpop.f32.mrb[0].mxu0
    %v5522 = vadd.f32 %v5481, %v5521
    %v5523 = vpop.f32.mrb[0].mxu0
    %v5524 = vpop.f32.mrb[0].mxu0
    %5525 = vdwg.mxu0
    %5526 = vmatprep.subr.bf16.mxu0 %v3476
    %5527 = vmatpush1.bf16.msra.mxu0 %v3475
    %5528 = vmatprep.subr.bf16.mxu0 %v3484
    %5529 = vmatpush1.bf16.msra.mxu0 %v3483
    %5530 = vmatprep.subr.bf16.mxu0 %v3492
    %5531 = vmatpush1.bf16.msra.mxu0 %v3491
    %5532 = vmatprep.subr.bf16.mxu0 %v3500
    %5533 = vmatpush1.bf16.msra.mxu0 %v3499
    %5534 = vmatprep.subr.bf16.mxu0 %v3508
    %5535 = vmatpush1.bf16.msra.mxu0 %v3507
    %5536 = vmatprep.subr.bf16.mxu0 %v3516
    %5537 = vmatpush1.bf16.msra.mxu0 %v3515
    %5538 = vmatprep.subr.bf16.mxu0 %v3524
    %5539 = vmatpush1.bf16.msra.mxu0 %v3523
    %5540 = vmatprep.subr.bf16.mxu0 %v3532
    %5541 = vmatpush1.bf16.msra.mxu0 %v3531
    %5542 = vmatprep.subr.bf16.mxu0 %v3540
    %5543 = vmatpush1.bf16.msra.mxu0 %v3539
    %5544 = vmatprep.subr.bf16.mxu0 %v3548
    %5545 = vmatpush1.bf16.msra.mxu0 %v3547
    %5546 = vmatprep.subr.bf16.mxu0 %v3556
    %5547 = vmatpush1.bf16.msra.mxu0 %v3555
    %5548 = vmatprep.subr.bf16.mxu0 %v3564
    %5549 = vmatpush1.bf16.msra.mxu0 %v3563
    %5550 = vmatprep.subr.bf16.mxu0 %v3572
    %5551 = vmatpush1.bf16.msra.mxu0 %v3571
    %5552 = vmatprep.subr.bf16.mxu0 %v3580
    %5553 = vmatpush1.bf16.msra.mxu0 %v3579
    %5554 = vmatprep.subr.bf16.mxu0 %v3588
    %5555 = vmatpush1.bf16.msra.mxu0 %v3587
    %5556 = vmatprep.subr.bf16.mxu0 %v3596
    %5557 = vmatpush1.bf16.msra.mxu0 %v3595
    %5558 = vmatprep.mubr.bf16.mxu0 %v5277
    %5559 = vmatmul.mubr.bf16.gmra.mrb[0].mxu0 %v5276
    %v5560 = vpop.f32.mrb[0].mxu0
    %v5561 = vadd.f32 %v5520, %v5560
    %v5562 = vpop.f32.mrb[0].mxu0
    %v5563 = vadd.f32 %v5522, %v5562
    %v5564 = vpop.f32.mrb[0].mxu0
    %v5565 = vpop.f32.mrb[0].mxu0
    %5566 = vdwg.mxu0
    %5567 = vmatprep.subr.bf16.mxu0 %v3604
    %5568 = vmatpush1.bf16.msra.mxu0 %v3603
    %5569 = vmatprep.subr.bf16.mxu0 %v3612
    %5570 = vmatpush1.bf16.msra.mxu0 %v3611
    %5571 = vmatprep.subr.bf16.mxu0 %v3620
    %5572 = vmatpush1.bf16.msra.mxu0 %v3619
    %5573 = vmatprep.subr.bf16.mxu0 %v3628
    %5574 = vmatpush1.bf16.msra.mxu0 %v3627
    %5575 = vmatprep.subr.bf16.mxu0 %v3636
    %5576 = vmatpush1.bf16.msra.mxu0 %v3635
    %5577 = vmatprep.subr.bf16.mxu0 %v3644
    %5578 = vmatpush1.bf16.msra.mxu0 %v3643
    %5579 = vmatprep.subr.bf16.mxu0 %v3652
    %5580 = vmatpush1.bf16.msra.mxu0 %v3651
    %5581 = vmatprep.subr.bf16.mxu0 %v3660
    %5582 = vmatpush1.bf16.msra.mxu0 %v3659
    %5583 = vmatprep.subr.bf16.mxu0 %v3668
    %5584 = vmatpush1.bf16.msra.mxu0 %v3667
    %5585 = vmatprep.subr.bf16.mxu0 %v3676
    %5586 = vmatpush1.bf16.msra.mxu0 %v3675
    %5587 = vmatprep.subr.bf16.mxu0 %v3684
    %5588 = vmatpush1.bf16.msra.mxu0 %v3683
    %5589 = vmatprep.subr.bf16.mxu0 %v3692
    %5590 = vmatpush1.bf16.msra.mxu0 %v3691
    %5591 = vmatprep.subr.bf16.mxu0 %v3700
    %5592 = vmatpush1.bf16.msra.mxu0 %v3699
    %5593 = vmatprep.subr.bf16.mxu0 %v3708
    %5594 = vmatpush1.bf16.msra.mxu0 %v3707
    %5595 = vmatprep.subr.bf16.mxu0 %v3716
    %5596 = vmatpush1.bf16.msra.mxu0 %v3715
    %5597 = vmatprep.subr.bf16.mxu0 %v3724
    %5598 = vmatpush1.bf16.msra.mxu0 %v3723
    %5599 = vmatprep.mubr.bf16.mxu0 %v5279
    %5600 = vmatmul.mubr.bf16.gmra.mrb[0].mxu0 %v5278
    %v5601 = vpop.f32.mrb[0].mxu0
    %v5602 = vadd.f32 %v5561, %v5601
    %v5603 = vpop.f32.mrb[0].mxu0
    %v5604 = vadd.f32 %v5563, %v5603
    %v5605 = vpop.f32.mrb[0].mxu0
    %v5606 = vpop.f32.mrb[0].mxu0
    %5607 = vdwg.mxu0
    %5608 = vmatprep.subr.bf16.mxu0 %v3222
    %5609 = vmatpush1.bf16.msra.mxu0 %v3221
    %5610 = vmatprep.subr.bf16.mxu0 %v3230
    %5611 = vmatpush1.bf16.msra.mxu0 %v3229
    %5612 = vmatprep.subr.bf16.mxu0 %v3238
    %5613 = vmatpush1.bf16.msra.mxu0 %v3237
    %5614 = vmatprep.subr.bf16.mxu0 %v3246
    %5615 = vmatpush1.bf16.msra.mxu0 %v3245
    %5616 = vmatprep.subr.bf16.mxu0 %v3254
    %5617 = vmatpush1.bf16.msra.mxu0 %v3253
    %5618 = vmatprep.subr.bf16.mxu0 %v3262
    %5619 = vmatpush1.bf16.msra.mxu0 %v3261
    %5620 = vmatprep.subr.bf16.mxu0 %v3270
    %5621 = vmatpush1.bf16.msra.mxu0 %v3269
    %5622 = vmatprep.subr.bf16.mxu0 %v3278
    %5623 = vmatpush1.bf16.msra.mxu0 %v3277
    %5624 = vmatprep.subr.bf16.mxu0 %v3286
    %5625 = vmatpush1.bf16.msra.mxu0 %v3285
    %5626 = vmatprep.subr.bf16.mxu0 %v3294
    %5627 = vmatpush1.bf16.msra.mxu0 %v3293
    %5628 = vmatprep.subr.bf16.mxu0 %v3302
    %5629 = vmatpush1.bf16.msra.mxu0 %v3301
    %5630 = vmatprep.subr.bf16.mxu0 %v3310
    %5631 = vmatpush1.bf16.msra.mxu0 %v3309
    %5632 = vmatprep.subr.bf16.mxu0 %v3318
    %5633 = vmatpush1.bf16.msra.mxu0 %v3317
    %5634 = vmatprep.subr.bf16.mxu0 %v3326
    %5635 = vmatpush1.bf16.msra.mxu0 %v3325
    %5636 = vmatprep.subr.bf16.mxu0 %v3334
    %5637 = vmatpush1.bf16.msra.mxu0 %v3333
    %5638 = vmatprep.subr.bf16.mxu0 %v3342
    %5639 = vmatpush1.bf16.msra.mxu0 %v3341
    %5640 = vmatprep.mubr.bf16.mxu0 %v5273
    %5641 = vmatmul.mubr.bf16.gmra.mrb[0].mxu0 %v5272
    %v5642 = vpop.f32.mrb[0].mxu0
    %v5643 = vadd.f32 0.0, %v5642
    %v5644 = vpop.f32.mrb[0].mxu0
    %v5645 = vadd.f32 0.0, %v5644
    %v5646 = vpop.f32.mrb[0].mxu0
    %v5647 = vpop.f32.mrb[0].mxu0
    %5648 = vdwg.mxu0
    %5649 = vmatprep.subr.bf16.mxu0 %v3350
    %5650 = vmatpush1.bf16.msra.mxu0 %v3349
    %5651 = vmatprep.subr.bf16.mxu0 %v3358
    %5652 = vmatpush1.bf16.msra.mxu0 %v3357
    %5653 = vmatprep.subr.bf16.mxu0 %v3366
    %5654 = vmatpush1.bf16.msra.mxu0 %v3365
    %5655 = vmatprep.subr.bf16.mxu0 %v3374
    %5656 = vmatpush1.bf16.msra.mxu0 %v3373
    %5657 = vmatprep.subr.bf16.mxu0 %v3382
    %5658 = vmatpush1.bf16.msra.mxu0 %v3381
    %5659 = vmatprep.subr.bf16.mxu0 %v3390
    %5660 = vmatpush1.bf16.msra.mxu0 %v3389
    %5661 = vmatprep.subr.bf16.mxu0 %v3398
    %5662 = vmatpush1.bf16.msra.mxu0 %v3397
    %5663 = vmatprep.subr.bf16.mxu0 %v3406
    %5664 = vmatpush1.bf16.msra.mxu0 %v3405
    %5665 = vmatprep.subr.bf16.mxu0 %v3414
    %5666 = vmatpush1.bf16.msra.mxu0 %v3413
    %5667 = vmatprep.subr.bf16.mxu0 %v3422
    %5668 = vmatpush1.bf16.msra.mxu0 %v3421
    %5669 = vmatprep.subr.bf16.mxu0 %v3430
    %5670 = vmatpush1.bf16.msra.mxu0 %v3429
    %5671 = vmatprep.subr.bf16.mxu0 %v3438
    %5672 = vmatpush1.bf16.msra.mxu0 %v3437
    %5673 = vmatprep.subr.bf16.mxu0 %v3446
    %5674 = vmatpush1.bf16.msra.mxu0 %v3445
    %5675 = vmatprep.subr.bf16.mxu0 %v3454
    %5676 = vmatpush1.bf16.msra.mxu0 %v3453
    %5677 = vmatprep.subr.bf16.mxu0 %v3462
    %5678 = vmatpush1.bf16.msra.mxu0 %v3461
    %5679 = vmatprep.subr.bf16.mxu0 %v3470
    %5680 = vmatpush1.bf16.msra.mxu0 %v3469
    %5681 = vmatprep.mubr.bf16.mxu0 %v5275
    %5682 = vmatmul.mubr.bf16.gmra.mrb[0].mxu0 %v5274
    %v5683 = vpop.f32.mrb[0].mxu0
    %v5684 = vadd.f32 %v5643, %v5683
    %v5685 = vpop.f32.mrb[0].mxu0
    %v5686 = vadd.f32 %v5645, %v5685
    %v5687 = vpop.f32.mrb[0].mxu0
    %v5688 = vpop.f32.mrb[0].mxu0
    %5689 = vdwg.mxu0
    %5690 = vmatprep.subr.bf16.mxu0 %v3478
    %5691 = vmatpush1.bf16.msra.mxu0 %v3477
    %5692 = vmatprep.subr.bf16.mxu0 %v3486
    %5693 = vmatpush1.bf16.msra.mxu0 %v3485
    %5694 = vmatprep.subr.bf16.mxu0 %v3494
    %5695 = vmatpush1.bf16.msra.mxu0 %v3493
    %5696 = vmatprep.subr.bf16.mxu0 %v3502
    %5697 = vmatpush1.bf16.msra.mxu0 %v3501
    %5698 = vmatprep.subr.bf16.mxu0 %v3510
    %5699 = vmatpush1.bf16.msra.mxu0 %v3509
    %5700 = vmatprep.subr.bf16.mxu0 %v3518
    %5701 = vmatpush1.bf16.msra.mxu0 %v3517
    %5702 = vmatprep.subr.bf16.mxu0 %v3526
    %5703 = vmatpush1.bf16.msra.mxu0 %v3525
    %5704 = vmatprep.subr.bf16.mxu0 %v3534
    %5705 = vmatpush1.bf16.msra.mxu0 %v3533
    %5706 = vmatprep.subr.bf16.mxu0 %v3542
    %5707 = vmatpush1.bf16.msra.mxu0 %v3541
    %5708 = vmatprep.subr.bf16.mxu0 %v3550
    %5709 = vmatpush1.bf16.msra.mxu0 %v3549
    %5710 = vmatprep.subr.bf16.mxu0 %v3558
    %5711 = vmatpush1.bf16.msra.mxu0 %v3557
    %5712 = vmatprep.subr.bf16.mxu0 %v3566
    %5713 = vmatpush1.bf16.msra.mxu0 %v3565
    %5714 = vmatprep.subr.bf16.mxu0 %v3574
    %5715 = vmatpush1.bf16.msra.mxu0 %v3573
    %5716 = vmatprep.subr.bf16.mxu0 %v3582
    %5717 = vmatpush1.bf16.msra.mxu0 %v3581
    %5718 = vmatprep.subr.bf16.mxu0 %v3590
    %5719 = vmatpush1.bf16.msra.mxu0 %v3589
    %5720 = vmatprep.subr.bf16.mxu0 %v3598
    %5721 = vmatpush1.bf16.msra.mxu0 %v3597
    %5722 = vmatprep.mubr.bf16.mxu0 %v5277
    %5723 = vmatmul.mubr.bf16.gmra.mrb[0].mxu0 %v5276
    %v5724 = vpop.f32.mrb[0].mxu0
    %v5725 = vadd.f32 %v5684, %v5724
    %v5726 = vpop.f32.mrb[0].mxu0
    %v5727 = vadd.f32 %v5686, %v5726
    %v5728 = vpop.f32.mrb[0].mxu0
    %v5729 = vpop.f32.mrb[0].mxu0
    %5730 = vdwg.mxu0
    %5731 = vmatprep.subr.bf16.mxu0 %v3606
    %5732 = vmatpush1.bf16.msra.mxu0 %v3605
    %5733 = vmatprep.subr.bf16.mxu0 %v3614
    %5734 = vmatpush1.bf16.msra.mxu0 %v3613
    %5735 = vmatprep.subr.bf16.mxu0 %v3622
    %5736 = vmatpush1.bf16.msra.mxu0 %v3621
    %5737 = vmatprep.subr.bf16.mxu0 %v3630
    %5738 = vmatpush1.bf16.msra.mxu0 %v3629
    %5739 = vmatprep.subr.bf16.mxu0 %v3638
    %5740 = vmatpush1.bf16.msra.mxu0 %v3637
    %5741 = vmatprep.subr.bf16.mxu0 %v3646
    %5742 = vmatpush1.bf16.msra.mxu0 %v3645
    %5743 = vmatprep.subr.bf16.mxu0 %v3654
    %5744 = vmatpush1.bf16.msra.mxu0 %v3653
    %5745 = vmatprep.subr.bf16.mxu0 %v3662
    %5746 = vmatpush1.bf16.msra.mxu0 %v3661
    %5747 = vmatprep.subr.bf16.mxu0 %v3670
    %5748 = vmatpush1.bf16.msra.mxu0 %v3669
    %5749 = vmatprep.subr.bf16.mxu0 %v3678
    %5750 = vmatpush1.bf16.msra.mxu0 %v3677
    %5751 = vmatprep.subr.bf16.mxu0 %v3686
    %5752 = vmatpush1.bf16.msra.mxu0 %v3685
    %5753 = vmatprep.subr.bf16.mxu0 %v3694
    %5754 = vmatpush1.bf16.msra.mxu0 %v3693
    %5755 = vmatprep.subr.bf16.mxu0 %v3702
    %5756 = vmatpush1.bf16.msra.mxu0 %v3701
    %5757 = vmatprep.subr.bf16.mxu0 %v3710
    %5758 = vmatpush1.bf16.msra.mxu0 %v3709
    %5759 = vmatprep.subr.bf16.mxu0 %v3718
    %5760 = vmatpush1.bf16.msra.mxu0 %v3717
    %5761 = vmatprep.subr.bf16.mxu0 %v3726
    %5762 = vmatpush1.bf16.msra.mxu0 %v3725
    %5763 = vmatprep.mubr.bf16.mxu0 %v5279
    %5764 = vmatmul.mubr.bf16.gmra.mrb[0].mxu0 %v5278
    %v5765 = vpop.f32.mrb[0].mxu0
    %v5766 = vadd.f32 %v5725, %v5765
    %v5767 = vpop.f32.mrb[0].mxu0
    %v5768 = vadd.f32 %v5727, %v5767
    %v5769 = vpop.f32.mrb[0].mxu0
    %v5770 = vpop.f32.mrb[0].mxu0
    %5771 = vdwg.mxu0
    %5772 = vmatprep.subr.bf16.mxu0 %v3224
    %5773 = vmatpush1.bf16.msra.mxu0 %v3223
    %5774 = vmatprep.subr.bf16.mxu0 %v3232
    %5775 = vmatpush1.bf16.msra.mxu0 %v3231
    %5776 = vmatprep.subr.bf16.mxu0 %v3240
    %5777 = vmatpush1.bf16.msra.mxu0 %v3239
    %5778 = vmatprep.subr.bf16.mxu0 %v3248
    %5779 = vmatpush1.bf16.msra.mxu0 %v3247
    %5780 = vmatprep.subr.bf16.mxu0 %v3256
    %5781 = vmatpush1.bf16.msra.mxu0 %v3255
    %5782 = vmatprep.subr.bf16.mxu0 %v3264
    %5783 = vmatpush1.bf16.msra.mxu0 %v3263
    %5784 = vmatprep.subr.bf16.mxu0 %v3272
    %5785 = vmatpush1.bf16.msra.mxu0 %v3271
    %5786 = vmatprep.subr.bf16.mxu0 %v3280
    %5787 = vmatpush1.bf16.msra.mxu0 %v3279
    %5788 = vmatprep.subr.bf16.mxu0 %v3288
    %5789 = vmatpush1.bf16.msra.mxu0 %v3287
    %5790 = vmatprep.subr.bf16.mxu0 %v3296
    %5791 = vmatpush1.bf16.msra.mxu0 %v3295
    %5792 = vmatprep.subr.bf16.mxu0 %v3304
    %5793 = vmatpush1.bf16.msra.mxu0 %v3303
    %5794 = vmatprep.subr.bf16.mxu0 %v3312
    %5795 = vmatpush1.bf16.msra.mxu0 %v3311
    %5796 = vmatprep.subr.bf16.mxu0 %v3320
    %5797 = vmatpush1.bf16.msra.mxu0 %v3319
    %5798 = vmatprep.subr.bf16.mxu0 %v3328
    %5799 = vmatpush1.bf16.msra.mxu0 %v3327
    %5800 = vmatprep.subr.bf16.mxu0 %v3336
    %5801 = vmatpush1.bf16.msra.mxu0 %v3335
    %5802 = vmatprep.subr.bf16.mxu0 %v3344
    %5803 = vmatpush1.bf16.msra.mxu0 %v3343
    %5804 = vmatprep.mubr.bf16.mxu0 %v5273
    %5805 = vmatmul.mubr.bf16.gmra.mrb[0].mxu0 %v5272
    %v5806 = vpop.f32.mrb[0].mxu0
    %v5807 = vadd.f32 0.0, %v5806
    %v5808 = vpop.f32.mrb[0].mxu0
    %v5809 = vadd.f32 0.0, %v5808
    %v5810 = vpop.f32.mrb[0].mxu0
    %v5811 = vpop.f32.mrb[0].mxu0
    %5812 = vdwg.mxu0
    %5813 = vmatprep.subr.bf16.mxu0 %v3352
    %5814 = vmatpush1.bf16.msra.mxu0 %v3351
    %5815 = vmatprep.subr.bf16.mxu0 %v3360
    %5816 = vmatpush1.bf16.msra.mxu0 %v3359
    %5817 = vmatprep.subr.bf16.mxu0 %v3368
    %5818 = vmatpush1.bf16.msra.mxu0 %v3367
    %5819 = vmatprep.subr.bf16.mxu0 %v3376
    %5820 = vmatpush1.bf16.msra.mxu0 %v3375
    %5821 = vmatprep.subr.bf16.mxu0 %v3384
    %5822 = vmatpush1.bf16.msra.mxu0 %v3383
    %5823 = vmatprep.subr.bf16.mxu0 %v3392
    %5824 = vmatpush1.bf16.msra.mxu0 %v3391
    %5825 = vmatprep.subr.bf16.mxu0 %v3400
    %5826 = vmatpush1.bf16.msra.mxu0 %v3399
    %5827 = vmatprep.subr.bf16.mxu0 %v3408
    %5828 = vmatpush1.bf16.msra.mxu0 %v3407
    %5829 = vmatprep.subr.bf16.mxu0 %v3416
    %5830 = vmatpush1.bf16.msra.mxu0 %v3415
    %5831 = vmatprep.subr.bf16.mxu0 %v3424
    %5832 = vmatpush1.bf16.msra.mxu0 %v3423
    %5833 = vmatprep.subr.bf16.mxu0 %v3432
    %5834 = vmatpush1.bf16.msra.mxu0 %v3431
    %5835 = vmatprep.subr.bf16.mxu0 %v3440
    %5836 = vmatpush1.bf16.msra.mxu0 %v3439
    %5837 = vmatprep.subr.bf16.mxu0 %v3448
    %5838 = vmatpush1.bf16.msra.mxu0 %v3447
    %5839 = vmatprep.subr.bf16.mxu0 %v3456
    %5840 = vmatpush1.bf16.msra.mxu0 %v3455
    %5841 = vmatprep.subr.bf16.mxu0 %v3464
    %5842 = vmatpush1.bf16.msra.mxu0 %v3463
    %5843 = vmatprep.subr.bf16.mxu0 %v3472
    %5844 = vmatpush1.bf16.msra.mxu0 %v3471
    %5845 = vmatprep.mubr.bf16.mxu0 %v5275
    %5846 = vmatmul.mubr.bf16.gmra.mrb[0].mxu0 %v5274
    %v5847 = vpop.f32.mrb[0].mxu0
    %v5848 = vadd.f32 %v5807, %v5847
    %v5849 = vpop.f32.mrb[0].mxu0
    %v5850 = vadd.f32 %v5809, %v5849
    %v5851 = vpop.f32.mrb[0].mxu0
    %v5852 = vpop.f32.mrb[0].mxu0
    %5853 = vdwg.mxu0
    %5854 = vmatprep.subr.bf16.mxu0 %v3480
    %5855 = vmatpush1.bf16.msra.mxu0 %v3479
    %5856 = vmatprep.subr.bf16.mxu0 %v3488
    %5857 = vmatpush1.bf16.msra.mxu0 %v3487
    %5858 = vmatprep.subr.bf16.mxu0 %v3496
    %5859 = vmatpush1.bf16.msra.mxu0 %v3495
    %5860 = vmatprep.subr.bf16.mxu0 %v3504
    %5861 = vmatpush1.bf16.msra.mxu0 %v3503
    %5862 = vmatprep.subr.bf16.mxu0 %v3512
    %5863 = vmatpush1.bf16.msra.mxu0 %v3511
    %5864 = vmatprep.subr.bf16.mxu0 %v3520
    %5865 = vmatpush1.bf16.msra.mxu0 %v3519
    %5866 = vmatprep.subr.bf16.mxu0 %v3528
    %5867 = vmatpush1.bf16.msra.mxu0 %v3527
    %5868 = vmatprep.subr.bf16.mxu0 %v3536
    %5869 = vmatpush1.bf16.msra.mxu0 %v3535
    %5870 = vmatprep.subr.bf16.mxu0 %v3544
    %5871 = vmatpush1.bf16.msra.mxu0 %v3543
    %5872 = vmatprep.subr.bf16.mxu0 %v3552
    %5873 = vmatpush1.bf16.msra.mxu0 %v3551
    %5874 = vmatprep.subr.bf16.mxu0 %v3560
    %5875 = vmatpush1.bf16.msra.mxu0 %v3559
    %5876 = vmatprep.subr.bf16.mxu0 %v3568
    %5877 = vmatpush1.bf16.msra.mxu0 %v3567
    %5878 = vmatprep.subr.bf16.mxu0 %v3576
    %5879 = vmatpush1.bf16.msra.mxu0 %v3575
    %5880 = vmatprep.subr.bf16.mxu0 %v3584
    %5881 = vmatpush1.bf16.msra.mxu0 %v3583
    %5882 = vmatprep.subr.bf16.mxu0 %v3592
    %5883 = vmatpush1.bf16.msra.mxu0 %v3591
    %5884 = vmatprep.subr.bf16.mxu0 %v3600
    %5885 = vmatpush1.bf16.msra.mxu0 %v3599
    %5886 = vmatprep.mubr.bf16.mxu0 %v5277
    %5887 = vmatmul.mubr.bf16.gmra.mrb[0].mxu0 %v5276
    %v5888 = vpop.f32.mrb[0].mxu0
    %v5889 = vadd.f32 %v5848, %v5888
    %v5890 = vpop.f32.mrb[0].mxu0
    %v5891 = vadd.f32 %v5850, %v5890
    %v5892 = vpop.f32.mrb[0].mxu0
    %v5893 = vpop.f32.mrb[0].mxu0
    %5894 = vdwg.mxu0
    %5895 = vmatprep.subr.bf16.mxu0 %v3608
    %5896 = vmatpush1.bf16.msra.mxu0 %v3607
    %5897 = vmatprep.subr.bf16.mxu0 %v3616
    %5898 = vmatpush1.bf16.msra.mxu0 %v3615
    %5899 = vmatprep.subr.bf16.mxu0 %v3624
    %5900 = vmatpush1.bf16.msra.mxu0 %v3623
    %5901 = vmatprep.subr.bf16.mxu0 %v3632
    %5902 = vmatpush1.bf16.msra.mxu0 %v3631
    %5903 = vmatprep.subr.bf16.mxu0 %v3640
    %5904 = vmatpush1.bf16.msra.mxu0 %v3639
    %5905 = vmatprep.subr.bf16.mxu0 %v3648
    %5906 = vmatpush1.bf16.msra.mxu0 %v3647
    %5907 = vmatprep.subr.bf16.mxu0 %v3656
    %5908 = vmatpush1.bf16.msra.mxu0 %v3655
    %5909 = vmatprep.subr.bf16.mxu0 %v3664
    %5910 = vmatpush1.bf16.msra.mxu0 %v3663
    %5911 = vmatprep.subr.bf16.mxu0 %v3672
    %5912 = vmatpush1.bf16.msra.mxu0 %v3671
    %5913 = vmatprep.subr.bf16.mxu0 %v3680
    %5914 = vmatpush1.bf16.msra.mxu0 %v3679
    %5915 = vmatprep.subr.bf16.mxu0 %v3688
    %5916 = vmatpush1.bf16.msra.mxu0 %v3687
    %5917 = vmatprep.subr.bf16.mxu0 %v3696
    %5918 = vmatpush1.bf16.msra.mxu0 %v3695
    %5919 = vmatprep.subr.bf16.mxu0 %v3704
    %5920 = vmatpush1.bf16.msra.mxu0 %v3703
    %5921 = vmatprep.subr.bf16.mxu0 %v3712
    %5922 = vmatpush1.bf16.msra.mxu0 %v3711
    %5923 = vmatprep.subr.bf16.mxu0 %v3720
    %5924 = vmatpush1.bf16.msra.mxu0 %v3719
    %5925 = vmatprep.subr.bf16.mxu0 %v3728
    %5926 = vmatpush1.bf16.msra.mxu0 %v3727
    %5927 = vmatprep.mubr.bf16.mxu0 %v5279
    %5928 = vmatmul.mubr.bf16.gmra.mrb[0].mxu0 %v5278
    %v5929 = vpop.f32.mrb[0].mxu0
    %v5930 = vadd.f32 %v5889, %v5929
    %v5931 = vpop.f32.mrb[0].mxu0
    %v5932 = vadd.f32 %v5891, %v5931
    %v5933 = vpop.f32.mrb[0].mxu0
    %v5934 = vpop.f32.mrb[0].mxu0
    %5935 = vdwg.mxu0
    %v5936 = vmul.f32 %v5438, %v4848
    %v5937 = vmul.f32 %v5440, %v4852
    %v5938 = vmul.f32 %v5602, %v4856
    %v5939 = vmul.f32 %v5604, %v4860
    %v5940 = vmul.f32 %v5766, %v4864
    %v5941 = vmul.f32 %v5768, %v4868
    %v5942 = vmul.f32 %v5930, %v4872
    %v5943 = vmul.f32 %v5932, %v4876
    %v5944 = vadd.f32 %v5936, %v3935
    %v5945 = vadd.f32 %v5937, %v3939
    %v5946 = vadd.f32 %v5938, %v3943
    %v5947 = vadd.f32 %v5939, %v3947
    %v5948 = vadd.f32 %v5940, %v3951
    %v5949 = vadd.f32 %v5941, %v3955
    %v5950 = vadd.f32 %v5942, %v3959
    %v5951 = vadd.f32 %v5943, %v3963
    %v5952 = vpack.c.bf16 %v5944, %v5944
    %v5953 = vpack.c.bf16 %v5945, %v5945
    %v5954 = vpack.c.bf16 %v5946, %v5946
    %v5955 = vpack.c.bf16 %v5947, %v5947
    %v5956 = vpack.c.bf16 %v5948, %v5948
    %v5957 = vpack.c.bf16 %v5949, %v5949
    %v5958 = vpack.c.bf16 %v5950, %v5950
    %v5959 = vpack.c.bf16 %v5951, %v5951
    %5960 = vmatprep.subr.bf16.mxu0 %v3794
    %5961 = vmatpush1.bf16.xpose.msra.mxu0 %v3793
    %5962 = vmatprep.subr.bf16.mxu0 %v3802
    %5963 = vmatpush1.bf16.xpose.msra.mxu0 %v3801
    %5964 = vmatprep.subr.bf16.mxu0 %v3810
    %5965 = vmatpush1.bf16.xpose.msra.mxu0 %v3809
    %5966 = vmatprep.subr.bf16.mxu0 %v3818
    %5967 = vmatpush1.bf16.xpose.msra.mxu0 %v3817
    %5968 = vmatprep.subr.bf16.mxu0 %v3826
    %5969 = vmatpush1.bf16.xpose.msra.mxu0 %v3825
    %5970 = vmatprep.subr.bf16.mxu0 %v3834
    %5971 = vmatpush1.bf16.xpose.msra.mxu0 %v3833
    %5972 = vmatprep.subr.bf16.mxu0 %v3842
    %5973 = vmatpush1.bf16.xpose.msra.mxu0 %v3841
    %5974 = vmatprep.subr.bf16.mxu0 %v3850
    %5975 = vmatpush1.bf16.xpose.msra.mxu0 %v3849
    %5976 = vmatprep.subr.bf16.mxu0 %v3858
    %5977 = vmatpush1.bf16.xpose.msra.mxu0 %v3857
    %5978 = vmatprep.subr.bf16.mxu0 %v3866
    %5979 = vmatpush1.bf16.xpose.msra.mxu0 %v3865
    %5980 = vmatprep.subr.bf16.mxu0 %v3874
    %5981 = vmatpush1.bf16.xpose.msra.mxu0 %v3873
    %5982 = vmatprep.subr.bf16.mxu0 %v3882
    %5983 = vmatpush1.bf16.xpose.msra.mxu0 %v3881
    %5984 = vmatprep.subr.bf16.mxu0 %v3890
    %5985 = vmatpush1.bf16.xpose.msra.mxu0 %v3889
    %5986 = vmatprep.subr.bf16.mxu0 %v3898
    %5987 = vmatpush1.bf16.xpose.msra.mxu0 %v3897
    %5988 = vmatprep.subr.bf16.mxu0 %v3906
    %5989 = vmatpush1.bf16.xpose.msra.mxu0 %v3905
    %5990 = vmatprep.subr.bf16.mxu0 %v3914
    %5991 = vmatpush1.bf16.xpose.msra.mxu0 %v3913
    %5992 = vmatprep.mubr.bf16.mxu0 %v5953
    %5993 = vmatmul.mubr.bf16.gmra.mrb[0].mxu0 %v5952
    %v5994 = vpop.f32.mrb[0].mxu0
    %v5995 = vadd.f32 0.0, %v5994
    %v5996 = vpop.f32.mrb[0].mxu0
    %v5997 = vadd.f32 0.0, %v5996
    %v5998 = vpop.f32.mrb[0].mxu0
    %v5999 = vpop.f32.mrb[0].mxu0
    %6000 = vdwg.mxu0
    %6001 = vmatprep.subr.bf16.mxu0 %v3796
    %6002 = vmatpush1.bf16.xpose.msra.mxu0 %v3795
    %6003 = vmatprep.subr.bf16.mxu0 %v3804
    %6004 = vmatpush1.bf16.xpose.msra.mxu0 %v3803
    %6005 = vmatprep.subr.bf16.mxu0 %v3812
    %6006 = vmatpush1.bf16.xpose.msra.mxu0 %v3811
    %6007 = vmatprep.subr.bf16.mxu0 %v3820
    %6008 = vmatpush1.bf16.xpose.msra.mxu0 %v3819
    %6009 = vmatprep.subr.bf16.mxu0 %v3828
    %6010 = vmatpush1.bf16.xpose.msra.mxu0 %v3827
    %6011 = vmatprep.subr.bf16.mxu0 %v3836
    %6012 = vmatpush1.bf16.xpose.msra.mxu0 %v3835
    %6013 = vmatprep.subr.bf16.mxu0 %v3844
    %6014 = vmatpush1.bf16.xpose.msra.mxu0 %v3843
    %6015 = vmatprep.subr.bf16.mxu0 %v3852
    %6016 = vmatpush1.bf16.xpose.msra.mxu0 %v3851
    %6017 = vmatprep.subr.bf16.mxu0 %v3860
    %6018 = vmatpush1.bf16.xpose.msra.mxu0 %v3859
    %6019 = vmatprep.subr.bf16.mxu0 %v3868
    %6020 = vmatpush1.bf16.xpose.msra.mxu0 %v3867
    %6021 = vmatprep.subr.bf16.mxu0 %v3876
    %6022 = vmatpush1.bf16.xpose.msra.mxu0 %v3875
    %6023 = vmatprep.subr.bf16.mxu0 %v3884
    %6024 = vmatpush1.bf16.xpose.msra.mxu0 %v3883
    %6025 = vmatprep.subr.bf16.mxu0 %v3892
    %6026 = vmatpush1.bf16.xpose.msra.mxu0 %v3891
    %6027 = vmatprep.subr.bf16.mxu0 %v3900
    %6028 = vmatpush1.bf16.xpose.msra.mxu0 %v3899
    %6029 = vmatprep.subr.bf16.mxu0 %v3908
    %6030 = vmatpush1.bf16.xpose.msra.mxu0 %v3907
    %6031 = vmatprep.subr.bf16.mxu0 %v3916
    %6032 = vmatpush1.bf16.xpose.msra.mxu0 %v3915
    %6033 = vmatprep.mubr.bf16.mxu0 %v5955
    %6034 = vmatmul.mubr.bf16.gmra.mrb[0].mxu0 %v5954
    %v6035 = vpop.f32.mrb[0].mxu0
    %v6036 = vadd.f32 %v5995, %v6035
    %v6037 = vpop.f32.mrb[0].mxu0
    %v6038 = vadd.f32 %v5997, %v6037
    %v6039 = vpop.f32.mrb[0].mxu0
    %v6040 = vpop.f32.mrb[0].mxu0
    %6041 = vdwg.mxu0
    %6042 = vmatprep.subr.bf16.mxu0 %v3798
    %6043 = vmatpush1.bf16.xpose.msra.mxu0 %v3797
    %6044 = vmatprep.subr.bf16.mxu0 %v3806
    %6045 = vmatpush1.bf16.xpose.msra.mxu0 %v3805
    %6046 = vmatprep.subr.bf16.mxu0 %v3814
    %6047 = vmatpush1.bf16.xpose.msra.mxu0 %v3813
    %6048 = vmatprep.subr.bf16.mxu0 %v3822
    %6049 = vmatpush1.bf16.xpose.msra.mxu0 %v3821
    %6050 = vmatprep.subr.bf16.mxu0 %v3830
    %6051 = vmatpush1.bf16.xpose.msra.mxu0 %v3829
    %6052 = vmatprep.subr.bf16.mxu0 %v3838
    %6053 = vmatpush1.bf16.xpose.msra.mxu0 %v3837
    %6054 = vmatprep.subr.bf16.mxu0 %v3846
    %6055 = vmatpush1.bf16.xpose.msra.mxu0 %v3845
    %6056 = vmatprep.subr.bf16.mxu0 %v3854
    %6057 = vmatpush1.bf16.xpose.msra.mxu0 %v3853
    %6058 = vmatprep.subr.bf16.mxu0 %v3862
    %6059 = vmatpush1.bf16.xpose.msra.mxu0 %v3861
    %6060 = vmatprep.subr.bf16.mxu0 %v3870
    %6061 = vmatpush1.bf16.xpose.msra.mxu0 %v3869
    %6062 = vmatprep.subr.bf16.mxu0 %v3878
    %6063 = vmatpush1.bf16.xpose.msra.mxu0 %v3877
    %6064 = vmatprep.subr.bf16.mxu0 %v3886
    %6065 = vmatpush1.bf16.xpose.msra.mxu0 %v3885
    %6066 = vmatprep.subr.bf16.mxu0 %v3894
    %6067 = vmatpush1.bf16.xpose.msra.mxu0 %v3893
    %6068 = vmatprep.subr.bf16.mxu0 %v3902
    %6069 = vmatpush1.bf16.xpose.msra.mxu0 %v3901
    %6070 = vmatprep.subr.bf16.mxu0 %v3910
    %6071 = vmatpush1.bf16.xpose.msra.mxu0 %v3909
    %6072 = vmatprep.subr.bf16.mxu0 %v3918
    %6073 = vmatpush1.bf16.xpose.msra.mxu0 %v3917
    %6074 = vmatprep.mubr.bf16.mxu0 %v5957
    %6075 = vmatmul.mubr.bf16.gmra.mrb[0].mxu0 %v5956
    %v6076 = vpop.f32.mrb[0].mxu0
    %v6077 = vadd.f32 %v6036, %v6076
    %v6078 = vpop.f32.mrb[0].mxu0
    %v6079 = vadd.f32 %v6038, %v6078
    %v6080 = vpop.f32.mrb[0].mxu0
    %v6081 = vpop.f32.mrb[0].mxu0
    %6082 = vdwg.mxu0
    %6083 = vmatprep.subr.bf16.mxu0 %v3800
    %6084 = vmatpush1.bf16.xpose.msra.mxu0 %v3799
    %6085 = vmatprep.subr.bf16.mxu0 %v3808
    %6086 = vmatpush1.bf16.xpose.msra.mxu0 %v3807
    %6087 = vmatprep.subr.bf16.mxu0 %v3816
    %6088 = vmatpush1.bf16.xpose.msra.mxu0 %v3815
    %6089 = vmatprep.subr.bf16.mxu0 %v3824
    %6090 = vmatpush1.bf16.xpose.msra.mxu0 %v3823
    %6091 = vmatprep.subr.bf16.mxu0 %v3832
    %6092 = vmatpush1.bf16.xpose.msra.mxu0 %v3831
    %6093 = vmatprep.subr.bf16.mxu0 %v3840
    %6094 = vmatpush1.bf16.xpose.msra.mxu0 %v3839
    %6095 = vmatprep.subr.bf16.mxu0 %v3848
    %6096 = vmatpush1.bf16.xpose.msra.mxu0 %v3847
    %6097 = vmatprep.subr.bf16.mxu0 %v3856
    %6098 = vmatpush1.bf16.xpose.msra.mxu0 %v3855
    %6099 = vmatprep.subr.bf16.mxu0 %v3864
    %6100 = vmatpush1.bf16.xpose.msra.mxu0 %v3863
    %6101 = vmatprep.subr.bf16.mxu0 %v3872
    %6102 = vmatpush1.bf16.xpose.msra.mxu0 %v3871
    %6103 = vmatprep.subr.bf16.mxu0 %v3880
    %6104 = vmatpush1.bf16.xpose.msra.mxu0 %v3879
    %6105 = vmatprep.subr.bf16.mxu0 %v3888
    %6106 = vmatpush1.bf16.xpose.msra.mxu0 %v3887
    %6107 = vmatprep.subr.bf16.mxu0 %v3896
    %6108 = vmatpush1.bf16.xpose.msra.mxu0 %v3895
    %6109 = vmatprep.subr.bf16.mxu0 %v3904
    %6110 = vmatpush1.bf16.xpose.msra.mxu0 %v3903
    %6111 = vmatprep.subr.bf16.mxu0 %v3912
    %6112 = vmatpush1.bf16.xpose.msra.mxu0 %v3911
    %6113 = vmatprep.subr.bf16.mxu0 %v3920
    %6114 = vmatpush1.bf16.xpose.msra.mxu0 %v3919
    %6115 = vmatprep.mubr.bf16.mxu0 %v5959
    %6116 = vmatmul.mubr.bf16.gmra.mrb[0].mxu0 %v5958
    %v6117 = vpop.f32.mrb[0].mxu0
    %v6118 = vadd.f32 %v6077, %v6117
    %v6119 = vpop.f32.mrb[0].mxu0
    %v6120 = vadd.f32 %v6079, %v6119
    %v6121 = vpop.f32.mrb[0].mxu0
    %v6122 = vpop.f32.mrb[0].mxu0
    %6123 = vdwg.mxu0
    %v6124 = vmul.f32 %v6118, %v5077
    %v6125 = vmul.f32 %v6120, %v5081
    %v6126 = vadd.f32 %v5088, %v6124
    %v6127 = vadd.f32 %v5089, %v6125
    %v6128 = vadd.f32 %v6126, %v3978
    %v6129 = vadd.f32 %v6127, %v3982
    %v6130 = vpack.c.bf16 %v6128, %v6128
    %v6131 = vpack.c.bf16 %v6129, %v6129
    %6132 = vmatprep.subr.bf16.mxu0 %v2834
    %6133 = vmatpush1.bf16.msra.mxu0 %v2833
    %6134 = vmatprep.subr.bf16.mxu0 %v2842
    %6135 = vmatpush1.bf16.msra.mxu0 %v2841
    %6136 = vmatprep.subr.bf16.mxu0 %v2850
    %6137 = vmatpush1.bf16.msra.mxu0 %v2849
    %6138 = vmatprep.subr.bf16.mxu0 %v2858
    %6139 = vmatpush1.bf16.msra.mxu0 %v2857
    %6140 = vmatprep.subr.bf16.mxu0 %v2866
    %6141 = vmatpush1.bf16.msra.mxu0 %v2865
    %6142 = vmatprep.subr.bf16.mxu0 %v2874
    %6143 = vmatpush1.bf16.msra.mxu0 %v2873
    %6144 = vmatprep.subr.bf16.mxu0 %v2882
    %6145 = vmatpush1.bf16.msra.mxu0 %v2881
    %6146 = vmatprep.subr.bf16.mxu0 %v2890
    %6147 = vmatpush1.bf16.msra.mxu0 %v2889
    %6148 = vmatprep.subr.bf16.mxu0 %v2898
    %6149 = vmatpush1.bf16.msra.mxu0 %v2897
    %6150 = vmatprep.subr.bf16.mxu0 %v2906
    %6151 = vmatpush1.bf16.msra.mxu0 %v2905
    %6152 = vmatprep.subr.bf16.mxu0 %v2914
    %6153 = vmatpush1.bf16.msra.mxu0 %v2913
    %6154 = vmatprep.subr.bf16.mxu0 %v2922
    %6155 = vmatpush1.bf16.msra.mxu0 %v2921
    %6156 = vmatprep.subr.bf16.mxu0 %v2930
    %6157 = vmatpush1.bf16.msra.mxu0 %v2929
    %6158 = vmatprep.subr.bf16.mxu0 %v2938
    %6159 = vmatpush1.bf16.msra.mxu0 %v2937
    %6160 = vmatprep.subr.bf16.mxu0 %v2946
    %6161 = vmatpush1.bf16.msra.mxu0 %v2945
    %6162 = vmatprep.subr.bf16.mxu0 %v2954
    %6163 = vmatpush1.bf16.msra.mxu0 %v2953
    %6164 = vmatprep.mubr.bf16.mxu0 %v6131
    %6165 = vmatmul.mubr.bf16.gmra.mrb[0].mxu0 %v6130
    %v6166 = vpop.f32.mrb[0].mxu0
    %v6167 = vadd.f32 0.0, %v6166
    %v6168 = vpop.f32.mrb[0].mxu0
    %v6169 = vadd.f32 0.0, %v6168
    %v6170 = vpop.f32.mrb[0].mxu0
    %v6171 = vpop.f32.mrb[0].mxu0
    %6172 = vdwg.mxu0
    %6173 = vmatprep.subr.bf16.mxu0 %v2836
    %6174 = vmatpush1.bf16.msra.mxu0 %v2835
    %6175 = vmatprep.subr.bf16.mxu0 %v2844
    %6176 = vmatpush1.bf16.msra.mxu0 %v2843
    %6177 = vmatprep.subr.bf16.mxu0 %v2852
    %6178 = vmatpush1.bf16.msra.mxu0 %v2851
    %6179 = vmatprep.subr.bf16.mxu0 %v2860
    %6180 = vmatpush1.bf16.msra.mxu0 %v2859
    %6181 = vmatprep.subr.bf16.mxu0 %v2868
    %6182 = vmatpush1.bf16.msra.mxu0 %v2867
    %6183 = vmatprep.subr.bf16.mxu0 %v2876
    %6184 = vmatpush1.bf16.msra.mxu0 %v2875
    %6185 = vmatprep.subr.bf16.mxu0 %v2884
    %6186 = vmatpush1.bf16.msra.mxu0 %v2883
    %6187 = vmatprep.subr.bf16.mxu0 %v2892
    %6188 = vmatpush1.bf16.msra.mxu0 %v2891
    %6189 = vmatprep.subr.bf16.mxu0 %v2900
    %6190 = vmatpush1.bf16.msra.mxu0 %v2899
    %6191 = vmatprep.subr.bf16.mxu0 %v2908
    %6192 = vmatpush1.bf16.msra.mxu0 %v2907
    %6193 = vmatprep.subr.bf16.mxu0 %v2916
    %6194 = vmatpush1.bf16.msra.mxu0 %v2915
    %6195 = vmatprep.subr.bf16.mxu0 %v2924
    %6196 = vmatpush1.bf16.msra.mxu0 %v2923
    %6197 = vmatprep.subr.bf16.mxu0 %v2932
    %6198 = vmatpush1.bf16.msra.mxu0 %v2931
    %6199 = vmatprep.subr.bf16.mxu0 %v2940
    %6200 = vmatpush1.bf16.msra.mxu0 %v2939
    %6201 = vmatprep.subr.bf16.mxu0 %v2948
    %6202 = vmatpush1.bf16.msra.mxu0 %v2947
    %6203 = vmatprep.subr.bf16.mxu0 %v2956
    %6204 = vmatpush1.bf16.msra.mxu0 %v2955
    %6205 = vmatprep.mubr.bf16.mxu0 %v6131
    %6206 = vmatmul.mubr.bf16.gmra.mrb[0].mxu0 %v6130
    %v6207 = vpop.f32.mrb[0].mxu0
    %v6208 = vadd.f32 0.0, %v6207
    %v6209 = vpop.f32.mrb[0].mxu0
    %v6210 = vadd.f32 0.0, %v6209
    %v6211 = vpop.f32.mrb[0].mxu0
    %v6212 = vpop.f32.mrb[0].mxu0
    %6213 = vdwg.mxu0
    %6214 = vmatprep.subr.bf16.mxu0 %v2838
    %6215 = vmatpush1.bf16.msra.mxu0 %v2837
    %6216 = vmatprep.subr.bf16.mxu0 %v2846
    %6217 = vmatpush1.bf16.msra.mxu0 %v2845
    %6218 = vmatprep.subr.bf16.mxu0 %v2854
    %6219 = vmatpush1.bf16.msra.mxu0 %v2853
    %6220 = vmatprep.subr.bf16.mxu0 %v2862
    %6221 = vmatpush1.bf16.msra.mxu0 %v2861
    %6222 = vmatprep.subr.bf16.mxu0 %v2870
    %6223 = vmatpush1.bf16.msra.mxu0 %v2869
    %6224 = vmatprep.subr.bf16.mxu0 %v2878
    %6225 = vmatpush1.bf16.msra.mxu0 %v2877
    %6226 = vmatprep.subr.bf16.mxu0 %v2886
    %6227 = vmatpush1.bf16.msra.mxu0 %v2885
    %6228 = vmatprep.subr.bf16.mxu0 %v2894
    %6229 = vmatpush1.bf16.msra.mxu0 %v2893
    %6230 = vmatprep.subr.bf16.mxu0 %v2902
    %6231 = vmatpush1.bf16.msra.mxu0 %v2901
    %6232 = vmatprep.subr.bf16.mxu0 %v2910
    %6233 = vmatpush1.bf16.msra.mxu0 %v2909
    %6234 = vmatprep.subr.bf16.mxu0 %v2918
    %6235 = vmatpush1.bf16.msra.mxu0 %v2917
    %6236 = vmatprep.subr.bf16.mxu0 %v2926
    %6237 = vmatpush1.bf16.msra.mxu0 %v2925
    %6238 = vmatprep.subr.bf16.mxu0 %v2934
    %6239 = vmatpush1.bf16.msra.mxu0 %v2933
    %6240 = vmatprep.subr.bf16.mxu0 %v2942
    %6241 = vmatpush1.bf16.msra.mxu0 %v2941
    %6242 = vmatprep.subr.bf16.mxu0 %v2950
    %6243 = vmatpush1.bf16.msra.mxu0 %v2949
    %6244 = vmatprep.subr.bf16.mxu0 %v2958
    %6245 = vmatpush1.bf16.msra.mxu0 %v2957
    %6246 = vmatprep.mubr.bf16.mxu0 %v6131
    %6247 = vmatmul.mubr.bf16.gmra.mrb[0].mxu0 %v6130
    %v6248 = vpop.f32.mrb[0].mxu0
    %v6249 = vadd.f32 0.0, %v6248
    %v6250 = vpop.f32.mrb[0].mxu0
    %v6251 = vadd.f32 0.0, %v6250
    %v6252 = vpop.f32.mrb[0].mxu0
    %v6253 = vpop.f32.mrb[0].mxu0
    %6254 = vdwg.mxu0
    %6255 = vmatprep.subr.bf16.mxu0 %v2840
    %6256 = vmatpush1.bf16.msra.mxu0 %v2839
    %6257 = vmatprep.subr.bf16.mxu0 %v2848
    %6258 = vmatpush1.bf16.msra.mxu0 %v2847
    %6259 = vmatprep.subr.bf16.mxu0 %v2856
    %6260 = vmatpush1.bf16.msra.mxu0 %v2855
    %6261 = vmatprep.subr.bf16.mxu0 %v2864
    %6262 = vmatpush1.bf16.msra.mxu0 %v2863
    %6263 = vmatprep.subr.bf16.mxu0 %v2872
    %6264 = vmatpush1.bf16.msra.mxu0 %v2871
    %6265 = vmatprep.subr.bf16.mxu0 %v2880
    %6266 = vmatpush1.bf16.msra.mxu0 %v2879
    %6267 = vmatprep.subr.bf16.mxu0 %v2888
    %6268 = vmatpush1.bf16.msra.mxu0 %v2887
    %6269 = vmatprep.subr.bf16.mxu0 %v2896
    %6270 = vmatpush1.bf16.msra.mxu0 %v2895
    %6271 = vmatprep.subr.bf16.mxu0 %v2904
    %6272 = vmatpush1.bf16.msra.mxu0 %v2903
    %6273 = vmatprep.subr.bf16.mxu0 %v2912
    %6274 = vmatpush1.bf16.msra.mxu0 %v2911
    %6275 = vmatprep.subr.bf16.mxu0 %v2920
    %6276 = vmatpush1.bf16.msra.mxu0 %v2919
    %6277 = vmatprep.subr.bf16.mxu0 %v2928
    %6278 = vmatpush1.bf16.msra.mxu0 %v2927
    %6279 = vmatprep.subr.bf16.mxu0 %v2936
    %6280 = vmatpush1.bf16.msra.mxu0 %v2935
    %6281 = vmatprep.subr.bf16.mxu0 %v2944
    %6282 = vmatpush1.bf16.msra.mxu0 %v2943
    %6283 = vmatprep.subr.bf16.mxu0 %v2952
    %6284 = vmatpush1.bf16.msra.mxu0 %v2951
    %6285 = vmatprep.subr.bf16.mxu0 %v2960
    %6286 = vmatpush1.bf16.msra.mxu0 %v2959
    %6287 = vmatprep.mubr.bf16.mxu0 %v6131
    %6288 = vmatmul.mubr.bf16.gmra.mrb[0].mxu0 %v6130
    %v6289 = vpop.f32.mrb[0].mxu0
    %v6290 = vadd.f32 0.0, %v6289
    %v6291 = vpop.f32.mrb[0].mxu0
    %v6292 = vadd.f32 0.0, %v6291
    %v6293 = vpop.f32.mrb[0].mxu0
    %v6294 = vpop.f32.mrb[0].mxu0
    %6295 = vdwg.mxu0
    %v6296 = vmul.f32 %v6167, %v2671
    %v6297 = vmul.f32 %v6169, %v2675
    %v6298 = vmul.f32 %v6208, %v2679
    %v6299 = vmul.f32 %v6210, %v2683
    %v6300 = vmul.f32 %v6249, %v2687
    %v6301 = vmul.f32 %v6251, %v2691
    %v6302 = vmul.f32 %v6290, %v2695
    %v6303 = vmul.f32 %v6292, %v2699
    %v6304 = vadd.f32 %v2761, %v6296
    %v6305 = vadd.f32 %v2762, %v6297
    %v6306 = vadd.f32 %v2763, %v6298
    %v6307 = vadd.f32 %v2764, %v6299
    %v6308 = vadd.f32 %v2765, %v6300
    %v6309 = vadd.f32 %v2766, %v6301
    %v6310 = vadd.f32 %v2767, %v6302
    %v6311 = vadd.f32 %v2768, %v6303
    %v6312 = vpack.c.bf16 %v6304, %v6304
    %v6313 = vpack.c.bf16 %v6305, %v6305
    %v6314 = vpack.c.bf16 %v6306, %v6306
    %v6315 = vpack.c.bf16 %v6307, %v6307
    %v6316 = vpack.c.bf16 %v6308, %v6308
    %v6317 = vpack.c.bf16 %v6309, %v6309
    %v6318 = vpack.c.bf16 %v6310, %v6310
    %v6319 = vpack.c.bf16 %v6311, %v6311
    %6320 = vmatprep.subr.bf16.mxu0 %v3218
    %6321 = vmatpush1.bf16.msra.mxu0 %v3217
    %6322 = vmatprep.subr.bf16.mxu0 %v3226
    %6323 = vmatpush1.bf16.msra.mxu0 %v3225
    %6324 = vmatprep.subr.bf16.mxu0 %v3234
    %6325 = vmatpush1.bf16.msra.mxu0 %v3233
    %6326 = vmatprep.subr.bf16.mxu0 %v3242
    %6327 = vmatpush1.bf16.msra.mxu0 %v3241
    %6328 = vmatprep.subr.bf16.mxu0 %v3250
    %6329 = vmatpush1.bf16.msra.mxu0 %v3249
    %6330 = vmatprep.subr.bf16.mxu0 %v3258
    %6331 = vmatpush1.bf16.msra.mxu0 %v3257
    %6332 = vmatprep.subr.bf16.mxu0 %v3266
    %6333 = vmatpush1.bf16.msra.mxu0 %v3265
    %6334 = vmatprep.subr.bf16.mxu0 %v3274
    %6335 = vmatpush1.bf16.msra.mxu0 %v3273
    %6336 = vmatprep.subr.bf16.mxu0 %v3282
    %6337 = vmatpush1.bf16.msra.mxu0 %v3281
    %6338 = vmatprep.subr.bf16.mxu0 %v3290
    %6339 = vmatpush1.bf16.msra.mxu0 %v3289
    %6340 = vmatprep.subr.bf16.mxu0 %v3298
    %6341 = vmatpush1.bf16.msra.mxu0 %v3297
    %6342 = vmatprep.subr.bf16.mxu0 %v3306
    %6343 = vmatpush1.bf16.msra.mxu0 %v3305
    %6344 = vmatprep.subr.bf16.mxu0 %v3314
    %6345 = vmatpush1.bf16.msra.mxu0 %v3313
    %6346 = vmatprep.subr.bf16.mxu0 %v3322
    %6347 = vmatpush1.bf16.msra.mxu0 %v3321
    %6348 = vmatprep.subr.bf16.mxu0 %v3330
    %6349 = vmatpush1.bf16.msra.mxu0 %v3329
    %6350 = vmatprep.subr.bf16.mxu0 %v3338
    %6351 = vmatpush1.bf16.msra.mxu0 %v3337
    %6352 = vmatprep.mubr.bf16.mxu0 %v6313
    %6353 = vmatmul.mubr.bf16.gmra.mrb[0].mxu0 %v6312
    %v6354 = vpop.f32.mrb[0].mxu0
    %v6355 = vadd.f32 0.0, %v6354
    %v6356 = vpop.f32.mrb[0].mxu0
    %v6357 = vadd.f32 0.0, %v6356
    %v6358 = vpop.f32.mrb[0].mxu0
    %v6359 = vpop.f32.mrb[0].mxu0
    %6360 = vdwg.mxu0
    %6361 = vmatprep.subr.bf16.mxu0 %v3346
    %6362 = vmatpush1.bf16.msra.mxu0 %v3345
    %6363 = vmatprep.subr.bf16.mxu0 %v3354
    %6364 = vmatpush1.bf16.msra.mxu0 %v3353
    %6365 = vmatprep.subr.bf16.mxu0 %v3362
    %6366 = vmatpush1.bf16.msra.mxu0 %v3361
    %6367 = vmatprep.subr.bf16.mxu0 %v3370
    %6368 = vmatpush1.bf16.msra.mxu0 %v3369
    %6369 = vmatprep.subr.bf16.mxu0 %v3378
    %6370 = vmatpush1.bf16.msra.mxu0 %v3377
    %6371 = vmatprep.subr.bf16.mxu0 %v3386
    %6372 = vmatpush1.bf16.msra.mxu0 %v3385
    %6373 = vmatprep.subr.bf16.mxu0 %v3394
    %6374 = vmatpush1.bf16.msra.mxu0 %v3393
    %6375 = vmatprep.subr.bf16.mxu0 %v3402
    %6376 = vmatpush1.bf16.msra.mxu0 %v3401
    %6377 = vmatprep.subr.bf16.mxu0 %v3410
    %6378 = vmatpush1.bf16.msra.mxu0 %v3409
    %6379 = vmatprep.subr.bf16.mxu0 %v3418
    %6380 = vmatpush1.bf16.msra.mxu0 %v3417
    %6381 = vmatprep.subr.bf16.mxu0 %v3426
    %6382 = vmatpush1.bf16.msra.mxu0 %v3425
    %6383 = vmatprep.subr.bf16.mxu0 %v3434
    %6384 = vmatpush1.bf16.msra.mxu0 %v3433
    %6385 = vmatprep.subr.bf16.mxu0 %v3442
    %6386 = vmatpush1.bf16.msra.mxu0 %v3441
    %6387 = vmatprep.subr.bf16.mxu0 %v3450
    %6388 = vmatpush1.bf16.msra.mxu0 %v3449
    %6389 = vmatprep.subr.bf16.mxu0 %v3458
    %6390 = vmatpush1.bf16.msra.mxu0 %v3457
    %6391 = vmatprep.subr.bf16.mxu0 %v3466
    %6392 = vmatpush1.bf16.msra.mxu0 %v3465
    %6393 = vmatprep.mubr.bf16.mxu0 %v6315
    %6394 = vmatmul.mubr.bf16.gmra.mrb[0].mxu0 %v6314
    %v6395 = vpop.f32.mrb[0].mxu0
    %v6396 = vadd.f32 %v6355, %v6395
    %v6397 = vpop.f32.mrb[0].mxu0
    %v6398 = vadd.f32 %v6357, %v6397
    %v6399 = vpop.f32.mrb[0].mxu0
    %v6400 = vpop.f32.mrb[0].mxu0
    %6401 = vdwg.mxu0
    %6402 = vmatprep.subr.bf16.mxu0 %v3474
    %6403 = vmatpush1.bf16.msra.mxu0 %v3473
    %6404 = vmatprep.subr.bf16.mxu0 %v3482
    %6405 = vmatpush1.bf16.msra.mxu0 %v3481
    %6406 = vmatprep.subr.bf16.mxu0 %v3490
    %6407 = vmatpush1.bf16.msra.mxu0 %v3489
    %6408 = vmatprep.subr.bf16.mxu0 %v3498
    %6409 = vmatpush1.bf16.msra.mxu0 %v3497
    %6410 = vmatprep.subr.bf16.mxu0 %v3506
    %6411 = vmatpush1.bf16.msra.mxu0 %v3505
    %6412 = vmatprep.subr.bf16.mxu0 %v3514
    %6413 = vmatpush1.bf16.msra.mxu0 %v3513
    %6414 = vmatprep.subr.bf16.mxu0 %v3522
    %6415 = vmatpush1.bf16.msra.mxu0 %v3521
    %6416 = vmatprep.subr.bf16.mxu0 %v3530
    %6417 = vmatpush1.bf16.msra.mxu0 %v3529
    %6418 = vmatprep.subr.bf16.mxu0 %v3538
    %6419 = vmatpush1.bf16.msra.mxu0 %v3537
    %6420 = vmatprep.subr.bf16.mxu0 %v3546
    %6421 = vmatpush1.bf16.msra.mxu0 %v3545
    %6422 = vmatprep.subr.bf16.mxu0 %v3554
    %6423 = vmatpush1.bf16.msra.mxu0 %v3553
    %6424 = vmatprep.subr.bf16.mxu0 %v3562
    %6425 = vmatpush1.bf16.msra.mxu0 %v3561
    %6426 = vmatprep.subr.bf16.mxu0 %v3570
    %6427 = vmatpush1.bf16.msra.mxu0 %v3569
    %6428 = vmatprep.subr.bf16.mxu0 %v3578
    %6429 = vmatpush1.bf16.msra.mxu0 %v3577
    %6430 = vmatprep.subr.bf16.mxu0 %v3586
    %6431 = vmatpush1.bf16.msra.mxu0 %v3585
    %6432 = vmatprep.subr.bf16.mxu0 %v3594
    %6433 = vmatpush1.bf16.msra.mxu0 %v3593
    %6434 = vmatprep.mubr.bf16.mxu0 %v6317
    %6435 = vmatmul.mubr.bf16.gmra.mrb[0].mxu0 %v6316
    %v6436 = vpop.f32.mrb[0].mxu0
    %v6437 = vadd.f32 %v6396, %v6436
    %v6438 = vpop.f32.mrb[0].mxu0
    %v6439 = vadd.f32 %v6398, %v6438
    %v6440 = vpop.f32.mrb[0].mxu0
    %v6441 = vpop.f32.mrb[0].mxu0
    %6442 = vdwg.mxu0
    %6443 = vmatprep.subr.bf16.mxu0 %v3602
    %6444 = vmatpush1.bf16.msra.mxu0 %v3601
    %6445 = vmatprep.subr.bf16.mxu0 %v3610
    %6446 = vmatpush1.bf16.msra.mxu0 %v3609
    %6447 = vmatprep.subr.bf16.mxu0 %v3618
    %6448 = vmatpush1.bf16.msra.mxu0 %v3617
    %6449 = vmatprep.subr.bf16.mxu0 %v3626
    %6450 = vmatpush1.bf16.msra.mxu0 %v3625
    %6451 = vmatprep.subr.bf16.mxu0 %v3634
    %6452 = vmatpush1.bf16.msra.mxu0 %v3633
    %6453 = vmatprep.subr.bf16.mxu0 %v3642
    %6454 = vmatpush1.bf16.msra.mxu0 %v3641
    %6455 = vmatprep.subr.bf16.mxu0 %v3650
    %6456 = vmatpush1.bf16.msra.mxu0 %v3649
    %6457 = vmatprep.subr.bf16.mxu0 %v3658
    %6458 = vmatpush1.bf16.msra.mxu0 %v3657
    %6459 = vmatprep.subr.bf16.mxu0 %v3666
    %6460 = vmatpush1.bf16.msra.mxu0 %v3665
    %6461 = vmatprep.subr.bf16.mxu0 %v3674
    %6462 = vmatpush1.bf16.msra.mxu0 %v3673
    %6463 = vmatprep.subr.bf16.mxu0 %v3682
    %6464 = vmatpush1.bf16.msra.mxu0 %v3681
    %6465 = vmatprep.subr.bf16.mxu0 %v3690
    %6466 = vmatpush1.bf16.msra.mxu0 %v3689
    %6467 = vmatprep.subr.bf16.mxu0 %v3698
    %6468 = vmatpush1.bf16.msra.mxu0 %v3697
    %6469 = vmatprep.subr.bf16.mxu0 %v3706
    %6470 = vmatpush1.bf16.msra.mxu0 %v3705
    %6471 = vmatprep.subr.bf16.mxu0 %v3714
    %6472 = vmatpush1.bf16.msra.mxu0 %v3713
    %6473 = vmatprep.subr.bf16.mxu0 %v3722
    %6474 = vmatpush1.bf16.msra.mxu0 %v3721
    %6475 = vmatprep.mubr.bf16.mxu0 %v6319
    %6476 = vmatmul.mubr.bf16.gmra.mrb[0].mxu0 %v6318
    %v6477 = vpop.f32.mrb[0].mxu0
    %v6478 = vadd.f32 %v6437, %v6477
    %v6479 = vpop.f32.mrb[0].mxu0
    %v6480 = vadd.f32 %v6439, %v6479
    %v6481 = vpop.f32.mrb[0].mxu0
    %v6482 = vpop.f32.mrb[0].mxu0
    %6483 = vdwg.mxu0
    %6484 = vmatprep.subr.bf16.mxu0 %v3220
    %6485 = vmatpush1.bf16.msra.mxu0 %v3219
    %6486 = vmatprep.subr.bf16.mxu0 %v3228
    %6487 = vmatpush1.bf16.msra.mxu0 %v3227
    %6488 = vmatprep.subr.bf16.mxu0 %v3236
    %6489 = vmatpush1.bf16.msra.mxu0 %v3235
    %6490 = vmatprep.subr.bf16.mxu0 %v3244
    %6491 = vmatpush1.bf16.msra.mxu0 %v3243
    %6492 = vmatprep.subr.bf16.mxu0 %v3252
    %6493 = vmatpush1.bf16.msra.mxu0 %v3251
    %6494 = vmatprep.subr.bf16.mxu0 %v3260
    %6495 = vmatpush1.bf16.msra.mxu0 %v3259
    %6496 = vmatprep.subr.bf16.mxu0 %v3268
    %6497 = vmatpush1.bf16.msra.mxu0 %v3267
    %6498 = vmatprep.subr.bf16.mxu0 %v3276
    %6499 = vmatpush1.bf16.msra.mxu0 %v3275
    %6500 = vmatprep.subr.bf16.mxu0 %v3284
    %6501 = vmatpush1.bf16.msra.mxu0 %v3283
    %6502 = vmatprep.subr.bf16.mxu0 %v3292
    %6503 = vmatpush1.bf16.msra.mxu0 %v3291
    %6504 = vmatprep.subr.bf16.mxu0 %v3300
    %6505 = vmatpush1.bf16.msra.mxu0 %v3299
    %6506 = vmatprep.subr.bf16.mxu0 %v3308
    %6507 = vmatpush1.bf16.msra.mxu0 %v3307
    %6508 = vmatprep.subr.bf16.mxu0 %v3316
    %6509 = vmatpush1.bf16.msra.mxu0 %v3315
    %6510 = vmatprep.subr.bf16.mxu0 %v3324
    %6511 = vmatpush1.bf16.msra.mxu0 %v3323
    %6512 = vmatprep.subr.bf16.mxu0 %v3332
    %6513 = vmatpush1.bf16.msra.mxu0 %v3331
    %6514 = vmatprep.subr.bf16.mxu0 %v3340
    %6515 = vmatpush1.bf16.msra.mxu0 %v3339
    %6516 = vmatprep.mubr.bf16.mxu0 %v6313
    %6517 = vmatmul.mubr.bf16.gmra.mrb[0].mxu0 %v6312
    %v6518 = vpop.f32.mrb[0].mxu0
    %v6519 = vadd.f32 0.0, %v6518
    %v6520 = vpop.f32.mrb[0].mxu0
    %v6521 = vadd.f32 0.0, %v6520
    %v6522 = vpop.f32.mrb[0].mxu0
    %v6523 = vpop.f32.mrb[0].mxu0
    %6524 = vdwg.mxu0
    %6525 = vmatprep.subr.bf16.mxu0 %v3348
    %6526 = vmatpush1.bf16.msra.mxu0 %v3347
    %6527 = vmatprep.subr.bf16.mxu0 %v3356
    %6528 = vmatpush1.bf16.msra.mxu0 %v3355
    %6529 = vmatprep.subr.bf16.mxu0 %v3364
    %6530 = vmatpush1.bf16.msra.mxu0 %v3363
    %6531 = vmatprep.subr.bf16.mxu0 %v3372
    %6532 = vmatpush1.bf16.msra.mxu0 %v3371
    %6533 = vmatprep.subr.bf16.mxu0 %v3380
    %6534 = vmatpush1.bf16.msra.mxu0 %v3379
    %6535 = vmatprep.subr.bf16.mxu0 %v3388
    %6536 = vmatpush1.bf16.msra.mxu0 %v3387
    %6537 = vmatprep.subr.bf16.mxu0 %v3396
    %6538 = vmatpush1.bf16.msra.mxu0 %v3395
    %6539 = vmatprep.subr.bf16.mxu0 %v3404
    %6540 = vmatpush1.bf16.msra.mxu0 %v3403
    %6541 = vmatprep.subr.bf16.mxu0 %v3412
    %6542 = vmatpush1.bf16.msra.mxu0 %v3411
    %6543 = vmatprep.subr.bf16.mxu0 %v3420
    %6544 = vmatpush1.bf16.msra.mxu0 %v3419
    %6545 = vmatprep.subr.bf16.mxu0 %v3428
    %6546 = vmatpush1.bf16.msra.mxu0 %v3427
    %6547 = vmatprep.subr.bf16.mxu0 %v3436
    %6548 = vmatpush1.bf16.msra.mxu0 %v3435
    %6549 = vmatprep.subr.bf16.mxu0 %v3444
    %6550 = vmatpush1.bf16.msra.mxu0 %v3443
    %6551 = vmatprep.subr.bf16.mxu0 %v3452
    %6552 = vmatpush1.bf16.msra.mxu0 %v3451
    %6553 = vmatprep.subr.bf16.mxu0 %v3460
    %6554 = vmatpush1.bf16.msra.mxu0 %v3459
    %6555 = vmatprep.subr.bf16.mxu0 %v3468
    %6556 = vmatpush1.bf16.msra.mxu0 %v3467
    %6557 = vmatprep.mubr.bf16.mxu0 %v6315
    %6558 = vmatmul.mubr.bf16.gmra.mrb[0].mxu0 %v6314
    %v6559 = vpop.f32.mrb[0].mxu0
    %v6560 = vadd.f32 %v6519, %v6559
    %v6561 = vpop.f32.mrb[0].mxu0
    %v6562 = vadd.f32 %v6521, %v6561
    %v6563 = vpop.f32.mrb[0].mxu0
    %v6564 = vpop.f32.mrb[0].mxu0
    %6565 = vdwg.mxu0
    %6566 = vmatprep.subr.bf16.mxu0 %v3476
    %6567 = vmatpush1.bf16.msra.mxu0 %v3475
    %6568 = vmatprep.subr.bf16.mxu0 %v3484
    %6569 = vmatpush1.bf16.msra.mxu0 %v3483
    %6570 = vmatprep.subr.bf16.mxu0 %v3492
    %6571 = vmatpush1.bf16.msra.mxu0 %v3491
    %6572 = vmatprep.subr.bf16.mxu0 %v3500
    %6573 = vmatpush1.bf16.msra.mxu0 %v3499
    %6574 = vmatprep.subr.bf16.mxu0 %v3508
    %6575 = vmatpush1.bf16.msra.mxu0 %v3507
    %6576 = vmatprep.subr.bf16.mxu0 %v3516
    %6577 = vmatpush1.bf16.msra.mxu0 %v3515
    %6578 = vmatprep.subr.bf16.mxu0 %v3524
    %6579 = vmatpush1.bf16.msra.mxu0 %v3523
    %6580 = vmatprep.subr.bf16.mxu0 %v3532
    %6581 = vmatpush1.bf16.msra.mxu0 %v3531
    %6582 = vmatprep.subr.bf16.mxu0 %v3540
    %6583 = vmatpush1.bf16.msra.mxu0 %v3539
    %6584 = vmatprep.subr.bf16.mxu0 %v3548
    %6585 = vmatpush1.bf16.msra.mxu0 %v3547
    %6586 = vmatprep.subr.bf16.mxu0 %v3556
    %6587 = vmatpush1.bf16.msra.mxu0 %v3555
    %6588 = vmatprep.subr.bf16.mxu0 %v3564
    %6589 = vmatpush1.bf16.msra.mxu0 %v3563
    %6590 = vmatprep.subr.bf16.mxu0 %v3572
    %6591 = vmatpush1.bf16.msra.mxu0 %v3571
    %6592 = vmatprep.subr.bf16.mxu0 %v3580
    %6593 = vmatpush1.bf16.msra.mxu0 %v3579
    %6594 = vmatprep.subr.bf16.mxu0 %v3588
    %6595 = vmatpush1.bf16.msra.mxu0 %v3587
    %6596 = vmatprep.subr.bf16.mxu0 %v3596
    %6597 = vmatpush1.bf16.msra.mxu0 %v3595
    %6598 = vmatprep.mubr.bf16.mxu0 %v6317
    %6599 = vmatmul.mubr.bf16.gmra.mrb[0].mxu0 %v6316
    %v6600 = vpop.f32.mrb[0].mxu0
    %v6601 = vadd.f32 %v6560, %v6600
    %v6602 = vpop.f32.mrb[0].mxu0
    %v6603 = vadd.f32 %v6562, %v6602
    %v6604 = vpop.f32.mrb[0].mxu0
    %v6605 = vpop.f32.mrb[0].mxu0
    %6606 = vdwg.mxu0
    %6607 = vmatprep.subr.bf16.mxu0 %v3604
    %6608 = vmatpush1.bf16.msra.mxu0 %v3603
    %6609 = vmatprep.subr.bf16.mxu0 %v3612
    %6610 = vmatpush1.bf16.msra.mxu0 %v3611
    %6611 = vmatprep.subr.bf16.mxu0 %v3620
    %6612 = vmatpush1.bf16.msra.mxu0 %v3619
    %6613 = vmatprep.subr.bf16.mxu0 %v3628
    %6614 = vmatpush1.bf16.msra.mxu0 %v3627
    %6615 = vmatprep.subr.bf16.mxu0 %v3636
    %6616 = vmatpush1.bf16.msra.mxu0 %v3635
    %6617 = vmatprep.subr.bf16.mxu0 %v3644
    %6618 = vmatpush1.bf16.msra.mxu0 %v3643
    %6619 = vmatprep.subr.bf16.mxu0 %v3652
    %6620 = vmatpush1.bf16.msra.mxu0 %v3651
    %6621 = vmatprep.subr.bf16.mxu0 %v3660
    %6622 = vmatpush1.bf16.msra.mxu0 %v3659
    %6623 = vmatprep.subr.bf16.mxu0 %v3668
    %6624 = vmatpush1.bf16.msra.mxu0 %v3667
    %6625 = vmatprep.subr.bf16.mxu0 %v3676
    %6626 = vmatpush1.bf16.msra.mxu0 %v3675
    %6627 = vmatprep.subr.bf16.mxu0 %v3684
    %6628 = vmatpush1.bf16.msra.mxu0 %v3683
    %6629 = vmatprep.subr.bf16.mxu0 %v3692
    %6630 = vmatpush1.bf16.msra.mxu0 %v3691
    %6631 = vmatprep.subr.bf16.mxu0 %v3700
    %6632 = vmatpush1.bf16.msra.mxu0 %v3699
    %6633 = vmatprep.subr.bf16.mxu0 %v3708
    %6634 = vmatpush1.bf16.msra.mxu0 %v3707
    %6635 = vmatprep.subr.bf16.mxu0 %v3716
    %6636 = vmatpush1.bf16.msra.mxu0 %v3715
    %6637 = vmatprep.subr.bf16.mxu0 %v3724
    %6638 = vmatpush1.bf16.msra.mxu0 %v3723
    %6639 = vmatprep.mubr.bf16.mxu0 %v6319
    %6640 = vmatmul.mubr.bf16.gmra.mrb[0].mxu0 %v6318
    %v6641 = vpop.f32.mrb[0].mxu0
    %v6642 = vadd.f32 %v6601, %v6641
    %v6643 = vpop.f32.mrb[0].mxu0
    %v6644 = vadd.f32 %v6603, %v6643
    %v6645 = vpop.f32.mrb[0].mxu0
    %v6646 = vpop.f32.mrb[0].mxu0
    %6647 = vdwg.mxu0
    %6648 = vmatprep.subr.bf16.mxu0 %v3222
    %6649 = vmatpush1.bf16.msra.mxu0 %v3221
    %6650 = vmatprep.subr.bf16.mxu0 %v3230
    %6651 = vmatpush1.bf16.msra.mxu0 %v3229
    %6652 = vmatprep.subr.bf16.mxu0 %v3238
    %6653 = vmatpush1.bf16.msra.mxu0 %v3237
    %6654 = vmatprep.subr.bf16.mxu0 %v3246
    %6655 = vmatpush1.bf16.msra.mxu0 %v3245
    %6656 = vmatprep.subr.bf16.mxu0 %v3254
    %6657 = vmatpush1.bf16.msra.mxu0 %v3253
    %6658 = vmatprep.subr.bf16.mxu0 %v3262
    %6659 = vmatpush1.bf16.msra.mxu0 %v3261
    %6660 = vmatprep.subr.bf16.mxu0 %v3270
    %6661 = vmatpush1.bf16.msra.mxu0 %v3269
    %6662 = vmatprep.subr.bf16.mxu0 %v3278
    %6663 = vmatpush1.bf16.msra.mxu0 %v3277
    %6664 = vmatprep.subr.bf16.mxu0 %v3286
    %6665 = vmatpush1.bf16.msra.mxu0 %v3285
    %6666 = vmatprep.subr.bf16.mxu0 %v3294
    %6667 = vmatpush1.bf16.msra.mxu0 %v3293
    %6668 = vmatprep.subr.bf16.mxu0 %v3302
    %6669 = vmatpush1.bf16.msra.mxu0 %v3301
    %6670 = vmatprep.subr.bf16.mxu0 %v3310
    %6671 = vmatpush1.bf16.msra.mxu0 %v3309
    %6672 = vmatprep.subr.bf16.mxu0 %v3318
    %6673 = vmatpush1.bf16.msra.mxu0 %v3317
    %6674 = vmatprep.subr.bf16.mxu0 %v3326
    %6675 = vmatpush1.bf16.msra.mxu0 %v3325
    %6676 = vmatprep.subr.bf16.mxu0 %v3334
    %6677 = vmatpush1.bf16.msra.mxu0 %v3333
    %6678 = vmatprep.subr.bf16.mxu0 %v3342
    %6679 = vmatpush1.bf16.msra.mxu0 %v3341
    %6680 = vmatprep.mubr.bf16.mxu0 %v6313
    %6681 = vmatmul.mubr.bf16.gmra.mrb[0].mxu0 %v6312
    %v6682 = vpop.f32.mrb[0].mxu0
    %v6683 = vadd.f32 0.0, %v6682
    %v6684 = vpop.f32.mrb[0].mxu0
    %v6685 = vadd.f32 0.0, %v6684
    %v6686 = vpop.f32.mrb[0].mxu0
    %v6687 = vpop.f32.mrb[0].mxu0
    %6688 = vdwg.mxu0
    %6689 = vmatprep.subr.bf16.mxu0 %v3350
    %6690 = vmatpush1.bf16.msra.mxu0 %v3349
    %6691 = vmatprep.subr.bf16.mxu0 %v3358
    %6692 = vmatpush1.bf16.msra.mxu0 %v3357
    %6693 = vmatprep.subr.bf16.mxu0 %v3366
    %6694 = vmatpush1.bf16.msra.mxu0 %v3365
    %6695 = vmatprep.subr.bf16.mxu0 %v3374
    %6696 = vmatpush1.bf16.msra.mxu0 %v3373
    %6697 = vmatprep.subr.bf16.mxu0 %v3382
    %6698 = vmatpush1.bf16.msra.mxu0 %v3381
    %6699 = vmatprep.subr.bf16.mxu0 %v3390
    %6700 = vmatpush1.bf16.msra.mxu0 %v3389
    %6701 = vmatprep.subr.bf16.mxu0 %v3398
    %6702 = vmatpush1.bf16.msra.mxu0 %v3397
    %6703 = vmatprep.subr.bf16.mxu0 %v3406
    %6704 = vmatpush1.bf16.msra.mxu0 %v3405
    %6705 = vmatprep.subr.bf16.mxu0 %v3414
    %6706 = vmatpush1.bf16.msra.mxu0 %v3413
    %6707 = vmatprep.subr.bf16.mxu0 %v3422
    %6708 = vmatpush1.bf16.msra.mxu0 %v3421
    %6709 = vmatprep.subr.bf16.mxu0 %v3430
    %6710 = vmatpush1.bf16.msra.mxu0 %v3429
    %6711 = vmatprep.subr.bf16.mxu0 %v3438
    %6712 = vmatpush1.bf16.msra.mxu0 %v3437
    %6713 = vmatprep.subr.bf16.mxu0 %v3446
    %6714 = vmatpush1.bf16.msra.mxu0 %v3445
    %6715 = vmatprep.subr.bf16.mxu0 %v3454
    %6716 = vmatpush1.bf16.msra.mxu0 %v3453
    %6717 = vmatprep.subr.bf16.mxu0 %v3462
    %6718 = vmatpush1.bf16.msra.mxu0 %v3461
    %6719 = vmatprep.subr.bf16.mxu0 %v3470
    %6720 = vmatpush1.bf16.msra.mxu0 %v3469
    %6721 = vmatprep.mubr.bf16.mxu0 %v6315
    %6722 = vmatmul.mubr.bf16.gmra.mrb[0].mxu0 %v6314
    %v6723 = vpop.f32.mrb[0].mxu0
    %v6724 = vadd.f32 %v6683, %v6723
    %v6725 = vpop.f32.mrb[0].mxu0
    %v6726 = vadd.f32 %v6685, %v6725
    %v6727 = vpop.f32.mrb[0].mxu0
    %v6728 = vpop.f32.mrb[0].mxu0
    %6729 = vdwg.mxu0
    %6730 = vmatprep.subr.bf16.mxu0 %v3478
    %6731 = vmatpush1.bf16.msra.mxu0 %v3477
    %6732 = vmatprep.subr.bf16.mxu0 %v3486
    %6733 = vmatpush1.bf16.msra.mxu0 %v3485
    %6734 = vmatprep.subr.bf16.mxu0 %v3494
    %6735 = vmatpush1.bf16.msra.mxu0 %v3493
    %6736 = vmatprep.subr.bf16.mxu0 %v3502
    %6737 = vmatpush1.bf16.msra.mxu0 %v3501
    %6738 = vmatprep.subr.bf16.mxu0 %v3510
    %6739 = vmatpush1.bf16.msra.mxu0 %v3509
    %6740 = vmatprep.subr.bf16.mxu0 %v3518
    %6741 = vmatpush1.bf16.msra.mxu0 %v3517
    %6742 = vmatprep.subr.bf16.mxu0 %v3526
    %6743 = vmatpush1.bf16.msra.mxu0 %v3525
    %6744 = vmatprep.subr.bf16.mxu0 %v3534
    %6745 = vmatpush1.bf16.msra.mxu0 %v3533
    %6746 = vmatprep.subr.bf16.mxu0 %v3542
    %6747 = vmatpush1.bf16.msra.mxu0 %v3541
    %6748 = vmatprep.subr.bf16.mxu0 %v3550
    %6749 = vmatpush1.bf16.msra.mxu0 %v3549
    %6750 = vmatprep.subr.bf16.mxu0 %v3558
    %6751 = vmatpush1.bf16.msra.mxu0 %v3557
    %6752 = vmatprep.subr.bf16.mxu0 %v3566
    %6753 = vmatpush1.bf16.msra.mxu0 %v3565
    %6754 = vmatprep.subr.bf16.mxu0 %v3574
    %6755 = vmatpush1.bf16.msra.mxu0 %v3573
    %6756 = vmatprep.subr.bf16.mxu0 %v3582
    %6757 = vmatpush1.bf16.msra.mxu0 %v3581
    %6758 = vmatprep.subr.bf16.mxu0 %v3590
    %6759 = vmatpush1.bf16.msra.mxu0 %v3589
    %6760 = vmatprep.subr.bf16.mxu0 %v3598
    %6761 = vmatpush1.bf16.msra.mxu0 %v3597
    %6762 = vmatprep.mubr.bf16.mxu0 %v6317
    %6763 = vmatmul.mubr.bf16.gmra.mrb[0].mxu0 %v6316
    %v6764 = vpop.f32.mrb[0].mxu0
    %v6765 = vadd.f32 %v6724, %v6764
    %v6766 = vpop.f32.mrb[0].mxu0
    %v6767 = vadd.f32 %v6726, %v6766
    %v6768 = vpop.f32.mrb[0].mxu0
    %v6769 = vpop.f32.mrb[0].mxu0
    %6770 = vdwg.mxu0
    %6771 = vmatprep.subr.bf16.mxu0 %v3606
    %6772 = vmatpush1.bf16.msra.mxu0 %v3605
    %6773 = vmatprep.subr.bf16.mxu0 %v3614
    %6774 = vmatpush1.bf16.msra.mxu0 %v3613
    %6775 = vmatprep.subr.bf16.mxu0 %v3622
    %6776 = vmatpush1.bf16.msra.mxu0 %v3621
    %6777 = vmatprep.subr.bf16.mxu0 %v3630
    %6778 = vmatpush1.bf16.msra.mxu0 %v3629
    %6779 = vmatprep.subr.bf16.mxu0 %v3638
    %6780 = vmatpush1.bf16.msra.mxu0 %v3637
    %6781 = vmatprep.subr.bf16.mxu0 %v3646
    %6782 = vmatpush1.bf16.msra.mxu0 %v3645
    %6783 = vmatprep.subr.bf16.mxu0 %v3654
    %6784 = vmatpush1.bf16.msra.mxu0 %v3653
    %6785 = vmatprep.subr.bf16.mxu0 %v3662
    %6786 = vmatpush1.bf16.msra.mxu0 %v3661
    %6787 = vmatprep.subr.bf16.mxu0 %v3670
    %6788 = vmatpush1.bf16.msra.mxu0 %v3669
    %6789 = vmatprep.subr.bf16.mxu0 %v3678
    %6790 = vmatpush1.bf16.msra.mxu0 %v3677
    %6791 = vmatprep.subr.bf16.mxu0 %v3686
    %6792 = vmatpush1.bf16.msra.mxu0 %v3685
    %6793 = vmatprep.subr.bf16.mxu0 %v3694
    %6794 = vmatpush1.bf16.msra.mxu0 %v3693
    %6795 = vmatprep.subr.bf16.mxu0 %v3702
    %6796 = vmatpush1.bf16.msra.mxu0 %v3701
    %6797 = vmatprep.subr.bf16.mxu0 %v3710
    %6798 = vmatpush1.bf16.msra.mxu0 %v3709
    %6799 = vmatprep.subr.bf16.mxu0 %v3718
    %6800 = vmatpush1.bf16.msra.mxu0 %v3717
    %6801 = vmatprep.subr.bf16.mxu0 %v3726
    %6802 = vmatpush1.bf16.msra.mxu0 %v3725
    %6803 = vmatprep.mubr.bf16.mxu0 %v6319
    %6804 = vmatmul.mubr.bf16.gmra.mrb[0].mxu0 %v6318
    %v6805 = vpop.f32.mrb[0].mxu0
    %v6806 = vadd.f32 %v6765, %v6805
    %v6807 = vpop.f32.mrb[0].mxu0
    %v6808 = vadd.f32 %v6767, %v6807
    %v6809 = vpop.f32.mrb[0].mxu0
    %v6810 = vpop.f32.mrb[0].mxu0
    %6811 = vdwg.mxu0
    %6812 = vmatprep.subr.bf16.mxu0 %v3224
    %6813 = vmatpush1.bf16.msra.mxu0 %v3223
    %6814 = vmatprep.subr.bf16.mxu0 %v3232
    %6815 = vmatpush1.bf16.msra.mxu0 %v3231
    %6816 = vmatprep.subr.bf16.mxu0 %v3240
    %6817 = vmatpush1.bf16.msra.mxu0 %v3239
    %6818 = vmatprep.subr.bf16.mxu0 %v3248
    %6819 = vmatpush1.bf16.msra.mxu0 %v3247
    %6820 = vmatprep.subr.bf16.mxu0 %v3256
    %6821 = vmatpush1.bf16.msra.mxu0 %v3255
    %6822 = vmatprep.subr.bf16.mxu0 %v3264
    %6823 = vmatpush1.bf16.msra.mxu0 %v3263
    %6824 = vmatprep.subr.bf16.mxu0 %v3272
    %6825 = vmatpush1.bf16.msra.mxu0 %v3271
    %6826 = vmatprep.subr.bf16.mxu0 %v3280
    %6827 = vmatpush1.bf16.msra.mxu0 %v3279
    %6828 = vmatprep.subr.bf16.mxu0 %v3288
    %6829 = vmatpush1.bf16.msra.mxu0 %v3287
    %6830 = vmatprep.subr.bf16.mxu0 %v3296
    %6831 = vmatpush1.bf16.msra.mxu0 %v3295
    %6832 = vmatprep.subr.bf16.mxu0 %v3304
    %6833 = vmatpush1.bf16.msra.mxu0 %v3303
    %6834 = vmatprep.subr.bf16.mxu0 %v3312
    %6835 = vmatpush1.bf16.msra.mxu0 %v3311
    %6836 = vmatprep.subr.bf16.mxu0 %v3320
    %6837 = vmatpush1.bf16.msra.mxu0 %v3319
    %6838 = vmatprep.subr.bf16.mxu0 %v3328
    %6839 = vmatpush1.bf16.msra.mxu0 %v3327
    %6840 = vmatprep.subr.bf16.mxu0 %v3336
    %6841 = vmatpush1.bf16.msra.mxu0 %v3335
    %6842 = vmatprep.subr.bf16.mxu0 %v3344
    %6843 = vmatpush1.bf16.msra.mxu0 %v3343
    %6844 = vmatprep.mubr.bf16.mxu0 %v6313
    %6845 = vmatmul.mubr.bf16.gmra.mrb[0].mxu0 %v6312
    %v6846 = vpop.f32.mrb[0].mxu0
    %v6847 = vadd.f32 0.0, %v6846
    %v6848 = vpop.f32.mrb[0].mxu0
    %v6849 = vadd.f32 0.0, %v6848
    %v6850 = vpop.f32.mrb[0].mxu0
    %v6851 = vpop.f32.mrb[0].mxu0
    %6852 = vdwg.mxu0
    %6853 = vmatprep.subr.bf16.mxu0 %v3352
    %6854 = vmatpush1.bf16.msra.mxu0 %v3351
    %6855 = vmatprep.subr.bf16.mxu0 %v3360
    %6856 = vmatpush1.bf16.msra.mxu0 %v3359
    %6857 = vmatprep.subr.bf16.mxu0 %v3368
    %6858 = vmatpush1.bf16.msra.mxu0 %v3367
    %6859 = vmatprep.subr.bf16.mxu0 %v3376
    %6860 = vmatpush1.bf16.msra.mxu0 %v3375
    %6861 = vmatprep.subr.bf16.mxu0 %v3384
    %6862 = vmatpush1.bf16.msra.mxu0 %v3383
    %6863 = vmatprep.subr.bf16.mxu0 %v3392
    %6864 = vmatpush1.bf16.msra.mxu0 %v3391
    %6865 = vmatprep.subr.bf16.mxu0 %v3400
    %6866 = vmatpush1.bf16.msra.mxu0 %v3399
    %6867 = vmatprep.subr.bf16.mxu0 %v3408
    %6868 = vmatpush1.bf16.msra.mxu0 %v3407
    %6869 = vmatprep.subr.bf16.mxu0 %v3416
    %6870 = vmatpush1.bf16.msra.mxu0 %v3415
    %6871 = vmatprep.subr.bf16.mxu0 %v3424
    %6872 = vmatpush1.bf16.msra.mxu0 %v3423
    %6873 = vmatprep.subr.bf16.mxu0 %v3432
    %6874 = vmatpush1.bf16.msra.mxu0 %v3431
    %6875 = vmatprep.subr.bf16.mxu0 %v3440
    %6876 = vmatpush1.bf16.msra.mxu0 %v3439
    %6877 = vmatprep.subr.bf16.mxu0 %v3448
    %6878 = vmatpush1.bf16.msra.mxu0 %v3447
    %6879 = vmatprep.subr.bf16.mxu0 %v3456
    %6880 = vmatpush1.bf16.msra.mxu0 %v3455
    %6881 = vmatprep.subr.bf16.mxu0 %v3464
    %6882 = vmatpush1.bf16.msra.mxu0 %v3463
    %6883 = vmatprep.subr.bf16.mxu0 %v3472
    %6884 = vmatpush1.bf16.msra.mxu0 %v3471
    %6885 = vmatprep.mubr.bf16.mxu0 %v6315
    %6886 = vmatmul.mubr.bf16.gmra.mrb[0].mxu0 %v6314
    %v6887 = vpop.f32.mrb[0].mxu0
    %v6888 = vadd.f32 %v6847, %v6887
    %v6889 = vpop.f32.mrb[0].mxu0
    %v6890 = vadd.f32 %v6849, %v6889
    %v6891 = vpop.f32.mrb[0].mxu0
    %v6892 = vpop.f32.mrb[0].mxu0
    %6893 = vdwg.mxu0
    %6894 = vmatprep.subr.bf16.mxu0 %v3480
    %6895 = vmatpush1.bf16.msra.mxu0 %v3479
    %6896 = vmatprep.subr.bf16.mxu0 %v3488
    %6897 = vmatpush1.bf16.msra.mxu0 %v3487
    %6898 = vmatprep.subr.bf16.mxu0 %v3496
    %6899 = vmatpush1.bf16.msra.mxu0 %v3495
    %6900 = vmatprep.subr.bf16.mxu0 %v3504
    %6901 = vmatpush1.bf16.msra.mxu0 %v3503
    %6902 = vmatprep.subr.bf16.mxu0 %v3512
    %6903 = vmatpush1.bf16.msra.mxu0 %v3511
    %6904 = vmatprep.subr.bf16.mxu0 %v3520
    %6905 = vmatpush1.bf16.msra.mxu0 %v3519
    %6906 = vmatprep.subr.bf16.mxu0 %v3528
    %6907 = vmatpush1.bf16.msra.mxu0 %v3527
    %6908 = vmatprep.subr.bf16.mxu0 %v3536
    %6909 = vmatpush1.bf16.msra.mxu0 %v3535
    %6910 = vmatprep.subr.bf16.mxu0 %v3544
    %6911 = vmatpush1.bf16.msra.mxu0 %v3543
    %6912 = vmatprep.subr.bf16.mxu0 %v3552
    %6913 = vmatpush1.bf16.msra.mxu0 %v3551
    %6914 = vmatprep.subr.bf16.mxu0 %v3560
    %6915 = vmatpush1.bf16.msra.mxu0 %v3559
    %6916 = vmatprep.subr.bf16.mxu0 %v3568
    %6917 = vmatpush1.bf16.msra.mxu0 %v3567
    %6918 = vmatprep.subr.bf16.mxu0 %v3576
    %6919 = vmatpush1.bf16.msra.mxu0 %v3575
    %6920 = vmatprep.subr.bf16.mxu0 %v3584
    %6921 = vmatpush1.bf16.msra.mxu0 %v3583
    %6922 = vmatprep.subr.bf16.mxu0 %v3592
    %6923 = vmatpush1.bf16.msra.mxu0 %v3591
    %6924 = vmatprep.subr.bf16.mxu0 %v3600
    %6925 = vmatpush1.bf16.msra.mxu0 %v3599
    %6926 = vmatprep.mubr.bf16.mxu0 %v6317
    %6927 = vmatmul.mubr.bf16.gmra.mrb[0].mxu0 %v6316
    %v6928 = vpop.f32.mrb[0].mxu0
    %v6929 = vadd.f32 %v6888, %v6928
    %v6930 = vpop.f32.mrb[0].mxu0
    %v6931 = vadd.f32 %v6890, %v6930
    %v6932 = vpop.f32.mrb[0].mxu0
    %v6933 = vpop.f32.mrb[0].mxu0
    %6934 = vdwg.mxu0
    %6935 = vmatprep.subr.bf16.mxu0 %v3608
    %6936 = vmatpush1.bf16.msra.mxu0 %v3607
    %6937 = vmatprep.subr.bf16.mxu0 %v3616
    %6938 = vmatpush1.bf16.msra.mxu0 %v3615
    %6939 = vmatprep.subr.bf16.mxu0 %v3624
    %6940 = vmatpush1.bf16.msra.mxu0 %v3623
    %6941 = vmatprep.subr.bf16.mxu0 %v3632
    %6942 = vmatpush1.bf16.msra.mxu0 %v3631
    %6943 = vmatprep.subr.bf16.mxu0 %v3640
    %6944 = vmatpush1.bf16.msra.mxu0 %v3639
    %6945 = vmatprep.subr.bf16.mxu0 %v3648
    %6946 = vmatpush1.bf16.msra.mxu0 %v3647
    %6947 = vmatprep.subr.bf16.mxu0 %v3656
    %6948 = vmatpush1.bf16.msra.mxu0 %v3655
    %6949 = vmatprep.subr.bf16.mxu0 %v3664
    %6950 = vmatpush1.bf16.msra.mxu0 %v3663
    %6951 = vmatprep.subr.bf16.mxu0 %v3672
    %6952 = vmatpush1.bf16.msra.mxu0 %v3671
    %6953 = vmatprep.subr.bf16.mxu0 %v3680
    %6954 = vmatpush1.bf16.msra.mxu0 %v3679
    %6955 = vmatprep.subr.bf16.mxu0 %v3688
    %6956 = vmatpush1.bf16.msra.mxu0 %v3687
    %6957 = vmatprep.subr.bf16.mxu0 %v3696
    %6958 = vmatpush1.bf16.msra.mxu0 %v3695
    %6959 = vmatprep.subr.bf16.mxu0 %v3704
    %6960 = vmatpush1.bf16.msra.mxu0 %v3703
    %6961 = vmatprep.subr.bf16.mxu0 %v3712
    %6962 = vmatpush1.bf16.msra.mxu0 %v3711
    %6963 = vmatprep.subr.bf16.mxu0 %v3720
    %6964 = vmatpush1.bf16.msra.mxu0 %v3719
    %6965 = vmatprep.subr.bf16.mxu0 %v3728
    %6966 = vmatpush1.bf16.msra.mxu0 %v3727
    %6967 = vmatprep.mubr.bf16.mxu0 %v6319
    %6968 = vmatmul.mubr.bf16.gmra.mrb[0].mxu0 %v6318
    %v6969 = vpop.f32.mrb[0].mxu0
    %v6970 = vadd.f32 %v6929, %v6969
    %v6971 = vpop.f32.mrb[0].mxu0
    %v6972 = vadd.f32 %v6931, %v6971
    %v6973 = vpop.f32.mrb[0].mxu0
    %v6974 = vpop.f32.mrb[0].mxu0
    %6975 = vdwg.mxu0
    %v6976 = vmul.f32 %v6478, %v4848
    %v6977 = vmul.f32 %v6480, %v4852
    %v6978 = vmul.f32 %v6642, %v4856
    %v6979 = vmul.f32 %v6644, %v4860
    %v6980 = vmul.f32 %v6806, %v4864
    %v6981 = vmul.f32 %v6808, %v4868
    %v6982 = vmul.f32 %v6970, %v4872
    %v6983 = vmul.f32 %v6972, %v4876
    %v6984 = vadd.f32 %v6976, %v3935
    %v6985 = vadd.f32 %v6977, %v3939
    %v6986 = vadd.f32 %v6978, %v3943
    %v6987 = vadd.f32 %v6979, %v3947
    %v6988 = vadd.f32 %v6980, %v3951
    %v6989 = vadd.f32 %v6981, %v3955
    %v6990 = vadd.f32 %v6982, %v3959
    %v6991 = vadd.f32 %v6983, %v3963
    %v6992 = vpack.c.bf16 %v6984, %v6984
    %v6993 = vpack.c.bf16 %v6985, %v6985
    %v6994 = vpack.c.bf16 %v6986, %v6986
    %v6995 = vpack.c.bf16 %v6987, %v6987
    %v6996 = vpack.c.bf16 %v6988, %v6988
    %v6997 = vpack.c.bf16 %v6989, %v6989
    %v6998 = vpack.c.bf16 %v6990, %v6990
    %v6999 = vpack.c.bf16 %v6991, %v6991
    %7000 = vmatprep.subr.bf16.mxu0 %v3794
    %7001 = vmatpush1.bf16.xpose.msra.mxu0 %v3793
    %7002 = vmatprep.subr.bf16.mxu0 %v3802
    %7003 = vmatpush1.bf16.xpose.msra.mxu0 %v3801
    %7004 = vmatprep.subr.bf16.mxu0 %v3810
    %7005 = vmatpush1.bf16.xpose.msra.mxu0 %v3809
    %7006 = vmatprep.subr.bf16.mxu0 %v3818
    %7007 = vmatpush1.bf16.xpose.msra.mxu0 %v3817
    %7008 = vmatprep.subr.bf16.mxu0 %v3826
    %7009 = vmatpush1.bf16.xpose.msra.mxu0 %v3825
    %7010 = vmatprep.subr.bf16.mxu0 %v3834
    %7011 = vmatpush1.bf16.xpose.msra.mxu0 %v3833
    %7012 = vmatprep.subr.bf16.mxu0 %v3842
    %7013 = vmatpush1.bf16.xpose.msra.mxu0 %v3841
    %7014 = vmatprep.subr.bf16.mxu0 %v3850
    %7015 = vmatpush1.bf16.xpose.msra.mxu0 %v3849
    %7016 = vmatprep.subr.bf16.mxu0 %v3858
    %7017 = vmatpush1.bf16.xpose.msra.mxu0 %v3857
    %7018 = vmatprep.subr.bf16.mxu0 %v3866
    %7019 = vmatpush1.bf16.xpose.msra.mxu0 %v3865
    %7020 = vmatprep.subr.bf16.mxu0 %v3874
    %7021 = vmatpush1.bf16.xpose.msra.mxu0 %v3873
    %7022 = vmatprep.subr.bf16.mxu0 %v3882
    %7023 = vmatpush1.bf16.xpose.msra.mxu0 %v3881
    %7024 = vmatprep.subr.bf16.mxu0 %v3890
    %7025 = vmatpush1.bf16.xpose.msra.mxu0 %v3889
    %7026 = vmatprep.subr.bf16.mxu0 %v3898
    %7027 = vmatpush1.bf16.xpose.msra.mxu0 %v3897
    %7028 = vmatprep.subr.bf16.mxu0 %v3906
    %7029 = vmatpush1.bf16.xpose.msra.mxu0 %v3905
    %7030 = vmatprep.subr.bf16.mxu0 %v3914
    %7031 = vmatpush1.bf16.xpose.msra.mxu0 %v3913
    %7032 = vmatprep.mubr.bf16.mxu0 %v6993
    %7033 = vmatmul.mubr.bf16.gmra.mrb[0].mxu0 %v6992
    %v7034 = vpop.f32.mrb[0].mxu0
    %v7035 = vadd.f32 0.0, %v7034
    %v7036 = vpop.f32.mrb[0].mxu0
    %v7037 = vadd.f32 0.0, %v7036
    %v7038 = vpop.f32.mrb[0].mxu0
    %v7039 = vpop.f32.mrb[0].mxu0
    %7040 = vdwg.mxu0
    %7041 = vmatprep.subr.bf16.mxu0 %v3796
    %7042 = vmatpush1.bf16.xpose.msra.mxu0 %v3795
    %7043 = vmatprep.subr.bf16.mxu0 %v3804
    %7044 = vmatpush1.bf16.xpose.msra.mxu0 %v3803
    %7045 = vmatprep.subr.bf16.mxu0 %v3812
    %7046 = vmatpush1.bf16.xpose.msra.mxu0 %v3811
    %7047 = vmatprep.subr.bf16.mxu0 %v3820
    %7048 = vmatpush1.bf16.xpose.msra.mxu0 %v3819
    %7049 = vmatprep.subr.bf16.mxu0 %v3828
    %7050 = vmatpush1.bf16.xpose.msra.mxu0 %v3827
    %7051 = vmatprep.subr.bf16.mxu0 %v3836
    %7052 = vmatpush1.bf16.xpose.msra.mxu0 %v3835
    %7053 = vmatprep.subr.bf16.mxu0 %v3844
    %7054 = vmatpush1.bf16.xpose.msra.mxu0 %v3843
    %7055 = vmatprep.subr.bf16.mxu0 %v3852
    %7056 = vmatpush1.bf16.xpose.msra.mxu0 %v3851
    %7057 = vmatprep.subr.bf16.mxu0 %v3860
    %7058 = vmatpush1.bf16.xpose.msra.mxu0 %v3859
    %7059 = vmatprep.subr.bf16.mxu0 %v3868
    %7060 = vmatpush1.bf16.xpose.msra.mxu0 %v3867
    %7061 = vmatprep.subr.bf16.mxu0 %v3876
    %7062 = vmatpush1.bf16.xpose.msra.mxu0 %v3875
    %7063 = vmatprep.subr.bf16.mxu0 %v3884
    %7064 = vmatpush1.bf16.xpose.msra.mxu0 %v3883
    %7065 = vmatprep.subr.bf16.mxu0 %v3892
    %7066 = vmatpush1.bf16.xpose.msra.mxu0 %v3891
    %7067 = vmatprep.subr.bf16.mxu0 %v3900
    %7068 = vmatpush1.bf16.xpose.msra.mxu0 %v3899
    %7069 = vmatprep.subr.bf16.mxu0 %v3908
    %7070 = vmatpush1.bf16.xpose.msra.mxu0 %v3907
    %7071 = vmatprep.subr.bf16.mxu0 %v3916
    %7072 = vmatpush1.bf16.xpose.msra.mxu0 %v3915
    %7073 = vmatprep.mubr.bf16.mxu0 %v6995
    %7074 = vmatmul.mubr.bf16.gmra.mrb[0].mxu0 %v6994
    %v7075 = vpop.f32.mrb[0].mxu0
    %v7076 = vadd.f32 %v7035, %v7075
    %v7077 = vpop.f32.mrb[0].mxu0
    %v7078 = vadd.f32 %v7037, %v7077
    %v7079 = vpop.f32.mrb[0].mxu0
    %v7080 = vpop.f32.mrb[0].mxu0
    %7081 = vdwg.mxu0
    %7082 = vmatprep.subr.bf16.mxu0 %v3798
    %7083 = vmatpush1.bf16.xpose.msra.mxu0 %v3797
    %7084 = vmatprep.subr.bf16.mxu0 %v3806
    %7085 = vmatpush1.bf16.xpose.msra.mxu0 %v3805
    %7086 = vmatprep.subr.bf16.mxu0 %v3814
    %7087 = vmatpush1.bf16.xpose.msra.mxu0 %v3813
    %7088 = vmatprep.subr.bf16.mxu0 %v3822
    %7089 = vmatpush1.bf16.xpose.msra.mxu0 %v3821
    %7090 = vmatprep.subr.bf16.mxu0 %v3830
    %7091 = vmatpush1.bf16.xpose.msra.mxu0 %v3829
    %7092 = vmatprep.subr.bf16.mxu0 %v3838
    %7093 = vmatpush1.bf16.xpose.msra.mxu0 %v3837
    %7094 = vmatprep.subr.bf16.mxu0 %v3846
    %7095 = vmatpush1.bf16.xpose.msra.mxu0 %v3845
    %7096 = vmatprep.subr.bf16.mxu0 %v3854
    %7097 = vmatpush1.bf16.xpose.msra.mxu0 %v3853
    %7098 = vmatprep.subr.bf16.mxu0 %v3862
    %7099 = vmatpush1.bf16.xpose.msra.mxu0 %v3861
    %7100 = vmatprep.subr.bf16.mxu0 %v3870
    %7101 = vmatpush1.bf16.xpose.msra.mxu0 %v3869
    %7102 = vmatprep.subr.bf16.mxu0 %v3878
    %7103 = vmatpush1.bf16.xpose.msra.mxu0 %v3877
    %7104 = vmatprep.subr.bf16.mxu0 %v3886
    %7105 = vmatpush1.bf16.xpose.msra.mxu0 %v3885
    %7106 = vmatprep.subr.bf16.mxu0 %v3894
    %7107 = vmatpush1.bf16.xpose.msra.mxu0 %v3893
    %7108 = vmatprep.subr.bf16.mxu0 %v3902
    %7109 = vmatpush1.bf16.xpose.msra.mxu0 %v3901
    %7110 = vmatprep.subr.bf16.mxu0 %v3910
    %7111 = vmatpush1.bf16.xpose.msra.mxu0 %v3909
    %7112 = vmatprep.subr.bf16.mxu0 %v3918
    %7113 = vmatpush1.bf16.xpose.msra.mxu0 %v3917
    %7114 = vmatprep.mubr.bf16.mxu0 %v6997
    %7115 = vmatmul.mubr.bf16.gmra.mrb[0].mxu0 %v6996
    %v7116 = vpop.f32.mrb[0].mxu0
    %v7117 = vadd.f32 %v7076, %v7116
    %v7118 = vpop.f32.mrb[0].mxu0
    %v7119 = vadd.f32 %v7078, %v7118
    %v7120 = vpop.f32.mrb[0].mxu0
    %v7121 = vpop.f32.mrb[0].mxu0
    %7122 = vdwg.mxu0
    %7123 = vmatprep.subr.bf16.mxu0 %v3800
    %7124 = vmatpush1.bf16.xpose.msra.mxu0 %v3799
    %7125 = vmatprep.subr.bf16.mxu0 %v3808
    %7126 = vmatpush1.bf16.xpose.msra.mxu0 %v3807
    %7127 = vmatprep.subr.bf16.mxu0 %v3816
    %7128 = vmatpush1.bf16.xpose.msra.mxu0 %v3815
    %7129 = vmatprep.subr.bf16.mxu0 %v3824
    %7130 = vmatpush1.bf16.xpose.msra.mxu0 %v3823
    %7131 = vmatprep.subr.bf16.mxu0 %v3832
    %7132 = vmatpush1.bf16.xpose.msra.mxu0 %v3831
    %7133 = vmatprep.subr.bf16.mxu0 %v3840
    %7134 = vmatpush1.bf16.xpose.msra.mxu0 %v3839
    %7135 = vmatprep.subr.bf16.mxu0 %v3848
    %7136 = vmatpush1.bf16.xpose.msra.mxu0 %v3847
    %7137 = vmatprep.subr.bf16.mxu0 %v3856
    %7138 = vmatpush1.bf16.xpose.msra.mxu0 %v3855
    %7139 = vmatprep.subr.bf16.mxu0 %v3864
    %7140 = vmatpush1.bf16.xpose.msra.mxu0 %v3863
    %7141 = vmatprep.subr.bf16.mxu0 %v3872
    %7142 = vmatpush1.bf16.xpose.msra.mxu0 %v3871
    %7143 = vmatprep.subr.bf16.mxu0 %v3880
    %7144 = vmatpush1.bf16.xpose.msra.mxu0 %v3879
    %7145 = vmatprep.subr.bf16.mxu0 %v3888
    %7146 = vmatpush1.bf16.xpose.msra.mxu0 %v3887
    %7147 = vmatprep.subr.bf16.mxu0 %v3896
    %7148 = vmatpush1.bf16.xpose.msra.mxu0 %v3895
    %7149 = vmatprep.subr.bf16.mxu0 %v3904
    %7150 = vmatpush1.bf16.xpose.msra.mxu0 %v3903
    %7151 = vmatprep.subr.bf16.mxu0 %v3912
    %7152 = vmatpush1.bf16.xpose.msra.mxu0 %v3911
    %7153 = vmatprep.subr.bf16.mxu0 %v3920
    %7154 = vmatpush1.bf16.xpose.msra.mxu0 %v3919
    %7155 = vmatprep.mubr.bf16.mxu0 %v6999
    %7156 = vmatmul.mubr.bf16.gmra.mrb[0].mxu0 %v6998
    %v7157 = vpop.f32.mrb[0].mxu0
    %v7158 = vadd.f32 %v7117, %v7157
    %v7159 = vpop.f32.mrb[0].mxu0
    %v7160 = vadd.f32 %v7119, %v7159
    %v7161 = vpop.f32.mrb[0].mxu0
    %v7162 = vpop.f32.mrb[0].mxu0
    %7163 = vdwg.mxu0
    %v7164 = vmul.f32 %v7158, %v5077
    %v7165 = vmul.f32 %v7160, %v5081
    %v7166 = vadd.f32 %v6128, %v7164
    %v7167 = vadd.f32 %v6129, %v7165
    %v7168 = vadd.f32 %v7166, %v3978
    %v7169 = vadd.f32 %v7167, %v3982
    %7170 = vst [vmem:[#allocation13] sm:$0xff] %v7168
    %7171 = vst [vmem:[#allocation13 + $0x8] sm:$0xff] %v7169
    %7172 = vst [vmem:[#allocation13 + $0x10] sm:$0xff] %v395
    %7173 = vst [vmem:[#allocation13 + $0x18] sm:$0xff] %v590
    // Predicated region
    $region50: #{_run_fused.1} parent=1 // pred_check
      _
    $region51: #{_run_fused.1} parent=1 // pred_check_branch
      %7175 = sbr.rel (0) target = $region53
    $region52: #{_run_fused.1} parent=1 // pred_region
      %s7177 = ssub.s32 512, 512
      %7178 = vsyncadd [#allocation4], %s7177
      %s7180 = sshll.u32 [#allocation13], 4
      %s7181 = int_to_ptr.vmem [resolvable:$true] %s7180
      %7183 = dma.vmem_to_hbm [thread:$0]  %s7181, 512, %s6, [#allocation4]
    $region53: #{_run_fused.1} parent=1 // pred_fallthru
      _
    // Predicated region
    $region54: #{_run_fused.1} parent=1 // pred_check
      _
    $region55: #{_run_fused.1} parent=1 // pred_check_branch
      %7185 = sbr.rel (0) target = $region57
    $region56: #{_run_fused.1} parent=1 // pred_region
      %7186 = dma.done [#allocation4], 512
    $region57: #{_run_fused.1} parent=1 // pred_fallthru
      _
    %7187 = vsyncpa [#allocation3], 1
    %7188 = vsyncpa [#allocation6], 1
    %7189 = vsyncpa [#allocation9], 1
    %7190 = vsyncpa [#allocation12], 1
    %7191 = vsyncpa [#allocation4], 1

</llo_original>
